<compile_context>
chip_gen: v7x
topology: tpu7x:2x2x1
jax: 0.10.0
libtpu: 0.0.40
codegen_flags: <defaults>
</compile_context>

<pallas_src>
import math
from functools import partial

import numpy as np

import jax
import jax.numpy as jnp
from jax.experimental import pallas as pl
from jax.experimental.pallas import tpu as pltpu


# ----------------------------------------------------------------------------
# plain-JAX glue: exact ports of the camera-math helpers
# ----------------------------------------------------------------------------

def _normalize(x, axis, eps=1e-12):
    # torch.nn.functional.normalize: x / max(||x||_2, eps)
    n = jnp.linalg.norm(x, axis=axis, keepdims=True)
    return x / jnp.maximum(n, eps)


def spherical_to_xyz_coords(rho, phi, theta):
    x = rho * jnp.sin(phi) * jnp.cos(theta)
    y = rho * jnp.sin(phi) * jnp.sin(theta)
    z = rho * jnp.cos(phi)
    return jnp.stack((x, y, z), axis=1)


def rotate_about(a, b, theta):
    a = a.reshape(1, 1, 1, -1)
    b = b.reshape(b.shape[0], 1, b.shape[1], b.shape[3])
    theta = theta.reshape(1, -1, 1, 1)
    ab_dot = jnp.sum(a * b, axis=3, keepdims=True)
    bb_dot = jnp.sum(b * b, axis=3, keepdims=True)
    par = ab_dot / bb_dot * b
    perp = a - par
    w = jnp.cross(b, perp, axis=3)
    perp_norm = jnp.linalg.norm(perp, axis=3, keepdims=True)
    res = par + perp * jnp.cos(theta) + perp_norm * _normalize(w, 3) * jnp.sin(theta)
    return res.reshape(res.shape[0], -1, 1, res.shape[3])


def look_at(centers, normals, up, eye_lcs, thetas=None):
    V = centers.shape[0]
    N = eye_lcs.shape[0]
    up = up[None, :]
    axis_z = _normalize(normals, 1)
    axis_y = jnp.tile(_normalize(up, 1), (V, 1))
    axis_x = _normalize(jnp.cross(axis_y, axis_z, axis=1), 1)
    axis_y = _normalize(jnp.cross(axis_z, axis_x, axis=1), 1)
    axis = jnp.concatenate(
        [axis_x[:, None], axis_y[:, None], axis_z[:, None]], axis=1)          # (V,3,3)
    centers = centers.reshape(-1, 1, 1, 3)
    eye = jnp.matmul(eye_lcs.reshape(1, -1, 1, 3), axis.reshape(-1, 1, 3, 3)) + centers
    front_dir = _normalize(eye - centers, 3)                                  # (V,N,1,3)
    up_dir = _normalize(up, 1)
    last = jnp.array([0.0, 0.0, 0.0, 1.0], dtype=centers.dtype).reshape(1, 1, 1, 4)
    if thetas is None:
        up_dir = jnp.tile(up.reshape(1, 1, 1, -1), (V, N, 1, 1))
        right_dir = _normalize(jnp.cross(up_dir, front_dir, axis=3), 3)
        up_dir = _normalize(jnp.cross(front_dir, right_dir, axis=3), 3)
        mat = jnp.concatenate([right_dir, up_dir, front_dir], axis=2)         # (V,N,3,3)
        vec = -1.0 * jnp.matmul(mat, jnp.swapaxes(eye, 2, 3))                 # (V,N,3,1)
        mat = jnp.concatenate([mat, vec], axis=3)                             # (V,N,3,4)
        mat = jnp.concatenate([mat, jnp.tile(last, (V, N, 1, 1))], axis=2)    # (V,N,4,4)
    else:
        R = thetas.shape[0]
        up_dir = rotate_about(up_dir, front_dir, thetas)                      # (V,R*N,1,3)
        front_dir = jnp.tile(front_dir, (1, R, 1, 1))
        right_dir = _normalize(jnp.cross(up_dir, front_dir, axis=3), 3)
        up_dir = _normalize(jnp.cross(front_dir, right_dir, axis=3), 3)
        mat = jnp.concatenate([right_dir, up_dir, front_dir], axis=2)
        eye = jnp.tile(eye, (1, R, 1, 1))
        vec = -1.0 * jnp.matmul(mat, jnp.swapaxes(eye, 2, 3))
        mat = jnp.concatenate([mat, vec], axis=3)
        mat = jnp.concatenate([mat, jnp.tile(last, (V, N * R, 1, 1))], axis=2)
    return mat


def projection_matrix(field_of_view, aspect, znear, zfar):
    mat = np.zeros((4, 4), dtype=np.float32)
    fov_rad = field_of_view / 180.0 * math.pi
    tan_half_fov = math.tan(fov_rad / 2.0)
    mat[0, 0] = 1.0 / aspect / tan_half_fov
    mat[1, 1] = 1.0 / tan_half_fov
    mat[2, 2] = -(zfar + znear) / (zfar - znear)
    mat[3, 2] = -1.0
    mat[2, 3] = -2.0 * zfar * znear / (zfar - znear)
    return jnp.asarray(mat)


# ----------------------------------------------------------------------------
# Pallas kernel: soft depth splatting with point-tiled accumulation
# ----------------------------------------------------------------------------

_EPS = 1e-8          # matches the 1e-8 weight init of the reference forward
_IMG_TILE = 8        # images per grid step (sublane-dense output)
_PC = 8              # points processed per inner chunk (sublane axis)
_PT_TILE_MAX = 256   # points per grid step on the reduction axis
_PIX_TILE_MAX = 512  # lanes per pixel tile (vreg-pressure cap; multiple of 128)


def _round_up(x, m):
    return ((x + m - 1) // m) * m


def _pick_pix_tile(ss_pad, n_img_tiles):
    """ss_pad is a multiple of 128; pick the largest tile <= _PIX_TILE_MAX."""
    pix_tile = 128
    for cand in (_PIX_TILE_MAX, 256, 128):
        if ss_pad % cand == 0:
            pix_tile = cand
            break
    # v7x megacore: make sure the two parallel grid axes have >= 2 total steps
    # so both TensorCores get work on small problems.
    if n_img_tiles * (ss_pad // pix_tile) < 2 and pix_tile >= 256:
        pix_tile //= 2
    return pix_tile


def _make_raster_kernel(img_tile, pt_tile, pix_tile, pc, eps):
    n_chunks = pt_tile // pc

    def kernel(attrs_ref, pix_ref, out_ref, num_acc, den_acc):
        # grid = (image tiles, pixel tiles, point tiles); point axis is the
        # reduction -> accumulate into resident 3-D VMEM scratch, finalize on
        # the last point tile.  num_acc/den_acc: (img_tile, pc, pix_tile).
        k = pl.program_id(2)

        @pl.when(k == 0)
        def _():
            num_acc[...] = jnp.zeros_like(num_acc)
            den_acc[...] = jnp.zeros_like(den_acc)

        # pixel centers, pre-scaled by 1/sqrt(sigma) on the host
        px = pix_ref[0:1, :]                       # (1, pix_tile)
        py = pix_ref[1:2, :]                       # (1, pix_tile)

        for m in range(img_tile):                  # static unroll over images
            num_m = jnp.zeros((pc, pix_tile), jnp.float32)
            den_m = jnp.zeros((pc, pix_tile), jnp.float32)
            for c in range(n_chunks):              # static unroll over point chunks
                a = attrs_ref[m, c * pc:(c + 1) * pc, :]   # (pc, 8) packed attrs
                u = a[:, 0:1]                      # screen x / sqrt(sigma)
                v = a[:, 1:2]                      # screen y / sqrt(sigma)
                r2 = a[:, 2:3]                     # (dist_ratio * r_screen)^2 / sigma
                wz = a[:, 3:4]                     # valid * exp((1-z)/gamma)
                wzz = a[:, 4:5]                    # wz * z
                dx = px - u                        # (pc, pix_tile)
                dy = py - v
                d2 = dx * dx + dy * dy             # already divided by sigma
                g = jnp.exp(-d2)                   # spatial softness (EUP slot)
                cov = jnp.where(d2 <= r2, g, 0.0)
                num_m = num_m + cov * wzz
                den_m = den_m + cov * wz
            # full 8-sublane-dense RMW, once per image per grid step;
            # NO cross-sublane reduce here (deferred to finalize).
            num_acc[m] += num_m
            den_acc[m] += den_m

        @pl.when(k == pl.num_programs(2) - 1)
        def _():
            # deferred PC-axis reduce + normalize, once per output block
            for m in range(img_tile):
                num = jnp.sum(num_acc[m], axis=0, keepdims=True) + eps
                den = jnp.sum(den_acc[m], axis=0, keepdims=True) + eps
                out_ref[m:m + 1, :] = num * pl.reciprocal(den, approx=False)

    return kernel


@partial(jax.jit, static_argnames=("image_size", "sigma", "gamma", "dist_ratio",
                                   "znear", "zfar", "tan_half_fov"))
def soft_rasterize_depth(mvp_mat, vertices, radii, *, image_size, sigma, gamma,
                         dist_ratio, znear, zfar, tan_half_fov):
    """mvp_mat: (V,N,4,4); vertices: (V,P,3); radii: (V,P) -> (V,N,1,S,S)."""
    f32 = jnp.float32
    V, N = mvp_mat.shape[0], mvp_mat.shape[1]
    P = vertices.shape[1]
    S = int(image_size)
    SS = S * S
    M = V * N
    inv_sqrt_sigma = 1.0 / math.sqrt(float(sigma))
    inv_sigma = 1.0 / float(sigma)

    # ---- hoisted per-point screen-space attributes (tiny; plain JAX) ----
    mvp = mvp_mat.astype(f32)
    verts_h = jnp.concatenate(
        [vertices.astype(f32), jnp.ones((V, P, 1), f32)], axis=-1)       # (V,P,4)
    clip = jnp.einsum('vnij,vpj->vnpi', mvp, verts_h)                    # (V,N,P,4)
    w = clip[..., 3]
    w_safe = jnp.maximum(w, 1e-6)
    inv_w = 1.0 / w_safe
    u = clip[..., 0] * inv_w * 0.5 + 0.5
    v = 0.5 - clip[..., 1] * inv_w * 0.5
    z = clip[..., 2] * inv_w * 0.5 + 0.5
    r_scr = radii.astype(f32)[:, None, :] * (0.5 / tan_half_fov) * inv_w
    r_eff = dist_ratio * r_scr
    valid = (w > znear) & (z >= 0.0) & (z <= 1.0)
    wz = jnp.where(valid, jnp.exp((1.0 - z) / gamma), 0.0)               # per-point weight
    wzz = wz * z
    # sigma folded into coordinates / radius so the kernel computes exp(-d2)
    u_s = u * inv_sqrt_sigma
    v_s = v * inv_sqrt_sigma
    r2_s = (r_eff * r_eff) * inv_sigma
    zero = jnp.zeros_like(u)
    attrs = jnp.stack([u_s, v_s, r2_s, wz, wzz, zero, zero, zero], axis=-1)  # (V,N,P,8)
    attrs = attrs.reshape(M, P, 8)

    # ---- tiling ----
    pt_tile = min(_PT_TILE_MAX, _round_up(P, _PC))
    P_pad = _round_up(P, pt_tile)
    M_pad = _round_up(M, _IMG_TILE)
    SS_pad = _round_up(SS, 128)                    # keeps pixel tiles lane-dense
    pix_tile = _pick_pix_tile(SS_pad, M_pad // _IMG_TILE)

    attrs = jnp.pad(attrs, ((0, M_pad - M), (0, P_pad - P), (0, 0)))     # pads -> wz=0

    # precomputed pixel centers (scaled by 1/sqrt(sigma)):
    # row 0 = x, row 1 = y (flat idx = y*S + x)
    coords = ((jnp.arange(S, dtype=f32) + 0.5) / S) * inv_sqrt_sigma
    pix = jnp.stack([jnp.tile(coords, (S,)), jnp.repeat(coords, S)], axis=0)  # (2, SS)
    pix = jnp.pad(pix, ((0, 0), (0, SS_pad - SS)))

    kernel = _make_raster_kernel(_IMG_TILE, pt_tile, pix_tile, _PC, _EPS)

    cost = pl.CostEstimate(
        flops=int(13 * M * P * SS),
        transcendentals=int(M * P * SS),
        bytes_accessed=int(attrs.size * 4 + pix.size * 4 + M_pad * SS_pad * 4),
    )

    out = pl.pallas_call(
        kernel,
        out_shape=jax.ShapeDtypeStruct((M_pad, SS_pad), jnp.float32),
        grid_spec=pltpu.PrefetchScalarGridSpec(
            num_scalar_prefetch=0,
            grid=(M_pad // _IMG_TILE, SS_pad // pix_tile, P_pad // pt_tile),
            in_specs=[
                pl.BlockSpec((_IMG_TILE, pt_tile, 8), lambda i, j, k: (i, k, 0)),
                pl.BlockSpec((2, pix_tile), lambda i, j, k: (0, j)),
            ],
            out_specs=pl.BlockSpec((_IMG_TILE, pix_tile), lambda i, j, k: (i, j)),
            scratch_shapes=[pltpu.VMEM((_IMG_TILE, _PC, pix_tile), jnp.float32),
                            pltpu.VMEM((_IMG_TILE, _PC, pix_tile), jnp.float32)],
        ),
        compiler_params=pltpu.CompilerParams(
            dimension_semantics=("parallel", "parallel", "arbitrary")),
        cost_estimate=cost,
    )(attrs, pix)

    return out[:M, :SS].reshape(V, N, 1, S, S)


# ----------------------------------------------------------------------------
# MultiViewRenderer
# ----------------------------------------------------------------------------

class MultiViewRenderer:
    def __init__(self, num_views, num_rotations=0, field_of_view=60.0, aspect=1.0,
                 znear=0.1, zfar=6.0, image_size=64, sigma=1.0 / 64.0, gamma=5.0,
                 dist_ratio=5.0, dist_factor=1.0, radius_ratio=0.25,
                 draw_color=False, draw_depth=True, trainable=True, key=None):
        assert draw_depth and not draw_color, "only the default draw_depth path is implemented"
        self.num_views = num_views
        self.num_rotations = num_rotations
        self.znear, self.zfar = znear, zfar
        self.image_size = image_size
        self.sigma, self.gamma = sigma, gamma
        self.dist_ratio, self.dist_factor = dist_ratio, dist_factor
        self.radius_ratio = radius_ratio
        self.trainable = trainable
        self.tan_half_fov = math.tan(field_of_view / 180.0 * math.pi / 2.0)
        self.rho_min, self.rho_max = 0.3, 1.0
        self.phi_min, self.phi_max = 0.0, math.pi / 2.0
        self.theta_min, self.theta_max = 0.0, 2.0 * math.pi
        self.rot_min, self.rot_max = 0.0, 2.0 * math.pi

        self.proj_mat = projection_matrix(field_of_view, aspect, znear, zfar)

        # deterministic parameter init (replaces np.random.uniform in the reference)
        if key is None:
            key = jax.random.PRNGKey(0)
        k1, k2, k3, k4 = jax.random.split(key, 4)
        self.rho = jax.random.uniform(k1, (num_views,), jnp.float32,
                                      self.rho_min, self.rho_max)
        self.phi = jax.random.uniform(k2, (num_views,), jnp.float32,
                                      self.phi_min, self.phi_max)
        self.theta = jax.random.uniform(k3, (num_views,), jnp.float32,
                                        self.theta_min, self.theta_max)
        self.up = jnp.array([0.0, -1.0, 0.0], dtype=jnp.float32)
        if num_rotations > 0:
            self.rot = jax.random.uniform(k4, (num_rotations,), jnp.float32,
                                          self.rot_min, self.rot_max)
        else:
            self.rot = None

    def __call__(self, vertices, radii, colors, at_centers, at_normals):
        rho = jnp.clip(self.rho, self.rho_min, self.rho_max)
        phi = jnp.clip(self.phi, self.phi_min, self.phi_max)
        theta = jnp.clip(self.theta, self.theta_min, self.theta_max)
        rot = (jnp.clip(self.rot, self.rot_min, self.rot_max)
               if self.rot is not None else None)
        eye_lcs = spherical_to_xyz_coords(rho * self.dist_factor, phi, theta)
        mv_mat = look_at(at_centers, at_normals, self.up, eye_lcs, rot)      # (V,N,4,4)
        mvp_mat = jnp.matmul(self.proj_mat.reshape(1, 1, 4, 4), mv_mat)      # (V,N,4,4)
        images = soft_rasterize_depth(
            mvp_mat, vertices, radii * self.radius_ratio,
            image_size=self.image_size, sigma=self.sigma, gamma=self.gamma,
            dist_ratio=self.dist_ratio, znear=self.znear, zfar=self.zfar,
            tan_half_fov=self.tan_half_fov)
        return images, mv_mat


# ----------------------------------------------------------------------------

if __name__ == "__main__":
    key = jax.random.PRNGKey(0)
    k_param, k_c, k_n, k_v, k_r = jax.random.split(key, 5)

    B = 2          # number of objects / look-at centers (V in look_at)
    P = 64         # points per object
    NUM_VIEWS = 4  # cameras per object (N in look_at)
    S = 32         # image_size

    renderer = MultiViewRenderer(num_views=NUM_VIEWS, num_rotations=0,
                                 image_size=S, key=k_param)

    at_centers = jax.random.uniform(k_c, (B, 3), jnp.float32, -0.1, 0.1)
    at_normals = _normalize(jax.random.normal(k_n, (B, 3), jnp.float32), 1)
    vertices = at_centers[:, None, :] + jax.random.uniform(
        k_v, (B, P, 3), jnp.float32, -0.3, 0.3)
    radii = jax.random.uniform(k_r, (B, P), jnp.float32, 0.02, 0.08)

    images, mv_mat = renderer(vertices, radii, None, at_centers, at_normals)
    images, mv_mat = jax.block_until_ready((images, mv_mat))

    assert images.shape == (B, NUM_VIEWS, 1, S, S), images.shape
    assert mv_mat.shape == (B, NUM_VIEWS, 4, 4), mv_mat.shape
    assert bool(jnp.isfinite(images).all()) and bool(jnp.isfinite(mv_mat).all())
    print("KERNEL_OK")
</pallas_src>

<mosaic_0001>
module attributes {stable_mosaic.version = 11 : i64} {
  func.func @kernel(%arg0: i32, %arg1: i32, %arg2: i32, %arg3: memref<8x64x8xf32, #tpu.memory_space<vmem>>, %arg4: memref<2x512xf32, #tpu.memory_space<vmem>>, %arg5: memref<8x512xf32, #tpu.memory_space<vmem>>, %arg6: memref<8x8x512xf32, #tpu.memory_space<vmem>>, %arg7: memref<8x8x512xf32, #tpu.memory_space<vmem>>) attributes {dimension_semantics = [#tpu.dimension_semantics<parallel>, #tpu.dimension_semantics<parallel>, #tpu.dimension_semantics<arbitrary>], iteration_bounds = array<i64: 1, 2, 1>, scalar_prefetch = 0 : i64, scratch_operands = 2 : i64, tpu.core_type = #tpu.core_type<tc>, window_params = [{transform_indices = @transform_0, window_bounds = array<i64: 8, 64, 8>}, {transform_indices = @transform_1, window_bounds = array<i64: 2, 512>}, {transform_indices = @transform_2, window_bounds = array<i64: 8, 512>}]} {
    %c0_i32 = arith.constant 0 : i32
    %0 = arith.cmpi eq, %arg2, %c0_i32 : i32
    %1 = arith.extui %0 : i1 to i32
    %c0_i32_0 = arith.constant 0 : i32
    %2 = arith.cmpi ne, %1, %c0_i32_0 : i32
    scf.if %2 {
      %cst_423 = arith.constant 0.000000e+00 : f32
      %1976 = vector.broadcast %cst_423 : f32 to vector<8x8x512xf32>
      %c0_424 = arith.constant 0 : index
      %c0_425 = arith.constant 0 : index
      %c0_426 = arith.constant 0 : index
      %1977 = vector.load %arg6[%c0_424, %c0_425, %c0_426] : memref<8x8x512xf32, #tpu.memory_space<vmem>>, vector<8x8x512xf32>
      tpu.vector_store %arg6[%c0_424, %c0_425, %c0_426], %1976 {strides = array<i32>} : memref<8x8x512xf32, #tpu.memory_space<vmem>>, vector<8x8x512xf32>,
      %cst_427 = arith.constant 0.000000e+00 : f32
      %1978 = vector.broadcast %cst_427 : f32 to vector<8x8x512xf32>
      %c0_428 = arith.constant 0 : index
      %c0_429 = arith.constant 0 : index
      %c0_430 = arith.constant 0 : index
      %1979 = vector.load %arg7[%c0_428, %c0_429, %c0_430] : memref<8x8x512xf32, #tpu.memory_space<vmem>>, vector<8x8x512xf32>
      tpu.vector_store %arg7[%c0_428, %c0_429, %c0_430], %1978 {strides = array<i32>} : memref<8x8x512xf32, #tpu.memory_space<vmem>>, vector<8x8x512xf32>,
    } else {
    }
    %c0 = arith.constant 0 : index
    %c0_1 = arith.constant 0 : index
    %3 = vector.load %arg4[%c0, %c0_1] : memref<2x512xf32, #tpu.memory_space<vmem>>, vector<1x512xf32>
    %c1 = arith.constant 1 : index
    %c0_2 = arith.constant 0 : index
    %4 = vector.load %arg4[%c1, %c0_2] : memref<2x512xf32, #tpu.memory_space<vmem>>, vector<1x512xf32>
    %cst = arith.constant 0.000000e+00 : f32
    %5 = vector.broadcast %cst : f32 to vector<8x512xf32>
    %cst_3 = arith.constant 0.000000e+00 : f32
    %6 = vector.broadcast %cst_3 : f32 to vector<8x512xf32>
    %c0_4 = arith.constant 0 : index
    %c0_5 = arith.constant 0 : index
    %c0_6 = arith.constant 0 : index
    %7 = vector.load %arg3[%c0_4, %c0_5, %c0_6] : memref<8x64x8xf32, #tpu.memory_space<vmem>>, vector<1x8x8xf32>
    %8 = vector.shape_cast %7 : vector<1x8x8xf32> to vector<8x8xf32>
    %9 = vector.extract_strided_slice %8 {offsets = [0, 0], sizes = [8, 1], strides = [1, 1]} : vector<8x8xf32> to vector<8x1xf32>
    %10 = vector.extract_strided_slice %8 {offsets = [0, 1], sizes = [8, 1], strides = [1, 1]} : vector<8x8xf32> to vector<8x1xf32>
    %11 = vector.extract_strided_slice %8 {offsets = [0, 2], sizes = [8, 1], strides = [1, 1]} : vector<8x8xf32> to vector<8x1xf32>
    %12 = vector.extract_strided_slice %8 {offsets = [0, 3], sizes = [8, 1], strides = [1, 1]} : vector<8x8xf32> to vector<8x1xf32>
    %13 = vector.extract_strided_slice %8 {offsets = [0, 4], sizes = [8, 1], strides = [1, 1]} : vector<8x8xf32> to vector<8x1xf32>
    %14 = vector.broadcast %3 : vector<1x512xf32> to vector<8x512xf32>
    %15 = vector.broadcast %9 : vector<8x1xf32> to vector<8x512xf32>
    %16 = arith.subf %14, %15 : vector<8x512xf32>
    %17 = vector.broadcast %4 : vector<1x512xf32> to vector<8x512xf32>
    %18 = vector.broadcast %10 : vector<8x1xf32> to vector<8x512xf32>
    %19 = arith.subf %17, %18 : vector<8x512xf32>
    %20 = arith.mulf %16, %16 : vector<8x512xf32>
    %21 = arith.mulf %19, %19 : vector<8x512xf32>
    %22 = arith.addf %20, %21 : vector<8x512xf32>
    %cst_7 = arith.constant 0.000000e+00 : f32
    %23 = vector.broadcast %cst_7 : f32 to vector<8x512xf32>
    %24 = arith.subf %23, %22 : vector<8x512xf32>
    %25 = math.exp %24 : vector<8x512xf32>
    %26 = vector.broadcast %11 : vector<8x1xf32> to vector<8x512xf32>
    %27 = arith.cmpf ole, %22, %26 : vector<8x512xf32>
    %cst_8 = arith.constant 0.000000e+00 : f32
    %28 = vector.broadcast %cst_8 : f32 to vector<8x512xf32>
    %29 = arith.select %27, %25, %28 : vector<8x512xi1>, vector<8x512xf32>
    %30 = vector.broadcast %13 : vector<8x1xf32> to vector<8x512xf32>
    %31 = arith.mulf %29, %30 : vector<8x512xf32>
    %32 = arith.addf %5, %31 : vector<8x512xf32>
    %33 = vector.broadcast %12 : vector<8x1xf32> to vector<8x512xf32>
    %34 = arith.mulf %29, %33 : vector<8x512xf32>
    %35 = arith.addf %6, %34 : vector<8x512xf32>
    %c0_9 = arith.constant 0 : index
    %c8 = arith.constant 8 : index
    %c0_10 = arith.constant 0 : index
    %36 = vector.load %arg3[%c0_9, %c8, %c0_10] : memref<8x64x8xf32, #tpu.memory_space<vmem>>, vector<1x8x8xf32>
    %37 = vector.shape_cast %36 : vector<1x8x8xf32> to vector<8x8xf32>
    %38 = vector.extract_strided_slice %37 {offsets = [0, 0], sizes = [8, 1], strides = [1, 1]} : vector<8x8xf32> to vector<8x1xf32>
    %39 = vector.extract_strided_slice %37 {offsets = [0, 1], sizes = [8, 1], strides = [1, 1]} : vector<8x8xf32> to vector<8x1xf32>
    %40 = vector.extract_strided_slice %37 {offsets = [0, 2], sizes = [8, 1], strides = [1, 1]} : vector<8x8xf32> to vector<8x1xf32>
    %41 = vector.extract_strided_slice %37 {offsets = [0, 3], sizes = [8, 1], strides = [1, 1]} : vector<8x8xf32> to vector<8x1xf32>
    %42 = vector.extract_strided_slice %37 {offsets = [0, 4], sizes = [8, 1], strides = [1, 1]} : vector<8x8xf32> to vector<8x1xf32>
    %43 = vector.broadcast %3 : vector<1x512xf32> to vector<8x512xf32>
    %44 = vector.broadcast %38 : vector<8x1xf32> to vector<8x512xf32>
    %45 = arith.subf %43, %44 : vector<8x512xf32>
    %46 = vector.broadcast %4 : vector<1x512xf32> to vector<8x512xf32>
    %47 = vector.broadcast %39 : vector<8x1xf32> to vector<8x512xf32>
    %48 = arith.subf %46, %47 : vector<8x512xf32>
    %49 = arith.mulf %45, %45 : vector<8x512xf32>
    %50 = arith.mulf %48, %48 : vector<8x512xf32>
    %51 = arith.addf %49, %50 : vector<8x512xf32>
    %cst_11 = arith.constant 0.000000e+00 : f32
    %52 = vector.broadcast %cst_11 : f32 to vector<8x512xf32>
    %53 = arith.subf %52, %51 : vector<8x512xf32>
    %54 = math.exp %53 : vector<8x512xf32>
    %55 = vector.broadcast %40 : vector<8x1xf32> to vector<8x512xf32>
    %56 = arith.cmpf ole, %51, %55 : vector<8x512xf32>
    %cst_12 = arith.constant 0.000000e+00 : f32
    %57 = vector.broadcast %cst_12 : f32 to vector<8x512xf32>
    %58 = arith.select %56, %54, %57 : vector<8x512xi1>, vector<8x512xf32>
    %59 = vector.broadcast %42 : vector<8x1xf32> to vector<8x512xf32>
    %60 = arith.mulf %58, %59 : vector<8x512xf32>
    %61 = arith.addf %32, %60 : vector<8x512xf32>
    %62 = vector.broadcast %41 : vector<8x1xf32> to vector<8x512xf32>
    %63 = arith.mulf %58, %62 : vector<8x512xf32>
    %64 = arith.addf %35, %63 : vector<8x512xf32>
    %c0_13 = arith.constant 0 : index
    %c16 = arith.constant 16 : index
    %c0_14 = arith.constant 0 : index
    %65 = vector.load %arg3[%c0_13, %c16, %c0_14] : memref<8x64x8xf32, #tpu.memory_space<vmem>>, vector<1x8x8xf32>
    %66 = vector.shape_cast %65 : vector<1x8x8xf32> to vector<8x8xf32>
    %67 = vector.extract_strided_slice %66 {offsets = [0, 0], sizes = [8, 1], strides = [1, 1]} : vector<8x8xf32> to vector<8x1xf32>
    %68 = vector.extract_strided_slice %66 {offsets = [0, 1], sizes = [8, 1], strides = [1, 1]} : vector<8x8xf32> to vector<8x1xf32>
    %69 = vector.extract_strided_slice %66 {offsets = [0, 2], sizes = [8, 1], strides = [1, 1]} : vector<8x8xf32> to vector<8x1xf32>
    %70 = vector.extract_strided_slice %66 {offsets = [0, 3], sizes = [8, 1], strides = [1, 1]} : vector<8x8xf32> to vector<8x1xf32>
    %71 = vector.extract_strided_slice %66 {offsets = [0, 4], sizes = [8, 1], strides = [1, 1]} : vector<8x8xf32> to vector<8x1xf32>
    %72 = vector.broadcast %3 : vector<1x512xf32> to vector<8x512xf32>
    %73 = vector.broadcast %67 : vector<8x1xf32> to vector<8x512xf32>
    %74 = arith.subf %72, %73 : vector<8x512xf32>
    %75 = vector.broadcast %4 : vector<1x512xf32> to vector<8x512xf32>
    %76 = vector.broadcast %68 : vector<8x1xf32> to vector<8x512xf32>
    %77 = arith.subf %75, %76 : vector<8x512xf32>
    %78 = arith.mulf %74, %74 : vector<8x512xf32>
    %79 = arith.mulf %77, %77 : vector<8x512xf32>
    %80 = arith.addf %78, %79 : vector<8x512xf32>
    %cst_15 = arith.constant 0.000000e+00 : f32
    %81 = vector.broadcast %cst_15 : f32 to vector<8x512xf32>
    %82 = arith.subf %81, %80 : vector<8x512xf32>
    %83 = math.exp %82 : vector<8x512xf32>
    %84 = vector.broadcast %69 : vector<8x1xf32> to vector<8x512xf32>
    %85 = arith.cmpf ole, %80, %84 : vector<8x512xf32>
    %cst_16 = arith.constant 0.000000e+00 : f32
    %86 = vector.broadcast %cst_16 : f32 to vector<8x512xf32>
    %87 = arith.select %85, %83, %86 : vector<8x512xi1>, vector<8x512xf32>
    %88 = vector.broadcast %71 : vector<8x1xf32> to vector<8x512xf32>
    %89 = arith.mulf %87, %88 : vector<8x512xf32>
    %90 = arith.addf %61, %89 : vector<8x512xf32>
    %91 = vector.broadcast %70 : vector<8x1xf32> to vector<8x512xf32>
    %92 = arith.mulf %87, %91 : vector<8x512xf32>
    %93 = arith.addf %64, %92 : vector<8x512xf32>
    %c0_17 = arith.constant 0 : index
    %c24 = arith.constant 24 : index
    %c0_18 = arith.constant 0 : index
    %94 = vector.load %arg3[%c0_17, %c24, %c0_18] : memref<8x64x8xf32, #tpu.memory_space<vmem>>, vector<1x8x8xf32>
    %95 = vector.shape_cast %94 : vector<1x8x8xf32> to vector<8x8xf32>
    %96 = vector.extract_strided_slice %95 {offsets = [0, 0], sizes = [8, 1], strides = [1, 1]} : vector<8x8xf32> to vector<8x1xf32>
    %97 = vector.extract_strided_slice %95 {offsets = [0, 1], sizes = [8, 1], strides = [1, 1]} : vector<8x8xf32> to vector<8x1xf32>
    %98 = vector.extract_strided_slice %95 {offsets = [0, 2], sizes = [8, 1], strides = [1, 1]} : vector<8x8xf32> to vector<8x1xf32>
    %99 = vector.extract_strided_slice %95 {offsets = [0, 3], sizes = [8, 1], strides = [1, 1]} : vector<8x8xf32> to vector<8x1xf32>
    %100 = vector.extract_strided_slice %95 {offsets = [0, 4], sizes = [8, 1], strides = [1, 1]} : vector<8x8xf32> to vector<8x1xf32>
    %101 = vector.broadcast %3 : vector<1x512xf32> to vector<8x512xf32>
    %102 = vector.broadcast %96 : vector<8x1xf32> to vector<8x512xf32>
    %103 = arith.subf %101, %102 : vector<8x512xf32>
    %104 = vector.broadcast %4 : vector<1x512xf32> to vector<8x512xf32>
    %105 = vector.broadcast %97 : vector<8x1xf32> to vector<8x512xf32>
    %106 = arith.subf %104, %105 : vector<8x512xf32>
    %107 = arith.mulf %103, %103 : vector<8x512xf32>
    %108 = arith.mulf %106, %106 : vector<8x512xf32>
    %109 = arith.addf %107, %108 : vector<8x512xf32>
    %cst_19 = arith.constant 0.000000e+00 : f32
    %110 = vector.broadcast %cst_19 : f32 to vector<8x512xf32>
    %111 = arith.subf %110, %109 : vector<8x512xf32>
    %112 = math.exp %111 : vector<8x512xf32>
    %113 = vector.broadcast %98 : vector<8x1xf32> to vector<8x512xf32>
    %114 = arith.cmpf ole, %109, %113 : vector<8x512xf32>
    %cst_20 = arith.constant 0.000000e+00 : f32
    %115 = vector.broadcast %cst_20 : f32 to vector<8x512xf32>
    %116 = arith.select %114, %112, %115 : vector<8x512xi1>, vector<8x512xf32>
    %117 = vector.broadcast %100 : vector<8x1xf32> to vector<8x512xf32>
    %118 = arith.mulf %116, %117 : vector<8x512xf32>
    %119 = arith.addf %90, %118 : vector<8x512xf32>
    %120 = vector.broadcast %99 : vector<8x1xf32> to vector<8x512xf32>
    %121 = arith.mulf %116, %120 : vector<8x512xf32>
    %122 = arith.addf %93, %121 : vector<8x512xf32>
    %c0_21 = arith.constant 0 : index
    %c32 = arith.constant 32 : index
    %c0_22 = arith.constant 0 : index
    %123 = vector.load %arg3[%c0_21, %c32, %c0_22] : memref<8x64x8xf32, #tpu.memory_space<vmem>>, vector<1x8x8xf32>
    %124 = vector.shape_cast %123 : vector<1x8x8xf32> to vector<8x8xf32>
    %125 = vector.extract_strided_slice %124 {offsets = [0, 0], sizes = [8, 1], strides = [1, 1]} : vector<8x8xf32> to vector<8x1xf32>
    %126 = vector.extract_strided_slice %124 {offsets = [0, 1], sizes = [8, 1], strides = [1, 1]} : vector<8x8xf32> to vector<8x1xf32>
    %127 = vector.extract_strided_slice %124 {offsets = [0, 2], sizes = [8, 1], strides = [1, 1]} : vector<8x8xf32> to vector<8x1xf32>
    %128 = vector.extract_strided_slice %124 {offsets = [0, 3], sizes = [8, 1], strides = [1, 1]} : vector<8x8xf32> to vector<8x1xf32>
    %129 = vector.extract_strided_slice %124 {offsets = [0, 4], sizes = [8, 1], strides = [1, 1]} : vector<8x8xf32> to vector<8x1xf32>
    %130 = vector.broadcast %3 : vector<1x512xf32> to vector<8x512xf32>
    %131 = vector.broadcast %125 : vector<8x1xf32> to vector<8x512xf32>
    %132 = arith.subf %130, %131 : vector<8x512xf32>
    %133 = vector.broadcast %4 : vector<1x512xf32> to vector<8x512xf32>
    %134 = vector.broadcast %126 : vector<8x1xf32> to vector<8x512xf32>
    %135 = arith.subf %133, %134 : vector<8x512xf32>
    %136 = arith.mulf %132, %132 : vector<8x512xf32>
    %137 = arith.mulf %135, %135 : vector<8x512xf32>
    %138 = arith.addf %136, %137 : vector<8x512xf32>
    %cst_23 = arith.constant 0.000000e+00 : f32
    %139 = vector.broadcast %cst_23 : f32 to vector<8x512xf32>
    %140 = arith.subf %139, %138 : vector<8x512xf32>
    %141 = math.exp %140 : vector<8x512xf32>
    %142 = vector.broadcast %127 : vector<8x1xf32> to vector<8x512xf32>
    %143 = arith.cmpf ole, %138, %142 : vector<8x512xf32>
    %cst_24 = arith.constant 0.000000e+00 : f32
    %144 = vector.broadcast %cst_24 : f32 to vector<8x512xf32>
    %145 = arith.select %143, %141, %144 : vector<8x512xi1>, vector<8x512xf32>
    %146 = vector.broadcast %129 : vector<8x1xf32> to vector<8x512xf32>
    %147 = arith.mulf %145, %146 : vector<8x512xf32>
    %148 = arith.addf %119, %147 : vector<8x512xf32>
    %149 = vector.broadcast %128 : vector<8x1xf32> to vector<8x512xf32>
    %150 = arith.mulf %145, %149 : vector<8x512xf32>
    %151 = arith.addf %122, %150 : vector<8x512xf32>
    %c0_25 = arith.constant 0 : index
    %c40 = arith.constant 40 : index
    %c0_26 = arith.constant 0 : index
    %152 = vector.load %arg3[%c0_25, %c40, %c0_26] : memref<8x64x8xf32, #tpu.memory_space<vmem>>, vector<1x8x8xf32>
    %153 = vector.shape_cast %152 : vector<1x8x8xf32> to vector<8x8xf32>
    %154 = vector.extract_strided_slice %153 {offsets = [0, 0], sizes = [8, 1], strides = [1, 1]} : vector<8x8xf32> to vector<8x1xf32>
    %155 = vector.extract_strided_slice %153 {offsets = [0, 1], sizes = [8, 1], strides = [1, 1]} : vector<8x8xf32> to vector<8x1xf32>
    %156 = vector.extract_strided_slice %153 {offsets = [0, 2], sizes = [8, 1], strides = [1, 1]} : vector<8x8xf32> to vector<8x1xf32>
    %157 = vector.extract_strided_slice %153 {offsets = [0, 3], sizes = [8, 1], strides = [1, 1]} : vector<8x8xf32> to vector<8x1xf32>
    %158 = vector.extract_strided_slice %153 {offsets = [0, 4], sizes = [8, 1], strides = [1, 1]} : vector<8x8xf32> to vector<8x1xf32>
    %159 = vector.broadcast %3 : vector<1x512xf32> to vector<8x512xf32>
    %160 = vector.broadcast %154 : vector<8x1xf32> to vector<8x512xf32>
    %161 = arith.subf %159, %160 : vector<8x512xf32>
    %162 = vector.broadcast %4 : vector<1x512xf32> to vector<8x512xf32>
    %163 = vector.broadcast %155 : vector<8x1xf32> to vector<8x512xf32>
    %164 = arith.subf %162, %163 : vector<8x512xf32>
    %165 = arith.mulf %161, %161 : vector<8x512xf32>
    %166 = arith.mulf %164, %164 : vector<8x512xf32>
    %167 = arith.addf %165, %166 : vector<8x512xf32>
    %cst_27 = arith.constant 0.000000e+00 : f32
    %168 = vector.broadcast %cst_27 : f32 to vector<8x512xf32>
    %169 = arith.subf %168, %167 : vector<8x512xf32>
    %170 = math.exp %169 : vector<8x512xf32>
    %171 = vector.broadcast %156 : vector<8x1xf32> to vector<8x512xf32>
    %172 = arith.cmpf ole, %167, %171 : vector<8x512xf32>
    %cst_28 = arith.constant 0.000000e+00 : f32
    %173 = vector.broadcast %cst_28 : f32 to vector<8x512xf32>
    %174 = arith.select %172, %170, %173 : vector<8x512xi1>, vector<8x512xf32>
    %175 = vector.broadcast %158 : vector<8x1xf32> to vector<8x512xf32>
    %176 = arith.mulf %174, %175 : vector<8x512xf32>
    %177 = arith.addf %148, %176 : vector<8x512xf32>
    %178 = vector.broadcast %157 : vector<8x1xf32> to vector<8x512xf32>
    %179 = arith.mulf %174, %178 : vector<8x512xf32>
    %180 = arith.addf %151, %179 : vector<8x512xf32>
    %c0_29 = arith.constant 0 : index
    %c48 = arith.constant 48 : index
    %c0_30 = arith.constant 0 : index
    %181 = vector.load %arg3[%c0_29, %c48, %c0_30] : memref<8x64x8xf32, #tpu.memory_space<vmem>>, vector<1x8x8xf32>
    %182 = vector.shape_cast %181 : vector<1x8x8xf32> to vector<8x8xf32>
    %183 = vector.extract_strided_slice %182 {offsets = [0, 0], sizes = [8, 1], strides = [1, 1]} : vector<8x8xf32> to vector<8x1xf32>
    %184 = vector.extract_strided_slice %182 {offsets = [0, 1], sizes = [8, 1], strides = [1, 1]} : vector<8x8xf32> to vector<8x1xf32>
    %185 = vector.extract_strided_slice %182 {offsets = [0, 2], sizes = [8, 1], strides = [1, 1]} : vector<8x8xf32> to vector<8x1xf32>
    %186 = vector.extract_strided_slice %182 {offsets = [0, 3], sizes = [8, 1], strides = [1, 1]} : vector<8x8xf32> to vector<8x1xf32>
    %187 = vector.extract_strided_slice %182 {offsets = [0, 4], sizes = [8, 1], strides = [1, 1]} : vector<8x8xf32> to vector<8x1xf32>
    %188 = vector.broadcast %3 : vector<1x512xf32> to vector<8x512xf32>
    %189 = vector.broadcast %183 : vector<8x1xf32> to vector<8x512xf32>
    %190 = arith.subf %188, %189 : vector<8x512xf32>
    %191 = vector.broadcast %4 : vector<1x512xf32> to vector<8x512xf32>
    %192 = vector.broadcast %184 : vector<8x1xf32> to vector<8x512xf32>
    %193 = arith.subf %191, %192 : vector<8x512xf32>
    %194 = arith.mulf %190, %190 : vector<8x512xf32>
    %195 = arith.mulf %193, %193 : vector<8x512xf32>
    %196 = arith.addf %194, %195 : vector<8x512xf32>
    %cst_31 = arith.constant 0.000000e+00 : f32
    %197 = vector.broadcast %cst_31 : f32 to vector<8x512xf32>
    %198 = arith.subf %197, %196 : vector<8x512xf32>
    %199 = math.exp %198 : vector<8x512xf32>
    %200 = vector.broadcast %185 : vector<8x1xf32> to vector<8x512xf32>
    %201 = arith.cmpf ole, %196, %200 : vector<8x512xf32>
    %cst_32 = arith.constant 0.000000e+00 : f32
    %202 = vector.broadcast %cst_32 : f32 to vector<8x512xf32>
    %203 = arith.select %201, %199, %202 : vector<8x512xi1>, vector<8x512xf32>
    %204 = vector.broadcast %187 : vector<8x1xf32> to vector<8x512xf32>
    %205 = arith.mulf %203, %204 : vector<8x512xf32>
    %206 = arith.addf %177, %205 : vector<8x512xf32>
    %207 = vector.broadcast %186 : vector<8x1xf32> to vector<8x512xf32>
    %208 = arith.mulf %203, %207 : vector<8x512xf32>
    %209 = arith.addf %180, %208 : vector<8x512xf32>
    %c0_33 = arith.constant 0 : index
    %c56 = arith.constant 56 : index
    %c0_34 = arith.constant 0 : index
    %210 = vector.load %arg3[%c0_33, %c56, %c0_34] : memref<8x64x8xf32, #tpu.memory_space<vmem>>, vector<1x8x8xf32>
    %211 = vector.shape_cast %210 : vector<1x8x8xf32> to vector<8x8xf32>
    %212 = vector.extract_strided_slice %211 {offsets = [0, 0], sizes = [8, 1], strides = [1, 1]} : vector<8x8xf32> to vector<8x1xf32>
    %213 = vector.extract_strided_slice %211 {offsets = [0, 1], sizes = [8, 1], strides = [1, 1]} : vector<8x8xf32> to vector<8x1xf32>
    %214 = vector.extract_strided_slice %211 {offsets = [0, 2], sizes = [8, 1], strides = [1, 1]} : vector<8x8xf32> to vector<8x1xf32>
    %215 = vector.extract_strided_slice %211 {offsets = [0, 3], sizes = [8, 1], strides = [1, 1]} : vector<8x8xf32> to vector<8x1xf32>
    %216 = vector.extract_strided_slice %211 {offsets = [0, 4], sizes = [8, 1], strides = [1, 1]} : vector<8x8xf32> to vector<8x1xf32>
    %217 = vector.broadcast %3 : vector<1x512xf32> to vector<8x512xf32>
    %218 = vector.broadcast %212 : vector<8x1xf32> to vector<8x512xf32>
    %219 = arith.subf %217, %218 : vector<8x512xf32>
    %220 = vector.broadcast %4 : vector<1x512xf32> to vector<8x512xf32>
    %221 = vector.broadcast %213 : vector<8x1xf32> to vector<8x512xf32>
    %222 = arith.subf %220, %221 : vector<8x512xf32>
    %223 = arith.mulf %219, %219 : vector<8x512xf32>
    %224 = arith.mulf %222, %222 : vector<8x512xf32>
    %225 = arith.addf %223, %224 : vector<8x512xf32>
    %cst_35 = arith.constant 0.000000e+00 : f32
    %226 = vector.broadcast %cst_35 : f32 to vector<8x512xf32>
    %227 = arith.subf %226, %225 : vector<8x512xf32>
    %228 = math.exp %227 : vector<8x512xf32>
    %229 = vector.broadcast %214 : vector<8x1xf32> to vector<8x512xf32>
    %230 = arith.cmpf ole, %225, %229 : vector<8x512xf32>
    %cst_36 = arith.constant 0.000000e+00 : f32
    %231 = vector.broadcast %cst_36 : f32 to vector<8x512xf32>
    %232 = arith.select %230, %228, %231 : vector<8x512xi1>, vector<8x512xf32>
    %233 = vector.broadcast %216 : vector<8x1xf32> to vector<8x512xf32>
    %234 = arith.mulf %232, %233 : vector<8x512xf32>
    %235 = arith.addf %206, %234 : vector<8x512xf32>
    %236 = vector.broadcast %215 : vector<8x1xf32> to vector<8x512xf32>
    %237 = arith.mulf %232, %236 : vector<8x512xf32>
    %238 = arith.addf %209, %237 : vector<8x512xf32>
    %c0_37 = arith.constant 0 : index
    %c0_38 = arith.constant 0 : index
    %c0_39 = arith.constant 0 : index
    %239 = vector.load %arg6[%c0_37, %c0_38, %c0_39] : memref<8x8x512xf32, #tpu.memory_space<vmem>>, vector<1x8x512xf32>
    %240 = vector.shape_cast %239 : vector<1x8x512xf32> to vector<8x512xf32>
    %241 = arith.addf %240, %235 : vector<8x512xf32>
    %c0_40 = arith.constant 0 : index
    %c0_41 = arith.constant 0 : index
    %c0_42 = arith.constant 0 : index
    %242 = vector.load %arg6[%c0_40, %c0_41, %c0_42] : memref<8x8x512xf32, #tpu.memory_space<vmem>>, vector<1x8x512xf32>
    %243 = vector.shape_cast %242 : vector<1x8x512xf32> to vector<8x512xf32>
    %244 = vector.shape_cast %241 : vector<8x512xf32> to vector<1x8x512xf32>
    tpu.vector_store %arg6[%c0_40, %c0_41, %c0_42], %244 {strides = array<i32>} : memref<8x8x512xf32, #tpu.memory_space<vmem>>, vector<1x8x512xf32>,
    %c0_43 = arith.constant 0 : index
    %c0_44 = arith.constant 0 : index
    %c0_45 = arith.constant 0 : index
    %245 = vector.load %arg7[%c0_43, %c0_44, %c0_45] : memref<8x8x512xf32, #tpu.memory_space<vmem>>, vector<1x8x512xf32>
    %246 = vector.shape_cast %245 : vector<1x8x512xf32> to vector<8x512xf32>
    %247 = arith.addf %246, %238 : vector<8x512xf32>
    %c0_46 = arith.constant 0 : index
    %c0_47 = arith.constant 0 : index
    %c0_48 = arith.constant 0 : index
    %248 = vector.load %arg7[%c0_46, %c0_47, %c0_48] : memref<8x8x512xf32, #tpu.memory_space<vmem>>, vector<1x8x512xf32>
    %249 = vector.shape_cast %248 : vector<1x8x512xf32> to vector<8x512xf32>
    %250 = vector.shape_cast %247 : vector<8x512xf32> to vector<1x8x512xf32>
    tpu.vector_store %arg7[%c0_46, %c0_47, %c0_48], %250 {strides = array<i32>} : memref<8x8x512xf32, #tpu.memory_space<vmem>>, vector<1x8x512xf32>,
    %cst_49 = arith.constant 0.000000e+00 : f32
    %251 = vector.broadcast %cst_49 : f32 to vector<8x512xf32>
    %cst_50 = arith.constant 0.000000e+00 : f32
    %252 = vector.broadcast %cst_50 : f32 to vector<8x512xf32>
    %c1_51 = arith.constant 1 : index
    %c0_52 = arith.constant 0 : index
    %c0_53 = arith.constant 0 : index
    %253 = vector.load %arg3[%c1_51, %c0_52, %c0_53] : memref<8x64x8xf32, #tpu.memory_space<vmem>>, vector<1x8x8xf32>
    %254 = vector.shape_cast %253 : vector<1x8x8xf32> to vector<8x8xf32>
    %255 = vector.extract_strided_slice %254 {offsets = [0, 0], sizes = [8, 1], strides = [1, 1]} : vector<8x8xf32> to vector<8x1xf32>
    %256 = vector.extract_strided_slice %254 {offsets = [0, 1], sizes = [8, 1], strides = [1, 1]} : vector<8x8xf32> to vector<8x1xf32>
    %257 = vector.extract_strided_slice %254 {offsets = [0, 2], sizes = [8, 1], strides = [1, 1]} : vector<8x8xf32> to vector<8x1xf32>
    %258 = vector.extract_strided_slice %254 {offsets = [0, 3], sizes = [8, 1], strides = [1, 1]} : vector<8x8xf32> to vector<8x1xf32>
    %259 = vector.extract_strided_slice %254 {offsets = [0, 4], sizes = [8, 1], strides = [1, 1]} : vector<8x8xf32> to vector<8x1xf32>
    %260 = vector.broadcast %3 : vector<1x512xf32> to vector<8x512xf32>
    %261 = vector.broadcast %255 : vector<8x1xf32> to vector<8x512xf32>
    %262 = arith.subf %260, %261 : vector<8x512xf32>
    %263 = vector.broadcast %4 : vector<1x512xf32> to vector<8x512xf32>
    %264 = vector.broadcast %256 : vector<8x1xf32> to vector<8x512xf32>
    %265 = arith.subf %263, %264 : vector<8x512xf32>
    %266 = arith.mulf %262, %262 : vector<8x512xf32>
    %267 = arith.mulf %265, %265 : vector<8x512xf32>
    %268 = arith.addf %266, %267 : vector<8x512xf32>
    %cst_54 = arith.constant 0.000000e+00 : f32
    %269 = vector.broadcast %cst_54 : f32 to vector<8x512xf32>
    %270 = arith.subf %269, %268 : vector<8x512xf32>
    %271 = math.exp %270 : vector<8x512xf32>
    %272 = vector.broadcast %257 : vector<8x1xf32> to vector<8x512xf32>
    %273 = arith.cmpf ole, %268, %272 : vector<8x512xf32>
    %cst_55 = arith.constant 0.000000e+00 : f32
    %274 = vector.broadcast %cst_55 : f32 to vector<8x512xf32>
    %275 = arith.select %273, %271, %274 : vector<8x512xi1>, vector<8x512xf32>
    %276 = vector.broadcast %259 : vector<8x1xf32> to vector<8x512xf32>
    %277 = arith.mulf %275, %276 : vector<8x512xf32>
    %278 = arith.addf %251, %277 : vector<8x512xf32>
    %279 = vector.broadcast %258 : vector<8x1xf32> to vector<8x512xf32>
    %280 = arith.mulf %275, %279 : vector<8x512xf32>
    %281 = arith.addf %252, %280 : vector<8x512xf32>
    %c1_56 = arith.constant 1 : index
    %c8_57 = arith.constant 8 : index
    %c0_58 = arith.constant 0 : index
    %282 = vector.load %arg3[%c1_56, %c8_57, %c0_58] : memref<8x64x8xf32, #tpu.memory_space<vmem>>, vector<1x8x8xf32>
    %283 = vector.shape_cast %282 : vector<1x8x8xf32> to vector<8x8xf32>
    %284 = vector.extract_strided_slice %283 {offsets = [0, 0], sizes = [8, 1], strides = [1, 1]} : vector<8x8xf32> to vector<8x1xf32>
    %285 = vector.extract_strided_slice %283 {offsets = [0, 1], sizes = [8, 1], strides = [1, 1]} : vector<8x8xf32> to vector<8x1xf32>
    %286 = vector.extract_strided_slice %283 {offsets = [0, 2], sizes = [8, 1], strides = [1, 1]} : vector<8x8xf32> to vector<8x1xf32>
    %287 = vector.extract_strided_slice %283 {offsets = [0, 3], sizes = [8, 1], strides = [1, 1]} : vector<8x8xf32> to vector<8x1xf32>
    %288 = vector.extract_strided_slice %283 {offsets = [0, 4], sizes = [8, 1], strides = [1, 1]} : vector<8x8xf32> to vector<8x1xf32>
    %289 = vector.broadcast %3 : vector<1x512xf32> to vector<8x512xf32>
    %290 = vector.broadcast %284 : vector<8x1xf32> to vector<8x512xf32>
    %291 = arith.subf %289, %290 : vector<8x512xf32>
    %292 = vector.broadcast %4 : vector<1x512xf32> to vector<8x512xf32>
    %293 = vector.broadcast %285 : vector<8x1xf32> to vector<8x512xf32>
    %294 = arith.subf %292, %293 : vector<8x512xf32>
    %295 = arith.mulf %291, %291 : vector<8x512xf32>
    %296 = arith.mulf %294, %294 : vector<8x512xf32>
    %297 = arith.addf %295, %296 : vector<8x512xf32>
    %cst_59 = arith.constant 0.000000e+00 : f32
    %298 = vector.broadcast %cst_59 : f32 to vector<8x512xf32>
    %299 = arith.subf %298, %297 : vector<8x512xf32>
    %300 = math.exp %299 : vector<8x512xf32>
    %301 = vector.broadcast %286 : vector<8x1xf32> to vector<8x512xf32>
    %302 = arith.cmpf ole, %297, %301 : vector<8x512xf32>
    %cst_60 = arith.constant 0.000000e+00 : f32
    %303 = vector.broadcast %cst_60 : f32 to vector<8x512xf32>
    %304 = arith.select %302, %300, %303 : vector<8x512xi1>, vector<8x512xf32>
    %305 = vector.broadcast %288 : vector<8x1xf32> to vector<8x512xf32>
    %306 = arith.mulf %304, %305 : vector<8x512xf32>
    %307 = arith.addf %278, %306 : vector<8x512xf32>
    %308 = vector.broadcast %287 : vector<8x1xf32> to vector<8x512xf32>
    %309 = arith.mulf %304, %308 : vector<8x512xf32>
    %310 = arith.addf %281, %309 : vector<8x512xf32>
    %c1_61 = arith.constant 1 : index
    %c16_62 = arith.constant 16 : index
    %c0_63 = arith.constant 0 : index
    %311 = vector.load %arg3[%c1_61, %c16_62, %c0_63] : memref<8x64x8xf32, #tpu.memory_space<vmem>>, vector<1x8x8xf32>
    %312 = vector.shape_cast %311 : vector<1x8x8xf32> to vector<8x8xf32>
    %313 = vector.extract_strided_slice %312 {offsets = [0, 0], sizes = [8, 1], strides = [1, 1]} : vector<8x8xf32> to vector<8x1xf32>
    %314 = vector.extract_strided_slice %312 {offsets = [0, 1], sizes = [8, 1], strides = [1, 1]} : vector<8x8xf32> to vector<8x1xf32>
    %315 = vector.extract_strided_slice %312 {offsets = [0, 2], sizes = [8, 1], strides = [1, 1]} : vector<8x8xf32> to vector<8x1xf32>
    %316 = vector.extract_strided_slice %312 {offsets = [0, 3], sizes = [8, 1], strides = [1, 1]} : vector<8x8xf32> to vector<8x1xf32>
    %317 = vector.extract_strided_slice %312 {offsets = [0, 4], sizes = [8, 1], strides = [1, 1]} : vector<8x8xf32> to vector<8x1xf32>
    %318 = vector.broadcast %3 : vector<1x512xf32> to vector<8x512xf32>
    %319 = vector.broadcast %313 : vector<8x1xf32> to vector<8x512xf32>
    %320 = arith.subf %318, %319 : vector<8x512xf32>
    %321 = vector.broadcast %4 : vector<1x512xf32> to vector<8x512xf32>
    %322 = vector.broadcast %314 : vector<8x1xf32> to vector<8x512xf32>
    %323 = arith.subf %321, %322 : vector<8x512xf32>
    %324 = arith.mulf %320, %320 : vector<8x512xf32>
    %325 = arith.mulf %323, %323 : vector<8x512xf32>
    %326 = arith.addf %324, %325 : vector<8x512xf32>
    %cst_64 = arith.constant 0.000000e+00 : f32
    %327 = vector.broadcast %cst_64 : f32 to vector<8x512xf32>
    %328 = arith.subf %327, %326 : vector<8x512xf32>
    %329 = math.exp %328 : vector<8x512xf32>
    %330 = vector.broadcast %315 : vector<8x1xf32> to vector<8x512xf32>
    %331 = arith.cmpf ole, %326, %330 : vector<8x512xf32>
    %cst_65 = arith.constant 0.000000e+00 : f32
    %332 = vector.broadcast %cst_65 : f32 to vector<8x512xf32>
    %333 = arith.select %331, %329, %332 : vector<8x512xi1>, vector<8x512xf32>
    %334 = vector.broadcast %317 : vector<8x1xf32> to vector<8x512xf32>
    %335 = arith.mulf %333, %334 : vector<8x512xf32>
    %336 = arith.addf %307, %335 : vector<8x512xf32>
    %337 = vector.broadcast %316 : vector<8x1xf32> to vector<8x512xf32>
    %338 = arith.mulf %333, %337 : vector<8x512xf32>
    %339 = arith.addf %310, %338 : vector<8x512xf32>
    %c1_66 = arith.constant 1 : index
    %c24_67 = arith.constant 24 : index
    %c0_68 = arith.constant 0 : index
    %340 = vector.load %arg3[%c1_66, %c24_67, %c0_68] : memref<8x64x8xf32, #tpu.memory_space<vmem>>, vector<1x8x8xf32>
    %341 = vector.shape_cast %340 : vector<1x8x8xf32> to vector<8x8xf32>
    %342 = vector.extract_strided_slice %341 {offsets = [0, 0], sizes = [8, 1], strides = [1, 1]} : vector<8x8xf32> to vector<8x1xf32>
    %343 = vector.extract_strided_slice %341 {offsets = [0, 1], sizes = [8, 1], strides = [1, 1]} : vector<8x8xf32> to vector<8x1xf32>
    %344 = vector.extract_strided_slice %341 {offsets = [0, 2], sizes = [8, 1], strides = [1, 1]} : vector<8x8xf32> to vector<8x1xf32>
    %345 = vector.extract_strided_slice %341 {offsets = [0, 3], sizes = [8, 1], strides = [1, 1]} : vector<8x8xf32> to vector<8x1xf32>
    %346 = vector.extract_strided_slice %341 {offsets = [0, 4], sizes = [8, 1], strides = [1, 1]} : vector<8x8xf32> to vector<8x1xf32>
    %347 = vector.broadcast %3 : vector<1x512xf32> to vector<8x512xf32>
    %348 = vector.broadcast %342 : vector<8x1xf32> to vector<8x512xf32>
    %349 = arith.subf %347, %348 : vector<8x512xf32>
    %350 = vector.broadcast %4 : vector<1x512xf32> to vector<8x512xf32>
    %351 = vector.broadcast %343 : vector<8x1xf32> to vector<8x512xf32>
    %352 = arith.subf %350, %351 : vector<8x512xf32>
    %353 = arith.mulf %349, %349 : vector<8x512xf32>
    %354 = arith.mulf %352, %352 : vector<8x512xf32>
    %355 = arith.addf %353, %354 : vector<8x512xf32>
    %cst_69 = arith.constant 0.000000e+00 : f32
    %356 = vector.broadcast %cst_69 : f32 to vector<8x512xf32>
    %357 = arith.subf %356, %355 : vector<8x512xf32>
    %358 = math.exp %357 : vector<8x512xf32>
    %359 = vector.broadcast %344 : vector<8x1xf32> to vector<8x512xf32>
    %360 = arith.cmpf ole, %355, %359 : vector<8x512xf32>
    %cst_70 = arith.constant 0.000000e+00 : f32
    %361 = vector.broadcast %cst_70 : f32 to vector<8x512xf32>
    %362 = arith.select %360, %358, %361 : vector<8x512xi1>, vector<8x512xf32>
    %363 = vector.broadcast %346 : vector<8x1xf32> to vector<8x512xf32>
    %364 = arith.mulf %362, %363 : vector<8x512xf32>
    %365 = arith.addf %336, %364 : vector<8x512xf32>
    %366 = vector.broadcast %345 : vector<8x1xf32> to vector<8x512xf32>
    %367 = arith.mulf %362, %366 : vector<8x512xf32>
    %368 = arith.addf %339, %367 : vector<8x512xf32>
    %c1_71 = arith.constant 1 : index
    %c32_72 = arith.constant 32 : index
    %c0_73 = arith.constant 0 : index
    %369 = vector.load %arg3[%c1_71, %c32_72, %c0_73] : memref<8x64x8xf32, #tpu.memory_space<vmem>>, vector<1x8x8xf32>
    %370 = vector.shape_cast %369 : vector<1x8x8xf32> to vector<8x8xf32>
    %371 = vector.extract_strided_slice %370 {offsets = [0, 0], sizes = [8, 1], strides = [1, 1]} : vector<8x8xf32> to vector<8x1xf32>
    %372 = vector.extract_strided_slice %370 {offsets = [0, 1], sizes = [8, 1], strides = [1, 1]} : vector<8x8xf32> to vector<8x1xf32>
    %373 = vector.extract_strided_slice %370 {offsets = [0, 2], sizes = [8, 1], strides = [1, 1]} : vector<8x8xf32> to vector<8x1xf32>
    %374 = vector.extract_strided_slice %370 {offsets = [0, 3], sizes = [8, 1], strides = [1, 1]} : vector<8x8xf32> to vector<8x1xf32>
    %375 = vector.extract_strided_slice %370 {offsets = [0, 4], sizes = [8, 1], strides = [1, 1]} : vector<8x8xf32> to vector<8x1xf32>
    %376 = vector.broadcast %3 : vector<1x512xf32> to vector<8x512xf32>
    %377 = vector.broadcast %371 : vector<8x1xf32> to vector<8x512xf32>
    %378 = arith.subf %376, %377 : vector<8x512xf32>
    %379 = vector.broadcast %4 : vector<1x512xf32> to vector<8x512xf32>
    %380 = vector.broadcast %372 : vector<8x1xf32> to vector<8x512xf32>
    %381 = arith.subf %379, %380 : vector<8x512xf32>
    %382 = arith.mulf %378, %378 : vector<8x512xf32>
    %383 = arith.mulf %381, %381 : vector<8x512xf32>
    %384 = arith.addf %382, %383 : vector<8x512xf32>
    %cst_74 = arith.constant 0.000000e+00 : f32
    %385 = vector.broadcast %cst_74 : f32 to vector<8x512xf32>
    %386 = arith.subf %385, %384 : vector<8x512xf32>
    %387 = math.exp %386 : vector<8x512xf32>
    %388 = vector.broadcast %373 : vector<8x1xf32> to vector<8x512xf32>
    %389 = arith.cmpf ole, %384, %388 : vector<8x512xf32>
    %cst_75 = arith.constant 0.000000e+00 : f32
    %390 = vector.broadcast %cst_75 : f32 to vector<8x512xf32>
    %391 = arith.select %389, %387, %390 : vector<8x512xi1>, vector<8x512xf32>
    %392 = vector.broadcast %375 : vector<8x1xf32> to vector<8x512xf32>
    %393 = arith.mulf %391, %392 : vector<8x512xf32>
    %394 = arith.addf %365, %393 : vector<8x512xf32>
    %395 = vector.broadcast %374 : vector<8x1xf32> to vector<8x512xf32>
    %396 = arith.mulf %391, %395 : vector<8x512xf32>
    %397 = arith.addf %368, %396 : vector<8x512xf32>
    %c1_76 = arith.constant 1 : index
    %c40_77 = arith.constant 40 : index
    %c0_78 = arith.constant 0 : index
    %398 = vector.load %arg3[%c1_76, %c40_77, %c0_78] : memref<8x64x8xf32, #tpu.memory_space<vmem>>, vector<1x8x8xf32>
    %399 = vector.shape_cast %398 : vector<1x8x8xf32> to vector<8x8xf32>
    %400 = vector.extract_strided_slice %399 {offsets = [0, 0], sizes = [8, 1], strides = [1, 1]} : vector<8x8xf32> to vector<8x1xf32>
    %401 = vector.extract_strided_slice %399 {offsets = [0, 1], sizes = [8, 1], strides = [1, 1]} : vector<8x8xf32> to vector<8x1xf32>
    %402 = vector.extract_strided_slice %399 {offsets = [0, 2], sizes = [8, 1], strides = [1, 1]} : vector<8x8xf32> to vector<8x1xf32>
    %403 = vector.extract_strided_slice %399 {offsets = [0, 3], sizes = [8, 1], strides = [1, 1]} : vector<8x8xf32> to vector<8x1xf32>
    %404 = vector.extract_strided_slice %399 {offsets = [0, 4], sizes = [8, 1], strides = [1, 1]} : vector<8x8xf32> to vector<8x1xf32>
    %405 = vector.broadcast %3 : vector<1x512xf32> to vector<8x512xf32>
    %406 = vector.broadcast %400 : vector<8x1xf32> to vector<8x512xf32>
    %407 = arith.subf %405, %406 : vector<8x512xf32>
    %408 = vector.broadcast %4 : vector<1x512xf32> to vector<8x512xf32>
    %409 = vector.broadcast %401 : vector<8x1xf32> to vector<8x512xf32>
    %410 = arith.subf %408, %409 : vector<8x512xf32>
    %411 = arith.mulf %407, %407 : vector<8x512xf32>
    %412 = arith.mulf %410, %410 : vector<8x512xf32>
    %413 = arith.addf %411, %412 : vector<8x512xf32>
    %cst_79 = arith.constant 0.000000e+00 : f32
    %414 = vector.broadcast %cst_79 : f32 to vector<8x512xf32>
    %415 = arith.subf %414, %413 : vector<8x512xf32>
    %416 = math.exp %415 : vector<8x512xf32>
    %417 = vector.broadcast %402 : vector<8x1xf32> to vector<8x512xf32>
    %418 = arith.cmpf ole, %413, %417 : vector<8x512xf32>
    %cst_80 = arith.constant 0.000000e+00 : f32
    %419 = vector.broadcast %cst_80 : f32 to vector<8x512xf32>
    %420 = arith.select %418, %416, %419 : vector<8x512xi1>, vector<8x512xf32>
    %421 = vector.broadcast %404 : vector<8x1xf32> to vector<8x512xf32>
    %422 = arith.mulf %420, %421 : vector<8x512xf32>
    %423 = arith.addf %394, %422 : vector<8x512xf32>
    %424 = vector.broadcast %403 : vector<8x1xf32> to vector<8x512xf32>
    %425 = arith.mulf %420, %424 : vector<8x512xf32>
    %426 = arith.addf %397, %425 : vector<8x512xf32>
    %c1_81 = arith.constant 1 : index
    %c48_82 = arith.constant 48 : index
    %c0_83 = arith.constant 0 : index
    %427 = vector.load %arg3[%c1_81, %c48_82, %c0_83] : memref<8x64x8xf32, #tpu.memory_space<vmem>>, vector<1x8x8xf32>
    %428 = vector.shape_cast %427 : vector<1x8x8xf32> to vector<8x8xf32>
    %429 = vector.extract_strided_slice %428 {offsets = [0, 0], sizes = [8, 1], strides = [1, 1]} : vector<8x8xf32> to vector<8x1xf32>
    %430 = vector.extract_strided_slice %428 {offsets = [0, 1], sizes = [8, 1], strides = [1, 1]} : vector<8x8xf32> to vector<8x1xf32>
    %431 = vector.extract_strided_slice %428 {offsets = [0, 2], sizes = [8, 1], strides = [1, 1]} : vector<8x8xf32> to vector<8x1xf32>
    %432 = vector.extract_strided_slice %428 {offsets = [0, 3], sizes = [8, 1], strides = [1, 1]} : vector<8x8xf32> to vector<8x1xf32>
    %433 = vector.extract_strided_slice %428 {offsets = [0, 4], sizes = [8, 1], strides = [1, 1]} : vector<8x8xf32> to vector<8x1xf32>
    %434 = vector.broadcast %3 : vector<1x512xf32> to vector<8x512xf32>
    %435 = vector.broadcast %429 : vector<8x1xf32> to vector<8x512xf32>
    %436 = arith.subf %434, %435 : vector<8x512xf32>
    %437 = vector.broadcast %4 : vector<1x512xf32> to vector<8x512xf32>
    %438 = vector.broadcast %430 : vector<8x1xf32> to vector<8x512xf32>
    %439 = arith.subf %437, %438 : vector<8x512xf32>
    %440 = arith.mulf %436, %436 : vector<8x512xf32>
    %441 = arith.mulf %439, %439 : vector<8x512xf32>
    %442 = arith.addf %440, %441 : vector<8x512xf32>
    %cst_84 = arith.constant 0.000000e+00 : f32
    %443 = vector.broadcast %cst_84 : f32 to vector<8x512xf32>
    %444 = arith.subf %443, %442 : vector<8x512xf32>
    %445 = math.exp %444 : vector<8x512xf32>
    %446 = vector.broadcast %431 : vector<8x1xf32> to vector<8x512xf32>
    %447 = arith.cmpf ole, %442, %446 : vector<8x512xf32>
    %cst_85 = arith.constant 0.000000e+00 : f32
    %448 = vector.broadcast %cst_85 : f32 to vector<8x512xf32>
    %449 = arith.select %447, %445, %448 : vector<8x512xi1>, vector<8x512xf32>
    %450 = vector.broadcast %433 : vector<8x1xf32> to vector<8x512xf32>
    %451 = arith.mulf %449, %450 : vector<8x512xf32>
    %452 = arith.addf %423, %451 : vector<8x512xf32>
    %453 = vector.broadcast %432 : vector<8x1xf32> to vector<8x512xf32>
    %454 = arith.mulf %449, %453 : vector<8x512xf32>
    %455 = arith.addf %426, %454 : vector<8x512xf32>
    %c1_86 = arith.constant 1 : index
    %c56_87 = arith.constant 56 : index
    %c0_88 = arith.constant 0 : index
    %456 = vector.load %arg3[%c1_86, %c56_87, %c0_88] : memref<8x64x8xf32, #tpu.memory_space<vmem>>, vector<1x8x8xf32>
    %457 = vector.shape_cast %456 : vector<1x8x8xf32> to vector<8x8xf32>
    %458 = vector.extract_strided_slice %457 {offsets = [0, 0], sizes = [8, 1], strides = [1, 1]} : vector<8x8xf32> to vector<8x1xf32>
    %459 = vector.extract_strided_slice %457 {offsets = [0, 1], sizes = [8, 1], strides = [1, 1]} : vector<8x8xf32> to vector<8x1xf32>
    %460 = vector.extract_strided_slice %457 {offsets = [0, 2], sizes = [8, 1], strides = [1, 1]} : vector<8x8xf32> to vector<8x1xf32>
    %461 = vector.extract_strided_slice %457 {offsets = [0, 3], sizes = [8, 1], strides = [1, 1]} : vector<8x8xf32> to vector<8x1xf32>
    %462 = vector.extract_strided_slice %457 {offsets = [0, 4], sizes = [8, 1], strides = [1, 1]} : vector<8x8xf32> to vector<8x1xf32>
    %463 = vector.broadcast %3 : vector<1x512xf32> to vector<8x512xf32>
    %464 = vector.broadcast %458 : vector<8x1xf32> to vector<8x512xf32>
    %465 = arith.subf %463, %464 : vector<8x512xf32>
    %466 = vector.broadcast %4 : vector<1x512xf32> to vector<8x512xf32>
    %467 = vector.broadcast %459 : vector<8x1xf32> to vector<8x512xf32>
    %468 = arith.subf %466, %467 : vector<8x512xf32>
    %469 = arith.mulf %465, %465 : vector<8x512xf32>
    %470 = arith.mulf %468, %468 : vector<8x512xf32>
    %471 = arith.addf %469, %470 : vector<8x512xf32>
    %cst_89 = arith.constant 0.000000e+00 : f32
    %472 = vector.broadcast %cst_89 : f32 to vector<8x512xf32>
    %473 = arith.subf %472, %471 : vector<8x512xf32>
    %474 = math.exp %473 : vector<8x512xf32>
    %475 = vector.broadcast %460 : vector<8x1xf32> to vector<8x512xf32>
    %476 = arith.cmpf ole, %471, %475 : vector<8x512xf32>
    %cst_90 = arith.constant 0.000000e+00 : f32
    %477 = vector.broadcast %cst_90 : f32 to vector<8x512xf32>
    %478 = arith.select %476, %474, %477 : vector<8x512xi1>, vector<8x512xf32>
    %479 = vector.broadcast %462 : vector<8x1xf32> to vector<8x512xf32>
    %480 = arith.mulf %478, %479 : vector<8x512xf32>
    %481 = arith.addf %452, %480 : vector<8x512xf32>
    %482 = vector.broadcast %461 : vector<8x1xf32> to vector<8x512xf32>
    %483 = arith.mulf %478, %482 : vector<8x512xf32>
    %484 = arith.addf %455, %483 : vector<8x512xf32>
    %c1_91 = arith.constant 1 : index
    %c0_92 = arith.constant 0 : index
    %c0_93 = arith.constant 0 : index
    %485 = vector.load %arg6[%c1_91, %c0_92, %c0_93] : memref<8x8x512xf32, #tpu.memory_space<vmem>>, vector<1x8x512xf32>
    %486 = vector.shape_cast %485 : vector<1x8x512xf32> to vector<8x512xf32>
    %487 = arith.addf %486, %481 : vector<8x512xf32>
    %c1_94 = arith.constant 1 : index
    %c0_95 = arith.constant 0 : index
    %c0_96 = arith.constant 0 : index
    %488 = vector.load %arg6[%c1_94, %c0_95, %c0_96] : memref<8x8x512xf32, #tpu.memory_space<vmem>>, vector<1x8x512xf32>
    %489 = vector.shape_cast %488 : vector<1x8x512xf32> to vector<8x512xf32>
    %490 = vector.shape_cast %487 : vector<8x512xf32> to vector<1x8x512xf32>
    tpu.vector_store %arg6[%c1_94, %c0_95, %c0_96], %490 {strides = array<i32>} : memref<8x8x512xf32, #tpu.memory_space<vmem>>, vector<1x8x512xf32>,
    %c1_97 = arith.constant 1 : index
    %c0_98 = arith.constant 0 : index
    %c0_99 = arith.constant 0 : index
    %491 = vector.load %arg7[%c1_97, %c0_98, %c0_99] : memref<8x8x512xf32, #tpu.memory_space<vmem>>, vector<1x8x512xf32>
    %492 = vector.shape_cast %491 : vector<1x8x512xf32> to vector<8x512xf32>
    %493 = arith.addf %492, %484 : vector<8x512xf32>
    %c1_100 = arith.constant 1 : index
    %c0_101 = arith.constant 0 : index
    %c0_102 = arith.constant 0 : index
    %494 = vector.load %arg7[%c1_100, %c0_101, %c0_102] : memref<8x8x512xf32, #tpu.memory_space<vmem>>, vector<1x8x512xf32>
    %495 = vector.shape_cast %494 : vector<1x8x512xf32> to vector<8x512xf32>
    %496 = vector.shape_cast %493 : vector<8x512xf32> to vector<1x8x512xf32>
    tpu.vector_store %arg7[%c1_100, %c0_101, %c0_102], %496 {strides = array<i32>} : memref<8x8x512xf32, #tpu.memory_space<vmem>>, vector<1x8x512xf32>,
    %cst_103 = arith.constant 0.000000e+00 : f32
    %497 = vector.broadcast %cst_103 : f32 to vector<8x512xf32>
    %cst_104 = arith.constant 0.000000e+00 : f32
    %498 = vector.broadcast %cst_104 : f32 to vector<8x512xf32>
    %c2 = arith.constant 2 : index
    %c0_105 = arith.constant 0 : index
    %c0_106 = arith.constant 0 : index
    %499 = vector.load %arg3[%c2, %c0_105, %c0_106] : memref<8x64x8xf32, #tpu.memory_space<vmem>>, vector<1x8x8xf32>
    %500 = vector.shape_cast %499 : vector<1x8x8xf32> to vector<8x8xf32>
    %501 = vector.extract_strided_slice %500 {offsets = [0, 0], sizes = [8, 1], strides = [1, 1]} : vector<8x8xf32> to vector<8x1xf32>
    %502 = vector.extract_strided_slice %500 {offsets = [0, 1], sizes = [8, 1], strides = [1, 1]} : vector<8x8xf32> to vector<8x1xf32>
    %503 = vector.extract_strided_slice %500 {offsets = [0, 2], sizes = [8, 1], strides = [1, 1]} : vector<8x8xf32> to vector<8x1xf32>
    %504 = vector.extract_strided_slice %500 {offsets = [0, 3], sizes = [8, 1], strides = [1, 1]} : vector<8x8xf32> to vector<8x1xf32>
    %505 = vector.extract_strided_slice %500 {offsets = [0, 4], sizes = [8, 1], strides = [1, 1]} : vector<8x8xf32> to vector<8x1xf32>
    %506 = vector.broadcast %3 : vector<1x512xf32> to vector<8x512xf32>
    %507 = vector.broadcast %501 : vector<8x1xf32> to vector<8x512xf32>
    %508 = arith.subf %506, %507 : vector<8x512xf32>
    %509 = vector.broadcast %4 : vector<1x512xf32> to vector<8x512xf32>
    %510 = vector.broadcast %502 : vector<8x1xf32> to vector<8x512xf32>
    %511 = arith.subf %509, %510 : vector<8x512xf32>
    %512 = arith.mulf %508, %508 : vector<8x512xf32>
    %513 = arith.mulf %511, %511 : vector<8x512xf32>
    %514 = arith.addf %512, %513 : vector<8x512xf32>
    %cst_107 = arith.constant 0.000000e+00 : f32
    %515 = vector.broadcast %cst_107 : f32 to vector<8x512xf32>
    %516 = arith.subf %515, %514 : vector<8x512xf32>
    %517 = math.exp %516 : vector<8x512xf32>
    %518 = vector.broadcast %503 : vector<8x1xf32> to vector<8x512xf32>
    %519 = arith.cmpf ole, %514, %518 : vector<8x512xf32>
    %cst_108 = arith.constant 0.000000e+00 : f32
    %520 = vector.broadcast %cst_108 : f32 to vector<8x512xf32>
    %521 = arith.select %519, %517, %520 : vector<8x512xi1>, vector<8x512xf32>
    %522 = vector.broadcast %505 : vector<8x1xf32> to vector<8x512xf32>
    %523 = arith.mulf %521, %522 : vector<8x512xf32>
    %524 = arith.addf %497, %523 : vector<8x512xf32>
    %525 = vector.broadcast %504 : vector<8x1xf32> to vector<8x512xf32>
    %526 = arith.mulf %521, %525 : vector<8x512xf32>
    %527 = arith.addf %498, %526 : vector<8x512xf32>
    %c2_109 = arith.constant 2 : index
    %c8_110 = arith.constant 8 : index
    %c0_111 = arith.constant 0 : index
    %528 = vector.load %arg3[%c2_109, %c8_110, %c0_111] : memref<8x64x8xf32, #tpu.memory_space<vmem>>, vector<1x8x8xf32>
    %529 = vector.shape_cast %528 : vector<1x8x8xf32> to vector<8x8xf32>
    %530 = vector.extract_strided_slice %529 {offsets = [0, 0], sizes = [8, 1], strides = [1, 1]} : vector<8x8xf32> to vector<8x1xf32>
    %531 = vector.extract_strided_slice %529 {offsets = [0, 1], sizes = [8, 1], strides = [1, 1]} : vector<8x8xf32> to vector<8x1xf32>
    %532 = vector.extract_strided_slice %529 {offsets = [0, 2], sizes = [8, 1], strides = [1, 1]} : vector<8x8xf32> to vector<8x1xf32>
    %533 = vector.extract_strided_slice %529 {offsets = [0, 3], sizes = [8, 1], strides = [1, 1]} : vector<8x8xf32> to vector<8x1xf32>
    %534 = vector.extract_strided_slice %529 {offsets = [0, 4], sizes = [8, 1], strides = [1, 1]} : vector<8x8xf32> to vector<8x1xf32>
    %535 = vector.broadcast %3 : vector<1x512xf32> to vector<8x512xf32>
    %536 = vector.broadcast %530 : vector<8x1xf32> to vector<8x512xf32>
    %537 = arith.subf %535, %536 : vector<8x512xf32>
    %538 = vector.broadcast %4 : vector<1x512xf32> to vector<8x512xf32>
    %539 = vector.broadcast %531 : vector<8x1xf32> to vector<8x512xf32>
    %540 = arith.subf %538, %539 : vector<8x512xf32>
    %541 = arith.mulf %537, %537 : vector<8x512xf32>
    %542 = arith.mulf %540, %540 : vector<8x512xf32>
    %543 = arith.addf %541, %542 : vector<8x512xf32>
    %cst_112 = arith.constant 0.000000e+00 : f32
    %544 = vector.broadcast %cst_112 : f32 to vector<8x512xf32>
    %545 = arith.subf %544, %543 : vector<8x512xf32>
    %546 = math.exp %545 : vector<8x512xf32>
    %547 = vector.broadcast %532 : vector<8x1xf32> to vector<8x512xf32>
    %548 = arith.cmpf ole, %543, %547 : vector<8x512xf32>
    %cst_113 = arith.constant 0.000000e+00 : f32
    %549 = vector.broadcast %cst_113 : f32 to vector<8x512xf32>
    %550 = arith.select %548, %546, %549 : vector<8x512xi1>, vector<8x512xf32>
    %551 = vector.broadcast %534 : vector<8x1xf32> to vector<8x512xf32>
    %552 = arith.mulf %550, %551 : vector<8x512xf32>
    %553 = arith.addf %524, %552 : vector<8x512xf32>
    %554 = vector.broadcast %533 : vector<8x1xf32> to vector<8x512xf32>
    %555 = arith.mulf %550, %554 : vector<8x512xf32>
    %556 = arith.addf %527, %555 : vector<8x512xf32>
    %c2_114 = arith.constant 2 : index
    %c16_115 = arith.constant 16 : index
    %c0_116 = arith.constant 0 : index
    %557 = vector.load %arg3[%c2_114, %c16_115, %c0_116] : memref<8x64x8xf32, #tpu.memory_space<vmem>>, vector<1x8x8xf32>
    %558 = vector.shape_cast %557 : vector<1x8x8xf32> to vector<8x8xf32>
    %559 = vector.extract_strided_slice %558 {offsets = [0, 0], sizes = [8, 1], strides = [1, 1]} : vector<8x8xf32> to vector<8x1xf32>
    %560 = vector.extract_strided_slice %558 {offsets = [0, 1], sizes = [8, 1], strides = [1, 1]} : vector<8x8xf32> to vector<8x1xf32>
    %561 = vector.extract_strided_slice %558 {offsets = [0, 2], sizes = [8, 1], strides = [1, 1]} : vector<8x8xf32> to vector<8x1xf32>
    %562 = vector.extract_strided_slice %558 {offsets = [0, 3], sizes = [8, 1], strides = [1, 1]} : vector<8x8xf32> to vector<8x1xf32>
    %563 = vector.extract_strided_slice %558 {offsets = [0, 4], sizes = [8, 1], strides = [1, 1]} : vector<8x8xf32> to vector<8x1xf32>
    %564 = vector.broadcast %3 : vector<1x512xf32> to vector<8x512xf32>
    %565 = vector.broadcast %559 : vector<8x1xf32> to vector<8x512xf32>
    %566 = arith.subf %564, %565 : vector<8x512xf32>
    %567 = vector.broadcast %4 : vector<1x512xf32> to vector<8x512xf32>
    %568 = vector.broadcast %560 : vector<8x1xf32> to vector<8x512xf32>
    %569 = arith.subf %567, %568 : vector<8x512xf32>
    %570 = arith.mulf %566, %566 : vector<8x512xf32>
    %571 = arith.mulf %569, %569 : vector<8x512xf32>
    %572 = arith.addf %570, %571 : vector<8x512xf32>
    %cst_117 = arith.constant 0.000000e+00 : f32
    %573 = vector.broadcast %cst_117 : f32 to vector<8x512xf32>
    %574 = arith.subf %573, %572 : vector<8x512xf32>
    %575 = math.exp %574 : vector<8x512xf32>
    %576 = vector.broadcast %561 : vector<8x1xf32> to vector<8x512xf32>
    %577 = arith.cmpf ole, %572, %576 : vector<8x512xf32>
    %cst_118 = arith.constant 0.000000e+00 : f32
    %578 = vector.broadcast %cst_118 : f32 to vector<8x512xf32>
    %579 = arith.select %577, %575, %578 : vector<8x512xi1>, vector<8x512xf32>
    %580 = vector.broadcast %563 : vector<8x1xf32> to vector<8x512xf32>
    %581 = arith.mulf %579, %580 : vector<8x512xf32>
    %582 = arith.addf %553, %581 : vector<8x512xf32>
    %583 = vector.broadcast %562 : vector<8x1xf32> to vector<8x512xf32>
    %584 = arith.mulf %579, %583 : vector<8x512xf32>
    %585 = arith.addf %556, %584 : vector<8x512xf32>
    %c2_119 = arith.constant 2 : index
    %c24_120 = arith.constant 24 : index
    %c0_121 = arith.constant 0 : index
    %586 = vector.load %arg3[%c2_119, %c24_120, %c0_121] : memref<8x64x8xf32, #tpu.memory_space<vmem>>, vector<1x8x8xf32>
    %587 = vector.shape_cast %586 : vector<1x8x8xf32> to vector<8x8xf32>
    %588 = vector.extract_strided_slice %587 {offsets = [0, 0], sizes = [8, 1], strides = [1, 1]} : vector<8x8xf32> to vector<8x1xf32>
    %589 = vector.extract_strided_slice %587 {offsets = [0, 1], sizes = [8, 1], strides = [1, 1]} : vector<8x8xf32> to vector<8x1xf32>
    %590 = vector.extract_strided_slice %587 {offsets = [0, 2], sizes = [8, 1], strides = [1, 1]} : vector<8x8xf32> to vector<8x1xf32>
    %591 = vector.extract_strided_slice %587 {offsets = [0, 3], sizes = [8, 1], strides = [1, 1]} : vector<8x8xf32> to vector<8x1xf32>
    %592 = vector.extract_strided_slice %587 {offsets = [0, 4], sizes = [8, 1], strides = [1, 1]} : vector<8x8xf32> to vector<8x1xf32>
    %593 = vector.broadcast %3 : vector<1x512xf32> to vector<8x512xf32>
    %594 = vector.broadcast %588 : vector<8x1xf32> to vector<8x512xf32>
    %595 = arith.subf %593, %594 : vector<8x512xf32>
    %596 = vector.broadcast %4 : vector<1x512xf32> to vector<8x512xf32>
    %597 = vector.broadcast %589 : vector<8x1xf32> to vector<8x512xf32>
    %598 = arith.subf %596, %597 : vector<8x512xf32>
    %599 = arith.mulf %595, %595 : vector<8x512xf32>
    %600 = arith.mulf %598, %598 : vector<8x512xf32>
    %601 = arith.addf %599, %600 : vector<8x512xf32>
    %cst_122 = arith.constant 0.000000e+00 : f32
    %602 = vector.broadcast %cst_122 : f32 to vector<8x512xf32>
    %603 = arith.subf %602, %601 : vector<8x512xf32>
    %604 = math.exp %603 : vector<8x512xf32>
    %605 = vector.broadcast %590 : vector<8x1xf32> to vector<8x512xf32>
    %606 = arith.cmpf ole, %601, %605 : vector<8x512xf32>
    %cst_123 = arith.constant 0.000000e+00 : f32
    %607 = vector.broadcast %cst_123 : f32 to vector<8x512xf32>
    %608 = arith.select %606, %604, %607 : vector<8x512xi1>, vector<8x512xf32>
    %609 = vector.broadcast %592 : vector<8x1xf32> to vector<8x512xf32>
    %610 = arith.mulf %608, %609 : vector<8x512xf32>
    %611 = arith.addf %582, %610 : vector<8x512xf32>
    %612 = vector.broadcast %591 : vector<8x1xf32> to vector<8x512xf32>
    %613 = arith.mulf %608, %612 : vector<8x512xf32>
    %614 = arith.addf %585, %613 : vector<8x512xf32>
    %c2_124 = arith.constant 2 : index
    %c32_125 = arith.constant 32 : index
    %c0_126 = arith.constant 0 : index
    %615 = vector.load %arg3[%c2_124, %c32_125, %c0_126] : memref<8x64x8xf32, #tpu.memory_space<vmem>>, vector<1x8x8xf32>
    %616 = vector.shape_cast %615 : vector<1x8x8xf32> to vector<8x8xf32>
    %617 = vector.extract_strided_slice %616 {offsets = [0, 0], sizes = [8, 1], strides = [1, 1]} : vector<8x8xf32> to vector<8x1xf32>
    %618 = vector.extract_strided_slice %616 {offsets = [0, 1], sizes = [8, 1], strides = [1, 1]} : vector<8x8xf32> to vector<8x1xf32>
    %619 = vector.extract_strided_slice %616 {offsets = [0, 2], sizes = [8, 1], strides = [1, 1]} : vector<8x8xf32> to vector<8x1xf32>
    %620 = vector.extract_strided_slice %616 {offsets = [0, 3], sizes = [8, 1], strides = [1, 1]} : vector<8x8xf32> to vector<8x1xf32>
    %621 = vector.extract_strided_slice %616 {offsets = [0, 4], sizes = [8, 1], strides = [1, 1]} : vector<8x8xf32> to vector<8x1xf32>
    %622 = vector.broadcast %3 : vector<1x512xf32> to vector<8x512xf32>
    %623 = vector.broadcast %617 : vector<8x1xf32> to vector<8x512xf32>
    %624 = arith.subf %622, %623 : vector<8x512xf32>
    %625 = vector.broadcast %4 : vector<1x512xf32> to vector<8x512xf32>
    %626 = vector.broadcast %618 : vector<8x1xf32> to vector<8x512xf32>
    %627 = arith.subf %625, %626 : vector<8x512xf32>
    %628 = arith.mulf %624, %624 : vector<8x512xf32>
    %629 = arith.mulf %627, %627 : vector<8x512xf32>
    %630 = arith.addf %628, %629 : vector<8x512xf32>
    %cst_127 = arith.constant 0.000000e+00 : f32
    %631 = vector.broadcast %cst_127 : f32 to vector<8x512xf32>
    %632 = arith.subf %631, %630 : vector<8x512xf32>
    %633 = math.exp %632 : vector<8x512xf32>
    %634 = vector.broadcast %619 : vector<8x1xf32> to vector<8x512xf32>
    %635 = arith.cmpf ole, %630, %634 : vector<8x512xf32>
    %cst_128 = arith.constant 0.000000e+00 : f32
    %636 = vector.broadcast %cst_128 : f32 to vector<8x512xf32>
    %637 = arith.select %635, %633, %636 : vector<8x512xi1>, vector<8x512xf32>
    %638 = vector.broadcast %621 : vector<8x1xf32> to vector<8x512xf32>
    %639 = arith.mulf %637, %638 : vector<8x512xf32>
    %640 = arith.addf %611, %639 : vector<8x512xf32>
    %641 = vector.broadcast %620 : vector<8x1xf32> to vector<8x512xf32>
    %642 = arith.mulf %637, %641 : vector<8x512xf32>
    %643 = arith.addf %614, %642 : vector<8x512xf32>
    %c2_129 = arith.constant 2 : index
    %c40_130 = arith.constant 40 : index
    %c0_131 = arith.constant 0 : index
    %644 = vector.load %arg3[%c2_129, %c40_130, %c0_131] : memref<8x64x8xf32, #tpu.memory_space<vmem>>, vector<1x8x8xf32>
    %645 = vector.shape_cast %644 : vector<1x8x8xf32> to vector<8x8xf32>
    %646 = vector.extract_strided_slice %645 {offsets = [0, 0], sizes = [8, 1], strides = [1, 1]} : vector<8x8xf32> to vector<8x1xf32>
    %647 = vector.extract_strided_slice %645 {offsets = [0, 1], sizes = [8, 1], strides = [1, 1]} : vector<8x8xf32> to vector<8x1xf32>
    %648 = vector.extract_strided_slice %645 {offsets = [0, 2], sizes = [8, 1], strides = [1, 1]} : vector<8x8xf32> to vector<8x1xf32>
    %649 = vector.extract_strided_slice %645 {offsets = [0, 3], sizes = [8, 1], strides = [1, 1]} : vector<8x8xf32> to vector<8x1xf32>
    %650 = vector.extract_strided_slice %645 {offsets = [0, 4], sizes = [8, 1], strides = [1, 1]} : vector<8x8xf32> to vector<8x1xf32>
    %651 = vector.broadcast %3 : vector<1x512xf32> to vector<8x512xf32>
    %652 = vector.broadcast %646 : vector<8x1xf32> to vector<8x512xf32>
    %653 = arith.subf %651, %652 : vector<8x512xf32>
    %654 = vector.broadcast %4 : vector<1x512xf32> to vector<8x512xf32>
    %655 = vector.broadcast %647 : vector<8x1xf32> to vector<8x512xf32>
    %656 = arith.subf %654, %655 : vector<8x512xf32>
    %657 = arith.mulf %653, %653 : vector<8x512xf32>
    %658 = arith.mulf %656, %656 : vector<8x512xf32>
    %659 = arith.addf %657, %658 : vector<8x512xf32>
    %cst_132 = arith.constant 0.000000e+00 : f32
    %660 = vector.broadcast %cst_132 : f32 to vector<8x512xf32>
    %661 = arith.subf %660, %659 : vector<8x512xf32>
    %662 = math.exp %661 : vector<8x512xf32>
    %663 = vector.broadcast %648 : vector<8x1xf32> to vector<8x512xf32>
    %664 = arith.cmpf ole, %659, %663 : vector<8x512xf32>
    %cst_133 = arith.constant 0.000000e+00 : f32
    %665 = vector.broadcast %cst_133 : f32 to vector<8x512xf32>
    %666 = arith.select %664, %662, %665 : vector<8x512xi1>, vector<8x512xf32>
    %667 = vector.broadcast %650 : vector<8x1xf32> to vector<8x512xf32>
    %668 = arith.mulf %666, %667 : vector<8x512xf32>
    %669 = arith.addf %640, %668 : vector<8x512xf32>
    %670 = vector.broadcast %649 : vector<8x1xf32> to vector<8x512xf32>
    %671 = arith.mulf %666, %670 : vector<8x512xf32>
    %672 = arith.addf %643, %671 : vector<8x512xf32>
    %c2_134 = arith.constant 2 : index
    %c48_135 = arith.constant 48 : index
    %c0_136 = arith.constant 0 : index
    %673 = vector.load %arg3[%c2_134, %c48_135, %c0_136] : memref<8x64x8xf32, #tpu.memory_space<vmem>>, vector<1x8x8xf32>
    %674 = vector.shape_cast %673 : vector<1x8x8xf32> to vector<8x8xf32>
    %675 = vector.extract_strided_slice %674 {offsets = [0, 0], sizes = [8, 1], strides = [1, 1]} : vector<8x8xf32> to vector<8x1xf32>
    %676 = vector.extract_strided_slice %674 {offsets = [0, 1], sizes = [8, 1], strides = [1, 1]} : vector<8x8xf32> to vector<8x1xf32>
    %677 = vector.extract_strided_slice %674 {offsets = [0, 2], sizes = [8, 1], strides = [1, 1]} : vector<8x8xf32> to vector<8x1xf32>
    %678 = vector.extract_strided_slice %674 {offsets = [0, 3], sizes = [8, 1], strides = [1, 1]} : vector<8x8xf32> to vector<8x1xf32>
    %679 = vector.extract_strided_slice %674 {offsets = [0, 4], sizes = [8, 1], strides = [1, 1]} : vector<8x8xf32> to vector<8x1xf32>
    %680 = vector.broadcast %3 : vector<1x512xf32> to vector<8x512xf32>
    %681 = vector.broadcast %675 : vector<8x1xf32> to vector<8x512xf32>
    %682 = arith.subf %680, %681 : vector<8x512xf32>
    %683 = vector.broadcast %4 : vector<1x512xf32> to vector<8x512xf32>
    %684 = vector.broadcast %676 : vector<8x1xf32> to vector<8x512xf32>
    %685 = arith.subf %683, %684 : vector<8x512xf32>
    %686 = arith.mulf %682, %682 : vector<8x512xf32>
    %687 = arith.mulf %685, %685 : vector<8x512xf32>
    %688 = arith.addf %686, %687 : vector<8x512xf32>
    %cst_137 = arith.constant 0.000000e+00 : f32
    %689 = vector.broadcast %cst_137 : f32 to vector<8x512xf32>
    %690 = arith.subf %689, %688 : vector<8x512xf32>
    %691 = math.exp %690 : vector<8x512xf32>
    %692 = vector.broadcast %677 : vector<8x1xf32> to vector<8x512xf32>
    %693 = arith.cmpf ole, %688, %692 : vector<8x512xf32>
    %cst_138 = arith.constant 0.000000e+00 : f32
    %694 = vector.broadcast %cst_138 : f32 to vector<8x512xf32>
    %695 = arith.select %693, %691, %694 : vector<8x512xi1>, vector<8x512xf32>
    %696 = vector.broadcast %679 : vector<8x1xf32> to vector<8x512xf32>
    %697 = arith.mulf %695, %696 : vector<8x512xf32>
    %698 = arith.addf %669, %697 : vector<8x512xf32>
    %699 = vector.broadcast %678 : vector<8x1xf32> to vector<8x512xf32>
    %700 = arith.mulf %695, %699 : vector<8x512xf32>
    %701 = arith.addf %672, %700 : vector<8x512xf32>
    %c2_139 = arith.constant 2 : index
    %c56_140 = arith.constant 56 : index
    %c0_141 = arith.constant 0 : index
    %702 = vector.load %arg3[%c2_139, %c56_140, %c0_141] : memref<8x64x8xf32, #tpu.memory_space<vmem>>, vector<1x8x8xf32>
    %703 = vector.shape_cast %702 : vector<1x8x8xf32> to vector<8x8xf32>
    %704 = vector.extract_strided_slice %703 {offsets = [0, 0], sizes = [8, 1], strides = [1, 1]} : vector<8x8xf32> to vector<8x1xf32>
    %705 = vector.extract_strided_slice %703 {offsets = [0, 1], sizes = [8, 1], strides = [1, 1]} : vector<8x8xf32> to vector<8x1xf32>
    %706 = vector.extract_strided_slice %703 {offsets = [0, 2], sizes = [8, 1], strides = [1, 1]} : vector<8x8xf32> to vector<8x1xf32>
    %707 = vector.extract_strided_slice %703 {offsets = [0, 3], sizes = [8, 1], strides = [1, 1]} : vector<8x8xf32> to vector<8x1xf32>
    %708 = vector.extract_strided_slice %703 {offsets = [0, 4], sizes = [8, 1], strides = [1, 1]} : vector<8x8xf32> to vector<8x1xf32>
    %709 = vector.broadcast %3 : vector<1x512xf32> to vector<8x512xf32>
    %710 = vector.broadcast %704 : vector<8x1xf32> to vector<8x512xf32>
    %711 = arith.subf %709, %710 : vector<8x512xf32>
    %712 = vector.broadcast %4 : vector<1x512xf32> to vector<8x512xf32>
    %713 = vector.broadcast %705 : vector<8x1xf32> to vector<8x512xf32>
    %714 = arith.subf %712, %713 : vector<8x512xf32>
    %715 = arith.mulf %711, %711 : vector<8x512xf32>
    %716 = arith.mulf %714, %714 : vector<8x512xf32>
    %717 = arith.addf %715, %716 : vector<8x512xf32>
    %cst_142 = arith.constant 0.000000e+00 : f32
    %718 = vector.broadcast %cst_142 : f32 to vector<8x512xf32>
    %719 = arith.subf %718, %717 : vector<8x512xf32>
    %720 = math.exp %719 : vector<8x512xf32>
    %721 = vector.broadcast %706 : vector<8x1xf32> to vector<8x512xf32>
    %722 = arith.cmpf ole, %717, %721 : vector<8x512xf32>
    %cst_143 = arith.constant 0.000000e+00 : f32
    %723 = vector.broadcast %cst_143 : f32 to vector<8x512xf32>
    %724 = arith.select %722, %720, %723 : vector<8x512xi1>, vector<8x512xf32>
    %725 = vector.broadcast %708 : vector<8x1xf32> to vector<8x512xf32>
    %726 = arith.mulf %724, %725 : vector<8x512xf32>
    %727 = arith.addf %698, %726 : vector<8x512xf32>
    %728 = vector.broadcast %707 : vector<8x1xf32> to vector<8x512xf32>
    %729 = arith.mulf %724, %728 : vector<8x512xf32>
    %730 = arith.addf %701, %729 : vector<8x512xf32>
    %c2_144 = arith.constant 2 : index
    %c0_145 = arith.constant 0 : index
    %c0_146 = arith.constant 0 : index
    %731 = vector.load %arg6[%c2_144, %c0_145, %c0_146] : memref<8x8x512xf32, #tpu.memory_space<vmem>>, vector<1x8x512xf32>
    %732 = vector.shape_cast %731 : vector<1x8x512xf32> to vector<8x512xf32>
    %733 = arith.addf %732, %727 : vector<8x512xf32>
    %c2_147 = arith.constant 2 : index
    %c0_148 = arith.constant 0 : index
    %c0_149 = arith.constant 0 : index
    %734 = vector.load %arg6[%c2_147, %c0_148, %c0_149] : memref<8x8x512xf32, #tpu.memory_space<vmem>>, vector<1x8x512xf32>
    %735 = vector.shape_cast %734 : vector<1x8x512xf32> to vector<8x512xf32>
    %736 = vector.shape_cast %733 : vector<8x512xf32> to vector<1x8x512xf32>
    tpu.vector_store %arg6[%c2_147, %c0_148, %c0_149], %736 {strides = array<i32>} : memref<8x8x512xf32, #tpu.memory_space<vmem>>, vector<1x8x512xf32>,
    %c2_150 = arith.constant 2 : index
    %c0_151 = arith.constant 0 : index
    %c0_152 = arith.constant 0 : index
    %737 = vector.load %arg7[%c2_150, %c0_151, %c0_152] : memref<8x8x512xf32, #tpu.memory_space<vmem>>, vector<1x8x512xf32>
    %738 = vector.shape_cast %737 : vector<1x8x512xf32> to vector<8x512xf32>
    %739 = arith.addf %738, %730 : vector<8x512xf32>
    %c2_153 = arith.constant 2 : index
    %c0_154 = arith.constant 0 : index
    %c0_155 = arith.constant 0 : index
    %740 = vector.load %arg7[%c2_153, %c0_154, %c0_155] : memref<8x8x512xf32, #tpu.memory_space<vmem>>, vector<1x8x512xf32>
    %741 = vector.shape_cast %740 : vector<1x8x512xf32> to vector<8x512xf32>
    %742 = vector.shape_cast %739 : vector<8x512xf32> to vector<1x8x512xf32>
    tpu.vector_store %arg7[%c2_153, %c0_154, %c0_155], %742 {strides = array<i32>} : memref<8x8x512xf32, #tpu.memory_space<vmem>>, vector<1x8x512xf32>,
    %cst_156 = arith.constant 0.000000e+00 : f32
    %743 = vector.broadcast %cst_156 : f32 to vector<8x512xf32>
    %cst_157 = arith.constant 0.000000e+00 : f32
    %744 = vector.broadcast %cst_157 : f32 to vector<8x512xf32>
    %c3 = arith.constant 3 : index
    %c0_158 = arith.constant 0 : index
    %c0_159 = arith.constant 0 : index
    %745 = vector.load %arg3[%c3, %c0_158, %c0_159] : memref<8x64x8xf32, #tpu.memory_space<vmem>>, vector<1x8x8xf32>
    %746 = vector.shape_cast %745 : vector<1x8x8xf32> to vector<8x8xf32>
    %747 = vector.extract_strided_slice %746 {offsets = [0, 0], sizes = [8, 1], strides = [1, 1]} : vector<8x8xf32> to vector<8x1xf32>
    %748 = vector.extract_strided_slice %746 {offsets = [0, 1], sizes = [8, 1], strides = [1, 1]} : vector<8x8xf32> to vector<8x1xf32>
    %749 = vector.extract_strided_slice %746 {offsets = [0, 2], sizes = [8, 1], strides = [1, 1]} : vector<8x8xf32> to vector<8x1xf32>
    %750 = vector.extract_strided_slice %746 {offsets = [0, 3], sizes = [8, 1], strides = [1, 1]} : vector<8x8xf32> to vector<8x1xf32>
    %751 = vector.extract_strided_slice %746 {offsets = [0, 4], sizes = [8, 1], strides = [1, 1]} : vector<8x8xf32> to vector<8x1xf32>
    %752 = vector.broadcast %3 : vector<1x512xf32> to vector<8x512xf32>
    %753 = vector.broadcast %747 : vector<8x1xf32> to vector<8x512xf32>
    %754 = arith.subf %752, %753 : vector<8x512xf32>
    %755 = vector.broadcast %4 : vector<1x512xf32> to vector<8x512xf32>
    %756 = vector.broadcast %748 : vector<8x1xf32> to vector<8x512xf32>
    %757 = arith.subf %755, %756 : vector<8x512xf32>
    %758 = arith.mulf %754, %754 : vector<8x512xf32>
    %759 = arith.mulf %757, %757 : vector<8x512xf32>
    %760 = arith.addf %758, %759 : vector<8x512xf32>
    %cst_160 = arith.constant 0.000000e+00 : f32
    %761 = vector.broadcast %cst_160 : f32 to vector<8x512xf32>
    %762 = arith.subf %761, %760 : vector<8x512xf32>
    %763 = math.exp %762 : vector<8x512xf32>
    %764 = vector.broadcast %749 : vector<8x1xf32> to vector<8x512xf32>
    %765 = arith.cmpf ole, %760, %764 : vector<8x512xf32>
    %cst_161 = arith.constant 0.000000e+00 : f32
    %766 = vector.broadcast %cst_161 : f32 to vector<8x512xf32>
    %767 = arith.select %765, %763, %766 : vector<8x512xi1>, vector<8x512xf32>
    %768 = vector.broadcast %751 : vector<8x1xf32> to vector<8x512xf32>
    %769 = arith.mulf %767, %768 : vector<8x512xf32>
    %770 = arith.addf %743, %769 : vector<8x512xf32>
    %771 = vector.broadcast %750 : vector<8x1xf32> to vector<8x512xf32>
    %772 = arith.mulf %767, %771 : vector<8x512xf32>
    %773 = arith.addf %744, %772 : vector<8x512xf32>
    %c3_162 = arith.constant 3 : index
    %c8_163 = arith.constant 8 : index
    %c0_164 = arith.constant 0 : index
    %774 = vector.load %arg3[%c3_162, %c8_163, %c0_164] : memref<8x64x8xf32, #tpu.memory_space<vmem>>, vector<1x8x8xf32>
    %775 = vector.shape_cast %774 : vector<1x8x8xf32> to vector<8x8xf32>
    %776 = vector.extract_strided_slice %775 {offsets = [0, 0], sizes = [8, 1], strides = [1, 1]} : vector<8x8xf32> to vector<8x1xf32>
    %777 = vector.extract_strided_slice %775 {offsets = [0, 1], sizes = [8, 1], strides = [1, 1]} : vector<8x8xf32> to vector<8x1xf32>
    %778 = vector.extract_strided_slice %775 {offsets = [0, 2], sizes = [8, 1], strides = [1, 1]} : vector<8x8xf32> to vector<8x1xf32>
    %779 = vector.extract_strided_slice %775 {offsets = [0, 3], sizes = [8, 1], strides = [1, 1]} : vector<8x8xf32> to vector<8x1xf32>
    %780 = vector.extract_strided_slice %775 {offsets = [0, 4], sizes = [8, 1], strides = [1, 1]} : vector<8x8xf32> to vector<8x1xf32>
    %781 = vector.broadcast %3 : vector<1x512xf32> to vector<8x512xf32>
    %782 = vector.broadcast %776 : vector<8x1xf32> to vector<8x512xf32>
    %783 = arith.subf %781, %782 : vector<8x512xf32>
    %784 = vector.broadcast %4 : vector<1x512xf32> to vector<8x512xf32>
    %785 = vector.broadcast %777 : vector<8x1xf32> to vector<8x512xf32>
    %786 = arith.subf %784, %785 : vector<8x512xf32>
    %787 = arith.mulf %783, %783 : vector<8x512xf32>
    %788 = arith.mulf %786, %786 : vector<8x512xf32>
    %789 = arith.addf %787, %788 : vector<8x512xf32>
    %cst_165 = arith.constant 0.000000e+00 : f32
    %790 = vector.broadcast %cst_165 : f32 to vector<8x512xf32>
    %791 = arith.subf %790, %789 : vector<8x512xf32>
    %792 = math.exp %791 : vector<8x512xf32>
    %793 = vector.broadcast %778 : vector<8x1xf32> to vector<8x512xf32>
    %794 = arith.cmpf ole, %789, %793 : vector<8x512xf32>
    %cst_166 = arith.constant 0.000000e+00 : f32
    %795 = vector.broadcast %cst_166 : f32 to vector<8x512xf32>
    %796 = arith.select %794, %792, %795 : vector<8x512xi1>, vector<8x512xf32>
    %797 = vector.broadcast %780 : vector<8x1xf32> to vector<8x512xf32>
    %798 = arith.mulf %796, %797 : vector<8x512xf32>
    %799 = arith.addf %770, %798 : vector<8x512xf32>
    %800 = vector.broadcast %779 : vector<8x1xf32> to vector<8x512xf32>
    %801 = arith.mulf %796, %800 : vector<8x512xf32>
    %802 = arith.addf %773, %801 : vector<8x512xf32>
    %c3_167 = arith.constant 3 : index
    %c16_168 = arith.constant 16 : index
    %c0_169 = arith.constant 0 : index
    %803 = vector.load %arg3[%c3_167, %c16_168, %c0_169] : memref<8x64x8xf32, #tpu.memory_space<vmem>>, vector<1x8x8xf32>
    %804 = vector.shape_cast %803 : vector<1x8x8xf32> to vector<8x8xf32>
    %805 = vector.extract_strided_slice %804 {offsets = [0, 0], sizes = [8, 1], strides = [1, 1]} : vector<8x8xf32> to vector<8x1xf32>
    %806 = vector.extract_strided_slice %804 {offsets = [0, 1], sizes = [8, 1], strides = [1, 1]} : vector<8x8xf32> to vector<8x1xf32>
    %807 = vector.extract_strided_slice %804 {offsets = [0, 2], sizes = [8, 1], strides = [1, 1]} : vector<8x8xf32> to vector<8x1xf32>
    %808 = vector.extract_strided_slice %804 {offsets = [0, 3], sizes = [8, 1], strides = [1, 1]} : vector<8x8xf32> to vector<8x1xf32>
    %809 = vector.extract_strided_slice %804 {offsets = [0, 4], sizes = [8, 1], strides = [1, 1]} : vector<8x8xf32> to vector<8x1xf32>
    %810 = vector.broadcast %3 : vector<1x512xf32> to vector<8x512xf32>
    %811 = vector.broadcast %805 : vector<8x1xf32> to vector<8x512xf32>
    %812 = arith.subf %810, %811 : vector<8x512xf32>
    %813 = vector.broadcast %4 : vector<1x512xf32> to vector<8x512xf32>
    %814 = vector.broadcast %806 : vector<8x1xf32> to vector<8x512xf32>
    %815 = arith.subf %813, %814 : vector<8x512xf32>
    %816 = arith.mulf %812, %812 : vector<8x512xf32>
    %817 = arith.mulf %815, %815 : vector<8x512xf32>
    %818 = arith.addf %816, %817 : vector<8x512xf32>
    %cst_170 = arith.constant 0.000000e+00 : f32
    %819 = vector.broadcast %cst_170 : f32 to vector<8x512xf32>
    %820 = arith.subf %819, %818 : vector<8x512xf32>
    %821 = math.exp %820 : vector<8x512xf32>
    %822 = vector.broadcast %807 : vector<8x1xf32> to vector<8x512xf32>
    %823 = arith.cmpf ole, %818, %822 : vector<8x512xf32>
    %cst_171 = arith.constant 0.000000e+00 : f32
    %824 = vector.broadcast %cst_171 : f32 to vector<8x512xf32>
    %825 = arith.select %823, %821, %824 : vector<8x512xi1>, vector<8x512xf32>
    %826 = vector.broadcast %809 : vector<8x1xf32> to vector<8x512xf32>
    %827 = arith.mulf %825, %826 : vector<8x512xf32>
    %828 = arith.addf %799, %827 : vector<8x512xf32>
    %829 = vector.broadcast %808 : vector<8x1xf32> to vector<8x512xf32>
    %830 = arith.mulf %825, %829 : vector<8x512xf32>
    %831 = arith.addf %802, %830 : vector<8x512xf32>
    %c3_172 = arith.constant 3 : index
    %c24_173 = arith.constant 24 : index
    %c0_174 = arith.constant 0 : index
    %832 = vector.load %arg3[%c3_172, %c24_173, %c0_174] : memref<8x64x8xf32, #tpu.memory_space<vmem>>, vector<1x8x8xf32>
    %833 = vector.shape_cast %832 : vector<1x8x8xf32> to vector<8x8xf32>
    %834 = vector.extract_strided_slice %833 {offsets = [0, 0], sizes = [8, 1], strides = [1, 1]} : vector<8x8xf32> to vector<8x1xf32>
    %835 = vector.extract_strided_slice %833 {offsets = [0, 1], sizes = [8, 1], strides = [1, 1]} : vector<8x8xf32> to vector<8x1xf32>
    %836 = vector.extract_strided_slice %833 {offsets = [0, 2], sizes = [8, 1], strides = [1, 1]} : vector<8x8xf32> to vector<8x1xf32>
    %837 = vector.extract_strided_slice %833 {offsets = [0, 3], sizes = [8, 1], strides = [1, 1]} : vector<8x8xf32> to vector<8x1xf32>
    %838 = vector.extract_strided_slice %833 {offsets = [0, 4], sizes = [8, 1], strides = [1, 1]} : vector<8x8xf32> to vector<8x1xf32>
    %839 = vector.broadcast %3 : vector<1x512xf32> to vector<8x512xf32>
    %840 = vector.broadcast %834 : vector<8x1xf32> to vector<8x512xf32>
    %841 = arith.subf %839, %840 : vector<8x512xf32>
    %842 = vector.broadcast %4 : vector<1x512xf32> to vector<8x512xf32>
    %843 = vector.broadcast %835 : vector<8x1xf32> to vector<8x512xf32>
    %844 = arith.subf %842, %843 : vector<8x512xf32>
    %845 = arith.mulf %841, %841 : vector<8x512xf32>
    %846 = arith.mulf %844, %844 : vector<8x512xf32>
    %847 = arith.addf %845, %846 : vector<8x512xf32>
    %cst_175 = arith.constant 0.000000e+00 : f32
    %848 = vector.broadcast %cst_175 : f32 to vector<8x512xf32>
    %849 = arith.subf %848, %847 : vector<8x512xf32>
    %850 = math.exp %849 : vector<8x512xf32>
    %851 = vector.broadcast %836 : vector<8x1xf32> to vector<8x512xf32>
    %852 = arith.cmpf ole, %847, %851 : vector<8x512xf32>
    %cst_176 = arith.constant 0.000000e+00 : f32
    %853 = vector.broadcast %cst_176 : f32 to vector<8x512xf32>
    %854 = arith.select %852, %850, %853 : vector<8x512xi1>, vector<8x512xf32>
    %855 = vector.broadcast %838 : vector<8x1xf32> to vector<8x512xf32>
    %856 = arith.mulf %854, %855 : vector<8x512xf32>
    %857 = arith.addf %828, %856 : vector<8x512xf32>
    %858 = vector.broadcast %837 : vector<8x1xf32> to vector<8x512xf32>
    %859 = arith.mulf %854, %858 : vector<8x512xf32>
    %860 = arith.addf %831, %859 : vector<8x512xf32>
    %c3_177 = arith.constant 3 : index
    %c32_178 = arith.constant 32 : index
    %c0_179 = arith.constant 0 : index
    %861 = vector.load %arg3[%c3_177, %c32_178, %c0_179] : memref<8x64x8xf32, #tpu.memory_space<vmem>>, vector<1x8x8xf32>
    %862 = vector.shape_cast %861 : vector<1x8x8xf32> to vector<8x8xf32>
    %863 = vector.extract_strided_slice %862 {offsets = [0, 0], sizes = [8, 1], strides = [1, 1]} : vector<8x8xf32> to vector<8x1xf32>
    %864 = vector.extract_strided_slice %862 {offsets = [0, 1], sizes = [8, 1], strides = [1, 1]} : vector<8x8xf32> to vector<8x1xf32>
    %865 = vector.extract_strided_slice %862 {offsets = [0, 2], sizes = [8, 1], strides = [1, 1]} : vector<8x8xf32> to vector<8x1xf32>
    %866 = vector.extract_strided_slice %862 {offsets = [0, 3], sizes = [8, 1], strides = [1, 1]} : vector<8x8xf32> to vector<8x1xf32>
    %867 = vector.extract_strided_slice %862 {offsets = [0, 4], sizes = [8, 1], strides = [1, 1]} : vector<8x8xf32> to vector<8x1xf32>
    %868 = vector.broadcast %3 : vector<1x512xf32> to vector<8x512xf32>
    %869 = vector.broadcast %863 : vector<8x1xf32> to vector<8x512xf32>
    %870 = arith.subf %868, %869 : vector<8x512xf32>
    %871 = vector.broadcast %4 : vector<1x512xf32> to vector<8x512xf32>
    %872 = vector.broadcast %864 : vector<8x1xf32> to vector<8x512xf32>
    %873 = arith.subf %871, %872 : vector<8x512xf32>
    %874 = arith.mulf %870, %870 : vector<8x512xf32>
    %875 = arith.mulf %873, %873 : vector<8x512xf32>
    %876 = arith.addf %874, %875 : vector<8x512xf32>
    %cst_180 = arith.constant 0.000000e+00 : f32
    %877 = vector.broadcast %cst_180 : f32 to vector<8x512xf32>
    %878 = arith.subf %877, %876 : vector<8x512xf32>
    %879 = math.exp %878 : vector<8x512xf32>
    %880 = vector.broadcast %865 : vector<8x1xf32> to vector<8x512xf32>
    %881 = arith.cmpf ole, %876, %880 : vector<8x512xf32>
    %cst_181 = arith.constant 0.000000e+00 : f32
    %882 = vector.broadcast %cst_181 : f32 to vector<8x512xf32>
    %883 = arith.select %881, %879, %882 : vector<8x512xi1>, vector<8x512xf32>
    %884 = vector.broadcast %867 : vector<8x1xf32> to vector<8x512xf32>
    %885 = arith.mulf %883, %884 : vector<8x512xf32>
    %886 = arith.addf %857, %885 : vector<8x512xf32>
    %887 = vector.broadcast %866 : vector<8x1xf32> to vector<8x512xf32>
    %888 = arith.mulf %883, %887 : vector<8x512xf32>
    %889 = arith.addf %860, %888 : vector<8x512xf32>
    %c3_182 = arith.constant 3 : index
    %c40_183 = arith.constant 40 : index
    %c0_184 = arith.constant 0 : index
    %890 = vector.load %arg3[%c3_182, %c40_183, %c0_184] : memref<8x64x8xf32, #tpu.memory_space<vmem>>, vector<1x8x8xf32>
    %891 = vector.shape_cast %890 : vector<1x8x8xf32> to vector<8x8xf32>
    %892 = vector.extract_strided_slice %891 {offsets = [0, 0], sizes = [8, 1], strides = [1, 1]} : vector<8x8xf32> to vector<8x1xf32>
    %893 = vector.extract_strided_slice %891 {offsets = [0, 1], sizes = [8, 1], strides = [1, 1]} : vector<8x8xf32> to vector<8x1xf32>
    %894 = vector.extract_strided_slice %891 {offsets = [0, 2], sizes = [8, 1], strides = [1, 1]} : vector<8x8xf32> to vector<8x1xf32>
    %895 = vector.extract_strided_slice %891 {offsets = [0, 3], sizes = [8, 1], strides = [1, 1]} : vector<8x8xf32> to vector<8x1xf32>
    %896 = vector.extract_strided_slice %891 {offsets = [0, 4], sizes = [8, 1], strides = [1, 1]} : vector<8x8xf32> to vector<8x1xf32>
    %897 = vector.broadcast %3 : vector<1x512xf32> to vector<8x512xf32>
    %898 = vector.broadcast %892 : vector<8x1xf32> to vector<8x512xf32>
    %899 = arith.subf %897, %898 : vector<8x512xf32>
    %900 = vector.broadcast %4 : vector<1x512xf32> to vector<8x512xf32>
    %901 = vector.broadcast %893 : vector<8x1xf32> to vector<8x512xf32>
    %902 = arith.subf %900, %901 : vector<8x512xf32>
    %903 = arith.mulf %899, %899 : vector<8x512xf32>
    %904 = arith.mulf %902, %902 : vector<8x512xf32>
    %905 = arith.addf %903, %904 : vector<8x512xf32>
    %cst_185 = arith.constant 0.000000e+00 : f32
    %906 = vector.broadcast %cst_185 : f32 to vector<8x512xf32>
    %907 = arith.subf %906, %905 : vector<8x512xf32>
    %908 = math.exp %907 : vector<8x512xf32>
    %909 = vector.broadcast %894 : vector<8x1xf32> to vector<8x512xf32>
    %910 = arith.cmpf ole, %905, %909 : vector<8x512xf32>
    %cst_186 = arith.constant 0.000000e+00 : f32
    %911 = vector.broadcast %cst_186 : f32 to vector<8x512xf32>
    %912 = arith.select %910, %908, %911 : vector<8x512xi1>, vector<8x512xf32>
    %913 = vector.broadcast %896 : vector<8x1xf32> to vector<8x512xf32>
    %914 = arith.mulf %912, %913 : vector<8x512xf32>
    %915 = arith.addf %886, %914 : vector<8x512xf32>
    %916 = vector.broadcast %895 : vector<8x1xf32> to vector<8x512xf32>
    %917 = arith.mulf %912, %916 : vector<8x512xf32>
    %918 = arith.addf %889, %917 : vector<8x512xf32>
    %c3_187 = arith.constant 3 : index
    %c48_188 = arith.constant 48 : index
    %c0_189 = arith.constant 0 : index
    %919 = vector.load %arg3[%c3_187, %c48_188, %c0_189] : memref<8x64x8xf32, #tpu.memory_space<vmem>>, vector<1x8x8xf32>
    %920 = vector.shape_cast %919 : vector<1x8x8xf32> to vector<8x8xf32>
    %921 = vector.extract_strided_slice %920 {offsets = [0, 0], sizes = [8, 1], strides = [1, 1]} : vector<8x8xf32> to vector<8x1xf32>
    %922 = vector.extract_strided_slice %920 {offsets = [0, 1], sizes = [8, 1], strides = [1, 1]} : vector<8x8xf32> to vector<8x1xf32>
    %923 = vector.extract_strided_slice %920 {offsets = [0, 2], sizes = [8, 1], strides = [1, 1]} : vector<8x8xf32> to vector<8x1xf32>
    %924 = vector.extract_strided_slice %920 {offsets = [0, 3], sizes = [8, 1], strides = [1, 1]} : vector<8x8xf32> to vector<8x1xf32>
    %925 = vector.extract_strided_slice %920 {offsets = [0, 4], sizes = [8, 1], strides = [1, 1]} : vector<8x8xf32> to vector<8x1xf32>
    %926 = vector.broadcast %3 : vector<1x512xf32> to vector<8x512xf32>
    %927 = vector.broadcast %921 : vector<8x1xf32> to vector<8x512xf32>
    %928 = arith.subf %926, %927 : vector<8x512xf32>
    %929 = vector.broadcast %4 : vector<1x512xf32> to vector<8x512xf32>
    %930 = vector.broadcast %922 : vector<8x1xf32> to vector<8x512xf32>
    %931 = arith.subf %929, %930 : vector<8x512xf32>
    %932 = arith.mulf %928, %928 : vector<8x512xf32>
    %933 = arith.mulf %931, %931 : vector<8x512xf32>
    %934 = arith.addf %932, %933 : vector<8x512xf32>
    %cst_190 = arith.constant 0.000000e+00 : f32
    %935 = vector.broadcast %cst_190 : f32 to vector<8x512xf32>
    %936 = arith.subf %935, %934 : vector<8x512xf32>
    %937 = math.exp %936 : vector<8x512xf32>
    %938 = vector.broadcast %923 : vector<8x1xf32> to vector<8x512xf32>
    %939 = arith.cmpf ole, %934, %938 : vector<8x512xf32>
    %cst_191 = arith.constant 0.000000e+00 : f32
    %940 = vector.broadcast %cst_191 : f32 to vector<8x512xf32>
    %941 = arith.select %939, %937, %940 : vector<8x512xi1>, vector<8x512xf32>
    %942 = vector.broadcast %925 : vector<8x1xf32> to vector<8x512xf32>
    %943 = arith.mulf %941, %942 : vector<8x512xf32>
    %944 = arith.addf %915, %943 : vector<8x512xf32>
    %945 = vector.broadcast %924 : vector<8x1xf32> to vector<8x512xf32>
    %946 = arith.mulf %941, %945 : vector<8x512xf32>
    %947 = arith.addf %918, %946 : vector<8x512xf32>
    %c3_192 = arith.constant 3 : index
    %c56_193 = arith.constant 56 : index
    %c0_194 = arith.constant 0 : index
    %948 = vector.load %arg3[%c3_192, %c56_193, %c0_194] : memref<8x64x8xf32, #tpu.memory_space<vmem>>, vector<1x8x8xf32>
    %949 = vector.shape_cast %948 : vector<1x8x8xf32> to vector<8x8xf32>
    %950 = vector.extract_strided_slice %949 {offsets = [0, 0], sizes = [8, 1], strides = [1, 1]} : vector<8x8xf32> to vector<8x1xf32>
    %951 = vector.extract_strided_slice %949 {offsets = [0, 1], sizes = [8, 1], strides = [1, 1]} : vector<8x8xf32> to vector<8x1xf32>
    %952 = vector.extract_strided_slice %949 {offsets = [0, 2], sizes = [8, 1], strides = [1, 1]} : vector<8x8xf32> to vector<8x1xf32>
    %953 = vector.extract_strided_slice %949 {offsets = [0, 3], sizes = [8, 1], strides = [1, 1]} : vector<8x8xf32> to vector<8x1xf32>
    %954 = vector.extract_strided_slice %949 {offsets = [0, 4], sizes = [8, 1], strides = [1, 1]} : vector<8x8xf32> to vector<8x1xf32>
    %955 = vector.broadcast %3 : vector<1x512xf32> to vector<8x512xf32>
    %956 = vector.broadcast %950 : vector<8x1xf32> to vector<8x512xf32>
    %957 = arith.subf %955, %956 : vector<8x512xf32>
    %958 = vector.broadcast %4 : vector<1x512xf32> to vector<8x512xf32>
    %959 = vector.broadcast %951 : vector<8x1xf32> to vector<8x512xf32>
    %960 = arith.subf %958, %959 : vector<8x512xf32>
    %961 = arith.mulf %957, %957 : vector<8x512xf32>
    %962 = arith.mulf %960, %960 : vector<8x512xf32>
    %963 = arith.addf %961, %962 : vector<8x512xf32>
    %cst_195 = arith.constant 0.000000e+00 : f32
    %964 = vector.broadcast %cst_195 : f32 to vector<8x512xf32>
    %965 = arith.subf %964, %963 : vector<8x512xf32>
    %966 = math.exp %965 : vector<8x512xf32>
    %967 = vector.broadcast %952 : vector<8x1xf32> to vector<8x512xf32>
    %968 = arith.cmpf ole, %963, %967 : vector<8x512xf32>
    %cst_196 = arith.constant 0.000000e+00 : f32
    %969 = vector.broadcast %cst_196 : f32 to vector<8x512xf32>
    %970 = arith.select %968, %966, %969 : vector<8x512xi1>, vector<8x512xf32>
    %971 = vector.broadcast %954 : vector<8x1xf32> to vector<8x512xf32>
    %972 = arith.mulf %970, %971 : vector<8x512xf32>
    %973 = arith.addf %944, %972 : vector<8x512xf32>
    %974 = vector.broadcast %953 : vector<8x1xf32> to vector<8x512xf32>
    %975 = arith.mulf %970, %974 : vector<8x512xf32>
    %976 = arith.addf %947, %975 : vector<8x512xf32>
    %c3_197 = arith.constant 3 : index
    %c0_198 = arith.constant 0 : index
    %c0_199 = arith.constant 0 : index
    %977 = vector.load %arg6[%c3_197, %c0_198, %c0_199] : memref<8x8x512xf32, #tpu.memory_space<vmem>>, vector<1x8x512xf32>
    %978 = vector.shape_cast %977 : vector<1x8x512xf32> to vector<8x512xf32>
    %979 = arith.addf %978, %973 : vector<8x512xf32>
    %c3_200 = arith.constant 3 : index
    %c0_201 = arith.constant 0 : index
    %c0_202 = arith.constant 0 : index
    %980 = vector.load %arg6[%c3_200, %c0_201, %c0_202] : memref<8x8x512xf32, #tpu.memory_space<vmem>>, vector<1x8x512xf32>
    %981 = vector.shape_cast %980 : vector<1x8x512xf32> to vector<8x512xf32>
    %982 = vector.shape_cast %979 : vector<8x512xf32> to vector<1x8x512xf32>
    tpu.vector_store %arg6[%c3_200, %c0_201, %c0_202], %982 {strides = array<i32>} : memref<8x8x512xf32, #tpu.memory_space<vmem>>, vector<1x8x512xf32>,
    %c3_203 = arith.constant 3 : index
    %c0_204 = arith.constant 0 : index
    %c0_205 = arith.constant 0 : index
    %983 = vector.load %arg7[%c3_203, %c0_204, %c0_205] : memref<8x8x512xf32, #tpu.memory_space<vmem>>, vector<1x8x512xf32>
    %984 = vector.shape_cast %983 : vector<1x8x512xf32> to vector<8x512xf32>
    %985 = arith.addf %984, %976 : vector<8x512xf32>
    %c3_206 = arith.constant 3 : index
    %c0_207 = arith.constant 0 : index
    %c0_208 = arith.constant 0 : index
    %986 = vector.load %arg7[%c3_206, %c0_207, %c0_208] : memref<8x8x512xf32, #tpu.memory_space<vmem>>, vector<1x8x512xf32>
    %987 = vector.shape_cast %986 : vector<1x8x512xf32> to vector<8x512xf32>
    %988 = vector.shape_cast %985 : vector<8x512xf32> to vector<1x8x512xf32>
    tpu.vector_store %arg7[%c3_206, %c0_207, %c0_208], %988 {strides = array<i32>} : memref<8x8x512xf32, #tpu.memory_space<vmem>>, vector<1x8x512xf32>,
    %cst_209 = arith.constant 0.000000e+00 : f32
    %989 = vector.broadcast %cst_209 : f32 to vector<8x512xf32>
    %cst_210 = arith.constant 0.000000e+00 : f32
    %990 = vector.broadcast %cst_210 : f32 to vector<8x512xf32>
    %c4 = arith.constant 4 : index
    %c0_211 = arith.constant 0 : index
    %c0_212 = arith.constant 0 : index
    %991 = vector.load %arg3[%c4, %c0_211, %c0_212] : memref<8x64x8xf32, #tpu.memory_space<vmem>>, vector<1x8x8xf32>
    %992 = vector.shape_cast %991 : vector<1x8x8xf32> to vector<8x8xf32>
    %993 = vector.extract_strided_slice %992 {offsets = [0, 0], sizes = [8, 1], strides = [1, 1]} : vector<8x8xf32> to vector<8x1xf32>
    %994 = vector.extract_strided_slice %992 {offsets = [0, 1], sizes = [8, 1], strides = [1, 1]} : vector<8x8xf32> to vector<8x1xf32>
    %995 = vector.extract_strided_slice %992 {offsets = [0, 2], sizes = [8, 1], strides = [1, 1]} : vector<8x8xf32> to vector<8x1xf32>
    %996 = vector.extract_strided_slice %992 {offsets = [0, 3], sizes = [8, 1], strides = [1, 1]} : vector<8x8xf32> to vector<8x1xf32>
    %997 = vector.extract_strided_slice %992 {offsets = [0, 4], sizes = [8, 1], strides = [1, 1]} : vector<8x8xf32> to vector<8x1xf32>
    %998 = vector.broadcast %3 : vector<1x512xf32> to vector<8x512xf32>
    %999 = vector.broadcast %993 : vector<8x1xf32> to vector<8x512xf32>
    %1000 = arith.subf %998, %999 : vector<8x512xf32>
    %1001 = vector.broadcast %4 : vector<1x512xf32> to vector<8x512xf32>
    %1002 = vector.broadcast %994 : vector<8x1xf32> to vector<8x512xf32>
    %1003 = arith.subf %1001, %1002 : vector<8x512xf32>
    %1004 = arith.mulf %1000, %1000 : vector<8x512xf32>
    %1005 = arith.mulf %1003, %1003 : vector<8x512xf32>
    %1006 = arith.addf %1004, %1005 : vector<8x512xf32>
    %cst_213 = arith.constant 0.000000e+00 : f32
    %1007 = vector.broadcast %cst_213 : f32 to vector<8x512xf32>
    %1008 = arith.subf %1007, %1006 : vector<8x512xf32>
    %1009 = math.exp %1008 : vector<8x512xf32>
    %1010 = vector.broadcast %995 : vector<8x1xf32> to vector<8x512xf32>
    %1011 = arith.cmpf ole, %1006, %1010 : vector<8x512xf32>
    %cst_214 = arith.constant 0.000000e+00 : f32
    %1012 = vector.broadcast %cst_214 : f32 to vector<8x512xf32>
    %1013 = arith.select %1011, %1009, %1012 : vector<8x512xi1>, vector<8x512xf32>
    %1014 = vector.broadcast %997 : vector<8x1xf32> to vector<8x512xf32>
    %1015 = arith.mulf %1013, %1014 : vector<8x512xf32>
    %1016 = arith.addf %989, %1015 : vector<8x512xf32>
    %1017 = vector.broadcast %996 : vector<8x1xf32> to vector<8x512xf32>
    %1018 = arith.mulf %1013, %1017 : vector<8x512xf32>
    %1019 = arith.addf %990, %1018 : vector<8x512xf32>
    %c4_215 = arith.constant 4 : index
    %c8_216 = arith.constant 8 : index
    %c0_217 = arith.constant 0 : index
    %1020 = vector.load %arg3[%c4_215, %c8_216, %c0_217] : memref<8x64x8xf32, #tpu.memory_space<vmem>>, vector<1x8x8xf32>
    %1021 = vector.shape_cast %1020 : vector<1x8x8xf32> to vector<8x8xf32>
    %1022 = vector.extract_strided_slice %1021 {offsets = [0, 0], sizes = [8, 1], strides = [1, 1]} : vector<8x8xf32> to vector<8x1xf32>
    %1023 = vector.extract_strided_slice %1021 {offsets = [0, 1], sizes = [8, 1], strides = [1, 1]} : vector<8x8xf32> to vector<8x1xf32>
    %1024 = vector.extract_strided_slice %1021 {offsets = [0, 2], sizes = [8, 1], strides = [1, 1]} : vector<8x8xf32> to vector<8x1xf32>
    %1025 = vector.extract_strided_slice %1021 {offsets = [0, 3], sizes = [8, 1], strides = [1, 1]} : vector<8x8xf32> to vector<8x1xf32>
    %1026 = vector.extract_strided_slice %1021 {offsets = [0, 4], sizes = [8, 1], strides = [1, 1]} : vector<8x8xf32> to vector<8x1xf32>
    %1027 = vector.broadcast %3 : vector<1x512xf32> to vector<8x512xf32>
    %1028 = vector.broadcast %1022 : vector<8x1xf32> to vector<8x512xf32>
    %1029 = arith.subf %1027, %1028 : vector<8x512xf32>
    %1030 = vector.broadcast %4 : vector<1x512xf32> to vector<8x512xf32>
    %1031 = vector.broadcast %1023 : vector<8x1xf32> to vector<8x512xf32>
    %1032 = arith.subf %1030, %1031 : vector<8x512xf32>
    %1033 = arith.mulf %1029, %1029 : vector<8x512xf32>
    %1034 = arith.mulf %1032, %1032 : vector<8x512xf32>
    %1035 = arith.addf %1033, %1034 : vector<8x512xf32>
    %cst_218 = arith.constant 0.000000e+00 : f32
    %1036 = vector.broadcast %cst_218 : f32 to vector<8x512xf32>
    %1037 = arith.subf %1036, %1035 : vector<8x512xf32>
    %1038 = math.exp %1037 : vector<8x512xf32>
    %1039 = vector.broadcast %1024 : vector<8x1xf32> to vector<8x512xf32>
    %1040 = arith.cmpf ole, %1035, %1039 : vector<8x512xf32>
    %cst_219 = arith.constant 0.000000e+00 : f32
    %1041 = vector.broadcast %cst_219 : f32 to vector<8x512xf32>
    %1042 = arith.select %1040, %1038, %1041 : vector<8x512xi1>, vector<8x512xf32>
    %1043 = vector.broadcast %1026 : vector<8x1xf32> to vector<8x512xf32>
    %1044 = arith.mulf %1042, %1043 : vector<8x512xf32>
    %1045 = arith.addf %1016, %1044 : vector<8x512xf32>
    %1046 = vector.broadcast %1025 : vector<8x1xf32> to vector<8x512xf32>
    %1047 = arith.mulf %1042, %1046 : vector<8x512xf32>
    %1048 = arith.addf %1019, %1047 : vector<8x512xf32>
    %c4_220 = arith.constant 4 : index
    %c16_221 = arith.constant 16 : index
    %c0_222 = arith.constant 0 : index
    %1049 = vector.load %arg3[%c4_220, %c16_221, %c0_222] : memref<8x64x8xf32, #tpu.memory_space<vmem>>, vector<1x8x8xf32>
    %1050 = vector.shape_cast %1049 : vector<1x8x8xf32> to vector<8x8xf32>
    %1051 = vector.extract_strided_slice %1050 {offsets = [0, 0], sizes = [8, 1], strides = [1, 1]} : vector<8x8xf32> to vector<8x1xf32>
    %1052 = vector.extract_strided_slice %1050 {offsets = [0, 1], sizes = [8, 1], strides = [1, 1]} : vector<8x8xf32> to vector<8x1xf32>
    %1053 = vector.extract_strided_slice %1050 {offsets = [0, 2], sizes = [8, 1], strides = [1, 1]} : vector<8x8xf32> to vector<8x1xf32>
    %1054 = vector.extract_strided_slice %1050 {offsets = [0, 3], sizes = [8, 1], strides = [1, 1]} : vector<8x8xf32> to vector<8x1xf32>
    %1055 = vector.extract_strided_slice %1050 {offsets = [0, 4], sizes = [8, 1], strides = [1, 1]} : vector<8x8xf32> to vector<8x1xf32>
    %1056 = vector.broadcast %3 : vector<1x512xf32> to vector<8x512xf32>
    %1057 = vector.broadcast %1051 : vector<8x1xf32> to vector<8x512xf32>
    %1058 = arith.subf %1056, %1057 : vector<8x512xf32>
    %1059 = vector.broadcast %4 : vector<1x512xf32> to vector<8x512xf32>
    %1060 = vector.broadcast %1052 : vector<8x1xf32> to vector<8x512xf32>
    %1061 = arith.subf %1059, %1060 : vector<8x512xf32>
    %1062 = arith.mulf %1058, %1058 : vector<8x512xf32>
    %1063 = arith.mulf %1061, %1061 : vector<8x512xf32>
    %1064 = arith.addf %1062, %1063 : vector<8x512xf32>
    %cst_223 = arith.constant 0.000000e+00 : f32
    %1065 = vector.broadcast %cst_223 : f32 to vector<8x512xf32>
    %1066 = arith.subf %1065, %1064 : vector<8x512xf32>
    %1067 = math.exp %1066 : vector<8x512xf32>
    %1068 = vector.broadcast %1053 : vector<8x1xf32> to vector<8x512xf32>
    %1069 = arith.cmpf ole, %1064, %1068 : vector<8x512xf32>
    %cst_224 = arith.constant 0.000000e+00 : f32
    %1070 = vector.broadcast %cst_224 : f32 to vector<8x512xf32>
    %1071 = arith.select %1069, %1067, %1070 : vector<8x512xi1>, vector<8x512xf32>
    %1072 = vector.broadcast %1055 : vector<8x1xf32> to vector<8x512xf32>
    %1073 = arith.mulf %1071, %1072 : vector<8x512xf32>
    %1074 = arith.addf %1045, %1073 : vector<8x512xf32>
    %1075 = vector.broadcast %1054 : vector<8x1xf32> to vector<8x512xf32>
    %1076 = arith.mulf %1071, %1075 : vector<8x512xf32>
    %1077 = arith.addf %1048, %1076 : vector<8x512xf32>
    %c4_225 = arith.constant 4 : index
    %c24_226 = arith.constant 24 : index
    %c0_227 = arith.constant 0 : index
    %1078 = vector.load %arg3[%c4_225, %c24_226, %c0_227] : memref<8x64x8xf32, #tpu.memory_space<vmem>>, vector<1x8x8xf32>
    %1079 = vector.shape_cast %1078 : vector<1x8x8xf32> to vector<8x8xf32>
    %1080 = vector.extract_strided_slice %1079 {offsets = [0, 0], sizes = [8, 1], strides = [1, 1]} : vector<8x8xf32> to vector<8x1xf32>
    %1081 = vector.extract_strided_slice %1079 {offsets = [0, 1], sizes = [8, 1], strides = [1, 1]} : vector<8x8xf32> to vector<8x1xf32>
    %1082 = vector.extract_strided_slice %1079 {offsets = [0, 2], sizes = [8, 1], strides = [1, 1]} : vector<8x8xf32> to vector<8x1xf32>
    %1083 = vector.extract_strided_slice %1079 {offsets = [0, 3], sizes = [8, 1], strides = [1, 1]} : vector<8x8xf32> to vector<8x1xf32>
    %1084 = vector.extract_strided_slice %1079 {offsets = [0, 4], sizes = [8, 1], strides = [1, 1]} : vector<8x8xf32> to vector<8x1xf32>
    %1085 = vector.broadcast %3 : vector<1x512xf32> to vector<8x512xf32>
    %1086 = vector.broadcast %1080 : vector<8x1xf32> to vector<8x512xf32>
    %1087 = arith.subf %1085, %1086 : vector<8x512xf32>
    %1088 = vector.broadcast %4 : vector<1x512xf32> to vector<8x512xf32>
    %1089 = vector.broadcast %1081 : vector<8x1xf32> to vector<8x512xf32>
    %1090 = arith.subf %1088, %1089 : vector<8x512xf32>
    %1091 = arith.mulf %1087, %1087 : vector<8x512xf32>
    %1092 = arith.mulf %1090, %1090 : vector<8x512xf32>
    %1093 = arith.addf %1091, %1092 : vector<8x512xf32>
    %cst_228 = arith.constant 0.000000e+00 : f32
    %1094 = vector.broadcast %cst_228 : f32 to vector<8x512xf32>
    %1095 = arith.subf %1094, %1093 : vector<8x512xf32>
    %1096 = math.exp %1095 : vector<8x512xf32>
    %1097 = vector.broadcast %1082 : vector<8x1xf32> to vector<8x512xf32>
    %1098 = arith.cmpf ole, %1093, %1097 : vector<8x512xf32>
    %cst_229 = arith.constant 0.000000e+00 : f32
    %1099 = vector.broadcast %cst_229 : f32 to vector<8x512xf32>
    %1100 = arith.select %1098, %1096, %1099 : vector<8x512xi1>, vector<8x512xf32>
    %1101 = vector.broadcast %1084 : vector<8x1xf32> to vector<8x512xf32>
    %1102 = arith.mulf %1100, %1101 : vector<8x512xf32>
    %1103 = arith.addf %1074, %1102 : vector<8x512xf32>
    %1104 = vector.broadcast %1083 : vector<8x1xf32> to vector<8x512xf32>
    %1105 = arith.mulf %1100, %1104 : vector<8x512xf32>
    %1106 = arith.addf %1077, %1105 : vector<8x512xf32>
    %c4_230 = arith.constant 4 : index
    %c32_231 = arith.constant 32 : index
    %c0_232 = arith.constant 0 : index
    %1107 = vector.load %arg3[%c4_230, %c32_231, %c0_232] : memref<8x64x8xf32, #tpu.memory_space<vmem>>, vector<1x8x8xf32>
    %1108 = vector.shape_cast %1107 : vector<1x8x8xf32> to vector<8x8xf32>
    %1109 = vector.extract_strided_slice %1108 {offsets = [0, 0], sizes = [8, 1], strides = [1, 1]} : vector<8x8xf32> to vector<8x1xf32>
    %1110 = vector.extract_strided_slice %1108 {offsets = [0, 1], sizes = [8, 1], strides = [1, 1]} : vector<8x8xf32> to vector<8x1xf32>
    %1111 = vector.extract_strided_slice %1108 {offsets = [0, 2], sizes = [8, 1], strides = [1, 1]} : vector<8x8xf32> to vector<8x1xf32>
    %1112 = vector.extract_strided_slice %1108 {offsets = [0, 3], sizes = [8, 1], strides = [1, 1]} : vector<8x8xf32> to vector<8x1xf32>
    %1113 = vector.extract_strided_slice %1108 {offsets = [0, 4], sizes = [8, 1], strides = [1, 1]} : vector<8x8xf32> to vector<8x1xf32>
    %1114 = vector.broadcast %3 : vector<1x512xf32> to vector<8x512xf32>
    %1115 = vector.broadcast %1109 : vector<8x1xf32> to vector<8x512xf32>
    %1116 = arith.subf %1114, %1115 : vector<8x512xf32>
    %1117 = vector.broadcast %4 : vector<1x512xf32> to vector<8x512xf32>
    %1118 = vector.broadcast %1110 : vector<8x1xf32> to vector<8x512xf32>
    %1119 = arith.subf %1117, %1118 : vector<8x512xf32>
    %1120 = arith.mulf %1116, %1116 : vector<8x512xf32>
    %1121 = arith.mulf %1119, %1119 : vector<8x512xf32>
    %1122 = arith.addf %1120, %1121 : vector<8x512xf32>
    %cst_233 = arith.constant 0.000000e+00 : f32
    %1123 = vector.broadcast %cst_233 : f32 to vector<8x512xf32>
    %1124 = arith.subf %1123, %1122 : vector<8x512xf32>
    %1125 = math.exp %1124 : vector<8x512xf32>
    %1126 = vector.broadcast %1111 : vector<8x1xf32> to vector<8x512xf32>
    %1127 = arith.cmpf ole, %1122, %1126 : vector<8x512xf32>
    %cst_234 = arith.constant 0.000000e+00 : f32
    %1128 = vector.broadcast %cst_234 : f32 to vector<8x512xf32>
    %1129 = arith.select %1127, %1125, %1128 : vector<8x512xi1>, vector<8x512xf32>
    %1130 = vector.broadcast %1113 : vector<8x1xf32> to vector<8x512xf32>
    %1131 = arith.mulf %1129, %1130 : vector<8x512xf32>
    %1132 = arith.addf %1103, %1131 : vector<8x512xf32>
    %1133 = vector.broadcast %1112 : vector<8x1xf32> to vector<8x512xf32>
    %1134 = arith.mulf %1129, %1133 : vector<8x512xf32>
    %1135 = arith.addf %1106, %1134 : vector<8x512xf32>
    %c4_235 = arith.constant 4 : index
    %c40_236 = arith.constant 40 : index
    %c0_237 = arith.constant 0 : index
    %1136 = vector.load %arg3[%c4_235, %c40_236, %c0_237] : memref<8x64x8xf32, #tpu.memory_space<vmem>>, vector<1x8x8xf32>
    %1137 = vector.shape_cast %1136 : vector<1x8x8xf32> to vector<8x8xf32>
    %1138 = vector.extract_strided_slice %1137 {offsets = [0, 0], sizes = [8, 1], strides = [1, 1]} : vector<8x8xf32> to vector<8x1xf32>
    %1139 = vector.extract_strided_slice %1137 {offsets = [0, 1], sizes = [8, 1], strides = [1, 1]} : vector<8x8xf32> to vector<8x1xf32>
    %1140 = vector.extract_strided_slice %1137 {offsets = [0, 2], sizes = [8, 1], strides = [1, 1]} : vector<8x8xf32> to vector<8x1xf32>
    %1141 = vector.extract_strided_slice %1137 {offsets = [0, 3], sizes = [8, 1], strides = [1, 1]} : vector<8x8xf32> to vector<8x1xf32>
    %1142 = vector.extract_strided_slice %1137 {offsets = [0, 4], sizes = [8, 1], strides = [1, 1]} : vector<8x8xf32> to vector<8x1xf32>
    %1143 = vector.broadcast %3 : vector<1x512xf32> to vector<8x512xf32>
    %1144 = vector.broadcast %1138 : vector<8x1xf32> to vector<8x512xf32>
    %1145 = arith.subf %1143, %1144 : vector<8x512xf32>
    %1146 = vector.broadcast %4 : vector<1x512xf32> to vector<8x512xf32>
    %1147 = vector.broadcast %1139 : vector<8x1xf32> to vector<8x512xf32>
    %1148 = arith.subf %1146, %1147 : vector<8x512xf32>
    %1149 = arith.mulf %1145, %1145 : vector<8x512xf32>
    %1150 = arith.mulf %1148, %1148 : vector<8x512xf32>
    %1151 = arith.addf %1149, %1150 : vector<8x512xf32>
    %cst_238 = arith.constant 0.000000e+00 : f32
    %1152 = vector.broadcast %cst_238 : f32 to vector<8x512xf32>
    %1153 = arith.subf %1152, %1151 : vector<8x512xf32>
    %1154 = math.exp %1153 : vector<8x512xf32>
    %1155 = vector.broadcast %1140 : vector<8x1xf32> to vector<8x512xf32>
    %1156 = arith.cmpf ole, %1151, %1155 : vector<8x512xf32>
    %cst_239 = arith.constant 0.000000e+00 : f32
    %1157 = vector.broadcast %cst_239 : f32 to vector<8x512xf32>
    %1158 = arith.select %1156, %1154, %1157 : vector<8x512xi1>, vector<8x512xf32>
    %1159 = vector.broadcast %1142 : vector<8x1xf32> to vector<8x512xf32>
    %1160 = arith.mulf %1158, %1159 : vector<8x512xf32>
    %1161 = arith.addf %1132, %1160 : vector<8x512xf32>
    %1162 = vector.broadcast %1141 : vector<8x1xf32> to vector<8x512xf32>
    %1163 = arith.mulf %1158, %1162 : vector<8x512xf32>
    %1164 = arith.addf %1135, %1163 : vector<8x512xf32>
    %c4_240 = arith.constant 4 : index
    %c48_241 = arith.constant 48 : index
    %c0_242 = arith.constant 0 : index
    %1165 = vector.load %arg3[%c4_240, %c48_241, %c0_242] : memref<8x64x8xf32, #tpu.memory_space<vmem>>, vector<1x8x8xf32>
    %1166 = vector.shape_cast %1165 : vector<1x8x8xf32> to vector<8x8xf32>
    %1167 = vector.extract_strided_slice %1166 {offsets = [0, 0], sizes = [8, 1], strides = [1, 1]} : vector<8x8xf32> to vector<8x1xf32>
    %1168 = vector.extract_strided_slice %1166 {offsets = [0, 1], sizes = [8, 1], strides = [1, 1]} : vector<8x8xf32> to vector<8x1xf32>
    %1169 = vector.extract_strided_slice %1166 {offsets = [0, 2], sizes = [8, 1], strides = [1, 1]} : vector<8x8xf32> to vector<8x1xf32>
    %1170 = vector.extract_strided_slice %1166 {offsets = [0, 3], sizes = [8, 1], strides = [1, 1]} : vector<8x8xf32> to vector<8x1xf32>
    %1171 = vector.extract_strided_slice %1166 {offsets = [0, 4], sizes = [8, 1], strides = [1, 1]} : vector<8x8xf32> to vector<8x1xf32>
    %1172 = vector.broadcast %3 : vector<1x512xf32> to vector<8x512xf32>
    %1173 = vector.broadcast %1167 : vector<8x1xf32> to vector<8x512xf32>
    %1174 = arith.subf %1172, %1173 : vector<8x512xf32>
    %1175 = vector.broadcast %4 : vector<1x512xf32> to vector<8x512xf32>
    %1176 = vector.broadcast %1168 : vector<8x1xf32> to vector<8x512xf32>
    %1177 = arith.subf %1175, %1176 : vector<8x512xf32>
    %1178 = arith.mulf %1174, %1174 : vector<8x512xf32>
    %1179 = arith.mulf %1177, %1177 : vector<8x512xf32>
    %1180 = arith.addf %1178, %1179 : vector<8x512xf32>
    %cst_243 = arith.constant 0.000000e+00 : f32
    %1181 = vector.broadcast %cst_243 : f32 to vector<8x512xf32>
    %1182 = arith.subf %1181, %1180 : vector<8x512xf32>
    %1183 = math.exp %1182 : vector<8x512xf32>
    %1184 = vector.broadcast %1169 : vector<8x1xf32> to vector<8x512xf32>
    %1185 = arith.cmpf ole, %1180, %1184 : vector<8x512xf32>
    %cst_244 = arith.constant 0.000000e+00 : f32
    %1186 = vector.broadcast %cst_244 : f32 to vector<8x512xf32>
    %1187 = arith.select %1185, %1183, %1186 : vector<8x512xi1>, vector<8x512xf32>
    %1188 = vector.broadcast %1171 : vector<8x1xf32> to vector<8x512xf32>
    %1189 = arith.mulf %1187, %1188 : vector<8x512xf32>
    %1190 = arith.addf %1161, %1189 : vector<8x512xf32>
    %1191 = vector.broadcast %1170 : vector<8x1xf32> to vector<8x512xf32>
    %1192 = arith.mulf %1187, %1191 : vector<8x512xf32>
    %1193 = arith.addf %1164, %1192 : vector<8x512xf32>
    %c4_245 = arith.constant 4 : index
    %c56_246 = arith.constant 56 : index
    %c0_247 = arith.constant 0 : index
    %1194 = vector.load %arg3[%c4_245, %c56_246, %c0_247] : memref<8x64x8xf32, #tpu.memory_space<vmem>>, vector<1x8x8xf32>
    %1195 = vector.shape_cast %1194 : vector<1x8x8xf32> to vector<8x8xf32>
    %1196 = vector.extract_strided_slice %1195 {offsets = [0, 0], sizes = [8, 1], strides = [1, 1]} : vector<8x8xf32> to vector<8x1xf32>
    %1197 = vector.extract_strided_slice %1195 {offsets = [0, 1], sizes = [8, 1], strides = [1, 1]} : vector<8x8xf32> to vector<8x1xf32>
    %1198 = vector.extract_strided_slice %1195 {offsets = [0, 2], sizes = [8, 1], strides = [1, 1]} : vector<8x8xf32> to vector<8x1xf32>
    %1199 = vector.extract_strided_slice %1195 {offsets = [0, 3], sizes = [8, 1], strides = [1, 1]} : vector<8x8xf32> to vector<8x1xf32>
    %1200 = vector.extract_strided_slice %1195 {offsets = [0, 4], sizes = [8, 1], strides = [1, 1]} : vector<8x8xf32> to vector<8x1xf32>
    %1201 = vector.broadcast %3 : vector<1x512xf32> to vector<8x512xf32>
    %1202 = vector.broadcast %1196 : vector<8x1xf32> to vector<8x512xf32>
    %1203 = arith.subf %1201, %1202 : vector<8x512xf32>
    %1204 = vector.broadcast %4 : vector<1x512xf32> to vector<8x512xf32>
    %1205 = vector.broadcast %1197 : vector<8x1xf32> to vector<8x512xf32>
    %1206 = arith.subf %1204, %1205 : vector<8x512xf32>
    %1207 = arith.mulf %1203, %1203 : vector<8x512xf32>
    %1208 = arith.mulf %1206, %1206 : vector<8x512xf32>
    %1209 = arith.addf %1207, %1208 : vector<8x512xf32>
    %cst_248 = arith.constant 0.000000e+00 : f32
    %1210 = vector.broadcast %cst_248 : f32 to vector<8x512xf32>
    %1211 = arith.subf %1210, %1209 : vector<8x512xf32>
    %1212 = math.exp %1211 : vector<8x512xf32>
    %1213 = vector.broadcast %1198 : vector<8x1xf32> to vector<8x512xf32>
    %1214 = arith.cmpf ole, %1209, %1213 : vector<8x512xf32>
    %cst_249 = arith.constant 0.000000e+00 : f32
    %1215 = vector.broadcast %cst_249 : f32 to vector<8x512xf32>
    %1216 = arith.select %1214, %1212, %1215 : vector<8x512xi1>, vector<8x512xf32>
    %1217 = vector.broadcast %1200 : vector<8x1xf32> to vector<8x512xf32>
    %1218 = arith.mulf %1216, %1217 : vector<8x512xf32>
    %1219 = arith.addf %1190, %1218 : vector<8x512xf32>
    %1220 = vector.broadcast %1199 : vector<8x1xf32> to vector<8x512xf32>
    %1221 = arith.mulf %1216, %1220 : vector<8x512xf32>
    %1222 = arith.addf %1193, %1221 : vector<8x512xf32>
    %c4_250 = arith.constant 4 : index
    %c0_251 = arith.constant 0 : index
    %c0_252 = arith.constant 0 : index
    %1223 = vector.load %arg6[%c4_250, %c0_251, %c0_252] : memref<8x8x512xf32, #tpu.memory_space<vmem>>, vector<1x8x512xf32>
    %1224 = vector.shape_cast %1223 : vector<1x8x512xf32> to vector<8x512xf32>
    %1225 = arith.addf %1224, %1219 : vector<8x512xf32>
    %c4_253 = arith.constant 4 : index
    %c0_254 = arith.constant 0 : index
    %c0_255 = arith.constant 0 : index
    %1226 = vector.load %arg6[%c4_253, %c0_254, %c0_255] : memref<8x8x512xf32, #tpu.memory_space<vmem>>, vector<1x8x512xf32>
    %1227 = vector.shape_cast %1226 : vector<1x8x512xf32> to vector<8x512xf32>
    %1228 = vector.shape_cast %1225 : vector<8x512xf32> to vector<1x8x512xf32>
    tpu.vector_store %arg6[%c4_253, %c0_254, %c0_255], %1228 {strides = array<i32>} : memref<8x8x512xf32, #tpu.memory_space<vmem>>, vector<1x8x512xf32>,
    %c4_256 = arith.constant 4 : index
    %c0_257 = arith.constant 0 : index
    %c0_258 = arith.constant 0 : index
    %1229 = vector.load %arg7[%c4_256, %c0_257, %c0_258] : memref<8x8x512xf32, #tpu.memory_space<vmem>>, vector<1x8x512xf32>
    %1230 = vector.shape_cast %1229 : vector<1x8x512xf32> to vector<8x512xf32>
    %1231 = arith.addf %1230, %1222 : vector<8x512xf32>
    %c4_259 = arith.constant 4 : index
    %c0_260 = arith.constant 0 : index
    %c0_261 = arith.constant 0 : index
    %1232 = vector.load %arg7[%c4_259, %c0_260, %c0_261] : memref<8x8x512xf32, #tpu.memory_space<vmem>>, vector<1x8x512xf32>
    %1233 = vector.shape_cast %1232 : vector<1x8x512xf32> to vector<8x512xf32>
    %1234 = vector.shape_cast %1231 : vector<8x512xf32> to vector<1x8x512xf32>
    tpu.vector_store %arg7[%c4_259, %c0_260, %c0_261], %1234 {strides = array<i32>} : memref<8x8x512xf32, #tpu.memory_space<vmem>>, vector<1x8x512xf32>,
    %cst_262 = arith.constant 0.000000e+00 : f32
    %1235 = vector.broadcast %cst_262 : f32 to vector<8x512xf32>
    %cst_263 = arith.constant 0.000000e+00 : f32
    %1236 = vector.broadcast %cst_263 : f32 to vector<8x512xf32>
    %c5 = arith.constant 5 : index
    %c0_264 = arith.constant 0 : index
    %c0_265 = arith.constant 0 : index
    %1237 = vector.load %arg3[%c5, %c0_264, %c0_265] : memref<8x64x8xf32, #tpu.memory_space<vmem>>, vector<1x8x8xf32>
    %1238 = vector.shape_cast %1237 : vector<1x8x8xf32> to vector<8x8xf32>
    %1239 = vector.extract_strided_slice %1238 {offsets = [0, 0], sizes = [8, 1], strides = [1, 1]} : vector<8x8xf32> to vector<8x1xf32>
    %1240 = vector.extract_strided_slice %1238 {offsets = [0, 1], sizes = [8, 1], strides = [1, 1]} : vector<8x8xf32> to vector<8x1xf32>
    %1241 = vector.extract_strided_slice %1238 {offsets = [0, 2], sizes = [8, 1], strides = [1, 1]} : vector<8x8xf32> to vector<8x1xf32>
    %1242 = vector.extract_strided_slice %1238 {offsets = [0, 3], sizes = [8, 1], strides = [1, 1]} : vector<8x8xf32> to vector<8x1xf32>
    %1243 = vector.extract_strided_slice %1238 {offsets = [0, 4], sizes = [8, 1], strides = [1, 1]} : vector<8x8xf32> to vector<8x1xf32>
    %1244 = vector.broadcast %3 : vector<1x512xf32> to vector<8x512xf32>
    %1245 = vector.broadcast %1239 : vector<8x1xf32> to vector<8x512xf32>
    %1246 = arith.subf %1244, %1245 : vector<8x512xf32>
    %1247 = vector.broadcast %4 : vector<1x512xf32> to vector<8x512xf32>
    %1248 = vector.broadcast %1240 : vector<8x1xf32> to vector<8x512xf32>
    %1249 = arith.subf %1247, %1248 : vector<8x512xf32>
    %1250 = arith.mulf %1246, %1246 : vector<8x512xf32>
    %1251 = arith.mulf %1249, %1249 : vector<8x512xf32>
    %1252 = arith.addf %1250, %1251 : vector<8x512xf32>
    %cst_266 = arith.constant 0.000000e+00 : f32
    %1253 = vector.broadcast %cst_266 : f32 to vector<8x512xf32>
    %1254 = arith.subf %1253, %1252 : vector<8x512xf32>
    %1255 = math.exp %1254 : vector<8x512xf32>
    %1256 = vector.broadcast %1241 : vector<8x1xf32> to vector<8x512xf32>
    %1257 = arith.cmpf ole, %1252, %1256 : vector<8x512xf32>
    %cst_267 = arith.constant 0.000000e+00 : f32
    %1258 = vector.broadcast %cst_267 : f32 to vector<8x512xf32>
    %1259 = arith.select %1257, %1255, %1258 : vector<8x512xi1>, vector<8x512xf32>
    %1260 = vector.broadcast %1243 : vector<8x1xf32> to vector<8x512xf32>
    %1261 = arith.mulf %1259, %1260 : vector<8x512xf32>
    %1262 = arith.addf %1235, %1261 : vector<8x512xf32>
    %1263 = vector.broadcast %1242 : vector<8x1xf32> to vector<8x512xf32>
    %1264 = arith.mulf %1259, %1263 : vector<8x512xf32>
    %1265 = arith.addf %1236, %1264 : vector<8x512xf32>
    %c5_268 = arith.constant 5 : index
    %c8_269 = arith.constant 8 : index
    %c0_270 = arith.constant 0 : index
    %1266 = vector.load %arg3[%c5_268, %c8_269, %c0_270] : memref<8x64x8xf32, #tpu.memory_space<vmem>>, vector<1x8x8xf32>
    %1267 = vector.shape_cast %1266 : vector<1x8x8xf32> to vector<8x8xf32>
    %1268 = vector.extract_strided_slice %1267 {offsets = [0, 0], sizes = [8, 1], strides = [1, 1]} : vector<8x8xf32> to vector<8x1xf32>
    %1269 = vector.extract_strided_slice %1267 {offsets = [0, 1], sizes = [8, 1], strides = [1, 1]} : vector<8x8xf32> to vector<8x1xf32>
    %1270 = vector.extract_strided_slice %1267 {offsets = [0, 2], sizes = [8, 1], strides = [1, 1]} : vector<8x8xf32> to vector<8x1xf32>
    %1271 = vector.extract_strided_slice %1267 {offsets = [0, 3], sizes = [8, 1], strides = [1, 1]} : vector<8x8xf32> to vector<8x1xf32>
    %1272 = vector.extract_strided_slice %1267 {offsets = [0, 4], sizes = [8, 1], strides = [1, 1]} : vector<8x8xf32> to vector<8x1xf32>
    %1273 = vector.broadcast %3 : vector<1x512xf32> to vector<8x512xf32>
    %1274 = vector.broadcast %1268 : vector<8x1xf32> to vector<8x512xf32>
    %1275 = arith.subf %1273, %1274 : vector<8x512xf32>
    %1276 = vector.broadcast %4 : vector<1x512xf32> to vector<8x512xf32>
    %1277 = vector.broadcast %1269 : vector<8x1xf32> to vector<8x512xf32>
    %1278 = arith.subf %1276, %1277 : vector<8x512xf32>
    %1279 = arith.mulf %1275, %1275 : vector<8x512xf32>
    %1280 = arith.mulf %1278, %1278 : vector<8x512xf32>
    %1281 = arith.addf %1279, %1280 : vector<8x512xf32>
    %cst_271 = arith.constant 0.000000e+00 : f32
    %1282 = vector.broadcast %cst_271 : f32 to vector<8x512xf32>
    %1283 = arith.subf %1282, %1281 : vector<8x512xf32>
    %1284 = math.exp %1283 : vector<8x512xf32>
    %1285 = vector.broadcast %1270 : vector<8x1xf32> to vector<8x512xf32>
    %1286 = arith.cmpf ole, %1281, %1285 : vector<8x512xf32>
    %cst_272 = arith.constant 0.000000e+00 : f32
    %1287 = vector.broadcast %cst_272 : f32 to vector<8x512xf32>
    %1288 = arith.select %1286, %1284, %1287 : vector<8x512xi1>, vector<8x512xf32>
    %1289 = vector.broadcast %1272 : vector<8x1xf32> to vector<8x512xf32>
    %1290 = arith.mulf %1288, %1289 : vector<8x512xf32>
    %1291 = arith.addf %1262, %1290 : vector<8x512xf32>
    %1292 = vector.broadcast %1271 : vector<8x1xf32> to vector<8x512xf32>
    %1293 = arith.mulf %1288, %1292 : vector<8x512xf32>
    %1294 = arith.addf %1265, %1293 : vector<8x512xf32>
    %c5_273 = arith.constant 5 : index
    %c16_274 = arith.constant 16 : index
    %c0_275 = arith.constant 0 : index
    %1295 = vector.load %arg3[%c5_273, %c16_274, %c0_275] : memref<8x64x8xf32, #tpu.memory_space<vmem>>, vector<1x8x8xf32>
    %1296 = vector.shape_cast %1295 : vector<1x8x8xf32> to vector<8x8xf32>
    %1297 = vector.extract_strided_slice %1296 {offsets = [0, 0], sizes = [8, 1], strides = [1, 1]} : vector<8x8xf32> to vector<8x1xf32>
    %1298 = vector.extract_strided_slice %1296 {offsets = [0, 1], sizes = [8, 1], strides = [1, 1]} : vector<8x8xf32> to vector<8x1xf32>
    %1299 = vector.extract_strided_slice %1296 {offsets = [0, 2], sizes = [8, 1], strides = [1, 1]} : vector<8x8xf32> to vector<8x1xf32>
    %1300 = vector.extract_strided_slice %1296 {offsets = [0, 3], sizes = [8, 1], strides = [1, 1]} : vector<8x8xf32> to vector<8x1xf32>
    %1301 = vector.extract_strided_slice %1296 {offsets = [0, 4], sizes = [8, 1], strides = [1, 1]} : vector<8x8xf32> to vector<8x1xf32>
    %1302 = vector.broadcast %3 : vector<1x512xf32> to vector<8x512xf32>
    %1303 = vector.broadcast %1297 : vector<8x1xf32> to vector<8x512xf32>
    %1304 = arith.subf %1302, %1303 : vector<8x512xf32>
    %1305 = vector.broadcast %4 : vector<1x512xf32> to vector<8x512xf32>
    %1306 = vector.broadcast %1298 : vector<8x1xf32> to vector<8x512xf32>
    %1307 = arith.subf %1305, %1306 : vector<8x512xf32>
    %1308 = arith.mulf %1304, %1304 : vector<8x512xf32>
    %1309 = arith.mulf %1307, %1307 : vector<8x512xf32>
    %1310 = arith.addf %1308, %1309 : vector<8x512xf32>
    %cst_276 = arith.constant 0.000000e+00 : f32
    %1311 = vector.broadcast %cst_276 : f32 to vector<8x512xf32>
    %1312 = arith.subf %1311, %1310 : vector<8x512xf32>
    %1313 = math.exp %1312 : vector<8x512xf32>
    %1314 = vector.broadcast %1299 : vector<8x1xf32> to vector<8x512xf32>
    %1315 = arith.cmpf ole, %1310, %1314 : vector<8x512xf32>
    %cst_277 = arith.constant 0.000000e+00 : f32
    %1316 = vector.broadcast %cst_277 : f32 to vector<8x512xf32>
    %1317 = arith.select %1315, %1313, %1316 : vector<8x512xi1>, vector<8x512xf32>
    %1318 = vector.broadcast %1301 : vector<8x1xf32> to vector<8x512xf32>
    %1319 = arith.mulf %1317, %1318 : vector<8x512xf32>
    %1320 = arith.addf %1291, %1319 : vector<8x512xf32>
    %1321 = vector.broadcast %1300 : vector<8x1xf32> to vector<8x512xf32>
    %1322 = arith.mulf %1317, %1321 : vector<8x512xf32>
    %1323 = arith.addf %1294, %1322 : vector<8x512xf32>
    %c5_278 = arith.constant 5 : index
    %c24_279 = arith.constant 24 : index
    %c0_280 = arith.constant 0 : index
    %1324 = vector.load %arg3[%c5_278, %c24_279, %c0_280] : memref<8x64x8xf32, #tpu.memory_space<vmem>>, vector<1x8x8xf32>
    %1325 = vector.shape_cast %1324 : vector<1x8x8xf32> to vector<8x8xf32>
    %1326 = vector.extract_strided_slice %1325 {offsets = [0, 0], sizes = [8, 1], strides = [1, 1]} : vector<8x8xf32> to vector<8x1xf32>
    %1327 = vector.extract_strided_slice %1325 {offsets = [0, 1], sizes = [8, 1], strides = [1, 1]} : vector<8x8xf32> to vector<8x1xf32>
    %1328 = vector.extract_strided_slice %1325 {offsets = [0, 2], sizes = [8, 1], strides = [1, 1]} : vector<8x8xf32> to vector<8x1xf32>
    %1329 = vector.extract_strided_slice %1325 {offsets = [0, 3], sizes = [8, 1], strides = [1, 1]} : vector<8x8xf32> to vector<8x1xf32>
    %1330 = vector.extract_strided_slice %1325 {offsets = [0, 4], sizes = [8, 1], strides = [1, 1]} : vector<8x8xf32> to vector<8x1xf32>
    %1331 = vector.broadcast %3 : vector<1x512xf32> to vector<8x512xf32>
    %1332 = vector.broadcast %1326 : vector<8x1xf32> to vector<8x512xf32>
    %1333 = arith.subf %1331, %1332 : vector<8x512xf32>
    %1334 = vector.broadcast %4 : vector<1x512xf32> to vector<8x512xf32>
    %1335 = vector.broadcast %1327 : vector<8x1xf32> to vector<8x512xf32>
    %1336 = arith.subf %1334, %1335 : vector<8x512xf32>
    %1337 = arith.mulf %1333, %1333 : vector<8x512xf32>
    %1338 = arith.mulf %1336, %1336 : vector<8x512xf32>
    %1339 = arith.addf %1337, %1338 : vector<8x512xf32>
    %cst_281 = arith.constant 0.000000e+00 : f32
    %1340 = vector.broadcast %cst_281 : f32 to vector<8x512xf32>
    %1341 = arith.subf %1340, %1339 : vector<8x512xf32>
    %1342 = math.exp %1341 : vector<8x512xf32>
    %1343 = vector.broadcast %1328 : vector<8x1xf32> to vector<8x512xf32>
    %1344 = arith.cmpf ole, %1339, %1343 : vector<8x512xf32>
    %cst_282 = arith.constant 0.000000e+00 : f32
    %1345 = vector.broadcast %cst_282 : f32 to vector<8x512xf32>
    %1346 = arith.select %1344, %1342, %1345 : vector<8x512xi1>, vector<8x512xf32>
    %1347 = vector.broadcast %1330 : vector<8x1xf32> to vector<8x512xf32>
    %1348 = arith.mulf %1346, %1347 : vector<8x512xf32>
    %1349 = arith.addf %1320, %1348 : vector<8x512xf32>
    %1350 = vector.broadcast %1329 : vector<8x1xf32> to vector<8x512xf32>
    %1351 = arith.mulf %1346, %1350 : vector<8x512xf32>
    %1352 = arith.addf %1323, %1351 : vector<8x512xf32>
    %c5_283 = arith.constant 5 : index
    %c32_284 = arith.constant 32 : index
    %c0_285 = arith.constant 0 : index
    %1353 = vector.load %arg3[%c5_283, %c32_284, %c0_285] : memref<8x64x8xf32, #tpu.memory_space<vmem>>, vector<1x8x8xf32>
    %1354 = vector.shape_cast %1353 : vector<1x8x8xf32> to vector<8x8xf32>
    %1355 = vector.extract_strided_slice %1354 {offsets = [0, 0], sizes = [8, 1], strides = [1, 1]} : vector<8x8xf32> to vector<8x1xf32>
    %1356 = vector.extract_strided_slice %1354 {offsets = [0, 1], sizes = [8, 1], strides = [1, 1]} : vector<8x8xf32> to vector<8x1xf32>
    %1357 = vector.extract_strided_slice %1354 {offsets = [0, 2], sizes = [8, 1], strides = [1, 1]} : vector<8x8xf32> to vector<8x1xf32>
    %1358 = vector.extract_strided_slice %1354 {offsets = [0, 3], sizes = [8, 1], strides = [1, 1]} : vector<8x8xf32> to vector<8x1xf32>
    %1359 = vector.extract_strided_slice %1354 {offsets = [0, 4], sizes = [8, 1], strides = [1, 1]} : vector<8x8xf32> to vector<8x1xf32>
    %1360 = vector.broadcast %3 : vector<1x512xf32> to vector<8x512xf32>
    %1361 = vector.broadcast %1355 : vector<8x1xf32> to vector<8x512xf32>
    %1362 = arith.subf %1360, %1361 : vector<8x512xf32>
    %1363 = vector.broadcast %4 : vector<1x512xf32> to vector<8x512xf32>
    %1364 = vector.broadcast %1356 : vector<8x1xf32> to vector<8x512xf32>
    %1365 = arith.subf %1363, %1364 : vector<8x512xf32>
    %1366 = arith.mulf %1362, %1362 : vector<8x512xf32>
    %1367 = arith.mulf %1365, %1365 : vector<8x512xf32>
    %1368 = arith.addf %1366, %1367 : vector<8x512xf32>
    %cst_286 = arith.constant 0.000000e+00 : f32
    %1369 = vector.broadcast %cst_286 : f32 to vector<8x512xf32>
    %1370 = arith.subf %1369, %1368 : vector<8x512xf32>
    %1371 = math.exp %1370 : vector<8x512xf32>
    %1372 = vector.broadcast %1357 : vector<8x1xf32> to vector<8x512xf32>
    %1373 = arith.cmpf ole, %1368, %1372 : vector<8x512xf32>
    %cst_287 = arith.constant 0.000000e+00 : f32
    %1374 = vector.broadcast %cst_287 : f32 to vector<8x512xf32>
    %1375 = arith.select %1373, %1371, %1374 : vector<8x512xi1>, vector<8x512xf32>
    %1376 = vector.broadcast %1359 : vector<8x1xf32> to vector<8x512xf32>
    %1377 = arith.mulf %1375, %1376 : vector<8x512xf32>
    %1378 = arith.addf %1349, %1377 : vector<8x512xf32>
    %1379 = vector.broadcast %1358 : vector<8x1xf32> to vector<8x512xf32>
    %1380 = arith.mulf %1375, %1379 : vector<8x512xf32>
    %1381 = arith.addf %1352, %1380 : vector<8x512xf32>
    %c5_288 = arith.constant 5 : index
    %c40_289 = arith.constant 40 : index
    %c0_290 = arith.constant 0 : index
    %1382 = vector.load %arg3[%c5_288, %c40_289, %c0_290] : memref<8x64x8xf32, #tpu.memory_space<vmem>>, vector<1x8x8xf32>
    %1383 = vector.shape_cast %1382 : vector<1x8x8xf32> to vector<8x8xf32>
    %1384 = vector.extract_strided_slice %1383 {offsets = [0, 0], sizes = [8, 1], strides = [1, 1]} : vector<8x8xf32> to vector<8x1xf32>
    %1385 = vector.extract_strided_slice %1383 {offsets = [0, 1], sizes = [8, 1], strides = [1, 1]} : vector<8x8xf32> to vector<8x1xf32>
    %1386 = vector.extract_strided_slice %1383 {offsets = [0, 2], sizes = [8, 1], strides = [1, 1]} : vector<8x8xf32> to vector<8x1xf32>
    %1387 = vector.extract_strided_slice %1383 {offsets = [0, 3], sizes = [8, 1], strides = [1, 1]} : vector<8x8xf32> to vector<8x1xf32>
    %1388 = vector.extract_strided_slice %1383 {offsets = [0, 4], sizes = [8, 1], strides = [1, 1]} : vector<8x8xf32> to vector<8x1xf32>
    %1389 = vector.broadcast %3 : vector<1x512xf32> to vector<8x512xf32>
    %1390 = vector.broadcast %1384 : vector<8x1xf32> to vector<8x512xf32>
    %1391 = arith.subf %1389, %1390 : vector<8x512xf32>
    %1392 = vector.broadcast %4 : vector<1x512xf32> to vector<8x512xf32>
    %1393 = vector.broadcast %1385 : vector<8x1xf32> to vector<8x512xf32>
    %1394 = arith.subf %1392, %1393 : vector<8x512xf32>
    %1395 = arith.mulf %1391, %1391 : vector<8x512xf32>
    %1396 = arith.mulf %1394, %1394 : vector<8x512xf32>
    %1397 = arith.addf %1395, %1396 : vector<8x512xf32>
    %cst_291 = arith.constant 0.000000e+00 : f32
    %1398 = vector.broadcast %cst_291 : f32 to vector<8x512xf32>
    %1399 = arith.subf %1398, %1397 : vector<8x512xf32>
    %1400 = math.exp %1399 : vector<8x512xf32>
    %1401 = vector.broadcast %1386 : vector<8x1xf32> to vector<8x512xf32>
    %1402 = arith.cmpf ole, %1397, %1401 : vector<8x512xf32>
    %cst_292 = arith.constant 0.000000e+00 : f32
    %1403 = vector.broadcast %cst_292 : f32 to vector<8x512xf32>
    %1404 = arith.select %1402, %1400, %1403 : vector<8x512xi1>, vector<8x512xf32>
    %1405 = vector.broadcast %1388 : vector<8x1xf32> to vector<8x512xf32>
    %1406 = arith.mulf %1404, %1405 : vector<8x512xf32>
    %1407 = arith.addf %1378, %1406 : vector<8x512xf32>
    %1408 = vector.broadcast %1387 : vector<8x1xf32> to vector<8x512xf32>
    %1409 = arith.mulf %1404, %1408 : vector<8x512xf32>
    %1410 = arith.addf %1381, %1409 : vector<8x512xf32>
    %c5_293 = arith.constant 5 : index
    %c48_294 = arith.constant 48 : index
    %c0_295 = arith.constant 0 : index
    %1411 = vector.load %arg3[%c5_293, %c48_294, %c0_295] : memref<8x64x8xf32, #tpu.memory_space<vmem>>, vector<1x8x8xf32>
    %1412 = vector.shape_cast %1411 : vector<1x8x8xf32> to vector<8x8xf32>
    %1413 = vector.extract_strided_slice %1412 {offsets = [0, 0], sizes = [8, 1], strides = [1, 1]} : vector<8x8xf32> to vector<8x1xf32>
    %1414 = vector.extract_strided_slice %1412 {offsets = [0, 1], sizes = [8, 1], strides = [1, 1]} : vector<8x8xf32> to vector<8x1xf32>
    %1415 = vector.extract_strided_slice %1412 {offsets = [0, 2], sizes = [8, 1], strides = [1, 1]} : vector<8x8xf32> to vector<8x1xf32>
    %1416 = vector.extract_strided_slice %1412 {offsets = [0, 3], sizes = [8, 1], strides = [1, 1]} : vector<8x8xf32> to vector<8x1xf32>
    %1417 = vector.extract_strided_slice %1412 {offsets = [0, 4], sizes = [8, 1], strides = [1, 1]} : vector<8x8xf32> to vector<8x1xf32>
    %1418 = vector.broadcast %3 : vector<1x512xf32> to vector<8x512xf32>
    %1419 = vector.broadcast %1413 : vector<8x1xf32> to vector<8x512xf32>
    %1420 = arith.subf %1418, %1419 : vector<8x512xf32>
    %1421 = vector.broadcast %4 : vector<1x512xf32> to vector<8x512xf32>
    %1422 = vector.broadcast %1414 : vector<8x1xf32> to vector<8x512xf32>
    %1423 = arith.subf %1421, %1422 : vector<8x512xf32>
    %1424 = arith.mulf %1420, %1420 : vector<8x512xf32>
    %1425 = arith.mulf %1423, %1423 : vector<8x512xf32>
    %1426 = arith.addf %1424, %1425 : vector<8x512xf32>
    %cst_296 = arith.constant 0.000000e+00 : f32
    %1427 = vector.broadcast %cst_296 : f32 to vector<8x512xf32>
    %1428 = arith.subf %1427, %1426 : vector<8x512xf32>
    %1429 = math.exp %1428 : vector<8x512xf32>
    %1430 = vector.broadcast %1415 : vector<8x1xf32> to vector<8x512xf32>
    %1431 = arith.cmpf ole, %1426, %1430 : vector<8x512xf32>
    %cst_297 = arith.constant 0.000000e+00 : f32
    %1432 = vector.broadcast %cst_297 : f32 to vector<8x512xf32>
    %1433 = arith.select %1431, %1429, %1432 : vector<8x512xi1>, vector<8x512xf32>
    %1434 = vector.broadcast %1417 : vector<8x1xf32> to vector<8x512xf32>
    %1435 = arith.mulf %1433, %1434 : vector<8x512xf32>
    %1436 = arith.addf %1407, %1435 : vector<8x512xf32>
    %1437 = vector.broadcast %1416 : vector<8x1xf32> to vector<8x512xf32>
    %1438 = arith.mulf %1433, %1437 : vector<8x512xf32>
    %1439 = arith.addf %1410, %1438 : vector<8x512xf32>
    %c5_298 = arith.constant 5 : index
    %c56_299 = arith.constant 56 : index
    %c0_300 = arith.constant 0 : index
    %1440 = vector.load %arg3[%c5_298, %c56_299, %c0_300] : memref<8x64x8xf32, #tpu.memory_space<vmem>>, vector<1x8x8xf32>
    %1441 = vector.shape_cast %1440 : vector<1x8x8xf32> to vector<8x8xf32>
    %1442 = vector.extract_strided_slice %1441 {offsets = [0, 0], sizes = [8, 1], strides = [1, 1]} : vector<8x8xf32> to vector<8x1xf32>
    %1443 = vector.extract_strided_slice %1441 {offsets = [0, 1], sizes = [8, 1], strides = [1, 1]} : vector<8x8xf32> to vector<8x1xf32>
    %1444 = vector.extract_strided_slice %1441 {offsets = [0, 2], sizes = [8, 1], strides = [1, 1]} : vector<8x8xf32> to vector<8x1xf32>
    %1445 = vector.extract_strided_slice %1441 {offsets = [0, 3], sizes = [8, 1], strides = [1, 1]} : vector<8x8xf32> to vector<8x1xf32>
    %1446 = vector.extract_strided_slice %1441 {offsets = [0, 4], sizes = [8, 1], strides = [1, 1]} : vector<8x8xf32> to vector<8x1xf32>
    %1447 = vector.broadcast %3 : vector<1x512xf32> to vector<8x512xf32>
    %1448 = vector.broadcast %1442 : vector<8x1xf32> to vector<8x512xf32>
    %1449 = arith.subf %1447, %1448 : vector<8x512xf32>
    %1450 = vector.broadcast %4 : vector<1x512xf32> to vector<8x512xf32>
    %1451 = vector.broadcast %1443 : vector<8x1xf32> to vector<8x512xf32>
    %1452 = arith.subf %1450, %1451 : vector<8x512xf32>
    %1453 = arith.mulf %1449, %1449 : vector<8x512xf32>
    %1454 = arith.mulf %1452, %1452 : vector<8x512xf32>
    %1455 = arith.addf %1453, %1454 : vector<8x512xf32>
    %cst_301 = arith.constant 0.000000e+00 : f32
    %1456 = vector.broadcast %cst_301 : f32 to vector<8x512xf32>
    %1457 = arith.subf %1456, %1455 : vector<8x512xf32>
    %1458 = math.exp %1457 : vector<8x512xf32>
    %1459 = vector.broadcast %1444 : vector<8x1xf32> to vector<8x512xf32>
    %1460 = arith.cmpf ole, %1455, %1459 : vector<8x512xf32>
    %cst_302 = arith.constant 0.000000e+00 : f32
    %1461 = vector.broadcast %cst_302 : f32 to vector<8x512xf32>
    %1462 = arith.select %1460, %1458, %1461 : vector<8x512xi1>, vector<8x512xf32>
    %1463 = vector.broadcast %1446 : vector<8x1xf32> to vector<8x512xf32>
    %1464 = arith.mulf %1462, %1463 : vector<8x512xf32>
    %1465 = arith.addf %1436, %1464 : vector<8x512xf32>
    %1466 = vector.broadcast %1445 : vector<8x1xf32> to vector<8x512xf32>
    %1467 = arith.mulf %1462, %1466 : vector<8x512xf32>
    %1468 = arith.addf %1439, %1467 : vector<8x512xf32>
    %c5_303 = arith.constant 5 : index
    %c0_304 = arith.constant 0 : index
    %c0_305 = arith.constant 0 : index
    %1469 = vector.load %arg6[%c5_303, %c0_304, %c0_305] : memref<8x8x512xf32, #tpu.memory_space<vmem>>, vector<1x8x512xf32>
    %1470 = vector.shape_cast %1469 : vector<1x8x512xf32> to vector<8x512xf32>
    %1471 = arith.addf %1470, %1465 : vector<8x512xf32>
    %c5_306 = arith.constant 5 : index
    %c0_307 = arith.constant 0 : index
    %c0_308 = arith.constant 0 : index
    %1472 = vector.load %arg6[%c5_306, %c0_307, %c0_308] : memref<8x8x512xf32, #tpu.memory_space<vmem>>, vector<1x8x512xf32>
    %1473 = vector.shape_cast %1472 : vector<1x8x512xf32> to vector<8x512xf32>
    %1474 = vector.shape_cast %1471 : vector<8x512xf32> to vector<1x8x512xf32>
    tpu.vector_store %arg6[%c5_306, %c0_307, %c0_308], %1474 {strides = array<i32>} : memref<8x8x512xf32, #tpu.memory_space<vmem>>, vector<1x8x512xf32>,
    %c5_309 = arith.constant 5 : index
    %c0_310 = arith.constant 0 : index
    %c0_311 = arith.constant 0 : index
    %1475 = vector.load %arg7[%c5_309, %c0_310, %c0_311] : memref<8x8x512xf32, #tpu.memory_space<vmem>>, vector<1x8x512xf32>
    %1476 = vector.shape_cast %1475 : vector<1x8x512xf32> to vector<8x512xf32>
    %1477 = arith.addf %1476, %1468 : vector<8x512xf32>
    %c5_312 = arith.constant 5 : index
    %c0_313 = arith.constant 0 : index
    %c0_314 = arith.constant 0 : index
    %1478 = vector.load %arg7[%c5_312, %c0_313, %c0_314] : memref<8x8x512xf32, #tpu.memory_space<vmem>>, vector<1x8x512xf32>
    %1479 = vector.shape_cast %1478 : vector<1x8x512xf32> to vector<8x512xf32>
    %1480 = vector.shape_cast %1477 : vector<8x512xf32> to vector<1x8x512xf32>
    tpu.vector_store %arg7[%c5_312, %c0_313, %c0_314], %1480 {strides = array<i32>} : memref<8x8x512xf32, #tpu.memory_space<vmem>>, vector<1x8x512xf32>,
    %cst_315 = arith.constant 0.000000e+00 : f32
    %1481 = vector.broadcast %cst_315 : f32 to vector<8x512xf32>
    %cst_316 = arith.constant 0.000000e+00 : f32
    %1482 = vector.broadcast %cst_316 : f32 to vector<8x512xf32>
    %c6 = arith.constant 6 : index
    %c0_317 = arith.constant 0 : index
    %c0_318 = arith.constant 0 : index
    %1483 = vector.load %arg3[%c6, %c0_317, %c0_318] : memref<8x64x8xf32, #tpu.memory_space<vmem>>, vector<1x8x8xf32>
    %1484 = vector.shape_cast %1483 : vector<1x8x8xf32> to vector<8x8xf32>
    %1485 = vector.extract_strided_slice %1484 {offsets = [0, 0], sizes = [8, 1], strides = [1, 1]} : vector<8x8xf32> to vector<8x1xf32>
    %1486 = vector.extract_strided_slice %1484 {offsets = [0, 1], sizes = [8, 1], strides = [1, 1]} : vector<8x8xf32> to vector<8x1xf32>
    %1487 = vector.extract_strided_slice %1484 {offsets = [0, 2], sizes = [8, 1], strides = [1, 1]} : vector<8x8xf32> to vector<8x1xf32>
    %1488 = vector.extract_strided_slice %1484 {offsets = [0, 3], sizes = [8, 1], strides = [1, 1]} : vector<8x8xf32> to vector<8x1xf32>
    %1489 = vector.extract_strided_slice %1484 {offsets = [0, 4], sizes = [8, 1], strides = [1, 1]} : vector<8x8xf32> to vector<8x1xf32>
    %1490 = vector.broadcast %3 : vector<1x512xf32> to vector<8x512xf32>
    %1491 = vector.broadcast %1485 : vector<8x1xf32> to vector<8x512xf32>
    %1492 = arith.subf %1490, %1491 : vector<8x512xf32>
    %1493 = vector.broadcast %4 : vector<1x512xf32> to vector<8x512xf32>
    %1494 = vector.broadcast %1486 : vector<8x1xf32> to vector<8x512xf32>
    %1495 = arith.subf %1493, %1494 : vector<8x512xf32>
    %1496 = arith.mulf %1492, %1492 : vector<8x512xf32>
    %1497 = arith.mulf %1495, %1495 : vector<8x512xf32>
    %1498 = arith.addf %1496, %1497 : vector<8x512xf32>
    %cst_319 = arith.constant 0.000000e+00 : f32
    %1499 = vector.broadcast %cst_319 : f32 to vector<8x512xf32>
    %1500 = arith.subf %1499, %1498 : vector<8x512xf32>
    %1501 = math.exp %1500 : vector<8x512xf32>
    %1502 = vector.broadcast %1487 : vector<8x1xf32> to vector<8x512xf32>
    %1503 = arith.cmpf ole, %1498, %1502 : vector<8x512xf32>
    %cst_320 = arith.constant 0.000000e+00 : f32
    %1504 = vector.broadcast %cst_320 : f32 to vector<8x512xf32>
    %1505 = arith.select %1503, %1501, %1504 : vector<8x512xi1>, vector<8x512xf32>
    %1506 = vector.broadcast %1489 : vector<8x1xf32> to vector<8x512xf32>
    %1507 = arith.mulf %1505, %1506 : vector<8x512xf32>
    %1508 = arith.addf %1481, %1507 : vector<8x512xf32>
    %1509 = vector.broadcast %1488 : vector<8x1xf32> to vector<8x512xf32>
    %1510 = arith.mulf %1505, %1509 : vector<8x512xf32>
    %1511 = arith.addf %1482, %1510 : vector<8x512xf32>
    %c6_321 = arith.constant 6 : index
    %c8_322 = arith.constant 8 : index
    %c0_323 = arith.constant 0 : index
    %1512 = vector.load %arg3[%c6_321, %c8_322, %c0_323] : memref<8x64x8xf32, #tpu.memory_space<vmem>>, vector<1x8x8xf32>
    %1513 = vector.shape_cast %1512 : vector<1x8x8xf32> to vector<8x8xf32>
    %1514 = vector.extract_strided_slice %1513 {offsets = [0, 0], sizes = [8, 1], strides = [1, 1]} : vector<8x8xf32> to vector<8x1xf32>
    %1515 = vector.extract_strided_slice %1513 {offsets = [0, 1], sizes = [8, 1], strides = [1, 1]} : vector<8x8xf32> to vector<8x1xf32>
    %1516 = vector.extract_strided_slice %1513 {offsets = [0, 2], sizes = [8, 1], strides = [1, 1]} : vector<8x8xf32> to vector<8x1xf32>
    %1517 = vector.extract_strided_slice %1513 {offsets = [0, 3], sizes = [8, 1], strides = [1, 1]} : vector<8x8xf32> to vector<8x1xf32>
    %1518 = vector.extract_strided_slice %1513 {offsets = [0, 4], sizes = [8, 1], strides = [1, 1]} : vector<8x8xf32> to vector<8x1xf32>
    %1519 = vector.broadcast %3 : vector<1x512xf32> to vector<8x512xf32>
    %1520 = vector.broadcast %1514 : vector<8x1xf32> to vector<8x512xf32>
    %1521 = arith.subf %1519, %1520 : vector<8x512xf32>
    %1522 = vector.broadcast %4 : vector<1x512xf32> to vector<8x512xf32>
    %1523 = vector.broadcast %1515 : vector<8x1xf32> to vector<8x512xf32>
    %1524 = arith.subf %1522, %1523 : vector<8x512xf32>
    %1525 = arith.mulf %1521, %1521 : vector<8x512xf32>
    %1526 = arith.mulf %1524, %1524 : vector<8x512xf32>
    %1527 = arith.addf %1525, %1526 : vector<8x512xf32>
    %cst_324 = arith.constant 0.000000e+00 : f32
    %1528 = vector.broadcast %cst_324 : f32 to vector<8x512xf32>
    %1529 = arith.subf %1528, %1527 : vector<8x512xf32>
    %1530 = math.exp %1529 : vector<8x512xf32>
    %1531 = vector.broadcast %1516 : vector<8x1xf32> to vector<8x512xf32>
    %1532 = arith.cmpf ole, %1527, %1531 : vector<8x512xf32>
    %cst_325 = arith.constant 0.000000e+00 : f32
    %1533 = vector.broadcast %cst_325 : f32 to vector<8x512xf32>
    %1534 = arith.select %1532, %1530, %1533 : vector<8x512xi1>, vector<8x512xf32>
    %1535 = vector.broadcast %1518 : vector<8x1xf32> to vector<8x512xf32>
    %1536 = arith.mulf %1534, %1535 : vector<8x512xf32>
    %1537 = arith.addf %1508, %1536 : vector<8x512xf32>
    %1538 = vector.broadcast %1517 : vector<8x1xf32> to vector<8x512xf32>
    %1539 = arith.mulf %1534, %1538 : vector<8x512xf32>
    %1540 = arith.addf %1511, %1539 : vector<8x512xf32>
    %c6_326 = arith.constant 6 : index
    %c16_327 = arith.constant 16 : index
    %c0_328 = arith.constant 0 : index
    %1541 = vector.load %arg3[%c6_326, %c16_327, %c0_328] : memref<8x64x8xf32, #tpu.memory_space<vmem>>, vector<1x8x8xf32>
    %1542 = vector.shape_cast %1541 : vector<1x8x8xf32> to vector<8x8xf32>
    %1543 = vector.extract_strided_slice %1542 {offsets = [0, 0], sizes = [8, 1], strides = [1, 1]} : vector<8x8xf32> to vector<8x1xf32>
    %1544 = vector.extract_strided_slice %1542 {offsets = [0, 1], sizes = [8, 1], strides = [1, 1]} : vector<8x8xf32> to vector<8x1xf32>
    %1545 = vector.extract_strided_slice %1542 {offsets = [0, 2], sizes = [8, 1], strides = [1, 1]} : vector<8x8xf32> to vector<8x1xf32>
    %1546 = vector.extract_strided_slice %1542 {offsets = [0, 3], sizes = [8, 1], strides = [1, 1]} : vector<8x8xf32> to vector<8x1xf32>
    %1547 = vector.extract_strided_slice %1542 {offsets = [0, 4], sizes = [8, 1], strides = [1, 1]} : vector<8x8xf32> to vector<8x1xf32>
    %1548 = vector.broadcast %3 : vector<1x512xf32> to vector<8x512xf32>
    %1549 = vector.broadcast %1543 : vector<8x1xf32> to vector<8x512xf32>
    %1550 = arith.subf %1548, %1549 : vector<8x512xf32>
    %1551 = vector.broadcast %4 : vector<1x512xf32> to vector<8x512xf32>
    %1552 = vector.broadcast %1544 : vector<8x1xf32> to vector<8x512xf32>
    %1553 = arith.subf %1551, %1552 : vector<8x512xf32>
    %1554 = arith.mulf %1550, %1550 : vector<8x512xf32>
    %1555 = arith.mulf %1553, %1553 : vector<8x512xf32>
    %1556 = arith.addf %1554, %1555 : vector<8x512xf32>
    %cst_329 = arith.constant 0.000000e+00 : f32
    %1557 = vector.broadcast %cst_329 : f32 to vector<8x512xf32>
    %1558 = arith.subf %1557, %1556 : vector<8x512xf32>
    %1559 = math.exp %1558 : vector<8x512xf32>
    %1560 = vector.broadcast %1545 : vector<8x1xf32> to vector<8x512xf32>
    %1561 = arith.cmpf ole, %1556, %1560 : vector<8x512xf32>
    %cst_330 = arith.constant 0.000000e+00 : f32
    %1562 = vector.broadcast %cst_330 : f32 to vector<8x512xf32>
    %1563 = arith.select %1561, %1559, %1562 : vector<8x512xi1>, vector<8x512xf32>
    %1564 = vector.broadcast %1547 : vector<8x1xf32> to vector<8x512xf32>
    %1565 = arith.mulf %1563, %1564 : vector<8x512xf32>
    %1566 = arith.addf %1537, %1565 : vector<8x512xf32>
    %1567 = vector.broadcast %1546 : vector<8x1xf32> to vector<8x512xf32>
    %1568 = arith.mulf %1563, %1567 : vector<8x512xf32>
    %1569 = arith.addf %1540, %1568 : vector<8x512xf32>
    %c6_331 = arith.constant 6 : index
    %c24_332 = arith.constant 24 : index
    %c0_333 = arith.constant 0 : index
    %1570 = vector.load %arg3[%c6_331, %c24_332, %c0_333] : memref<8x64x8xf32, #tpu.memory_space<vmem>>, vector<1x8x8xf32>
    %1571 = vector.shape_cast %1570 : vector<1x8x8xf32> to vector<8x8xf32>
    %1572 = vector.extract_strided_slice %1571 {offsets = [0, 0], sizes = [8, 1], strides = [1, 1]} : vector<8x8xf32> to vector<8x1xf32>
    %1573 = vector.extract_strided_slice %1571 {offsets = [0, 1], sizes = [8, 1], strides = [1, 1]} : vector<8x8xf32> to vector<8x1xf32>
    %1574 = vector.extract_strided_slice %1571 {offsets = [0, 2], sizes = [8, 1], strides = [1, 1]} : vector<8x8xf32> to vector<8x1xf32>
    %1575 = vector.extract_strided_slice %1571 {offsets = [0, 3], sizes = [8, 1], strides = [1, 1]} : vector<8x8xf32> to vector<8x1xf32>
    %1576 = vector.extract_strided_slice %1571 {offsets = [0, 4], sizes = [8, 1], strides = [1, 1]} : vector<8x8xf32> to vector<8x1xf32>
    %1577 = vector.broadcast %3 : vector<1x512xf32> to vector<8x512xf32>
    %1578 = vector.broadcast %1572 : vector<8x1xf32> to vector<8x512xf32>
    %1579 = arith.subf %1577, %1578 : vector<8x512xf32>
    %1580 = vector.broadcast %4 : vector<1x512xf32> to vector<8x512xf32>
    %1581 = vector.broadcast %1573 : vector<8x1xf32> to vector<8x512xf32>
    %1582 = arith.subf %1580, %1581 : vector<8x512xf32>
    %1583 = arith.mulf %1579, %1579 : vector<8x512xf32>
    %1584 = arith.mulf %1582, %1582 : vector<8x512xf32>
    %1585 = arith.addf %1583, %1584 : vector<8x512xf32>
    %cst_334 = arith.constant 0.000000e+00 : f32
    %1586 = vector.broadcast %cst_334 : f32 to vector<8x512xf32>
    %1587 = arith.subf %1586, %1585 : vector<8x512xf32>
    %1588 = math.exp %1587 : vector<8x512xf32>
    %1589 = vector.broadcast %1574 : vector<8x1xf32> to vector<8x512xf32>
    %1590 = arith.cmpf ole, %1585, %1589 : vector<8x512xf32>
    %cst_335 = arith.constant 0.000000e+00 : f32
    %1591 = vector.broadcast %cst_335 : f32 to vector<8x512xf32>
    %1592 = arith.select %1590, %1588, %1591 : vector<8x512xi1>, vector<8x512xf32>
    %1593 = vector.broadcast %1576 : vector<8x1xf32> to vector<8x512xf32>
    %1594 = arith.mulf %1592, %1593 : vector<8x512xf32>
    %1595 = arith.addf %1566, %1594 : vector<8x512xf32>
    %1596 = vector.broadcast %1575 : vector<8x1xf32> to vector<8x512xf32>
    %1597 = arith.mulf %1592, %1596 : vector<8x512xf32>
    %1598 = arith.addf %1569, %1597 : vector<8x512xf32>
    %c6_336 = arith.constant 6 : index
    %c32_337 = arith.constant 32 : index
    %c0_338 = arith.constant 0 : index
    %1599 = vector.load %arg3[%c6_336, %c32_337, %c0_338] : memref<8x64x8xf32, #tpu.memory_space<vmem>>, vector<1x8x8xf32>
    %1600 = vector.shape_cast %1599 : vector<1x8x8xf32> to vector<8x8xf32>
    %1601 = vector.extract_strided_slice %1600 {offsets = [0, 0], sizes = [8, 1], strides = [1, 1]} : vector<8x8xf32> to vector<8x1xf32>
    %1602 = vector.extract_strided_slice %1600 {offsets = [0, 1], sizes = [8, 1], strides = [1, 1]} : vector<8x8xf32> to vector<8x1xf32>
    %1603 = vector.extract_strided_slice %1600 {offsets = [0, 2], sizes = [8, 1], strides = [1, 1]} : vector<8x8xf32> to vector<8x1xf32>
    %1604 = vector.extract_strided_slice %1600 {offsets = [0, 3], sizes = [8, 1], strides = [1, 1]} : vector<8x8xf32> to vector<8x1xf32>
    %1605 = vector.extract_strided_slice %1600 {offsets = [0, 4], sizes = [8, 1], strides = [1, 1]} : vector<8x8xf32> to vector<8x1xf32>
    %1606 = vector.broadcast %3 : vector<1x512xf32> to vector<8x512xf32>
    %1607 = vector.broadcast %1601 : vector<8x1xf32> to vector<8x512xf32>
    %1608 = arith.subf %1606, %1607 : vector<8x512xf32>
    %1609 = vector.broadcast %4 : vector<1x512xf32> to vector<8x512xf32>
    %1610 = vector.broadcast %1602 : vector<8x1xf32> to vector<8x512xf32>
    %1611 = arith.subf %1609, %1610 : vector<8x512xf32>
    %1612 = arith.mulf %1608, %1608 : vector<8x512xf32>
    %1613 = arith.mulf %1611, %1611 : vector<8x512xf32>
    %1614 = arith.addf %1612, %1613 : vector<8x512xf32>
    %cst_339 = arith.constant 0.000000e+00 : f32
    %1615 = vector.broadcast %cst_339 : f32 to vector<8x512xf32>
    %1616 = arith.subf %1615, %1614 : vector<8x512xf32>
    %1617 = math.exp %1616 : vector<8x512xf32>
    %1618 = vector.broadcast %1603 : vector<8x1xf32> to vector<8x512xf32>
    %1619 = arith.cmpf ole, %1614, %1618 : vector<8x512xf32>
    %cst_340 = arith.constant 0.000000e+00 : f32
    %1620 = vector.broadcast %cst_340 : f32 to vector<8x512xf32>
    %1621 = arith.select %1619, %1617, %1620 : vector<8x512xi1>, vector<8x512xf32>
    %1622 = vector.broadcast %1605 : vector<8x1xf32> to vector<8x512xf32>
    %1623 = arith.mulf %1621, %1622 : vector<8x512xf32>
    %1624 = arith.addf %1595, %1623 : vector<8x512xf32>
    %1625 = vector.broadcast %1604 : vector<8x1xf32> to vector<8x512xf32>
    %1626 = arith.mulf %1621, %1625 : vector<8x512xf32>
    %1627 = arith.addf %1598, %1626 : vector<8x512xf32>
    %c6_341 = arith.constant 6 : index
    %c40_342 = arith.constant 40 : index
    %c0_343 = arith.constant 0 : index
    %1628 = vector.load %arg3[%c6_341, %c40_342, %c0_343] : memref<8x64x8xf32, #tpu.memory_space<vmem>>, vector<1x8x8xf32>
    %1629 = vector.shape_cast %1628 : vector<1x8x8xf32> to vector<8x8xf32>
    %1630 = vector.extract_strided_slice %1629 {offsets = [0, 0], sizes = [8, 1], strides = [1, 1]} : vector<8x8xf32> to vector<8x1xf32>
    %1631 = vector.extract_strided_slice %1629 {offsets = [0, 1], sizes = [8, 1], strides = [1, 1]} : vector<8x8xf32> to vector<8x1xf32>
    %1632 = vector.extract_strided_slice %1629 {offsets = [0, 2], sizes = [8, 1], strides = [1, 1]} : vector<8x8xf32> to vector<8x1xf32>
    %1633 = vector.extract_strided_slice %1629 {offsets = [0, 3], sizes = [8, 1], strides = [1, 1]} : vector<8x8xf32> to vector<8x1xf32>
    %1634 = vector.extract_strided_slice %1629 {offsets = [0, 4], sizes = [8, 1], strides = [1, 1]} : vector<8x8xf32> to vector<8x1xf32>
    %1635 = vector.broadcast %3 : vector<1x512xf32> to vector<8x512xf32>
    %1636 = vector.broadcast %1630 : vector<8x1xf32> to vector<8x512xf32>
    %1637 = arith.subf %1635, %1636 : vector<8x512xf32>
    %1638 = vector.broadcast %4 : vector<1x512xf32> to vector<8x512xf32>
    %1639 = vector.broadcast %1631 : vector<8x1xf32> to vector<8x512xf32>
    %1640 = arith.subf %1638, %1639 : vector<8x512xf32>
    %1641 = arith.mulf %1637, %1637 : vector<8x512xf32>
    %1642 = arith.mulf %1640, %1640 : vector<8x512xf32>
    %1643 = arith.addf %1641, %1642 : vector<8x512xf32>
    %cst_344 = arith.constant 0.000000e+00 : f32
    %1644 = vector.broadcast %cst_344 : f32 to vector<8x512xf32>
    %1645 = arith.subf %1644, %1643 : vector<8x512xf32>
    %1646 = math.exp %1645 : vector<8x512xf32>
    %1647 = vector.broadcast %1632 : vector<8x1xf32> to vector<8x512xf32>
    %1648 = arith.cmpf ole, %1643, %1647 : vector<8x512xf32>
    %cst_345 = arith.constant 0.000000e+00 : f32
    %1649 = vector.broadcast %cst_345 : f32 to vector<8x512xf32>
    %1650 = arith.select %1648, %1646, %1649 : vector<8x512xi1>, vector<8x512xf32>
    %1651 = vector.broadcast %1634 : vector<8x1xf32> to vector<8x512xf32>
    %1652 = arith.mulf %1650, %1651 : vector<8x512xf32>
    %1653 = arith.addf %1624, %1652 : vector<8x512xf32>
    %1654 = vector.broadcast %1633 : vector<8x1xf32> to vector<8x512xf32>
    %1655 = arith.mulf %1650, %1654 : vector<8x512xf32>
    %1656 = arith.addf %1627, %1655 : vector<8x512xf32>
    %c6_346 = arith.constant 6 : index
    %c48_347 = arith.constant 48 : index
    %c0_348 = arith.constant 0 : index
    %1657 = vector.load %arg3[%c6_346, %c48_347, %c0_348] : memref<8x64x8xf32, #tpu.memory_space<vmem>>, vector<1x8x8xf32>
    %1658 = vector.shape_cast %1657 : vector<1x8x8xf32> to vector<8x8xf32>
    %1659 = vector.extract_strided_slice %1658 {offsets = [0, 0], sizes = [8, 1], strides = [1, 1]} : vector<8x8xf32> to vector<8x1xf32>
    %1660 = vector.extract_strided_slice %1658 {offsets = [0, 1], sizes = [8, 1], strides = [1, 1]} : vector<8x8xf32> to vector<8x1xf32>
    %1661 = vector.extract_strided_slice %1658 {offsets = [0, 2], sizes = [8, 1], strides = [1, 1]} : vector<8x8xf32> to vector<8x1xf32>
    %1662 = vector.extract_strided_slice %1658 {offsets = [0, 3], sizes = [8, 1], strides = [1, 1]} : vector<8x8xf32> to vector<8x1xf32>
    %1663 = vector.extract_strided_slice %1658 {offsets = [0, 4], sizes = [8, 1], strides = [1, 1]} : vector<8x8xf32> to vector<8x1xf32>
    %1664 = vector.broadcast %3 : vector<1x512xf32> to vector<8x512xf32>
    %1665 = vector.broadcast %1659 : vector<8x1xf32> to vector<8x512xf32>
    %1666 = arith.subf %1664, %1665 : vector<8x512xf32>
    %1667 = vector.broadcast %4 : vector<1x512xf32> to vector<8x512xf32>
    %1668 = vector.broadcast %1660 : vector<8x1xf32> to vector<8x512xf32>
    %1669 = arith.subf %1667, %1668 : vector<8x512xf32>
    %1670 = arith.mulf %1666, %1666 : vector<8x512xf32>
    %1671 = arith.mulf %1669, %1669 : vector<8x512xf32>
    %1672 = arith.addf %1670, %1671 : vector<8x512xf32>
    %cst_349 = arith.constant 0.000000e+00 : f32
    %1673 = vector.broadcast %cst_349 : f32 to vector<8x512xf32>
    %1674 = arith.subf %1673, %1672 : vector<8x512xf32>
    %1675 = math.exp %1674 : vector<8x512xf32>
    %1676 = vector.broadcast %1661 : vector<8x1xf32> to vector<8x512xf32>
    %1677 = arith.cmpf ole, %1672, %1676 : vector<8x512xf32>
    %cst_350 = arith.constant 0.000000e+00 : f32
    %1678 = vector.broadcast %cst_350 : f32 to vector<8x512xf32>
    %1679 = arith.select %1677, %1675, %1678 : vector<8x512xi1>, vector<8x512xf32>
    %1680 = vector.broadcast %1663 : vector<8x1xf32> to vector<8x512xf32>
    %1681 = arith.mulf %1679, %1680 : vector<8x512xf32>
    %1682 = arith.addf %1653, %1681 : vector<8x512xf32>
    %1683 = vector.broadcast %1662 : vector<8x1xf32> to vector<8x512xf32>
    %1684 = arith.mulf %1679, %1683 : vector<8x512xf32>
    %1685 = arith.addf %1656, %1684 : vector<8x512xf32>
    %c6_351 = arith.constant 6 : index
    %c56_352 = arith.constant 56 : index
    %c0_353 = arith.constant 0 : index
    %1686 = vector.load %arg3[%c6_351, %c56_352, %c0_353] : memref<8x64x8xf32, #tpu.memory_space<vmem>>, vector<1x8x8xf32>
    %1687 = vector.shape_cast %1686 : vector<1x8x8xf32> to vector<8x8xf32>
    %1688 = vector.extract_strided_slice %1687 {offsets = [0, 0], sizes = [8, 1], strides = [1, 1]} : vector<8x8xf32> to vector<8x1xf32>
    %1689 = vector.extract_strided_slice %1687 {offsets = [0, 1], sizes = [8, 1], strides = [1, 1]} : vector<8x8xf32> to vector<8x1xf32>
    %1690 = vector.extract_strided_slice %1687 {offsets = [0, 2], sizes = [8, 1], strides = [1, 1]} : vector<8x8xf32> to vector<8x1xf32>
    %1691 = vector.extract_strided_slice %1687 {offsets = [0, 3], sizes = [8, 1], strides = [1, 1]} : vector<8x8xf32> to vector<8x1xf32>
    %1692 = vector.extract_strided_slice %1687 {offsets = [0, 4], sizes = [8, 1], strides = [1, 1]} : vector<8x8xf32> to vector<8x1xf32>
    %1693 = vector.broadcast %3 : vector<1x512xf32> to vector<8x512xf32>
    %1694 = vector.broadcast %1688 : vector<8x1xf32> to vector<8x512xf32>
    %1695 = arith.subf %1693, %1694 : vector<8x512xf32>
    %1696 = vector.broadcast %4 : vector<1x512xf32> to vector<8x512xf32>
    %1697 = vector.broadcast %1689 : vector<8x1xf32> to vector<8x512xf32>
    %1698 = arith.subf %1696, %1697 : vector<8x512xf32>
    %1699 = arith.mulf %1695, %1695 : vector<8x512xf32>
    %1700 = arith.mulf %1698, %1698 : vector<8x512xf32>
    %1701 = arith.addf %1699, %1700 : vector<8x512xf32>
    %cst_354 = arith.constant 0.000000e+00 : f32
    %1702 = vector.broadcast %cst_354 : f32 to vector<8x512xf32>
    %1703 = arith.subf %1702, %1701 : vector<8x512xf32>
    %1704 = math.exp %1703 : vector<8x512xf32>
    %1705 = vector.broadcast %1690 : vector<8x1xf32> to vector<8x512xf32>
    %1706 = arith.cmpf ole, %1701, %1705 : vector<8x512xf32>
    %cst_355 = arith.constant 0.000000e+00 : f32
    %1707 = vector.broadcast %cst_355 : f32 to vector<8x512xf32>
    %1708 = arith.select %1706, %1704, %1707 : vector<8x512xi1>, vector<8x512xf32>
    %1709 = vector.broadcast %1692 : vector<8x1xf32> to vector<8x512xf32>
    %1710 = arith.mulf %1708, %1709 : vector<8x512xf32>
    %1711 = arith.addf %1682, %1710 : vector<8x512xf32>
    %1712 = vector.broadcast %1691 : vector<8x1xf32> to vector<8x512xf32>
    %1713 = arith.mulf %1708, %1712 : vector<8x512xf32>
    %1714 = arith.addf %1685, %1713 : vector<8x512xf32>
    %c6_356 = arith.constant 6 : index
    %c0_357 = arith.constant 0 : index
    %c0_358 = arith.constant 0 : index
    %1715 = vector.load %arg6[%c6_356, %c0_357, %c0_358] : memref<8x8x512xf32, #tpu.memory_space<vmem>>, vector<1x8x512xf32>
    %1716 = vector.shape_cast %1715 : vector<1x8x512xf32> to vector<8x512xf32>
    %1717 = arith.addf %1716, %1711 : vector<8x512xf32>
    %c6_359 = arith.constant 6 : index
    %c0_360 = arith.constant 0 : index
    %c0_361 = arith.constant 0 : index
    %1718 = vector.load %arg6[%c6_359, %c0_360, %c0_361] : memref<8x8x512xf32, #tpu.memory_space<vmem>>, vector<1x8x512xf32>
    %1719 = vector.shape_cast %1718 : vector<1x8x512xf32> to vector<8x512xf32>
    %1720 = vector.shape_cast %1717 : vector<8x512xf32> to vector<1x8x512xf32>
    tpu.vector_store %arg6[%c6_359, %c0_360, %c0_361], %1720 {strides = array<i32>} : memref<8x8x512xf32, #tpu.memory_space<vmem>>, vector<1x8x512xf32>,
    %c6_362 = arith.constant 6 : index
    %c0_363 = arith.constant 0 : index
    %c0_364 = arith.constant 0 : index
    %1721 = vector.load %arg7[%c6_362, %c0_363, %c0_364] : memref<8x8x512xf32, #tpu.memory_space<vmem>>, vector<1x8x512xf32>
    %1722 = vector.shape_cast %1721 : vector<1x8x512xf32> to vector<8x512xf32>
    %1723 = arith.addf %1722, %1714 : vector<8x512xf32>
    %c6_365 = arith.constant 6 : index
    %c0_366 = arith.constant 0 : index
    %c0_367 = arith.constant 0 : index
    %1724 = vector.load %arg7[%c6_365, %c0_366, %c0_367] : memref<8x8x512xf32, #tpu.memory_space<vmem>>, vector<1x8x512xf32>
    %1725 = vector.shape_cast %1724 : vector<1x8x512xf32> to vector<8x512xf32>
    %1726 = vector.shape_cast %1723 : vector<8x512xf32> to vector<1x8x512xf32>
    tpu.vector_store %arg7[%c6_365, %c0_366, %c0_367], %1726 {strides = array<i32>} : memref<8x8x512xf32, #tpu.memory_space<vmem>>, vector<1x8x512xf32>,
    %cst_368 = arith.constant 0.000000e+00 : f32
    %1727 = vector.broadcast %cst_368 : f32 to vector<8x512xf32>
    %cst_369 = arith.constant 0.000000e+00 : f32
    %1728 = vector.broadcast %cst_369 : f32 to vector<8x512xf32>
    %c7 = arith.constant 7 : index
    %c0_370 = arith.constant 0 : index
    %c0_371 = arith.constant 0 : index
    %1729 = vector.load %arg3[%c7, %c0_370, %c0_371] : memref<8x64x8xf32, #tpu.memory_space<vmem>>, vector<1x8x8xf32>
    %1730 = vector.shape_cast %1729 : vector<1x8x8xf32> to vector<8x8xf32>
    %1731 = vector.extract_strided_slice %1730 {offsets = [0, 0], sizes = [8, 1], strides = [1, 1]} : vector<8x8xf32> to vector<8x1xf32>
    %1732 = vector.extract_strided_slice %1730 {offsets = [0, 1], sizes = [8, 1], strides = [1, 1]} : vector<8x8xf32> to vector<8x1xf32>
    %1733 = vector.extract_strided_slice %1730 {offsets = [0, 2], sizes = [8, 1], strides = [1, 1]} : vector<8x8xf32> to vector<8x1xf32>
    %1734 = vector.extract_strided_slice %1730 {offsets = [0, 3], sizes = [8, 1], strides = [1, 1]} : vector<8x8xf32> to vector<8x1xf32>
    %1735 = vector.extract_strided_slice %1730 {offsets = [0, 4], sizes = [8, 1], strides = [1, 1]} : vector<8x8xf32> to vector<8x1xf32>
    %1736 = vector.broadcast %3 : vector<1x512xf32> to vector<8x512xf32>
    %1737 = vector.broadcast %1731 : vector<8x1xf32> to vector<8x512xf32>
    %1738 = arith.subf %1736, %1737 : vector<8x512xf32>
    %1739 = vector.broadcast %4 : vector<1x512xf32> to vector<8x512xf32>
    %1740 = vector.broadcast %1732 : vector<8x1xf32> to vector<8x512xf32>
    %1741 = arith.subf %1739, %1740 : vector<8x512xf32>
    %1742 = arith.mulf %1738, %1738 : vector<8x512xf32>
    %1743 = arith.mulf %1741, %1741 : vector<8x512xf32>
    %1744 = arith.addf %1742, %1743 : vector<8x512xf32>
    %cst_372 = arith.constant 0.000000e+00 : f32
    %1745 = vector.broadcast %cst_372 : f32 to vector<8x512xf32>
    %1746 = arith.subf %1745, %1744 : vector<8x512xf32>
    %1747 = math.exp %1746 : vector<8x512xf32>
    %1748 = vector.broadcast %1733 : vector<8x1xf32> to vector<8x512xf32>
    %1749 = arith.cmpf ole, %1744, %1748 : vector<8x512xf32>
    %cst_373 = arith.constant 0.000000e+00 : f32
    %1750 = vector.broadcast %cst_373 : f32 to vector<8x512xf32>
    %1751 = arith.select %1749, %1747, %1750 : vector<8x512xi1>, vector<8x512xf32>
    %1752 = vector.broadcast %1735 : vector<8x1xf32> to vector<8x512xf32>
    %1753 = arith.mulf %1751, %1752 : vector<8x512xf32>
    %1754 = arith.addf %1727, %1753 : vector<8x512xf32>
    %1755 = vector.broadcast %1734 : vector<8x1xf32> to vector<8x512xf32>
    %1756 = arith.mulf %1751, %1755 : vector<8x512xf32>
    %1757 = arith.addf %1728, %1756 : vector<8x512xf32>
    %c7_374 = arith.constant 7 : index
    %c8_375 = arith.constant 8 : index
    %c0_376 = arith.constant 0 : index
    %1758 = vector.load %arg3[%c7_374, %c8_375, %c0_376] : memref<8x64x8xf32, #tpu.memory_space<vmem>>, vector<1x8x8xf32>
    %1759 = vector.shape_cast %1758 : vector<1x8x8xf32> to vector<8x8xf32>
    %1760 = vector.extract_strided_slice %1759 {offsets = [0, 0], sizes = [8, 1], strides = [1, 1]} : vector<8x8xf32> to vector<8x1xf32>
    %1761 = vector.extract_strided_slice %1759 {offsets = [0, 1], sizes = [8, 1], strides = [1, 1]} : vector<8x8xf32> to vector<8x1xf32>
    %1762 = vector.extract_strided_slice %1759 {offsets = [0, 2], sizes = [8, 1], strides = [1, 1]} : vector<8x8xf32> to vector<8x1xf32>
    %1763 = vector.extract_strided_slice %1759 {offsets = [0, 3], sizes = [8, 1], strides = [1, 1]} : vector<8x8xf32> to vector<8x1xf32>
    %1764 = vector.extract_strided_slice %1759 {offsets = [0, 4], sizes = [8, 1], strides = [1, 1]} : vector<8x8xf32> to vector<8x1xf32>
    %1765 = vector.broadcast %3 : vector<1x512xf32> to vector<8x512xf32>
    %1766 = vector.broadcast %1760 : vector<8x1xf32> to vector<8x512xf32>
    %1767 = arith.subf %1765, %1766 : vector<8x512xf32>
    %1768 = vector.broadcast %4 : vector<1x512xf32> to vector<8x512xf32>
    %1769 = vector.broadcast %1761 : vector<8x1xf32> to vector<8x512xf32>
    %1770 = arith.subf %1768, %1769 : vector<8x512xf32>
    %1771 = arith.mulf %1767, %1767 : vector<8x512xf32>
    %1772 = arith.mulf %1770, %1770 : vector<8x512xf32>
    %1773 = arith.addf %1771, %1772 : vector<8x512xf32>
    %cst_377 = arith.constant 0.000000e+00 : f32
    %1774 = vector.broadcast %cst_377 : f32 to vector<8x512xf32>
    %1775 = arith.subf %1774, %1773 : vector<8x512xf32>
    %1776 = math.exp %1775 : vector<8x512xf32>
    %1777 = vector.broadcast %1762 : vector<8x1xf32> to vector<8x512xf32>
    %1778 = arith.cmpf ole, %1773, %1777 : vector<8x512xf32>
    %cst_378 = arith.constant 0.000000e+00 : f32
    %1779 = vector.broadcast %cst_378 : f32 to vector<8x512xf32>
    %1780 = arith.select %1778, %1776, %1779 : vector<8x512xi1>, vector<8x512xf32>
    %1781 = vector.broadcast %1764 : vector<8x1xf32> to vector<8x512xf32>
    %1782 = arith.mulf %1780, %1781 : vector<8x512xf32>
    %1783 = arith.addf %1754, %1782 : vector<8x512xf32>
    %1784 = vector.broadcast %1763 : vector<8x1xf32> to vector<8x512xf32>
    %1785 = arith.mulf %1780, %1784 : vector<8x512xf32>
    %1786 = arith.addf %1757, %1785 : vector<8x512xf32>
    %c7_379 = arith.constant 7 : index
    %c16_380 = arith.constant 16 : index
    %c0_381 = arith.constant 0 : index
    %1787 = vector.load %arg3[%c7_379, %c16_380, %c0_381] : memref<8x64x8xf32, #tpu.memory_space<vmem>>, vector<1x8x8xf32>
    %1788 = vector.shape_cast %1787 : vector<1x8x8xf32> to vector<8x8xf32>
    %1789 = vector.extract_strided_slice %1788 {offsets = [0, 0], sizes = [8, 1], strides = [1, 1]} : vector<8x8xf32> to vector<8x1xf32>
    %1790 = vector.extract_strided_slice %1788 {offsets = [0, 1], sizes = [8, 1], strides = [1, 1]} : vector<8x8xf32> to vector<8x1xf32>
    %1791 = vector.extract_strided_slice %1788 {offsets = [0, 2], sizes = [8, 1], strides = [1, 1]} : vector<8x8xf32> to vector<8x1xf32>
    %1792 = vector.extract_strided_slice %1788 {offsets = [0, 3], sizes = [8, 1], strides = [1, 1]} : vector<8x8xf32> to vector<8x1xf32>
    %1793 = vector.extract_strided_slice %1788 {offsets = [0, 4], sizes = [8, 1], strides = [1, 1]} : vector<8x8xf32> to vector<8x1xf32>
    %1794 = vector.broadcast %3 : vector<1x512xf32> to vector<8x512xf32>
    %1795 = vector.broadcast %1789 : vector<8x1xf32> to vector<8x512xf32>
    %1796 = arith.subf %1794, %1795 : vector<8x512xf32>
    %1797 = vector.broadcast %4 : vector<1x512xf32> to vector<8x512xf32>
    %1798 = vector.broadcast %1790 : vector<8x1xf32> to vector<8x512xf32>
    %1799 = arith.subf %1797, %1798 : vector<8x512xf32>
    %1800 = arith.mulf %1796, %1796 : vector<8x512xf32>
    %1801 = arith.mulf %1799, %1799 : vector<8x512xf32>
    %1802 = arith.addf %1800, %1801 : vector<8x512xf32>
    %cst_382 = arith.constant 0.000000e+00 : f32
    %1803 = vector.broadcast %cst_382 : f32 to vector<8x512xf32>
    %1804 = arith.subf %1803, %1802 : vector<8x512xf32>
    %1805 = math.exp %1804 : vector<8x512xf32>
    %1806 = vector.broadcast %1791 : vector<8x1xf32> to vector<8x512xf32>
    %1807 = arith.cmpf ole, %1802, %1806 : vector<8x512xf32>
    %cst_383 = arith.constant 0.000000e+00 : f32
    %1808 = vector.broadcast %cst_383 : f32 to vector<8x512xf32>
    %1809 = arith.select %1807, %1805, %1808 : vector<8x512xi1>, vector<8x512xf32>
    %1810 = vector.broadcast %1793 : vector<8x1xf32> to vector<8x512xf32>
    %1811 = arith.mulf %1809, %1810 : vector<8x512xf32>
    %1812 = arith.addf %1783, %1811 : vector<8x512xf32>
    %1813 = vector.broadcast %1792 : vector<8x1xf32> to vector<8x512xf32>
    %1814 = arith.mulf %1809, %1813 : vector<8x512xf32>
    %1815 = arith.addf %1786, %1814 : vector<8x512xf32>
    %c7_384 = arith.constant 7 : index
    %c24_385 = arith.constant 24 : index
    %c0_386 = arith.constant 0 : index
    %1816 = vector.load %arg3[%c7_384, %c24_385, %c0_386] : memref<8x64x8xf32, #tpu.memory_space<vmem>>, vector<1x8x8xf32>
    %1817 = vector.shape_cast %1816 : vector<1x8x8xf32> to vector<8x8xf32>
    %1818 = vector.extract_strided_slice %1817 {offsets = [0, 0], sizes = [8, 1], strides = [1, 1]} : vector<8x8xf32> to vector<8x1xf32>
    %1819 = vector.extract_strided_slice %1817 {offsets = [0, 1], sizes = [8, 1], strides = [1, 1]} : vector<8x8xf32> to vector<8x1xf32>
    %1820 = vector.extract_strided_slice %1817 {offsets = [0, 2], sizes = [8, 1], strides = [1, 1]} : vector<8x8xf32> to vector<8x1xf32>
    %1821 = vector.extract_strided_slice %1817 {offsets = [0, 3], sizes = [8, 1], strides = [1, 1]} : vector<8x8xf32> to vector<8x1xf32>
    %1822 = vector.extract_strided_slice %1817 {offsets = [0, 4], sizes = [8, 1], strides = [1, 1]} : vector<8x8xf32> to vector<8x1xf32>
    %1823 = vector.broadcast %3 : vector<1x512xf32> to vector<8x512xf32>
    %1824 = vector.broadcast %1818 : vector<8x1xf32> to vector<8x512xf32>
    %1825 = arith.subf %1823, %1824 : vector<8x512xf32>
    %1826 = vector.broadcast %4 : vector<1x512xf32> to vector<8x512xf32>
    %1827 = vector.broadcast %1819 : vector<8x1xf32> to vector<8x512xf32>
    %1828 = arith.subf %1826, %1827 : vector<8x512xf32>
    %1829 = arith.mulf %1825, %1825 : vector<8x512xf32>
    %1830 = arith.mulf %1828, %1828 : vector<8x512xf32>
    %1831 = arith.addf %1829, %1830 : vector<8x512xf32>
    %cst_387 = arith.constant 0.000000e+00 : f32
    %1832 = vector.broadcast %cst_387 : f32 to vector<8x512xf32>
    %1833 = arith.subf %1832, %1831 : vector<8x512xf32>
    %1834 = math.exp %1833 : vector<8x512xf32>
    %1835 = vector.broadcast %1820 : vector<8x1xf32> to vector<8x512xf32>
    %1836 = arith.cmpf ole, %1831, %1835 : vector<8x512xf32>
    %cst_388 = arith.constant 0.000000e+00 : f32
    %1837 = vector.broadcast %cst_388 : f32 to vector<8x512xf32>
    %1838 = arith.select %1836, %1834, %1837 : vector<8x512xi1>, vector<8x512xf32>
    %1839 = vector.broadcast %1822 : vector<8x1xf32> to vector<8x512xf32>
    %1840 = arith.mulf %1838, %1839 : vector<8x512xf32>
    %1841 = arith.addf %1812, %1840 : vector<8x512xf32>
    %1842 = vector.broadcast %1821 : vector<8x1xf32> to vector<8x512xf32>
    %1843 = arith.mulf %1838, %1842 : vector<8x512xf32>
    %1844 = arith.addf %1815, %1843 : vector<8x512xf32>
    %c7_389 = arith.constant 7 : index
    %c32_390 = arith.constant 32 : index
    %c0_391 = arith.constant 0 : index
    %1845 = vector.load %arg3[%c7_389, %c32_390, %c0_391] : memref<8x64x8xf32, #tpu.memory_space<vmem>>, vector<1x8x8xf32>
    %1846 = vector.shape_cast %1845 : vector<1x8x8xf32> to vector<8x8xf32>
    %1847 = vector.extract_strided_slice %1846 {offsets = [0, 0], sizes = [8, 1], strides = [1, 1]} : vector<8x8xf32> to vector<8x1xf32>
    %1848 = vector.extract_strided_slice %1846 {offsets = [0, 1], sizes = [8, 1], strides = [1, 1]} : vector<8x8xf32> to vector<8x1xf32>
    %1849 = vector.extract_strided_slice %1846 {offsets = [0, 2], sizes = [8, 1], strides = [1, 1]} : vector<8x8xf32> to vector<8x1xf32>
    %1850 = vector.extract_strided_slice %1846 {offsets = [0, 3], sizes = [8, 1], strides = [1, 1]} : vector<8x8xf32> to vector<8x1xf32>
    %1851 = vector.extract_strided_slice %1846 {offsets = [0, 4], sizes = [8, 1], strides = [1, 1]} : vector<8x8xf32> to vector<8x1xf32>
    %1852 = vector.broadcast %3 : vector<1x512xf32> to vector<8x512xf32>
    %1853 = vector.broadcast %1847 : vector<8x1xf32> to vector<8x512xf32>
    %1854 = arith.subf %1852, %1853 : vector<8x512xf32>
    %1855 = vector.broadcast %4 : vector<1x512xf32> to vector<8x512xf32>
    %1856 = vector.broadcast %1848 : vector<8x1xf32> to vector<8x512xf32>
    %1857 = arith.subf %1855, %1856 : vector<8x512xf32>
    %1858 = arith.mulf %1854, %1854 : vector<8x512xf32>
    %1859 = arith.mulf %1857, %1857 : vector<8x512xf32>
    %1860 = arith.addf %1858, %1859 : vector<8x512xf32>
    %cst_392 = arith.constant 0.000000e+00 : f32
    %1861 = vector.broadcast %cst_392 : f32 to vector<8x512xf32>
    %1862 = arith.subf %1861, %1860 : vector<8x512xf32>
    %1863 = math.exp %1862 : vector<8x512xf32>
    %1864 = vector.broadcast %1849 : vector<8x1xf32> to vector<8x512xf32>
    %1865 = arith.cmpf ole, %1860, %1864 : vector<8x512xf32>
    %cst_393 = arith.constant 0.000000e+00 : f32
    %1866 = vector.broadcast %cst_393 : f32 to vector<8x512xf32>
    %1867 = arith.select %1865, %1863, %1866 : vector<8x512xi1>, vector<8x512xf32>
    %1868 = vector.broadcast %1851 : vector<8x1xf32> to vector<8x512xf32>
    %1869 = arith.mulf %1867, %1868 : vector<8x512xf32>
    %1870 = arith.addf %1841, %1869 : vector<8x512xf32>
    %1871 = vector.broadcast %1850 : vector<8x1xf32> to vector<8x512xf32>
    %1872 = arith.mulf %1867, %1871 : vector<8x512xf32>
    %1873 = arith.addf %1844, %1872 : vector<8x512xf32>
    %c7_394 = arith.constant 7 : index
    %c40_395 = arith.constant 40 : index
    %c0_396 = arith.constant 0 : index
    %1874 = vector.load %arg3[%c7_394, %c40_395, %c0_396] : memref<8x64x8xf32, #tpu.memory_space<vmem>>, vector<1x8x8xf32>
    %1875 = vector.shape_cast %1874 : vector<1x8x8xf32> to vector<8x8xf32>
    %1876 = vector.extract_strided_slice %1875 {offsets = [0, 0], sizes = [8, 1], strides = [1, 1]} : vector<8x8xf32> to vector<8x1xf32>
    %1877 = vector.extract_strided_slice %1875 {offsets = [0, 1], sizes = [8, 1], strides = [1, 1]} : vector<8x8xf32> to vector<8x1xf32>
    %1878 = vector.extract_strided_slice %1875 {offsets = [0, 2], sizes = [8, 1], strides = [1, 1]} : vector<8x8xf32> to vector<8x1xf32>
    %1879 = vector.extract_strided_slice %1875 {offsets = [0, 3], sizes = [8, 1], strides = [1, 1]} : vector<8x8xf32> to vector<8x1xf32>
    %1880 = vector.extract_strided_slice %1875 {offsets = [0, 4], sizes = [8, 1], strides = [1, 1]} : vector<8x8xf32> to vector<8x1xf32>
    %1881 = vector.broadcast %3 : vector<1x512xf32> to vector<8x512xf32>
    %1882 = vector.broadcast %1876 : vector<8x1xf32> to vector<8x512xf32>
    %1883 = arith.subf %1881, %1882 : vector<8x512xf32>
    %1884 = vector.broadcast %4 : vector<1x512xf32> to vector<8x512xf32>
    %1885 = vector.broadcast %1877 : vector<8x1xf32> to vector<8x512xf32>
    %1886 = arith.subf %1884, %1885 : vector<8x512xf32>
    %1887 = arith.mulf %1883, %1883 : vector<8x512xf32>
    %1888 = arith.mulf %1886, %1886 : vector<8x512xf32>
    %1889 = arith.addf %1887, %1888 : vector<8x512xf32>
    %cst_397 = arith.constant 0.000000e+00 : f32
    %1890 = vector.broadcast %cst_397 : f32 to vector<8x512xf32>
    %1891 = arith.subf %1890, %1889 : vector<8x512xf32>
    %1892 = math.exp %1891 : vector<8x512xf32>
    %1893 = vector.broadcast %1878 : vector<8x1xf32> to vector<8x512xf32>
    %1894 = arith.cmpf ole, %1889, %1893 : vector<8x512xf32>
    %cst_398 = arith.constant 0.000000e+00 : f32
    %1895 = vector.broadcast %cst_398 : f32 to vector<8x512xf32>
    %1896 = arith.select %1894, %1892, %1895 : vector<8x512xi1>, vector<8x512xf32>
    %1897 = vector.broadcast %1880 : vector<8x1xf32> to vector<8x512xf32>
    %1898 = arith.mulf %1896, %1897 : vector<8x512xf32>
    %1899 = arith.addf %1870, %1898 : vector<8x512xf32>
    %1900 = vector.broadcast %1879 : vector<8x1xf32> to vector<8x512xf32>
    %1901 = arith.mulf %1896, %1900 : vector<8x512xf32>
    %1902 = arith.addf %1873, %1901 : vector<8x512xf32>
    %c7_399 = arith.constant 7 : index
    %c48_400 = arith.constant 48 : index
    %c0_401 = arith.constant 0 : index
    %1903 = vector.load %arg3[%c7_399, %c48_400, %c0_401] : memref<8x64x8xf32, #tpu.memory_space<vmem>>, vector<1x8x8xf32>
    %1904 = vector.shape_cast %1903 : vector<1x8x8xf32> to vector<8x8xf32>
    %1905 = vector.extract_strided_slice %1904 {offsets = [0, 0], sizes = [8, 1], strides = [1, 1]} : vector<8x8xf32> to vector<8x1xf32>
    %1906 = vector.extract_strided_slice %1904 {offsets = [0, 1], sizes = [8, 1], strides = [1, 1]} : vector<8x8xf32> to vector<8x1xf32>
    %1907 = vector.extract_strided_slice %1904 {offsets = [0, 2], sizes = [8, 1], strides = [1, 1]} : vector<8x8xf32> to vector<8x1xf32>
    %1908 = vector.extract_strided_slice %1904 {offsets = [0, 3], sizes = [8, 1], strides = [1, 1]} : vector<8x8xf32> to vector<8x1xf32>
    %1909 = vector.extract_strided_slice %1904 {offsets = [0, 4], sizes = [8, 1], strides = [1, 1]} : vector<8x8xf32> to vector<8x1xf32>
    %1910 = vector.broadcast %3 : vector<1x512xf32> to vector<8x512xf32>
    %1911 = vector.broadcast %1905 : vector<8x1xf32> to vector<8x512xf32>
    %1912 = arith.subf %1910, %1911 : vector<8x512xf32>
    %1913 = vector.broadcast %4 : vector<1x512xf32> to vector<8x512xf32>
    %1914 = vector.broadcast %1906 : vector<8x1xf32> to vector<8x512xf32>
    %1915 = arith.subf %1913, %1914 : vector<8x512xf32>
    %1916 = arith.mulf %1912, %1912 : vector<8x512xf32>
    %1917 = arith.mulf %1915, %1915 : vector<8x512xf32>
    %1918 = arith.addf %1916, %1917 : vector<8x512xf32>
    %cst_402 = arith.constant 0.000000e+00 : f32
    %1919 = vector.broadcast %cst_402 : f32 to vector<8x512xf32>
    %1920 = arith.subf %1919, %1918 : vector<8x512xf32>
    %1921 = math.exp %1920 : vector<8x512xf32>
    %1922 = vector.broadcast %1907 : vector<8x1xf32> to vector<8x512xf32>
    %1923 = arith.cmpf ole, %1918, %1922 : vector<8x512xf32>
    %cst_403 = arith.constant 0.000000e+00 : f32
    %1924 = vector.broadcast %cst_403 : f32 to vector<8x512xf32>
    %1925 = arith.select %1923, %1921, %1924 : vector<8x512xi1>, vector<8x512xf32>
    %1926 = vector.broadcast %1909 : vector<8x1xf32> to vector<8x512xf32>
    %1927 = arith.mulf %1925, %1926 : vector<8x512xf32>
    %1928 = arith.addf %1899, %1927 : vector<8x512xf32>
    %1929 = vector.broadcast %1908 : vector<8x1xf32> to vector<8x512xf32>
    %1930 = arith.mulf %1925, %1929 : vector<8x512xf32>
    %1931 = arith.addf %1902, %1930 : vector<8x512xf32>
    %c7_404 = arith.constant 7 : index
    %c56_405 = arith.constant 56 : index
    %c0_406 = arith.constant 0 : index
    %1932 = vector.load %arg3[%c7_404, %c56_405, %c0_406] : memref<8x64x8xf32, #tpu.memory_space<vmem>>, vector<1x8x8xf32>
    %1933 = vector.shape_cast %1932 : vector<1x8x8xf32> to vector<8x8xf32>
    %1934 = vector.extract_strided_slice %1933 {offsets = [0, 0], sizes = [8, 1], strides = [1, 1]} : vector<8x8xf32> to vector<8x1xf32>
    %1935 = vector.extract_strided_slice %1933 {offsets = [0, 1], sizes = [8, 1], strides = [1, 1]} : vector<8x8xf32> to vector<8x1xf32>
    %1936 = vector.extract_strided_slice %1933 {offsets = [0, 2], sizes = [8, 1], strides = [1, 1]} : vector<8x8xf32> to vector<8x1xf32>
    %1937 = vector.extract_strided_slice %1933 {offsets = [0, 3], sizes = [8, 1], strides = [1, 1]} : vector<8x8xf32> to vector<8x1xf32>
    %1938 = vector.extract_strided_slice %1933 {offsets = [0, 4], sizes = [8, 1], strides = [1, 1]} : vector<8x8xf32> to vector<8x1xf32>
    %1939 = vector.broadcast %3 : vector<1x512xf32> to vector<8x512xf32>
    %1940 = vector.broadcast %1934 : vector<8x1xf32> to vector<8x512xf32>
    %1941 = arith.subf %1939, %1940 : vector<8x512xf32>
    %1942 = vector.broadcast %4 : vector<1x512xf32> to vector<8x512xf32>
    %1943 = vector.broadcast %1935 : vector<8x1xf32> to vector<8x512xf32>
    %1944 = arith.subf %1942, %1943 : vector<8x512xf32>
    %1945 = arith.mulf %1941, %1941 : vector<8x512xf32>
    %1946 = arith.mulf %1944, %1944 : vector<8x512xf32>
    %1947 = arith.addf %1945, %1946 : vector<8x512xf32>
    %cst_407 = arith.constant 0.000000e+00 : f32
    %1948 = vector.broadcast %cst_407 : f32 to vector<8x512xf32>
    %1949 = arith.subf %1948, %1947 : vector<8x512xf32>
    %1950 = math.exp %1949 : vector<8x512xf32>
    %1951 = vector.broadcast %1936 : vector<8x1xf32> to vector<8x512xf32>
    %1952 = arith.cmpf ole, %1947, %1951 : vector<8x512xf32>
    %cst_408 = arith.constant 0.000000e+00 : f32
    %1953 = vector.broadcast %cst_408 : f32 to vector<8x512xf32>
    %1954 = arith.select %1952, %1950, %1953 : vector<8x512xi1>, vector<8x512xf32>
    %1955 = vector.broadcast %1938 : vector<8x1xf32> to vector<8x512xf32>
    %1956 = arith.mulf %1954, %1955 : vector<8x512xf32>
    %1957 = arith.addf %1928, %1956 : vector<8x512xf32>
    %1958 = vector.broadcast %1937 : vector<8x1xf32> to vector<8x512xf32>
    %1959 = arith.mulf %1954, %1958 : vector<8x512xf32>
    %1960 = arith.addf %1931, %1959 : vector<8x512xf32>
    %c7_409 = arith.constant 7 : index
    %c0_410 = arith.constant 0 : index
    %c0_411 = arith.constant 0 : index
    %1961 = vector.load %arg6[%c7_409, %c0_410, %c0_411] : memref<8x8x512xf32, #tpu.memory_space<vmem>>, vector<1x8x512xf32>
    %1962 = vector.shape_cast %1961 : vector<1x8x512xf32> to vector<8x512xf32>
    %1963 = arith.addf %1962, %1957 : vector<8x512xf32>
    %c7_412 = arith.constant 7 : index
    %c0_413 = arith.constant 0 : index
    %c0_414 = arith.constant 0 : index
    %1964 = vector.load %arg6[%c7_412, %c0_413, %c0_414] : memref<8x8x512xf32, #tpu.memory_space<vmem>>, vector<1x8x512xf32>
    %1965 = vector.shape_cast %1964 : vector<1x8x512xf32> to vector<8x512xf32>
    %1966 = vector.shape_cast %1963 : vector<8x512xf32> to vector<1x8x512xf32>
    tpu.vector_store %arg6[%c7_412, %c0_413, %c0_414], %1966 {strides = array<i32>} : memref<8x8x512xf32, #tpu.memory_space<vmem>>, vector<1x8x512xf32>,
    %c7_415 = arith.constant 7 : index
    %c0_416 = arith.constant 0 : index
    %c0_417 = arith.constant 0 : index
    %1967 = vector.load %arg7[%c7_415, %c0_416, %c0_417] : memref<8x8x512xf32, #tpu.memory_space<vmem>>, vector<1x8x512xf32>
    %1968 = vector.shape_cast %1967 : vector<1x8x512xf32> to vector<8x512xf32>
    %1969 = arith.addf %1968, %1960 : vector<8x512xf32>
    %c7_418 = arith.constant 7 : index
    %c0_419 = arith.constant 0 : index
    %c0_420 = arith.constant 0 : index
    %1970 = vector.load %arg7[%c7_418, %c0_419, %c0_420] : memref<8x8x512xf32, #tpu.memory_space<vmem>>, vector<1x8x512xf32>
    %1971 = vector.shape_cast %1970 : vector<1x8x512xf32> to vector<8x512xf32>
    %1972 = vector.shape_cast %1969 : vector<8x512xf32> to vector<1x8x512xf32>
    tpu.vector_store %arg7[%c7_418, %c0_419, %c0_420], %1972 {strides = array<i32>} : memref<8x8x512xf32, #tpu.memory_space<vmem>>, vector<1x8x512xf32>,
    %c0_i32_421 = arith.constant 0 : i32
    %1973 = arith.cmpi eq, %arg2, %c0_i32_421 : i32
    %1974 = arith.extui %1973 : i1 to i32
    %c0_i32_422 = arith.constant 0 : i32
    %1975 = arith.cmpi ne, %1974, %c0_i32_422 : i32
    scf.if %1975 {
      %c0_423 = arith.constant 0 : index
      %c0_424 = arith.constant 0 : index
      %c0_425 = arith.constant 0 : index
      %1976 = vector.load %arg6[%c0_423, %c0_424, %c0_425] : memref<8x8x512xf32, #tpu.memory_space<vmem>>, vector<1x8x512xf32>
      %1977 = vector.shape_cast %1976 : vector<1x8x512xf32> to vector<8x512xf32>
      %cst_426 = arith.constant dense<0.000000e+00> : vector<512xf32>
      %1978 = vector.multi_reduction <add>, %1977, %cst_426 [0] : vector<8x512xf32> to vector<512xf32>
      %1979 = vector.shape_cast %1978 : vector<512xf32> to vector<1x512xf32>
      %cst_427 = arith.constant 9.99999993E-9 : f32
      %1980 = vector.broadcast %cst_427 : f32 to vector<1x512xf32>
      %1981 = arith.addf %1979, %1980 : vector<1x512xf32>
      %c0_428 = arith.constant 0 : index
      %c0_429 = arith.constant 0 : index
      %c0_430 = arith.constant 0 : index
      %1982 = vector.load %arg7[%c0_428, %c0_429, %c0_430] : memref<8x8x512xf32, #tpu.memory_space<vmem>>, vector<1x8x512xf32>
      %1983 = vector.shape_cast %1982 : vector<1x8x512xf32> to vector<8x512xf32>
      %cst_431 = arith.constant dense<0.000000e+00> : vector<512xf32>
      %1984 = vector.multi_reduction <add>, %1983, %cst_431 [0] : vector<8x512xf32> to vector<512xf32>
      %1985 = vector.shape_cast %1984 : vector<512xf32> to vector<1x512xf32>
      %cst_432 = arith.constant 9.99999993E-9 : f32
      %1986 = vector.broadcast %cst_432 : f32 to vector<1x512xf32>
      %1987 = arith.addf %1985, %1986 : vector<1x512xf32>
      %1988 = tpu.reciprocal %1987 : vector<1x512xf32> -> vector<1x512xf32>
      %1989 = arith.mulf %1981, %1988 : vector<1x512xf32>
      %c0_433 = arith.constant 0 : index
      %c0_434 = arith.constant 0 : index
      %1990 = vector.load %arg5[%c0_433, %c0_434] : memref<8x512xf32, #tpu.memory_space<vmem>>, vector<1x512xf32>
      tpu.vector_store %arg5[%c0_433, %c0_434], %1989 {strides = array<i32>} : memref<8x512xf32, #tpu.memory_space<vmem>>, vector<1x512xf32>,
      %c1_435 = arith.constant 1 : index
      %c0_436 = arith.constant 0 : index
      %c0_437 = arith.constant 0 : index
      %1991 = vector.load %arg6[%c1_435, %c0_436, %c0_437] : memref<8x8x512xf32, #tpu.memory_space<vmem>>, vector<1x8x512xf32>
      %1992 = vector.shape_cast %1991 : vector<1x8x512xf32> to vector<8x512xf32>
      %cst_438 = arith.constant dense<0.000000e+00> : vector<512xf32>
      %1993 = vector.multi_reduction <add>, %1992, %cst_438 [0] : vector<8x512xf32> to vector<512xf32>
      %1994 = vector.shape_cast %1993 : vector<512xf32> to vector<1x512xf32>
      %cst_439 = arith.constant 9.99999993E-9 : f32
      %1995 = vector.broadcast %cst_439 : f32 to vector<1x512xf32>
      %1996 = arith.addf %1994, %1995 : vector<1x512xf32>
      %c1_440 = arith.constant 1 : index
      %c0_441 = arith.constant 0 : index
      %c0_442 = arith.constant 0 : index
      %1997 = vector.load %arg7[%c1_440, %c0_441, %c0_442] : memref<8x8x512xf32, #tpu.memory_space<vmem>>, vector<1x8x512xf32>
      %1998 = vector.shape_cast %1997 : vector<1x8x512xf32> to vector<8x512xf32>
      %cst_443 = arith.constant dense<0.000000e+00> : vector<512xf32>
      %1999 = vector.multi_reduction <add>, %1998, %cst_443 [0] : vector<8x512xf32> to vector<512xf32>
      %2000 = vector.shape_cast %1999 : vector<512xf32> to vector<1x512xf32>
      %cst_444 = arith.constant 9.99999993E-9 : f32
      %2001 = vector.broadcast %cst_444 : f32 to vector<1x512xf32>
      %2002 = arith.addf %2000, %2001 : vector<1x512xf32>
      %2003 = tpu.reciprocal %2002 : vector<1x512xf32> -> vector<1x512xf32>
      %2004 = arith.mulf %1996, %2003 : vector<1x512xf32>
      %c1_445 = arith.constant 1 : index
      %c0_446 = arith.constant 0 : index
      %2005 = vector.load %arg5[%c1_445, %c0_446] : memref<8x512xf32, #tpu.memory_space<vmem>>, vector<1x512xf32>
      tpu.vector_store %arg5[%c1_445, %c0_446], %2004 {strides = array<i32>} : memref<8x512xf32, #tpu.memory_space<vmem>>, vector<1x512xf32>,
      %c2_447 = arith.constant 2 : index
      %c0_448 = arith.constant 0 : index
      %c0_449 = arith.constant 0 : index
      %2006 = vector.load %arg6[%c2_447, %c0_448, %c0_449] : memref<8x8x512xf32, #tpu.memory_space<vmem>>, vector<1x8x512xf32>
      %2007 = vector.shape_cast %2006 : vector<1x8x512xf32> to vector<8x512xf32>
      %cst_450 = arith.constant dense<0.000000e+00> : vector<512xf32>
      %2008 = vector.multi_reduction <add>, %2007, %cst_450 [0] : vector<8x512xf32> to vector<512xf32>
      %2009 = vector.shape_cast %2008 : vector<512xf32> to vector<1x512xf32>
      %cst_451 = arith.constant 9.99999993E-9 : f32
      %2010 = vector.broadcast %cst_451 : f32 to vector<1x512xf32>
      %2011 = arith.addf %2009, %2010 : vector<1x512xf32>
      %c2_452 = arith.constant 2 : index
      %c0_453 = arith.constant 0 : index
      %c0_454 = arith.constant 0 : index
      %2012 = vector.load %arg7[%c2_452, %c0_453, %c0_454] : memref<8x8x512xf32, #tpu.memory_space<vmem>>, vector<1x8x512xf32>
      %2013 = vector.shape_cast %2012 : vector<1x8x512xf32> to vector<8x512xf32>
      %cst_455 = arith.constant dense<0.000000e+00> : vector<512xf32>
      %2014 = vector.multi_reduction <add>, %2013, %cst_455 [0] : vector<8x512xf32> to vector<512xf32>
      %2015 = vector.shape_cast %2014 : vector<512xf32> to vector<1x512xf32>
      %cst_456 = arith.constant 9.99999993E-9 : f32
      %2016 = vector.broadcast %cst_456 : f32 to vector<1x512xf32>
      %2017 = arith.addf %2015, %2016 : vector<1x512xf32>
      %2018 = tpu.reciprocal %2017 : vector<1x512xf32> -> vector<1x512xf32>
      %2019 = arith.mulf %2011, %2018 : vector<1x512xf32>
      %c2_457 = arith.constant 2 : index
      %c0_458 = arith.constant 0 : index
      %2020 = vector.load %arg5[%c2_457, %c0_458] : memref<8x512xf32, #tpu.memory_space<vmem>>, vector<1x512xf32>
      tpu.vector_store %arg5[%c2_457, %c0_458], %2019 {strides = array<i32>} : memref<8x512xf32, #tpu.memory_space<vmem>>, vector<1x512xf32>,
      %c3_459 = arith.constant 3 : index
      %c0_460 = arith.constant 0 : index
      %c0_461 = arith.constant 0 : index
      %2021 = vector.load %arg6[%c3_459, %c0_460, %c0_461] : memref<8x8x512xf32, #tpu.memory_space<vmem>>, vector<1x8x512xf32>
      %2022 = vector.shape_cast %2021 : vector<1x8x512xf32> to vector<8x512xf32>
      %cst_462 = arith.constant dense<0.000000e+00> : vector<512xf32>
      %2023 = vector.multi_reduction <add>, %2022, %cst_462 [0] : vector<8x512xf32> to vector<512xf32>
      %2024 = vector.shape_cast %2023 : vector<512xf32> to vector<1x512xf32>
      %cst_463 = arith.constant 9.99999993E-9 : f32
      %2025 = vector.broadcast %cst_463 : f32 to vector<1x512xf32>
      %2026 = arith.addf %2024, %2025 : vector<1x512xf32>
      %c3_464 = arith.constant 3 : index
      %c0_465 = arith.constant 0 : index
      %c0_466 = arith.constant 0 : index
      %2027 = vector.load %arg7[%c3_464, %c0_465, %c0_466] : memref<8x8x512xf32, #tpu.memory_space<vmem>>, vector<1x8x512xf32>
      %2028 = vector.shape_cast %2027 : vector<1x8x512xf32> to vector<8x512xf32>
      %cst_467 = arith.constant dense<0.000000e+00> : vector<512xf32>
      %2029 = vector.multi_reduction <add>, %2028, %cst_467 [0] : vector<8x512xf32> to vector<512xf32>
      %2030 = vector.shape_cast %2029 : vector<512xf32> to vector<1x512xf32>
      %cst_468 = arith.constant 9.99999993E-9 : f32
      %2031 = vector.broadcast %cst_468 : f32 to vector<1x512xf32>
      %2032 = arith.addf %2030, %2031 : vector<1x512xf32>
      %2033 = tpu.reciprocal %2032 : vector<1x512xf32> -> vector<1x512xf32>
      %2034 = arith.mulf %2026, %2033 : vector<1x512xf32>
      %c3_469 = arith.constant 3 : index
      %c0_470 = arith.constant 0 : index
      %2035 = vector.load %arg5[%c3_469, %c0_470] : memref<8x512xf32, #tpu.memory_space<vmem>>, vector<1x512xf32>
      tpu.vector_store %arg5[%c3_469, %c0_470], %2034 {strides = array<i32>} : memref<8x512xf32, #tpu.memory_space<vmem>>, vector<1x512xf32>,
      %c4_471 = arith.constant 4 : index
      %c0_472 = arith.constant 0 : index
      %c0_473 = arith.constant 0 : index
      %2036 = vector.load %arg6[%c4_471, %c0_472, %c0_473] : memref<8x8x512xf32, #tpu.memory_space<vmem>>, vector<1x8x512xf32>
      %2037 = vector.shape_cast %2036 : vector<1x8x512xf32> to vector<8x512xf32>
      %cst_474 = arith.constant dense<0.000000e+00> : vector<512xf32>
      %2038 = vector.multi_reduction <add>, %2037, %cst_474 [0] : vector<8x512xf32> to vector<512xf32>
      %2039 = vector.shape_cast %2038 : vector<512xf32> to vector<1x512xf32>
      %cst_475 = arith.constant 9.99999993E-9 : f32
      %2040 = vector.broadcast %cst_475 : f32 to vector<1x512xf32>
      %2041 = arith.addf %2039, %2040 : vector<1x512xf32>
      %c4_476 = arith.constant 4 : index
      %c0_477 = arith.constant 0 : index
      %c0_478 = arith.constant 0 : index
      %2042 = vector.load %arg7[%c4_476, %c0_477, %c0_478] : memref<8x8x512xf32, #tpu.memory_space<vmem>>, vector<1x8x512xf32>
      %2043 = vector.shape_cast %2042 : vector<1x8x512xf32> to vector<8x512xf32>
      %cst_479 = arith.constant dense<0.000000e+00> : vector<512xf32>
      %2044 = vector.multi_reduction <add>, %2043, %cst_479 [0] : vector<8x512xf32> to vector<512xf32>
      %2045 = vector.shape_cast %2044 : vector<512xf32> to vector<1x512xf32>
      %cst_480 = arith.constant 9.99999993E-9 : f32
      %2046 = vector.broadcast %cst_480 : f32 to vector<1x512xf32>
      %2047 = arith.addf %2045, %2046 : vector<1x512xf32>
      %2048 = tpu.reciprocal %2047 : vector<1x512xf32> -> vector<1x512xf32>
      %2049 = arith.mulf %2041, %2048 : vector<1x512xf32>
      %c4_481 = arith.constant 4 : index
      %c0_482 = arith.constant 0 : index
      %2050 = vector.load %arg5[%c4_481, %c0_482] : memref<8x512xf32, #tpu.memory_space<vmem>>, vector<1x512xf32>
      tpu.vector_store %arg5[%c4_481, %c0_482], %2049 {strides = array<i32>} : memref<8x512xf32, #tpu.memory_space<vmem>>, vector<1x512xf32>,
      %c5_483 = arith.constant 5 : index
      %c0_484 = arith.constant 0 : index
      %c0_485 = arith.constant 0 : index
      %2051 = vector.load %arg6[%c5_483, %c0_484, %c0_485] : memref<8x8x512xf32, #tpu.memory_space<vmem>>, vector<1x8x512xf32>
      %2052 = vector.shape_cast %2051 : vector<1x8x512xf32> to vector<8x512xf32>
      %cst_486 = arith.constant dense<0.000000e+00> : vector<512xf32>
      %2053 = vector.multi_reduction <add>, %2052, %cst_486 [0] : vector<8x512xf32> to vector<512xf32>
      %2054 = vector.shape_cast %2053 : vector<512xf32> to vector<1x512xf32>
      %cst_487 = arith.constant 9.99999993E-9 : f32
      %2055 = vector.broadcast %cst_487 : f32 to vector<1x512xf32>
      %2056 = arith.addf %2054, %2055 : vector<1x512xf32>
      %c5_488 = arith.constant 5 : index
      %c0_489 = arith.constant 0 : index
      %c0_490 = arith.constant 0 : index
      %2057 = vector.load %arg7[%c5_488, %c0_489, %c0_490] : memref<8x8x512xf32, #tpu.memory_space<vmem>>, vector<1x8x512xf32>
      %2058 = vector.shape_cast %2057 : vector<1x8x512xf32> to vector<8x512xf32>
      %cst_491 = arith.constant dense<0.000000e+00> : vector<512xf32>
      %2059 = vector.multi_reduction <add>, %2058, %cst_491 [0] : vector<8x512xf32> to vector<512xf32>
      %2060 = vector.shape_cast %2059 : vector<512xf32> to vector<1x512xf32>
      %cst_492 = arith.constant 9.99999993E-9 : f32
      %2061 = vector.broadcast %cst_492 : f32 to vector<1x512xf32>
      %2062 = arith.addf %2060, %2061 : vector<1x512xf32>
      %2063 = tpu.reciprocal %2062 : vector<1x512xf32> -> vector<1x512xf32>
      %2064 = arith.mulf %2056, %2063 : vector<1x512xf32>
      %c5_493 = arith.constant 5 : index
      %c0_494 = arith.constant 0 : index
      %2065 = vector.load %arg5[%c5_493, %c0_494] : memref<8x512xf32, #tpu.memory_space<vmem>>, vector<1x512xf32>
      tpu.vector_store %arg5[%c5_493, %c0_494], %2064 {strides = array<i32>} : memref<8x512xf32, #tpu.memory_space<vmem>>, vector<1x512xf32>,
      %c6_495 = arith.constant 6 : index
      %c0_496 = arith.constant 0 : index
      %c0_497 = arith.constant 0 : index
      %2066 = vector.load %arg6[%c6_495, %c0_496, %c0_497] : memref<8x8x512xf32, #tpu.memory_space<vmem>>, vector<1x8x512xf32>
      %2067 = vector.shape_cast %2066 : vector<1x8x512xf32> to vector<8x512xf32>
      %cst_498 = arith.constant dense<0.000000e+00> : vector<512xf32>
      %2068 = vector.multi_reduction <add>, %2067, %cst_498 [0] : vector<8x512xf32> to vector<512xf32>
      %2069 = vector.shape_cast %2068 : vector<512xf32> to vector<1x512xf32>
      %cst_499 = arith.constant 9.99999993E-9 : f32
      %2070 = vector.broadcast %cst_499 : f32 to vector<1x512xf32>
      %2071 = arith.addf %2069, %2070 : vector<1x512xf32>
      %c6_500 = arith.constant 6 : index
      %c0_501 = arith.constant 0 : index
      %c0_502 = arith.constant 0 : index
      %2072 = vector.load %arg7[%c6_500, %c0_501, %c0_502] : memref<8x8x512xf32, #tpu.memory_space<vmem>>, vector<1x8x512xf32>
      %2073 = vector.shape_cast %2072 : vector<1x8x512xf32> to vector<8x512xf32>
      %cst_503 = arith.constant dense<0.000000e+00> : vector<512xf32>
      %2074 = vector.multi_reduction <add>, %2073, %cst_503 [0] : vector<8x512xf32> to vector<512xf32>
      %2075 = vector.shape_cast %2074 : vector<512xf32> to vector<1x512xf32>
      %cst_504 = arith.constant 9.99999993E-9 : f32
      %2076 = vector.broadcast %cst_504 : f32 to vector<1x512xf32>
      %2077 = arith.addf %2075, %2076 : vector<1x512xf32>
      %2078 = tpu.reciprocal %2077 : vector<1x512xf32> -> vector<1x512xf32>
      %2079 = arith.mulf %2071, %2078 : vector<1x512xf32>
      %c6_505 = arith.constant 6 : index
      %c0_506 = arith.constant 0 : index
      %2080 = vector.load %arg5[%c6_505, %c0_506] : memref<8x512xf32, #tpu.memory_space<vmem>>, vector<1x512xf32>
      tpu.vector_store %arg5[%c6_505, %c0_506], %2079 {strides = array<i32>} : memref<8x512xf32, #tpu.memory_space<vmem>>, vector<1x512xf32>,
      %c7_507 = arith.constant 7 : index
      %c0_508 = arith.constant 0 : index
      %c0_509 = arith.constant 0 : index
      %2081 = vector.load %arg6[%c7_507, %c0_508, %c0_509] : memref<8x8x512xf32, #tpu.memory_space<vmem>>, vector<1x8x512xf32>
      %2082 = vector.shape_cast %2081 : vector<1x8x512xf32> to vector<8x512xf32>
      %cst_510 = arith.constant dense<0.000000e+00> : vector<512xf32>
      %2083 = vector.multi_reduction <add>, %2082, %cst_510 [0] : vector<8x512xf32> to vector<512xf32>
      %2084 = vector.shape_cast %2083 : vector<512xf32> to vector<1x512xf32>
      %cst_511 = arith.constant 9.99999993E-9 : f32
      %2085 = vector.broadcast %cst_511 : f32 to vector<1x512xf32>
      %2086 = arith.addf %2084, %2085 : vector<1x512xf32>
      %c7_512 = arith.constant 7 : index
      %c0_513 = arith.constant 0 : index
      %c0_514 = arith.constant 0 : index
      %2087 = vector.load %arg7[%c7_512, %c0_513, %c0_514] : memref<8x8x512xf32, #tpu.memory_space<vmem>>, vector<1x8x512xf32>
      %2088 = vector.shape_cast %2087 : vector<1x8x512xf32> to vector<8x512xf32>
      %cst_515 = arith.constant dense<0.000000e+00> : vector<512xf32>
      %2089 = vector.multi_reduction <add>, %2088, %cst_515 [0] : vector<8x512xf32> to vector<512xf32>
      %2090 = vector.shape_cast %2089 : vector<512xf32> to vector<1x512xf32>
      %cst_516 = arith.constant 9.99999993E-9 : f32
      %2091 = vector.broadcast %cst_516 : f32 to vector<1x512xf32>
      %2092 = arith.addf %2090, %2091 : vector<1x512xf32>
      %2093 = tpu.reciprocal %2092 : vector<1x512xf32> -> vector<1x512xf32>
      %2094 = arith.mulf %2086, %2093 : vector<1x512xf32>
      %c7_517 = arith.constant 7 : index
      %c0_518 = arith.constant 0 : index
      %2095 = vector.load %arg5[%c7_517, %c0_518] : memref<8x512xf32, #tpu.memory_space<vmem>>, vector<1x512xf32>
      tpu.vector_store %arg5[%c7_517, %c0_518], %2094 {strides = array<i32>} : memref<8x512xf32, #tpu.memory_space<vmem>>, vector<1x512xf32>,
    } else {
    }
    return
  }
  func.func @transform_0(%arg0: i32, %arg1: i32, %arg2: i32) -> (i32, i32, i32) {
    %c0_i32 = arith.constant 0 : i32
    %c0_i32_0 = arith.constant 0 : i32
    return %arg0, %arg2, %c0_i32 : i32, i32, i32
  }
  func.func @transform_1(%arg0: i32, %arg1: i32, %arg2: i32) -> (i32, i32) {
    %c0_i32 = arith.constant 0 : i32
    %c0_i32_0 = arith.constant 0 : i32
    return %c0_i32, %arg1 : i32, i32
  }
  func.func @transform_2(%arg0: i32, %arg1: i32, %arg2: i32) -> (i32, i32) {
    %c0_i32 = arith.constant 0 : i32
    return %arg0, %arg1 : i32, i32
  }
}

</mosaic_0001>

<llo_original>
// kernel: tile.8
$region0: #{tile.8}
  #allocation0 [shape = 's32[1]{0}', space=sflag, size = 0x4, scoped, tag = 'scoped memory for tile.8']
  %s0 = inlined_call_operand.vmem [shape: f32[32], index: 0, kind: input, shape index: {}]
  %s1 = inlined_call_operand.vmem [shape: f32[32,32], index: 1, kind: output, shape index: {}]
  // Predicated region
  $region2: #{tile.8} parent=0 // pred_check
    _
  $region3: #{tile.8} parent=0 // pred_check_branch
    %3 = sbr.rel (0) target = $region5
  $region4: #{tile.8} parent=0 // pred_region
    _
  $region5: #{tile.8} parent=0 // pred_fallthru
    _
  %v4 = vld [vmem:[%s0] ss:$0 sm:$0xff]
  %5 = vst [vmem:[%s1] sm:$0xff] %v4
  %s6 = scalar_lea.vmem %s1, 8
  %7 = vst [vmem:[%s6] sm:$0xff] %v4
  %s8 = scalar_lea.vmem %s1, 16
  %9 = vst [vmem:[%s8] sm:$0xff] %v4
  %s10 = scalar_lea.vmem %s1, 24
  %11 = vst [vmem:[%s10] sm:$0xff] %v4

// kernel: soft_rasterize_depth.1
$region0: #{soft_rasterize_depth.1}
  #allocation0 [shape = 'u32[]', space=smem, size = 0x4, offset = 0x4, fixed_abs, tag = 'smem constant byte address 0x4 - core index']
  #allocation1 [shape = 'u32[144,128]{1,0:T(1,128)}', space=vmem, size = 0x12000, scoped, tag = 'internal scratch']
  #allocation2 [shape = 'f32[8,8,512]{2,1,0:T(8,128)}', space=vmem, size = 0x20000, scoped, tag = 'scratch operand']
  #allocation3 [shape = 'f32[8,8,512]{2,1,0:T(8,128)}', space=vmem, size = 0x20000, scoped, tag = 'scratch operand']
  %s0 = inlined_call_operand.vmem [shape: f32[8,64,8], index: 0, kind: input, shape index: {}]
  %s1 = inlined_call_operand.vmem [shape: f32[2,1024], index: 1, kind: input, shape index: {}]
  %s2 = inlined_call_operand.vmem [shape: f32[8,1024], index: 2, kind: output, shape index: {}]
  %s3 = sld [smem:[#allocation0]]
  $region49: #{soft_rasterize_depth.1} parent=0
    _
  %s5 = ssub.s32 1, %s3
  %s6 = scalar_select 0, %s5, %s3
  loop: start=0, step=1, limit=4
  $region2: #{soft_rasterize_depth.1} parent=0 // loop_pre_header
    _
  $region3: #{soft_rasterize_depth.1} parent=0 // loop_header
    %s8 = sphi 0, %s12
    %p9 = scmp.ge.s32.totalorder %s8, 4
    %s15 = sphi 0, %s34
    %s16 = sphi 0, %s30
    %s17 = sphi 0, %s26
    %s18 = sphi 0, %s15
    %s19 = sphi 0, %s16
    %s20 = sphi 0, %s17
    %s21 = sphi 0, %s18
    %s22 = sphi 0, %s19
    %s23 = sphi 0, %s20
    %s39 = sphi 0, %s41
    %s42 = sphi 0, %s39
    %s43 = sphi 0, %s42
    %s59 = sphi 0, %s43
    %s65 = sphi 0, %s67
    %s68 = sphi 0, %s65
    %s69 = sphi 0, %s68
    %s85 = sphi 0, %s69
    %s93 = sphi 0, %s95
    %s96 = sphi 0, %s93
    %s97 = sphi 0, %s96
    %s113 = sphi 0, %s97
  $region4: #{soft_rasterize_depth.1} parent=0 // loop_header_branch
    %11 = sbr.rel (%p9) target = $region8
  $region5: #{soft_rasterize_depth.1} parent=0 // loop_body
    %s13 = ssub.s32 %s8, 1
    %s14 = ssub.s32 %s8, 2
    %s24 = sadd.s32 1, %s17
    %p25 = scmp.ge.s32.totalorder %s24, 1
    %s26 = scalar_select %p25, 0, %s24
    %s27 = sadd.s32 1, %s16
    %s28 = scalar_select %p25, %s27, %s16
    %p29 = scmp.ge.s32.totalorder %s28, 2
    %s30 = scalar_select %p29, 0, %s28
    %s31 = sadd.s32 1, %s15
    %s32 = scalar_select %p29, %s31, %s15
    %p33 = scmp.ge.s32.totalorder %s32, 1
    %s34 = scalar_select %p33, 0, %s32
    %s35 = ssub.s32 %s15, %s34
    %s36 = ssub.s32 %s17, %s26
    %s37 = sor.u32 %s35, %s36
    %p38 = scmp.eq.s32.totalorder %s37, 0
    %s40 = sadd.s32 %s39, 1
    %s41 = scalar_select %p38, %s39, %s40
    %p44 = pneg %p38
    %p45 = scmp.eq.s32.totalorder %s8, 1
    %p46 = por %p44, %p45
    %p47 = scmp.ne.s32.totalorder %s39, %s42
    %p48 = scmp.eq.s32.totalorder %s8, 0
    %p49 = por %p47, %p48
    %p50 = scmp.ne.s32.totalorder %s39, %s42
    %p51 = scmp.eq.s32.totalorder %s13, 1
    %p52 = por %p50, %p51
    %p53 = scmp.ne.s32.totalorder %s42, %s43
    %p54 = scmp.eq.s32.totalorder %s13, 0
    %p55 = por %p53, %p54
    %p56 = scmp.ne.s32.totalorder %s42, %s43
    %p57 = scmp.eq.s32.totalorder %s14, 1
    %p58 = por %p56, %p57
    %p60 = scmp.ne.s32.totalorder %s43, %s59
    %p61 = scmp.eq.s32.totalorder %s14, 0
    %p62 = por %p60, %p61
    %s63 = ssub.s32 %s16, %s30
    %p64 = scmp.eq.s32.totalorder %s63, 0
    %s66 = sadd.s32 %s65, 1
    %s67 = scalar_select %p64, %s65, %s66
    %p70 = pneg %p64
    %p71 = scmp.eq.s32.totalorder %s8, 1
    %p72 = por %p70, %p71
    %p73 = scmp.ne.s32.totalorder %s65, %s68
    %p74 = scmp.eq.s32.totalorder %s8, 0
    %p75 = por %p73, %p74
    %p76 = scmp.ne.s32.totalorder %s65, %s68
    %p77 = scmp.eq.s32.totalorder %s13, 1
    %p78 = por %p76, %p77
    %p79 = scmp.ne.s32.totalorder %s68, %s69
    %p80 = scmp.eq.s32.totalorder %s13, 0
    %p81 = por %p79, %p80
    %p82 = scmp.ne.s32.totalorder %s68, %s69
    %p83 = scmp.eq.s32.totalorder %s14, 1
    %p84 = por %p82, %p83
    %p86 = scmp.ne.s32.totalorder %s69, %s85
    %p87 = scmp.eq.s32.totalorder %s14, 0
    %p88 = por %p86, %p87
    %s89 = ssub.s32 %s15, %s34
    %s90 = ssub.s32 %s16, %s30
    %s91 = sor.u32 %s89, %s90
    %p92 = scmp.eq.s32.totalorder %s91, 0
    %s94 = sadd.s32 %s93, 1
    %s95 = scalar_select %p92, %s93, %s94
    %p98 = pneg %p92
    %p99 = scmp.eq.s32.totalorder %s8, 1
    %p100 = por %p98, %p99
    %p101 = scmp.ne.s32.totalorder %s93, %s96
    %p102 = scmp.eq.s32.totalorder %s8, 0
    %p103 = por %p101, %p102
    %p104 = scmp.ne.s32.totalorder %s93, %s96
    %p105 = scmp.eq.s32.totalorder %s13, 1
    %p106 = por %p104, %p105
    %p107 = scmp.ne.s32.totalorder %s96, %s97
    %p108 = scmp.eq.s32.totalorder %s13, 0
    %p109 = por %p107, %p108
    %p110 = scmp.ne.s32.totalorder %s96, %s97
    %p111 = scmp.eq.s32.totalorder %s14, 1
    %p112 = por %p110, %p111
    %p114 = scmp.ne.s32.totalorder %s97, %s113
    %p115 = scmp.eq.s32.totalorder %s14, 0
    %p116 = por %p114, %p115
    %p117 = scmp.le.s32.totalorder 1, %s8
    %p118 = scmp.lt.s32.totalorder %s8, 3
    %p119 = pnand %p117, %p118
    %p120 = pneg %p119
    // Predicated region
    $region9: #{soft_rasterize_depth.1} parent=5 // pred_check
      _
    $region10: #{soft_rasterize_depth.1} parent=5 // pred_check_branch
      %122 = sbr.rel (%p119) target = $region12
    $region11: #{soft_rasterize_depth.1} parent=5 // pred_region
      %s123 = ssub.s32 %s8, 1
      // Predicated region
      $region13: #{soft_rasterize_depth.1} parent=11 // pred_check
        %p124 = pneg %p55
      $region14: #{soft_rasterize_depth.1} parent=11 // pred_check_branch
        %126 = sbr.rel (%p124) target = $region16
      $region15: #{soft_rasterize_depth.1} parent=11 // pred_region
        %s127 = smul.u32 8, %s18
        %s128 = smul.u32 8, %s20
        %p129 = scmp.lt.s32.totalorder %s127, 7
        %s130 = scalar_select %p129, %s127, 7
        %p131 = scmp.lt.s32.totalorder %s128, 7
        %s132 = scalar_select %p131, %s128, 7
        %s133 = smul.addr %s130, 8
        %s134 = sadd.s32 %s132, %s133
        %s135 = smul.addr %s134, 8
        %s136 = scalar_lea.vmem %s0, %s135
        %s137 = smul.u32 8, %s18
        %s138 = smul.u32 8, %s20
      $region16: #{soft_rasterize_depth.1} parent=11 // pred_fallthru
        _
    $region12: #{soft_rasterize_depth.1} parent=5 // pred_fallthru
      _
    %p139 = scmp.lt.s32.totalorder %s8, 2
    // Predicated region
    $region17: #{soft_rasterize_depth.1} parent=5 // pred_check
      %p140 = pneg %p139
    $region18: #{soft_rasterize_depth.1} parent=5 // pred_check_branch
      %142 = sbr.rel (%p140) target = $region20
    $region19: #{soft_rasterize_depth.1} parent=5 // pred_region
      // Predicated region
      $region21: #{soft_rasterize_depth.1} parent=19 // pred_check
        %p143 = pneg %p75
      $region22: #{soft_rasterize_depth.1} parent=19 // pred_check_branch
        %145 = sbr.rel (%p143) target = $region24
      $region23: #{soft_rasterize_depth.1} parent=19 // pred_region
        %s146 = smul.u32 4, %s16
        %p147 = scmp.lt.s32.totalorder %s146, 7
        %s148 = scalar_select %p147, %s146, 7
        %s149 = smul.addr %s148, 2
        %s150 = scalar_lea.vmem %s1, %s149
        %s151 = smul.u32 4, %s16
      $region24: #{soft_rasterize_depth.1} parent=19 // pred_fallthru
        _
    $region20: #{soft_rasterize_depth.1} parent=5 // pred_fallthru
      _
    %p152 = scmp.le.s32.totalorder 1, %s8
    %p153 = scmp.lt.s32.totalorder %s8, 3
    %p154 = pnand %p152, %p153
    %p155 = pneg %p154
    // Predicated region
    $region25: #{soft_rasterize_depth.1} parent=5 // pred_check
      _
    $region26: #{soft_rasterize_depth.1} parent=5 // pred_check_branch
      %157 = sbr.rel (%p154) target = $region28
    $region27: #{soft_rasterize_depth.1} parent=5 // pred_region
      %s158 = ssub.s32 %s8, 1
      %s159 = smul.u32 8, %s18
      %s160 = smul.u32 8, %s20
      %p161 = scmp.lt.s32.totalorder %s159, 7
      %s162 = scalar_select %p161, %s159, 7
      %p163 = scmp.lt.s32.totalorder %s160, 7
      %s164 = scalar_select %p163, %s160, 7
      %s165 = smul.addr %s162, 8
      %s166 = sadd.s32 %s164, %s165
      %s167 = smul.addr %s166, 8
      %s168 = scalar_lea.vmem %s0, %s167
      %p169 = pneg %p55
      %p170 = pneg %p52
      %s171 = smul.u32 4, %s19
      %p172 = scmp.lt.s32.totalorder %s171, 7
      %s173 = scalar_select %p172, %s171, 7
      %s174 = smul.addr %s173, 2
      %s175 = scalar_lea.vmem %s1, %s174
      %p176 = pneg %p81
      %p177 = pneg %p78
      %p178 = pneg %p109
      %p179 = pneg %p106
      %s180 = smul.u32 4, %s19
      %p181 = scmp.lt.s32.totalorder %s18, 0
      %s182 = scalar_select %p181, %s18, 0
      %p183 = scmp.lt.s32.totalorder %s180, 7
      %s184 = scalar_select %p183, %s180, 7
      %s185 = smul.addr %s182, 8
      %s186 = sadd.s32 %s184, %s185
      %s187 = smul.addr %s186, 8
      %s188 = scalar_lea.vmem %s2, %s187
      %s189 = smul.u32 8, %s18
      %s190 = smul.u32 8, %s20
      %p191 = scmp.lt.s32.totalorder %s189, 7
      %s192 = scalar_select %p191, %s189, 7
      %p193 = scmp.lt.s32.totalorder %s190, 7
      %s194 = scalar_select %p193, %s190, 7
      %s195 = smul.addr %s192, 8
      %s196 = sadd.s32 %s194, %s195
      %s197 = smul.addr %s196, 8
      %s198 = scalar_lea.vmem %s0, %s197
      %s199 = smul.u32 8, %s18
      %s200 = smul.u32 8, %s20
      %s201 = smul.u32 4, %s19
      %p202 = scmp.lt.s32.totalorder %s201, 7
      %s203 = scalar_select %p202, %s201, 7
      %s204 = smul.addr %s203, 2
      %s205 = scalar_lea.vmem %s1, %s204
      %s206 = smul.u32 4, %s19
      %s207 = smul.u32 4, %s19
      %p208 = scmp.lt.s32.totalorder %s18, 0
      %s209 = scalar_select %p208, %s18, 0
      %p210 = scmp.lt.s32.totalorder %s207, 7
      %s211 = scalar_select %p210, %s207, 7
      %s212 = smul.addr %s209, 8
      %s213 = sadd.s32 %s211, %s212
      %s214 = smul.addr %s213, 8
      %s215 = scalar_lea.vmem %s2, %s214
      %s216 = smul.u32 4, %s19
      %p217 = scmp.eq.s32.totalorder %s20, 0
      // Predicated region
      $region29: #{soft_rasterize_depth.1} parent=27 // pred_check
        %p218 = pneg %p217
      $region30: #{soft_rasterize_depth.1} parent=27 // pred_check_branch
        %220 = sbr.rel (%p218) target = $region32
      $region31: #{soft_rasterize_depth.1} parent=27 // pred_region
        %221 = vst [vmem:[#allocation2] sm:$0xff] 0.0
        %222 = vst [vmem:[#allocation2 + $0x8] sm:$0xff] 0.0
        %223 = vst [vmem:[#allocation2 + $0x10] sm:$0xff] 0.0
        %224 = vst [vmem:[#allocation2 + $0x18] sm:$0xff] 0.0
        %225 = vst [vmem:[#allocation2 + $0x20] sm:$0xff] 0.0
        %226 = vst [vmem:[#allocation2 + $0x28] sm:$0xff] 0.0
        %227 = vst [vmem:[#allocation2 + $0x30] sm:$0xff] 0.0
        %228 = vst [vmem:[#allocation2 + $0x38] sm:$0xff] 0.0
        %229 = vst [vmem:[#allocation2 + $0x40] sm:$0xff] 0.0
        %230 = vst [vmem:[#allocation2 + $0x48] sm:$0xff] 0.0
        %231 = vst [vmem:[#allocation2 + $0x50] sm:$0xff] 0.0
        %232 = vst [vmem:[#allocation2 + $0x58] sm:$0xff] 0.0
        %233 = vst [vmem:[#allocation2 + $0x60] sm:$0xff] 0.0
        %234 = vst [vmem:[#allocation2 + $0x68] sm:$0xff] 0.0
        %235 = vst [vmem:[#allocation2 + $0x70] sm:$0xff] 0.0
        %236 = vst [vmem:[#allocation2 + $0x78] sm:$0xff] 0.0
        %237 = vst [vmem:[#allocation2 + $0x80] sm:$0xff] 0.0
        %238 = vst [vmem:[#allocation2 + $0x88] sm:$0xff] 0.0
        %239 = vst [vmem:[#allocation2 + $0x90] sm:$0xff] 0.0
        %240 = vst [vmem:[#allocation2 + $0x98] sm:$0xff] 0.0
        %241 = vst [vmem:[#allocation2 + $0xa0] sm:$0xff] 0.0
        %242 = vst [vmem:[#allocation2 + $0xa8] sm:$0xff] 0.0
        %243 = vst [vmem:[#allocation2 + $0xb0] sm:$0xff] 0.0
        %244 = vst [vmem:[#allocation2 + $0xb8] sm:$0xff] 0.0
        %245 = vst [vmem:[#allocation2 + $0xc0] sm:$0xff] 0.0
        %246 = vst [vmem:[#allocation2 + $0xc8] sm:$0xff] 0.0
        %247 = vst [vmem:[#allocation2 + $0xd0] sm:$0xff] 0.0
        %248 = vst [vmem:[#allocation2 + $0xd8] sm:$0xff] 0.0
        %249 = vst [vmem:[#allocation2 + $0xe0] sm:$0xff] 0.0
        %250 = vst [vmem:[#allocation2 + $0xe8] sm:$0xff] 0.0
        %251 = vst [vmem:[#allocation2 + $0xf0] sm:$0xff] 0.0
        %252 = vst [vmem:[#allocation2 + $0xf8] sm:$0xff] 0.0
        %253 = vst [vmem:[#allocation3] sm:$0xff] 0.0
        %254 = vst [vmem:[#allocation3 + $0x8] sm:$0xff] 0.0
        %255 = vst [vmem:[#allocation3 + $0x10] sm:$0xff] 0.0
        %256 = vst [vmem:[#allocation3 + $0x18] sm:$0xff] 0.0
        %257 = vst [vmem:[#allocation3 + $0x20] sm:$0xff] 0.0
        %258 = vst [vmem:[#allocation3 + $0x28] sm:$0xff] 0.0
        %259 = vst [vmem:[#allocation3 + $0x30] sm:$0xff] 0.0
        %260 = vst [vmem:[#allocation3 + $0x38] sm:$0xff] 0.0
        %261 = vst [vmem:[#allocation3 + $0x40] sm:$0xff] 0.0
        %262 = vst [vmem:[#allocation3 + $0x48] sm:$0xff] 0.0
        %263 = vst [vmem:[#allocation3 + $0x50] sm:$0xff] 0.0
        %264 = vst [vmem:[#allocation3 + $0x58] sm:$0xff] 0.0
        %265 = vst [vmem:[#allocation3 + $0x60] sm:$0xff] 0.0
        %266 = vst [vmem:[#allocation3 + $0x68] sm:$0xff] 0.0
        %267 = vst [vmem:[#allocation3 + $0x70] sm:$0xff] 0.0
        %268 = vst [vmem:[#allocation3 + $0x78] sm:$0xff] 0.0
        %269 = vst [vmem:[#allocation3 + $0x80] sm:$0xff] 0.0
        %270 = vst [vmem:[#allocation3 + $0x88] sm:$0xff] 0.0
        %271 = vst [vmem:[#allocation3 + $0x90] sm:$0xff] 0.0
        %272 = vst [vmem:[#allocation3 + $0x98] sm:$0xff] 0.0
        %273 = vst [vmem:[#allocation3 + $0xa0] sm:$0xff] 0.0
        %274 = vst [vmem:[#allocation3 + $0xa8] sm:$0xff] 0.0
        %275 = vst [vmem:[#allocation3 + $0xb0] sm:$0xff] 0.0
        %276 = vst [vmem:[#allocation3 + $0xb8] sm:$0xff] 0.0
        %277 = vst [vmem:[#allocation3 + $0xc0] sm:$0xff] 0.0
        %278 = vst [vmem:[#allocation3 + $0xc8] sm:$0xff] 0.0
        %279 = vst [vmem:[#allocation3 + $0xd0] sm:$0xff] 0.0
        %280 = vst [vmem:[#allocation3 + $0xd8] sm:$0xff] 0.0
        %281 = vst [vmem:[#allocation3 + $0xe0] sm:$0xff] 0.0
        %282 = vst [vmem:[#allocation3 + $0xe8] sm:$0xff] 0.0
        %283 = vst [vmem:[#allocation3 + $0xf0] sm:$0xff] 0.0
        %284 = vst [vmem:[#allocation3 + $0xf8] sm:$0xff] 0.0
      $region32: #{soft_rasterize_depth.1} parent=27 // pred_fallthru
        _
      %v285 = vld [vmem:[%s205] ss:$2 sm:$0xf]
      %s286 = scalar_lea.vmem %s205, 1
      %v287 = vld [vmem:[%s286] ss:$2 sm:$0xf]
      %v288 = vld [vmem:[%s198] sm:$0xff]
      %v290 = vlaneseq
      %v291 = vshrl.u32 %v290, 7
      %v292 = vsub.s32 0, %v291
      %v293 = vrot.slane %v285, %v292
      %v294 = vlaneseq
      %v295 = vshrl.u32 %v294, 7
      %v296 = vsub.s32 1, %v295
      %v297 = vrot.slane %v285, %v296
      %v298 = vlaneseq
      %v299 = vshrl.u32 %v298, 7
      %v300 = vsub.s32 2, %v299
      %v301 = vrot.slane %v285, %v300
      %v302 = vlaneseq
      %v303 = vshrl.u32 %v302, 7
      %v304 = vsub.s32 3, %v303
      %v305 = vrot.slane %v285, %v304
      %311 = vset.pattern.permute.xlu0 0
      %312 = vperm.xlu0 %311, %v288
      %v313 = vpop.permute.xlu0 %312
      %v315 = vsub.f32 %v293, %v313
      %v316 = vsub.f32 %v297, %v313
      %v317 = vsub.f32 %v301, %v313
      %v318 = vsub.f32 %v305, %v313
      %v320 = vlaneseq
      %v321 = vshrl.u32 %v320, 7
      %v322 = vsub.s32 0, %v321
      %v323 = vrot.slane %v287, %v322
      %v324 = vlaneseq
      %v325 = vshrl.u32 %v324, 7
      %v326 = vsub.s32 1, %v325
      %v327 = vrot.slane %v287, %v326
      %v328 = vlaneseq
      %v329 = vshrl.u32 %v328, 7
      %v330 = vsub.s32 2, %v329
      %v331 = vrot.slane %v287, %v330
      %v332 = vlaneseq
      %v333 = vshrl.u32 %v332, 7
      %v334 = vsub.s32 3, %v333
      %v335 = vrot.slane %v287, %v334
      %340 = vset.pattern.permute.xlu0 1
      %341 = vperm.xlu0 %340, %v288
      %v342 = vpop.permute.xlu0 %341
      %v344 = vsub.f32 %v323, %v342
      %v345 = vsub.f32 %v327, %v342
      %v346 = vsub.f32 %v331, %v342
      %v347 = vsub.f32 %v335, %v342
      %v348 = vmul.f32 %v315, %v315
      %v349 = vmul.f32 %v316, %v316
      %v350 = vmul.f32 %v317, %v317
      %v351 = vmul.f32 %v318, %v318
      %v352 = vmul.f32 %v344, %v344
      %v353 = vmul.f32 %v345, %v345
      %v354 = vmul.f32 %v346, %v346
      %v355 = vmul.f32 %v347, %v347
      %v356 = vadd.f32 %v348, %v352
      %v357 = vadd.f32 %v349, %v353
      %v358 = vadd.f32 %v350, %v354
      %v359 = vadd.f32 %v351, %v355
      %v360 = vsub.f32 0.0, %v356
      %v361 = vsub.f32 0.0, %v357
      %v362 = vsub.f32 0.0, %v358
      %v363 = vsub.f32 0.0, %v359
      %v364 = vmul.f32 %v360, 1.442695
      %v365 = vpow.pop %v364
      %v366 = vmul.f32 %v361, 1.442695
      %v367 = vpow.pop %v366
      %v368 = vmul.f32 %v362, 1.442695
      %v369 = vpow.pop %v368
      %v370 = vmul.f32 %v363, 1.442695
      %v371 = vpow.pop %v370
      %372 = vset.pattern.permute.xlu0 2
      %373 = vperm.xlu0 %372, %v288
      %v374 = vpop.permute.xlu0 %373
      %vm376 = vcmp.le.f32.partialorder %v356, %v374
      %vm377 = vcmp.le.f32.partialorder %v357, %v374
      %vm378 = vcmp.le.f32.partialorder %v358, %v374
      %vm379 = vcmp.le.f32.partialorder %v359, %v374
      %v380 = vsel %vm376, %v365, 0.0
      %v381 = vsel %vm377, %v367, 0.0
      %v382 = vsel %vm378, %v369, 0.0
      %v383 = vsel %vm379, %v371, 0.0
      %384 = vset.pattern.permute.xlu0 4
      %385 = vperm.xlu0 %384, %v288
      %v386 = vpop.permute.xlu0 %385
      %v388 = vmul.f32 %v380, %v386
      %v389 = vmul.f32 %v381, %v386
      %v390 = vmul.f32 %v382, %v386
      %v391 = vmul.f32 %v383, %v386
      %v392 = vadd.f32 %v388, 0.0
      %v393 = vadd.f32 %v389, 0.0
      %v394 = vadd.f32 %v390, 0.0
      %v395 = vadd.f32 %v391, 0.0
      %396 = vset.pattern.permute.xlu0 3
      %397 = vperm.xlu0 %396, %v288
      %v398 = vpop.permute.xlu0 %397
      %v400 = vmul.f32 %v380, %v398
      %v401 = vmul.f32 %v381, %v398
      %v402 = vmul.f32 %v382, %v398
      %v403 = vmul.f32 %v383, %v398
      %v404 = vadd.f32 %v400, 0.0
      %v405 = vadd.f32 %v401, 0.0
      %v406 = vadd.f32 %v402, 0.0
      %v407 = vadd.f32 %v403, 0.0
      %v408 = vld [vmem:[%s198 + $0x8] sm:$0xff]
      %410 = vset.pattern.permute.xlu0 0
      %411 = vperm.xlu0 %410, %v408
      %v412 = vpop.permute.xlu0 %411
      %v414 = vsub.f32 %v293, %v412
      %v415 = vsub.f32 %v297, %v412
      %v416 = vsub.f32 %v301, %v412
      %v417 = vsub.f32 %v305, %v412
      %418 = vset.pattern.permute.xlu0 1
      %419 = vperm.xlu0 %418, %v408
      %v420 = vpop.permute.xlu0 %419
      %v422 = vsub.f32 %v323, %v420
      %v423 = vsub.f32 %v327, %v420
      %v424 = vsub.f32 %v331, %v420
      %v425 = vsub.f32 %v335, %v420
      %v426 = vmul.f32 %v414, %v414
      %v427 = vmul.f32 %v415, %v415
      %v428 = vmul.f32 %v416, %v416
      %v429 = vmul.f32 %v417, %v417
      %v430 = vmul.f32 %v422, %v422
      %v431 = vmul.f32 %v423, %v423
      %v432 = vmul.f32 %v424, %v424
      %v433 = vmul.f32 %v425, %v425
      %v434 = vadd.f32 %v426, %v430
      %v435 = vadd.f32 %v427, %v431
      %v436 = vadd.f32 %v428, %v432
      %v437 = vadd.f32 %v429, %v433
      %v438 = vsub.f32 0.0, %v434
      %v439 = vsub.f32 0.0, %v435
      %v440 = vsub.f32 0.0, %v436
      %v441 = vsub.f32 0.0, %v437
      %v442 = vmul.f32 %v438, 1.442695
      %v443 = vpow.pop %v442
      %v444 = vmul.f32 %v439, 1.442695
      %v445 = vpow.pop %v444
      %v446 = vmul.f32 %v440, 1.442695
      %v447 = vpow.pop %v446
      %v448 = vmul.f32 %v441, 1.442695
      %v449 = vpow.pop %v448
      %450 = vset.pattern.permute.xlu0 2
      %451 = vperm.xlu0 %450, %v408
      %v452 = vpop.permute.xlu0 %451
      %vm454 = vcmp.le.f32.partialorder %v434, %v452
      %vm455 = vcmp.le.f32.partialorder %v435, %v452
      %vm456 = vcmp.le.f32.partialorder %v436, %v452
      %vm457 = vcmp.le.f32.partialorder %v437, %v452
      %v458 = vsel %vm454, %v443, 0.0
      %v459 = vsel %vm455, %v445, 0.0
      %v460 = vsel %vm456, %v447, 0.0
      %v461 = vsel %vm457, %v449, 0.0
      %462 = vset.pattern.permute.xlu0 4
      %463 = vperm.xlu0 %462, %v408
      %v464 = vpop.permute.xlu0 %463
      %v466 = vmul.f32 %v458, %v464
      %v467 = vmul.f32 %v459, %v464
      %v468 = vmul.f32 %v460, %v464
      %v469 = vmul.f32 %v461, %v464
      %v470 = vadd.f32 %v392, %v466
      %v471 = vadd.f32 %v393, %v467
      %v472 = vadd.f32 %v394, %v468
      %v473 = vadd.f32 %v395, %v469
      %474 = vset.pattern.permute.xlu0 3
      %475 = vperm.xlu0 %474, %v408
      %v476 = vpop.permute.xlu0 %475
      %v478 = vmul.f32 %v458, %v476
      %v479 = vmul.f32 %v459, %v476
      %v480 = vmul.f32 %v460, %v476
      %v481 = vmul.f32 %v461, %v476
      %v482 = vadd.f32 %v404, %v478
      %v483 = vadd.f32 %v405, %v479
      %v484 = vadd.f32 %v406, %v480
      %v485 = vadd.f32 %v407, %v481
      %v486 = vld [vmem:[%s198 + $0x10] sm:$0xff]
      %488 = vset.pattern.permute.xlu0 0
      %489 = vperm.xlu0 %488, %v486
      %v490 = vpop.permute.xlu0 %489
      %v492 = vsub.f32 %v293, %v490
      %v493 = vsub.f32 %v297, %v490
      %v494 = vsub.f32 %v301, %v490
      %v495 = vsub.f32 %v305, %v490
      %496 = vset.pattern.permute.xlu0 1
      %497 = vperm.xlu0 %496, %v486
      %v498 = vpop.permute.xlu0 %497
      %v500 = vsub.f32 %v323, %v498
      %v501 = vsub.f32 %v327, %v498
      %v502 = vsub.f32 %v331, %v498
      %v503 = vsub.f32 %v335, %v498
      %v504 = vmul.f32 %v492, %v492
      %v505 = vmul.f32 %v493, %v493
      %v506 = vmul.f32 %v494, %v494
      %v507 = vmul.f32 %v495, %v495
      %v508 = vmul.f32 %v500, %v500
      %v509 = vmul.f32 %v501, %v501
      %v510 = vmul.f32 %v502, %v502
      %v511 = vmul.f32 %v503, %v503
      %v512 = vadd.f32 %v504, %v508
      %v513 = vadd.f32 %v505, %v509
      %v514 = vadd.f32 %v506, %v510
      %v515 = vadd.f32 %v507, %v511
      %v516 = vsub.f32 0.0, %v512
      %v517 = vsub.f32 0.0, %v513
      %v518 = vsub.f32 0.0, %v514
      %v519 = vsub.f32 0.0, %v515
      %v520 = vmul.f32 %v516, 1.442695
      %v521 = vpow.pop %v520
      %v522 = vmul.f32 %v517, 1.442695
      %v523 = vpow.pop %v522
      %v524 = vmul.f32 %v518, 1.442695
      %v525 = vpow.pop %v524
      %v526 = vmul.f32 %v519, 1.442695
      %v527 = vpow.pop %v526
      %528 = vset.pattern.permute.xlu0 2
      %529 = vperm.xlu0 %528, %v486
      %v530 = vpop.permute.xlu0 %529
      %vm532 = vcmp.le.f32.partialorder %v512, %v530
      %vm533 = vcmp.le.f32.partialorder %v513, %v530
      %vm534 = vcmp.le.f32.partialorder %v514, %v530
      %vm535 = vcmp.le.f32.partialorder %v515, %v530
      %v536 = vsel %vm532, %v521, 0.0
      %v537 = vsel %vm533, %v523, 0.0
      %v538 = vsel %vm534, %v525, 0.0
      %v539 = vsel %vm535, %v527, 0.0
      %540 = vset.pattern.permute.xlu0 4
      %541 = vperm.xlu0 %540, %v486
      %v542 = vpop.permute.xlu0 %541
      %v544 = vmul.f32 %v536, %v542
      %v545 = vmul.f32 %v537, %v542
      %v546 = vmul.f32 %v538, %v542
      %v547 = vmul.f32 %v539, %v542
      %v548 = vadd.f32 %v470, %v544
      %v549 = vadd.f32 %v471, %v545
      %v550 = vadd.f32 %v472, %v546
      %v551 = vadd.f32 %v473, %v547
      %552 = vset.pattern.permute.xlu0 3
      %553 = vperm.xlu0 %552, %v486
      %v554 = vpop.permute.xlu0 %553
      %v556 = vmul.f32 %v536, %v554
      %v557 = vmul.f32 %v537, %v554
      %v558 = vmul.f32 %v538, %v554
      %v559 = vmul.f32 %v539, %v554
      %v560 = vadd.f32 %v482, %v556
      %v561 = vadd.f32 %v483, %v557
      %v562 = vadd.f32 %v484, %v558
      %v563 = vadd.f32 %v485, %v559
      %v564 = vld [vmem:[%s198 + $0x18] sm:$0xff]
      %566 = vset.pattern.permute.xlu0 0
      %567 = vperm.xlu0 %566, %v564
      %v568 = vpop.permute.xlu0 %567
      %v570 = vsub.f32 %v293, %v568
      %v571 = vsub.f32 %v297, %v568
      %v572 = vsub.f32 %v301, %v568
      %v573 = vsub.f32 %v305, %v568
      %574 = vset.pattern.permute.xlu0 1
      %575 = vperm.xlu0 %574, %v564
      %v576 = vpop.permute.xlu0 %575
      %v578 = vsub.f32 %v323, %v576
      %v579 = vsub.f32 %v327, %v576
      %v580 = vsub.f32 %v331, %v576
      %v581 = vsub.f32 %v335, %v576
      %v582 = vmul.f32 %v570, %v570
      %v583 = vmul.f32 %v571, %v571
      %v584 = vmul.f32 %v572, %v572
      %v585 = vmul.f32 %v573, %v573
      %v586 = vmul.f32 %v578, %v578
      %v587 = vmul.f32 %v579, %v579
      %v588 = vmul.f32 %v580, %v580
      %v589 = vmul.f32 %v581, %v581
      %v590 = vadd.f32 %v582, %v586
      %v591 = vadd.f32 %v583, %v587
      %v592 = vadd.f32 %v584, %v588
      %v593 = vadd.f32 %v585, %v589
      %v594 = vsub.f32 0.0, %v590
      %v595 = vsub.f32 0.0, %v591
      %v596 = vsub.f32 0.0, %v592
      %v597 = vsub.f32 0.0, %v593
      %v598 = vmul.f32 %v594, 1.442695
      %v599 = vpow.pop %v598
      %v600 = vmul.f32 %v595, 1.442695
      %v601 = vpow.pop %v600
      %v602 = vmul.f32 %v596, 1.442695
      %v603 = vpow.pop %v602
      %v604 = vmul.f32 %v597, 1.442695
      %v605 = vpow.pop %v604
      %606 = vset.pattern.permute.xlu0 2
      %607 = vperm.xlu0 %606, %v564
      %v608 = vpop.permute.xlu0 %607
      %vm610 = vcmp.le.f32.partialorder %v590, %v608
      %vm611 = vcmp.le.f32.partialorder %v591, %v608
      %vm612 = vcmp.le.f32.partialorder %v592, %v608
      %vm613 = vcmp.le.f32.partialorder %v593, %v608
      %v614 = vsel %vm610, %v599, 0.0
      %v615 = vsel %vm611, %v601, 0.0
      %v616 = vsel %vm612, %v603, 0.0
      %v617 = vsel %vm613, %v605, 0.0
      %618 = vset.pattern.permute.xlu0 4
      %619 = vperm.xlu0 %618, %v564
      %v620 = vpop.permute.xlu0 %619
      %v622 = vmul.f32 %v614, %v620
      %v623 = vmul.f32 %v615, %v620
      %v624 = vmul.f32 %v616, %v620
      %v625 = vmul.f32 %v617, %v620
      %v626 = vadd.f32 %v548, %v622
      %v627 = vadd.f32 %v549, %v623
      %v628 = vadd.f32 %v550, %v624
      %v629 = vadd.f32 %v551, %v625
      %630 = vset.pattern.permute.xlu0 3
      %631 = vperm.xlu0 %630, %v564
      %v632 = vpop.permute.xlu0 %631
      %v634 = vmul.f32 %v614, %v632
      %v635 = vmul.f32 %v615, %v632
      %v636 = vmul.f32 %v616, %v632
      %v637 = vmul.f32 %v617, %v632
      %v638 = vadd.f32 %v560, %v634
      %v639 = vadd.f32 %v561, %v635
      %v640 = vadd.f32 %v562, %v636
      %v641 = vadd.f32 %v563, %v637
      %v642 = vld [vmem:[%s198 + $0x20] sm:$0xff]
      %644 = vset.pattern.permute.xlu0 0
      %645 = vperm.xlu0 %644, %v642
      %v646 = vpop.permute.xlu0 %645
      %v648 = vsub.f32 %v293, %v646
      %v649 = vsub.f32 %v297, %v646
      %v650 = vsub.f32 %v301, %v646
      %v651 = vsub.f32 %v305, %v646
      %652 = vset.pattern.permute.xlu0 1
      %653 = vperm.xlu0 %652, %v642
      %v654 = vpop.permute.xlu0 %653
      %v656 = vsub.f32 %v323, %v654
      %v657 = vsub.f32 %v327, %v654
      %v658 = vsub.f32 %v331, %v654
      %v659 = vsub.f32 %v335, %v654
      %v660 = vmul.f32 %v648, %v648
      %v661 = vmul.f32 %v649, %v649
      %v662 = vmul.f32 %v650, %v650
      %v663 = vmul.f32 %v651, %v651
      %v664 = vmul.f32 %v656, %v656
      %v665 = vmul.f32 %v657, %v657
      %v666 = vmul.f32 %v658, %v658
      %v667 = vmul.f32 %v659, %v659
      %v668 = vadd.f32 %v660, %v664
      %v669 = vadd.f32 %v661, %v665
      %v670 = vadd.f32 %v662, %v666
      %v671 = vadd.f32 %v663, %v667
      %v672 = vsub.f32 0.0, %v668
      %v673 = vsub.f32 0.0, %v669
      %v674 = vsub.f32 0.0, %v670
      %v675 = vsub.f32 0.0, %v671
      %v676 = vmul.f32 %v672, 1.442695
      %v677 = vpow.pop %v676
      %v678 = vmul.f32 %v673, 1.442695
      %v679 = vpow.pop %v678
      %v680 = vmul.f32 %v674, 1.442695
      %v681 = vpow.pop %v680
      %v682 = vmul.f32 %v675, 1.442695
      %v683 = vpow.pop %v682
      %684 = vset.pattern.permute.xlu0 2
      %685 = vperm.xlu0 %684, %v642
      %v686 = vpop.permute.xlu0 %685
      %vm688 = vcmp.le.f32.partialorder %v668, %v686
      %vm689 = vcmp.le.f32.partialorder %v669, %v686
      %vm690 = vcmp.le.f32.partialorder %v670, %v686
      %vm691 = vcmp.le.f32.partialorder %v671, %v686
      %v692 = vsel %vm688, %v677, 0.0
      %v693 = vsel %vm689, %v679, 0.0
      %v694 = vsel %vm690, %v681, 0.0
      %v695 = vsel %vm691, %v683, 0.0
      %696 = vset.pattern.permute.xlu0 4
      %697 = vperm.xlu0 %696, %v642
      %v698 = vpop.permute.xlu0 %697
      %v700 = vmul.f32 %v692, %v698
      %v701 = vmul.f32 %v693, %v698
      %v702 = vmul.f32 %v694, %v698
      %v703 = vmul.f32 %v695, %v698
      %v704 = vadd.f32 %v626, %v700
      %v705 = vadd.f32 %v627, %v701
      %v706 = vadd.f32 %v628, %v702
      %v707 = vadd.f32 %v629, %v703
      %708 = vset.pattern.permute.xlu0 3
      %709 = vperm.xlu0 %708, %v642
      %v710 = vpop.permute.xlu0 %709
      %v712 = vmul.f32 %v692, %v710
      %v713 = vmul.f32 %v693, %v710
      %v714 = vmul.f32 %v694, %v710
      %v715 = vmul.f32 %v695, %v710
      %v716 = vadd.f32 %v638, %v712
      %v717 = vadd.f32 %v639, %v713
      %v718 = vadd.f32 %v640, %v714
      %v719 = vadd.f32 %v641, %v715
      %v720 = vld [vmem:[%s198 + $0x28] sm:$0xff]
      %722 = vset.pattern.permute.xlu0 0
      %723 = vperm.xlu0 %722, %v720
      %v724 = vpop.permute.xlu0 %723
      %v726 = vsub.f32 %v293, %v724
      %v727 = vsub.f32 %v297, %v724
      %v728 = vsub.f32 %v301, %v724
      %v729 = vsub.f32 %v305, %v724
      %730 = vset.pattern.permute.xlu0 1
      %731 = vperm.xlu0 %730, %v720
      %v732 = vpop.permute.xlu0 %731
      %v734 = vsub.f32 %v323, %v732
      %v735 = vsub.f32 %v327, %v732
      %v736 = vsub.f32 %v331, %v732
      %v737 = vsub.f32 %v335, %v732
      %v738 = vmul.f32 %v726, %v726
      %v739 = vmul.f32 %v727, %v727
      %v740 = vmul.f32 %v728, %v728
      %v741 = vmul.f32 %v729, %v729
      %v742 = vmul.f32 %v734, %v734
      %v743 = vmul.f32 %v735, %v735
      %v744 = vmul.f32 %v736, %v736
      %v745 = vmul.f32 %v737, %v737
      %v746 = vadd.f32 %v738, %v742
      %v747 = vadd.f32 %v739, %v743
      %v748 = vadd.f32 %v740, %v744
      %v749 = vadd.f32 %v741, %v745
      %v750 = vsub.f32 0.0, %v746
      %v751 = vsub.f32 0.0, %v747
      %v752 = vsub.f32 0.0, %v748
      %v753 = vsub.f32 0.0, %v749
      %v754 = vmul.f32 %v750, 1.442695
      %v755 = vpow.pop %v754
      %v756 = vmul.f32 %v751, 1.442695
      %v757 = vpow.pop %v756
      %v758 = vmul.f32 %v752, 1.442695
      %v759 = vpow.pop %v758
      %v760 = vmul.f32 %v753, 1.442695
      %v761 = vpow.pop %v760
      %762 = vset.pattern.permute.xlu0 2
      %763 = vperm.xlu0 %762, %v720
      %v764 = vpop.permute.xlu0 %763
      %vm766 = vcmp.le.f32.partialorder %v746, %v764
      %vm767 = vcmp.le.f32.partialorder %v747, %v764
      %vm768 = vcmp.le.f32.partialorder %v748, %v764
      %vm769 = vcmp.le.f32.partialorder %v749, %v764
      %v770 = vsel %vm766, %v755, 0.0
      %v771 = vsel %vm767, %v757, 0.0
      %v772 = vsel %vm768, %v759, 0.0
      %v773 = vsel %vm769, %v761, 0.0
      %774 = vset.pattern.permute.xlu0 4
      %775 = vperm.xlu0 %774, %v720
      %v776 = vpop.permute.xlu0 %775
      %v778 = vmul.f32 %v770, %v776
      %v779 = vmul.f32 %v771, %v776
      %v780 = vmul.f32 %v772, %v776
      %v781 = vmul.f32 %v773, %v776
      %v782 = vadd.f32 %v704, %v778
      %v783 = vadd.f32 %v705, %v779
      %v784 = vadd.f32 %v706, %v780
      %v785 = vadd.f32 %v707, %v781
      %786 = vset.pattern.permute.xlu0 3
      %787 = vperm.xlu0 %786, %v720
      %v788 = vpop.permute.xlu0 %787
      %v790 = vmul.f32 %v770, %v788
      %v791 = vmul.f32 %v771, %v788
      %v792 = vmul.f32 %v772, %v788
      %v793 = vmul.f32 %v773, %v788
      %v794 = vadd.f32 %v716, %v790
      %v795 = vadd.f32 %v717, %v791
      %v796 = vadd.f32 %v718, %v792
      %v797 = vadd.f32 %v719, %v793
      %v798 = vld [vmem:[%s198 + $0x30] sm:$0xff]
      %800 = vset.pattern.permute.xlu0 0
      %801 = vperm.xlu0 %800, %v798
      %v802 = vpop.permute.xlu0 %801
      %v804 = vsub.f32 %v293, %v802
      %v805 = vsub.f32 %v297, %v802
      %v806 = vsub.f32 %v301, %v802
      %v807 = vsub.f32 %v305, %v802
      %808 = vset.pattern.permute.xlu0 1
      %809 = vperm.xlu0 %808, %v798
      %v810 = vpop.permute.xlu0 %809
      %v812 = vsub.f32 %v323, %v810
      %v813 = vsub.f32 %v327, %v810
      %v814 = vsub.f32 %v331, %v810
      %v815 = vsub.f32 %v335, %v810
      %v816 = vmul.f32 %v804, %v804
      %v817 = vmul.f32 %v805, %v805
      %v818 = vmul.f32 %v806, %v806
      %v819 = vmul.f32 %v807, %v807
      %v820 = vmul.f32 %v812, %v812
      %v821 = vmul.f32 %v813, %v813
      %v822 = vmul.f32 %v814, %v814
      %v823 = vmul.f32 %v815, %v815
      %v824 = vadd.f32 %v816, %v820
      %v825 = vadd.f32 %v817, %v821
      %v826 = vadd.f32 %v818, %v822
      %v827 = vadd.f32 %v819, %v823
      %v828 = vsub.f32 0.0, %v824
      %v829 = vsub.f32 0.0, %v825
      %v830 = vsub.f32 0.0, %v826
      %v831 = vsub.f32 0.0, %v827
      %v832 = vmul.f32 %v828, 1.442695
      %v833 = vpow.pop %v832
      %v834 = vmul.f32 %v829, 1.442695
      %v835 = vpow.pop %v834
      %v836 = vmul.f32 %v830, 1.442695
      %v837 = vpow.pop %v836
      %v838 = vmul.f32 %v831, 1.442695
      %v839 = vpow.pop %v838
      %840 = vset.pattern.permute.xlu0 2
      %841 = vperm.xlu0 %840, %v798
      %v842 = vpop.permute.xlu0 %841
      %vm844 = vcmp.le.f32.partialorder %v824, %v842
      %vm845 = vcmp.le.f32.partialorder %v825, %v842
      %vm846 = vcmp.le.f32.partialorder %v826, %v842
      %vm847 = vcmp.le.f32.partialorder %v827, %v842
      %v848 = vsel %vm844, %v833, 0.0
      %v849 = vsel %vm845, %v835, 0.0
      %v850 = vsel %vm846, %v837, 0.0
      %v851 = vsel %vm847, %v839, 0.0
      %852 = vset.pattern.permute.xlu0 4
      %853 = vperm.xlu0 %852, %v798
      %v854 = vpop.permute.xlu0 %853
      %v856 = vmul.f32 %v848, %v854
      %v857 = vmul.f32 %v849, %v854
      %v858 = vmul.f32 %v850, %v854
      %v859 = vmul.f32 %v851, %v854
      %v860 = vadd.f32 %v782, %v856
      %v861 = vadd.f32 %v783, %v857
      %v862 = vadd.f32 %v784, %v858
      %v863 = vadd.f32 %v785, %v859
      %864 = vset.pattern.permute.xlu0 3
      %865 = vperm.xlu0 %864, %v798
      %v866 = vpop.permute.xlu0 %865
      %v868 = vmul.f32 %v848, %v866
      %v869 = vmul.f32 %v849, %v866
      %v870 = vmul.f32 %v850, %v866
      %v871 = vmul.f32 %v851, %v866
      %v872 = vadd.f32 %v794, %v868
      %v873 = vadd.f32 %v795, %v869
      %v874 = vadd.f32 %v796, %v870
      %v875 = vadd.f32 %v797, %v871
      %v876 = vld [vmem:[%s198 + $0x38] sm:$0xff]
      %878 = vset.pattern.permute.xlu0 0
      %879 = vperm.xlu0 %878, %v876
      %v880 = vpop.permute.xlu0 %879
      %v882 = vsub.f32 %v293, %v880
      %v883 = vsub.f32 %v297, %v880
      %v884 = vsub.f32 %v301, %v880
      %v885 = vsub.f32 %v305, %v880
      %886 = vset.pattern.permute.xlu0 1
      %887 = vperm.xlu0 %886, %v876
      %v888 = vpop.permute.xlu0 %887
      %v890 = vsub.f32 %v323, %v888
      %v891 = vsub.f32 %v327, %v888
      %v892 = vsub.f32 %v331, %v888
      %v893 = vsub.f32 %v335, %v888
      %v894 = vmul.f32 %v882, %v882
      %v895 = vmul.f32 %v883, %v883
      %v896 = vmul.f32 %v884, %v884
      %v897 = vmul.f32 %v885, %v885
      %v898 = vmul.f32 %v890, %v890
      %v899 = vmul.f32 %v891, %v891
      %v900 = vmul.f32 %v892, %v892
      %v901 = vmul.f32 %v893, %v893
      %v902 = vadd.f32 %v894, %v898
      %v903 = vadd.f32 %v895, %v899
      %v904 = vadd.f32 %v896, %v900
      %v905 = vadd.f32 %v897, %v901
      %v906 = vsub.f32 0.0, %v902
      %v907 = vsub.f32 0.0, %v903
      %v908 = vsub.f32 0.0, %v904
      %v909 = vsub.f32 0.0, %v905
      %v910 = vmul.f32 %v906, 1.442695
      %v911 = vpow.pop %v910
      %v912 = vmul.f32 %v907, 1.442695
      %v913 = vpow.pop %v912
      %v914 = vmul.f32 %v908, 1.442695
      %v915 = vpow.pop %v914
      %v916 = vmul.f32 %v909, 1.442695
      %v917 = vpow.pop %v916
      %918 = vset.pattern.permute.xlu0 2
      %919 = vperm.xlu0 %918, %v876
      %v920 = vpop.permute.xlu0 %919
      %vm922 = vcmp.le.f32.partialorder %v902, %v920
      %vm923 = vcmp.le.f32.partialorder %v903, %v920
      %vm924 = vcmp.le.f32.partialorder %v904, %v920
      %vm925 = vcmp.le.f32.partialorder %v905, %v920
      %v926 = vsel %vm922, %v911, 0.0
      %v927 = vsel %vm923, %v913, 0.0
      %v928 = vsel %vm924, %v915, 0.0
      %v929 = vsel %vm925, %v917, 0.0
      %930 = vset.pattern.permute.xlu0 4
      %931 = vperm.xlu0 %930, %v876
      %v932 = vpop.permute.xlu0 %931
      %v934 = vmul.f32 %v926, %v932
      %v935 = vmul.f32 %v927, %v932
      %v936 = vmul.f32 %v928, %v932
      %v937 = vmul.f32 %v929, %v932
      %v938 = vadd.f32 %v860, %v934
      %v939 = vadd.f32 %v861, %v935
      %v940 = vadd.f32 %v862, %v936
      %v941 = vadd.f32 %v863, %v937
      %942 = vset.pattern.permute.xlu0 3
      %943 = vperm.xlu0 %942, %v876
      %v944 = vpop.permute.xlu0 %943
      %v946 = vmul.f32 %v926, %v944
      %v947 = vmul.f32 %v927, %v944
      %v948 = vmul.f32 %v928, %v944
      %v949 = vmul.f32 %v929, %v944
      %v950 = vadd.f32 %v872, %v946
      %v951 = vadd.f32 %v873, %v947
      %v952 = vadd.f32 %v874, %v948
      %v953 = vadd.f32 %v875, %v949
      %v954 = vld [vmem:[#allocation2] sm:$0xff]
      %v955 = vld [vmem:[#allocation2 + $0x8] sm:$0xff]
      %v956 = vld [vmem:[#allocation2 + $0x10] sm:$0xff]
      %v957 = vld [vmem:[#allocation2 + $0x18] sm:$0xff]
      %v958 = vadd.f32 %v954, %v938
      %v959 = vadd.f32 %v955, %v939
      %v960 = vadd.f32 %v956, %v940
      %v961 = vadd.f32 %v957, %v941
      %962 = vst [vmem:[#allocation2] sm:$0xff] %v958
      %963 = vst [vmem:[#allocation2 + $0x8] sm:$0xff] %v959
      %964 = vst [vmem:[#allocation2 + $0x10] sm:$0xff] %v960
      %965 = vst [vmem:[#allocation2 + $0x18] sm:$0xff] %v961
      %v966 = vld [vmem:[#allocation3] sm:$0xff]
      %v967 = vld [vmem:[#allocation3 + $0x8] sm:$0xff]
      %v968 = vld [vmem:[#allocation3 + $0x10] sm:$0xff]
      %v969 = vld [vmem:[#allocation3 + $0x18] sm:$0xff]
      %v970 = vadd.f32 %v966, %v950
      %v971 = vadd.f32 %v967, %v951
      %v972 = vadd.f32 %v968, %v952
      %v973 = vadd.f32 %v969, %v953
      %974 = vst [vmem:[#allocation3] sm:$0xff] %v970
      %975 = vst [vmem:[#allocation3 + $0x8] sm:$0xff] %v971
      %976 = vst [vmem:[#allocation3 + $0x10] sm:$0xff] %v972
      %977 = vst [vmem:[#allocation3 + $0x18] sm:$0xff] %v973
      %s978 = scalar_lea.vmem %s198, 64
      %v979 = vld [vmem:[%s978] sm:$0xff]
      %981 = vset.pattern.permute.xlu0 0
      %982 = vperm.xlu0 %981, %v979
      %v983 = vpop.permute.xlu0 %982
      %v985 = vsub.f32 %v293, %v983
      %v986 = vsub.f32 %v297, %v983
      %v987 = vsub.f32 %v301, %v983
      %v988 = vsub.f32 %v305, %v983
      %989 = vset.pattern.permute.xlu0 1
      %990 = vperm.xlu0 %989, %v979
      %v991 = vpop.permute.xlu0 %990
      %v993 = vsub.f32 %v323, %v991
      %v994 = vsub.f32 %v327, %v991
      %v995 = vsub.f32 %v331, %v991
      %v996 = vsub.f32 %v335, %v991
      %v997 = vmul.f32 %v985, %v985
      %v998 = vmul.f32 %v986, %v986
      %v999 = vmul.f32 %v987, %v987
      %v1000 = vmul.f32 %v988, %v988
      %v1001 = vmul.f32 %v993, %v993
      %v1002 = vmul.f32 %v994, %v994
      %v1003 = vmul.f32 %v995, %v995
      %v1004 = vmul.f32 %v996, %v996
      %v1005 = vadd.f32 %v997, %v1001
      %v1006 = vadd.f32 %v998, %v1002
      %v1007 = vadd.f32 %v999, %v1003
      %v1008 = vadd.f32 %v1000, %v1004
      %v1009 = vsub.f32 0.0, %v1005
      %v1010 = vsub.f32 0.0, %v1006
      %v1011 = vsub.f32 0.0, %v1007
      %v1012 = vsub.f32 0.0, %v1008
      %v1013 = vmul.f32 %v1009, 1.442695
      %v1014 = vpow.pop %v1013
      %v1015 = vmul.f32 %v1010, 1.442695
      %v1016 = vpow.pop %v1015
      %v1017 = vmul.f32 %v1011, 1.442695
      %v1018 = vpow.pop %v1017
      %v1019 = vmul.f32 %v1012, 1.442695
      %v1020 = vpow.pop %v1019
      %1021 = vset.pattern.permute.xlu0 2
      %1022 = vperm.xlu0 %1021, %v979
      %v1023 = vpop.permute.xlu0 %1022
      %vm1025 = vcmp.le.f32.partialorder %v1005, %v1023
      %vm1026 = vcmp.le.f32.partialorder %v1006, %v1023
      %vm1027 = vcmp.le.f32.partialorder %v1007, %v1023
      %vm1028 = vcmp.le.f32.partialorder %v1008, %v1023
      %v1029 = vsel %vm1025, %v1014, 0.0
      %v1030 = vsel %vm1026, %v1016, 0.0
      %v1031 = vsel %vm1027, %v1018, 0.0
      %v1032 = vsel %vm1028, %v1020, 0.0
      %1033 = vset.pattern.permute.xlu0 4
      %1034 = vperm.xlu0 %1033, %v979
      %v1035 = vpop.permute.xlu0 %1034
      %v1037 = vmul.f32 %v1029, %v1035
      %v1038 = vmul.f32 %v1030, %v1035
      %v1039 = vmul.f32 %v1031, %v1035
      %v1040 = vmul.f32 %v1032, %v1035
      %v1041 = vadd.f32 %v1037, 0.0
      %v1042 = vadd.f32 %v1038, 0.0
      %v1043 = vadd.f32 %v1039, 0.0
      %v1044 = vadd.f32 %v1040, 0.0
      %1045 = vset.pattern.permute.xlu0 3
      %1046 = vperm.xlu0 %1045, %v979
      %v1047 = vpop.permute.xlu0 %1046
      %v1049 = vmul.f32 %v1029, %v1047
      %v1050 = vmul.f32 %v1030, %v1047
      %v1051 = vmul.f32 %v1031, %v1047
      %v1052 = vmul.f32 %v1032, %v1047
      %v1053 = vadd.f32 %v1049, 0.0
      %v1054 = vadd.f32 %v1050, 0.0
      %v1055 = vadd.f32 %v1051, 0.0
      %v1056 = vadd.f32 %v1052, 0.0
      %v1057 = vld [vmem:[%s978 + $0x8] sm:$0xff]
      %1059 = vset.pattern.permute.xlu0 0
      %1060 = vperm.xlu0 %1059, %v1057
      %v1061 = vpop.permute.xlu0 %1060
      %v1063 = vsub.f32 %v293, %v1061
      %v1064 = vsub.f32 %v297, %v1061
      %v1065 = vsub.f32 %v301, %v1061
      %v1066 = vsub.f32 %v305, %v1061
      %1067 = vset.pattern.permute.xlu0 1
      %1068 = vperm.xlu0 %1067, %v1057
      %v1069 = vpop.permute.xlu0 %1068
      %v1071 = vsub.f32 %v323, %v1069
      %v1072 = vsub.f32 %v327, %v1069
      %v1073 = vsub.f32 %v331, %v1069
      %v1074 = vsub.f32 %v335, %v1069
      %v1075 = vmul.f32 %v1063, %v1063
      %v1076 = vmul.f32 %v1064, %v1064
      %v1077 = vmul.f32 %v1065, %v1065
      %v1078 = vmul.f32 %v1066, %v1066
      %v1079 = vmul.f32 %v1071, %v1071
      %v1080 = vmul.f32 %v1072, %v1072
      %v1081 = vmul.f32 %v1073, %v1073
      %v1082 = vmul.f32 %v1074, %v1074
      %v1083 = vadd.f32 %v1075, %v1079
      %v1084 = vadd.f32 %v1076, %v1080
      %v1085 = vadd.f32 %v1077, %v1081
      %v1086 = vadd.f32 %v1078, %v1082
      %v1087 = vsub.f32 0.0, %v1083
      %v1088 = vsub.f32 0.0, %v1084
      %v1089 = vsub.f32 0.0, %v1085
      %v1090 = vsub.f32 0.0, %v1086
      %v1091 = vmul.f32 %v1087, 1.442695
      %v1092 = vpow.pop %v1091
      %v1093 = vmul.f32 %v1088, 1.442695
      %v1094 = vpow.pop %v1093
      %v1095 = vmul.f32 %v1089, 1.442695
      %v1096 = vpow.pop %v1095
      %v1097 = vmul.f32 %v1090, 1.442695
      %v1098 = vpow.pop %v1097
      %1099 = vset.pattern.permute.xlu0 2
      %1100 = vperm.xlu0 %1099, %v1057
      %v1101 = vpop.permute.xlu0 %1100
      %vm1103 = vcmp.le.f32.partialorder %v1083, %v1101
      %vm1104 = vcmp.le.f32.partialorder %v1084, %v1101
      %vm1105 = vcmp.le.f32.partialorder %v1085, %v1101
      %vm1106 = vcmp.le.f32.partialorder %v1086, %v1101
      %v1107 = vsel %vm1103, %v1092, 0.0
      %v1108 = vsel %vm1104, %v1094, 0.0
      %v1109 = vsel %vm1105, %v1096, 0.0
      %v1110 = vsel %vm1106, %v1098, 0.0
      %1111 = vset.pattern.permute.xlu0 4
      %1112 = vperm.xlu0 %1111, %v1057
      %v1113 = vpop.permute.xlu0 %1112
      %v1115 = vmul.f32 %v1107, %v1113
      %v1116 = vmul.f32 %v1108, %v1113
      %v1117 = vmul.f32 %v1109, %v1113
      %v1118 = vmul.f32 %v1110, %v1113
      %v1119 = vadd.f32 %v1041, %v1115
      %v1120 = vadd.f32 %v1042, %v1116
      %v1121 = vadd.f32 %v1043, %v1117
      %v1122 = vadd.f32 %v1044, %v1118
      %1123 = vset.pattern.permute.xlu0 3
      %1124 = vperm.xlu0 %1123, %v1057
      %v1125 = vpop.permute.xlu0 %1124
      %v1127 = vmul.f32 %v1107, %v1125
      %v1128 = vmul.f32 %v1108, %v1125
      %v1129 = vmul.f32 %v1109, %v1125
      %v1130 = vmul.f32 %v1110, %v1125
      %v1131 = vadd.f32 %v1053, %v1127
      %v1132 = vadd.f32 %v1054, %v1128
      %v1133 = vadd.f32 %v1055, %v1129
      %v1134 = vadd.f32 %v1056, %v1130
      %v1135 = vld [vmem:[%s978 + $0x10] sm:$0xff]
      %1137 = vset.pattern.permute.xlu0 0
      %1138 = vperm.xlu0 %1137, %v1135
      %v1139 = vpop.permute.xlu0 %1138
      %v1141 = vsub.f32 %v293, %v1139
      %v1142 = vsub.f32 %v297, %v1139
      %v1143 = vsub.f32 %v301, %v1139
      %v1144 = vsub.f32 %v305, %v1139
      %1145 = vset.pattern.permute.xlu0 1
      %1146 = vperm.xlu0 %1145, %v1135
      %v1147 = vpop.permute.xlu0 %1146
      %v1149 = vsub.f32 %v323, %v1147
      %v1150 = vsub.f32 %v327, %v1147
      %v1151 = vsub.f32 %v331, %v1147
      %v1152 = vsub.f32 %v335, %v1147
      %v1153 = vmul.f32 %v1141, %v1141
      %v1154 = vmul.f32 %v1142, %v1142
      %v1155 = vmul.f32 %v1143, %v1143
      %v1156 = vmul.f32 %v1144, %v1144
      %v1157 = vmul.f32 %v1149, %v1149
      %v1158 = vmul.f32 %v1150, %v1150
      %v1159 = vmul.f32 %v1151, %v1151
      %v1160 = vmul.f32 %v1152, %v1152
      %v1161 = vadd.f32 %v1153, %v1157
      %v1162 = vadd.f32 %v1154, %v1158
      %v1163 = vadd.f32 %v1155, %v1159
      %v1164 = vadd.f32 %v1156, %v1160
      %v1165 = vsub.f32 0.0, %v1161
      %v1166 = vsub.f32 0.0, %v1162
      %v1167 = vsub.f32 0.0, %v1163
      %v1168 = vsub.f32 0.0, %v1164
      %v1169 = vmul.f32 %v1165, 1.442695
      %v1170 = vpow.pop %v1169
      %v1171 = vmul.f32 %v1166, 1.442695
      %v1172 = vpow.pop %v1171
      %v1173 = vmul.f32 %v1167, 1.442695
      %v1174 = vpow.pop %v1173
      %v1175 = vmul.f32 %v1168, 1.442695
      %v1176 = vpow.pop %v1175
      %1177 = vset.pattern.permute.xlu0 2
      %1178 = vperm.xlu0 %1177, %v1135
      %v1179 = vpop.permute.xlu0 %1178
      %vm1181 = vcmp.le.f32.partialorder %v1161, %v1179
      %vm1182 = vcmp.le.f32.partialorder %v1162, %v1179
      %vm1183 = vcmp.le.f32.partialorder %v1163, %v1179
      %vm1184 = vcmp.le.f32.partialorder %v1164, %v1179
      %v1185 = vsel %vm1181, %v1170, 0.0
      %v1186 = vsel %vm1182, %v1172, 0.0
      %v1187 = vsel %vm1183, %v1174, 0.0
      %v1188 = vsel %vm1184, %v1176, 0.0
      %1189 = vset.pattern.permute.xlu0 4
      %1190 = vperm.xlu0 %1189, %v1135
      %v1191 = vpop.permute.xlu0 %1190
      %v1193 = vmul.f32 %v1185, %v1191
      %v1194 = vmul.f32 %v1186, %v1191
      %v1195 = vmul.f32 %v1187, %v1191
      %v1196 = vmul.f32 %v1188, %v1191
      %v1197 = vadd.f32 %v1119, %v1193
      %v1198 = vadd.f32 %v1120, %v1194
      %v1199 = vadd.f32 %v1121, %v1195
      %v1200 = vadd.f32 %v1122, %v1196
      %1201 = vset.pattern.permute.xlu0 3
      %1202 = vperm.xlu0 %1201, %v1135
      %v1203 = vpop.permute.xlu0 %1202
      %v1205 = vmul.f32 %v1185, %v1203
      %v1206 = vmul.f32 %v1186, %v1203
      %v1207 = vmul.f32 %v1187, %v1203
      %v1208 = vmul.f32 %v1188, %v1203
      %v1209 = vadd.f32 %v1131, %v1205
      %v1210 = vadd.f32 %v1132, %v1206
      %v1211 = vadd.f32 %v1133, %v1207
      %v1212 = vadd.f32 %v1134, %v1208
      %v1213 = vld [vmem:[%s978 + $0x18] sm:$0xff]
      %1215 = vset.pattern.permute.xlu0 0
      %1216 = vperm.xlu0 %1215, %v1213
      %v1217 = vpop.permute.xlu0 %1216
      %v1219 = vsub.f32 %v293, %v1217
      %v1220 = vsub.f32 %v297, %v1217
      %v1221 = vsub.f32 %v301, %v1217
      %v1222 = vsub.f32 %v305, %v1217
      %1223 = vset.pattern.permute.xlu0 1
      %1224 = vperm.xlu0 %1223, %v1213
      %v1225 = vpop.permute.xlu0 %1224
      %v1227 = vsub.f32 %v323, %v1225
      %v1228 = vsub.f32 %v327, %v1225
      %v1229 = vsub.f32 %v331, %v1225
      %v1230 = vsub.f32 %v335, %v1225
      %v1231 = vmul.f32 %v1219, %v1219
      %v1232 = vmul.f32 %v1220, %v1220
      %v1233 = vmul.f32 %v1221, %v1221
      %v1234 = vmul.f32 %v1222, %v1222
      %v1235 = vmul.f32 %v1227, %v1227
      %v1236 = vmul.f32 %v1228, %v1228
      %v1237 = vmul.f32 %v1229, %v1229
      %v1238 = vmul.f32 %v1230, %v1230
      %v1239 = vadd.f32 %v1231, %v1235
      %v1240 = vadd.f32 %v1232, %v1236
      %v1241 = vadd.f32 %v1233, %v1237
      %v1242 = vadd.f32 %v1234, %v1238
      %v1243 = vsub.f32 0.0, %v1239
      %v1244 = vsub.f32 0.0, %v1240
      %v1245 = vsub.f32 0.0, %v1241
      %v1246 = vsub.f32 0.0, %v1242
      %v1247 = vmul.f32 %v1243, 1.442695
      %v1248 = vpow.pop %v1247
      %v1249 = vmul.f32 %v1244, 1.442695
      %v1250 = vpow.pop %v1249
      %v1251 = vmul.f32 %v1245, 1.442695
      %v1252 = vpow.pop %v1251
      %v1253 = vmul.f32 %v1246, 1.442695
      %v1254 = vpow.pop %v1253
      %1255 = vset.pattern.permute.xlu0 2
      %1256 = vperm.xlu0 %1255, %v1213
      %v1257 = vpop.permute.xlu0 %1256
      %vm1259 = vcmp.le.f32.partialorder %v1239, %v1257
      %vm1260 = vcmp.le.f32.partialorder %v1240, %v1257
      %vm1261 = vcmp.le.f32.partialorder %v1241, %v1257
      %vm1262 = vcmp.le.f32.partialorder %v1242, %v1257
      %v1263 = vsel %vm1259, %v1248, 0.0
      %v1264 = vsel %vm1260, %v1250, 0.0
      %v1265 = vsel %vm1261, %v1252, 0.0
      %v1266 = vsel %vm1262, %v1254, 0.0
      %1267 = vset.pattern.permute.xlu0 4
      %1268 = vperm.xlu0 %1267, %v1213
      %v1269 = vpop.permute.xlu0 %1268
      %v1271 = vmul.f32 %v1263, %v1269
      %v1272 = vmul.f32 %v1264, %v1269
      %v1273 = vmul.f32 %v1265, %v1269
      %v1274 = vmul.f32 %v1266, %v1269
      %v1275 = vadd.f32 %v1197, %v1271
      %v1276 = vadd.f32 %v1198, %v1272
      %v1277 = vadd.f32 %v1199, %v1273
      %v1278 = vadd.f32 %v1200, %v1274
      %1279 = vset.pattern.permute.xlu0 3
      %1280 = vperm.xlu0 %1279, %v1213
      %v1281 = vpop.permute.xlu0 %1280
      %v1283 = vmul.f32 %v1263, %v1281
      %v1284 = vmul.f32 %v1264, %v1281
      %v1285 = vmul.f32 %v1265, %v1281
      %v1286 = vmul.f32 %v1266, %v1281
      %v1287 = vadd.f32 %v1209, %v1283
      %v1288 = vadd.f32 %v1210, %v1284
      %v1289 = vadd.f32 %v1211, %v1285
      %v1290 = vadd.f32 %v1212, %v1286
      %v1291 = vld [vmem:[%s978 + $0x20] sm:$0xff]
      %1293 = vset.pattern.permute.xlu0 0
      %1294 = vperm.xlu0 %1293, %v1291
      %v1295 = vpop.permute.xlu0 %1294
      %v1297 = vsub.f32 %v293, %v1295
      %v1298 = vsub.f32 %v297, %v1295
      %v1299 = vsub.f32 %v301, %v1295
      %v1300 = vsub.f32 %v305, %v1295
      %1301 = vset.pattern.permute.xlu0 1
      %1302 = vperm.xlu0 %1301, %v1291
      %v1303 = vpop.permute.xlu0 %1302
      %v1305 = vsub.f32 %v323, %v1303
      %v1306 = vsub.f32 %v327, %v1303
      %v1307 = vsub.f32 %v331, %v1303
      %v1308 = vsub.f32 %v335, %v1303
      %v1309 = vmul.f32 %v1297, %v1297
      %v1310 = vmul.f32 %v1298, %v1298
      %v1311 = vmul.f32 %v1299, %v1299
      %v1312 = vmul.f32 %v1300, %v1300
      %v1313 = vmul.f32 %v1305, %v1305
      %v1314 = vmul.f32 %v1306, %v1306
      %v1315 = vmul.f32 %v1307, %v1307
      %v1316 = vmul.f32 %v1308, %v1308
      %v1317 = vadd.f32 %v1309, %v1313
      %v1318 = vadd.f32 %v1310, %v1314
      %v1319 = vadd.f32 %v1311, %v1315
      %v1320 = vadd.f32 %v1312, %v1316
      %v1321 = vsub.f32 0.0, %v1317
      %v1322 = vsub.f32 0.0, %v1318
      %v1323 = vsub.f32 0.0, %v1319
      %v1324 = vsub.f32 0.0, %v1320
      %v1325 = vmul.f32 %v1321, 1.442695
      %v1326 = vpow.pop %v1325
      %v1327 = vmul.f32 %v1322, 1.442695
      %v1328 = vpow.pop %v1327
      %v1329 = vmul.f32 %v1323, 1.442695
      %v1330 = vpow.pop %v1329
      %v1331 = vmul.f32 %v1324, 1.442695
      %v1332 = vpow.pop %v1331
      %1333 = vset.pattern.permute.xlu0 2
      %1334 = vperm.xlu0 %1333, %v1291
      %v1335 = vpop.permute.xlu0 %1334
      %vm1337 = vcmp.le.f32.partialorder %v1317, %v1335
      %vm1338 = vcmp.le.f32.partialorder %v1318, %v1335
      %vm1339 = vcmp.le.f32.partialorder %v1319, %v1335
      %vm1340 = vcmp.le.f32.partialorder %v1320, %v1335
      %v1341 = vsel %vm1337, %v1326, 0.0
      %v1342 = vsel %vm1338, %v1328, 0.0
      %v1343 = vsel %vm1339, %v1330, 0.0
      %v1344 = vsel %vm1340, %v1332, 0.0
      %1345 = vset.pattern.permute.xlu0 4
      %1346 = vperm.xlu0 %1345, %v1291
      %v1347 = vpop.permute.xlu0 %1346
      %v1349 = vmul.f32 %v1341, %v1347
      %v1350 = vmul.f32 %v1342, %v1347
      %v1351 = vmul.f32 %v1343, %v1347
      %v1352 = vmul.f32 %v1344, %v1347
      %v1353 = vadd.f32 %v1275, %v1349
      %v1354 = vadd.f32 %v1276, %v1350
      %v1355 = vadd.f32 %v1277, %v1351
      %v1356 = vadd.f32 %v1278, %v1352
      %1357 = vset.pattern.permute.xlu0 3
      %1358 = vperm.xlu0 %1357, %v1291
      %v1359 = vpop.permute.xlu0 %1358
      %v1361 = vmul.f32 %v1341, %v1359
      %v1362 = vmul.f32 %v1342, %v1359
      %v1363 = vmul.f32 %v1343, %v1359
      %v1364 = vmul.f32 %v1344, %v1359
      %v1365 = vadd.f32 %v1287, %v1361
      %v1366 = vadd.f32 %v1288, %v1362
      %v1367 = vadd.f32 %v1289, %v1363
      %v1368 = vadd.f32 %v1290, %v1364
      %v1369 = vld [vmem:[%s978 + $0x28] sm:$0xff]
      %1371 = vset.pattern.permute.xlu0 0
      %1372 = vperm.xlu0 %1371, %v1369
      %v1373 = vpop.permute.xlu0 %1372
      %v1375 = vsub.f32 %v293, %v1373
      %v1376 = vsub.f32 %v297, %v1373
      %v1377 = vsub.f32 %v301, %v1373
      %v1378 = vsub.f32 %v305, %v1373
      %1379 = vset.pattern.permute.xlu0 1
      %1380 = vperm.xlu0 %1379, %v1369
      %v1381 = vpop.permute.xlu0 %1380
      %v1383 = vsub.f32 %v323, %v1381
      %v1384 = vsub.f32 %v327, %v1381
      %v1385 = vsub.f32 %v331, %v1381
      %v1386 = vsub.f32 %v335, %v1381
      %v1387 = vmul.f32 %v1375, %v1375
      %v1388 = vmul.f32 %v1376, %v1376
      %v1389 = vmul.f32 %v1377, %v1377
      %v1390 = vmul.f32 %v1378, %v1378
      %v1391 = vmul.f32 %v1383, %v1383
      %v1392 = vmul.f32 %v1384, %v1384
      %v1393 = vmul.f32 %v1385, %v1385
      %v1394 = vmul.f32 %v1386, %v1386
      %v1395 = vadd.f32 %v1387, %v1391
      %v1396 = vadd.f32 %v1388, %v1392
      %v1397 = vadd.f32 %v1389, %v1393
      %v1398 = vadd.f32 %v1390, %v1394
      %v1399 = vsub.f32 0.0, %v1395
      %v1400 = vsub.f32 0.0, %v1396
      %v1401 = vsub.f32 0.0, %v1397
      %v1402 = vsub.f32 0.0, %v1398
      %v1403 = vmul.f32 %v1399, 1.442695
      %v1404 = vpow.pop %v1403
      %v1405 = vmul.f32 %v1400, 1.442695
      %v1406 = vpow.pop %v1405
      %v1407 = vmul.f32 %v1401, 1.442695
      %v1408 = vpow.pop %v1407
      %v1409 = vmul.f32 %v1402, 1.442695
      %v1410 = vpow.pop %v1409
      %1411 = vset.pattern.permute.xlu0 2
      %1412 = vperm.xlu0 %1411, %v1369
      %v1413 = vpop.permute.xlu0 %1412
      %vm1415 = vcmp.le.f32.partialorder %v1395, %v1413
      %vm1416 = vcmp.le.f32.partialorder %v1396, %v1413
      %vm1417 = vcmp.le.f32.partialorder %v1397, %v1413
      %vm1418 = vcmp.le.f32.partialorder %v1398, %v1413
      %v1419 = vsel %vm1415, %v1404, 0.0
      %v1420 = vsel %vm1416, %v1406, 0.0
      %v1421 = vsel %vm1417, %v1408, 0.0
      %v1422 = vsel %vm1418, %v1410, 0.0
      %1423 = vset.pattern.permute.xlu0 4
      %1424 = vperm.xlu0 %1423, %v1369
      %v1425 = vpop.permute.xlu0 %1424
      %v1427 = vmul.f32 %v1419, %v1425
      %v1428 = vmul.f32 %v1420, %v1425
      %v1429 = vmul.f32 %v1421, %v1425
      %v1430 = vmul.f32 %v1422, %v1425
      %v1431 = vadd.f32 %v1353, %v1427
      %v1432 = vadd.f32 %v1354, %v1428
      %v1433 = vadd.f32 %v1355, %v1429
      %v1434 = vadd.f32 %v1356, %v1430
      %1435 = vset.pattern.permute.xlu0 3
      %1436 = vperm.xlu0 %1435, %v1369
      %v1437 = vpop.permute.xlu0 %1436
      %v1439 = vmul.f32 %v1419, %v1437
      %v1440 = vmul.f32 %v1420, %v1437
      %v1441 = vmul.f32 %v1421, %v1437
      %v1442 = vmul.f32 %v1422, %v1437
      %v1443 = vadd.f32 %v1365, %v1439
      %v1444 = vadd.f32 %v1366, %v1440
      %v1445 = vadd.f32 %v1367, %v1441
      %v1446 = vadd.f32 %v1368, %v1442
      %v1447 = vld [vmem:[%s978 + $0x30] sm:$0xff]
      %1449 = vset.pattern.permute.xlu0 0
      %1450 = vperm.xlu0 %1449, %v1447
      %v1451 = vpop.permute.xlu0 %1450
      %v1453 = vsub.f32 %v293, %v1451
      %v1454 = vsub.f32 %v297, %v1451
      %v1455 = vsub.f32 %v301, %v1451
      %v1456 = vsub.f32 %v305, %v1451
      %1457 = vset.pattern.permute.xlu0 1
      %1458 = vperm.xlu0 %1457, %v1447
      %v1459 = vpop.permute.xlu0 %1458
      %v1461 = vsub.f32 %v323, %v1459
      %v1462 = vsub.f32 %v327, %v1459
      %v1463 = vsub.f32 %v331, %v1459
      %v1464 = vsub.f32 %v335, %v1459
      %v1465 = vmul.f32 %v1453, %v1453
      %v1466 = vmul.f32 %v1454, %v1454
      %v1467 = vmul.f32 %v1455, %v1455
      %v1468 = vmul.f32 %v1456, %v1456
      %v1469 = vmul.f32 %v1461, %v1461
      %v1470 = vmul.f32 %v1462, %v1462
      %v1471 = vmul.f32 %v1463, %v1463
      %v1472 = vmul.f32 %v1464, %v1464
      %v1473 = vadd.f32 %v1465, %v1469
      %v1474 = vadd.f32 %v1466, %v1470
      %v1475 = vadd.f32 %v1467, %v1471
      %v1476 = vadd.f32 %v1468, %v1472
      %v1477 = vsub.f32 0.0, %v1473
      %v1478 = vsub.f32 0.0, %v1474
      %v1479 = vsub.f32 0.0, %v1475
      %v1480 = vsub.f32 0.0, %v1476
      %v1481 = vmul.f32 %v1477, 1.442695
      %v1482 = vpow.pop %v1481
      %v1483 = vmul.f32 %v1478, 1.442695
      %v1484 = vpow.pop %v1483
      %v1485 = vmul.f32 %v1479, 1.442695
      %v1486 = vpow.pop %v1485
      %v1487 = vmul.f32 %v1480, 1.442695
      %v1488 = vpow.pop %v1487
      %1489 = vset.pattern.permute.xlu0 2
      %1490 = vperm.xlu0 %1489, %v1447
      %v1491 = vpop.permute.xlu0 %1490
      %vm1493 = vcmp.le.f32.partialorder %v1473, %v1491
      %vm1494 = vcmp.le.f32.partialorder %v1474, %v1491
      %vm1495 = vcmp.le.f32.partialorder %v1475, %v1491
      %vm1496 = vcmp.le.f32.partialorder %v1476, %v1491
      %v1497 = vsel %vm1493, %v1482, 0.0
      %v1498 = vsel %vm1494, %v1484, 0.0
      %v1499 = vsel %vm1495, %v1486, 0.0
      %v1500 = vsel %vm1496, %v1488, 0.0
      %1501 = vset.pattern.permute.xlu0 4
      %1502 = vperm.xlu0 %1501, %v1447
      %v1503 = vpop.permute.xlu0 %1502
      %v1505 = vmul.f32 %v1497, %v1503
      %v1506 = vmul.f32 %v1498, %v1503
      %v1507 = vmul.f32 %v1499, %v1503
      %v1508 = vmul.f32 %v1500, %v1503
      %v1509 = vadd.f32 %v1431, %v1505
      %v1510 = vadd.f32 %v1432, %v1506
      %v1511 = vadd.f32 %v1433, %v1507
      %v1512 = vadd.f32 %v1434, %v1508
      %1513 = vset.pattern.permute.xlu0 3
      %1514 = vperm.xlu0 %1513, %v1447
      %v1515 = vpop.permute.xlu0 %1514
      %v1517 = vmul.f32 %v1497, %v1515
      %v1518 = vmul.f32 %v1498, %v1515
      %v1519 = vmul.f32 %v1499, %v1515
      %v1520 = vmul.f32 %v1500, %v1515
      %v1521 = vadd.f32 %v1443, %v1517
      %v1522 = vadd.f32 %v1444, %v1518
      %v1523 = vadd.f32 %v1445, %v1519
      %v1524 = vadd.f32 %v1446, %v1520
      %v1525 = vld [vmem:[%s978 + $0x38] sm:$0xff]
      %1527 = vset.pattern.permute.xlu0 0
      %1528 = vperm.xlu0 %1527, %v1525
      %v1529 = vpop.permute.xlu0 %1528
      %v1531 = vsub.f32 %v293, %v1529
      %v1532 = vsub.f32 %v297, %v1529
      %v1533 = vsub.f32 %v301, %v1529
      %v1534 = vsub.f32 %v305, %v1529
      %1535 = vset.pattern.permute.xlu0 1
      %1536 = vperm.xlu0 %1535, %v1525
      %v1537 = vpop.permute.xlu0 %1536
      %v1539 = vsub.f32 %v323, %v1537
      %v1540 = vsub.f32 %v327, %v1537
      %v1541 = vsub.f32 %v331, %v1537
      %v1542 = vsub.f32 %v335, %v1537
      %v1543 = vmul.f32 %v1531, %v1531
      %v1544 = vmul.f32 %v1532, %v1532
      %v1545 = vmul.f32 %v1533, %v1533
      %v1546 = vmul.f32 %v1534, %v1534
      %v1547 = vmul.f32 %v1539, %v1539
      %v1548 = vmul.f32 %v1540, %v1540
      %v1549 = vmul.f32 %v1541, %v1541
      %v1550 = vmul.f32 %v1542, %v1542
      %v1551 = vadd.f32 %v1543, %v1547
      %v1552 = vadd.f32 %v1544, %v1548
      %v1553 = vadd.f32 %v1545, %v1549
      %v1554 = vadd.f32 %v1546, %v1550
      %v1555 = vsub.f32 0.0, %v1551
      %v1556 = vsub.f32 0.0, %v1552
      %v1557 = vsub.f32 0.0, %v1553
      %v1558 = vsub.f32 0.0, %v1554
      %v1559 = vmul.f32 %v1555, 1.442695
      %v1560 = vpow.pop %v1559
      %v1561 = vmul.f32 %v1556, 1.442695
      %v1562 = vpow.pop %v1561
      %v1563 = vmul.f32 %v1557, 1.442695
      %v1564 = vpow.pop %v1563
      %v1565 = vmul.f32 %v1558, 1.442695
      %v1566 = vpow.pop %v1565
      %1567 = vset.pattern.permute.xlu0 2
      %1568 = vperm.xlu0 %1567, %v1525
      %v1569 = vpop.permute.xlu0 %1568
      %vm1571 = vcmp.le.f32.partialorder %v1551, %v1569
      %vm1572 = vcmp.le.f32.partialorder %v1552, %v1569
      %vm1573 = vcmp.le.f32.partialorder %v1553, %v1569
      %vm1574 = vcmp.le.f32.partialorder %v1554, %v1569
      %v1575 = vsel %vm1571, %v1560, 0.0
      %v1576 = vsel %vm1572, %v1562, 0.0
      %v1577 = vsel %vm1573, %v1564, 0.0
      %v1578 = vsel %vm1574, %v1566, 0.0
      %1579 = vset.pattern.permute.xlu0 4
      %1580 = vperm.xlu0 %1579, %v1525
      %v1581 = vpop.permute.xlu0 %1580
      %v1583 = vmul.f32 %v1575, %v1581
      %v1584 = vmul.f32 %v1576, %v1581
      %v1585 = vmul.f32 %v1577, %v1581
      %v1586 = vmul.f32 %v1578, %v1581
      %v1587 = vadd.f32 %v1509, %v1583
      %v1588 = vadd.f32 %v1510, %v1584
      %v1589 = vadd.f32 %v1511, %v1585
      %v1590 = vadd.f32 %v1512, %v1586
      %1591 = vset.pattern.permute.xlu0 3
      %1592 = vperm.xlu0 %1591, %v1525
      %v1593 = vpop.permute.xlu0 %1592
      %v1595 = vmul.f32 %v1575, %v1593
      %v1596 = vmul.f32 %v1576, %v1593
      %v1597 = vmul.f32 %v1577, %v1593
      %v1598 = vmul.f32 %v1578, %v1593
      %v1599 = vadd.f32 %v1521, %v1595
      %v1600 = vadd.f32 %v1522, %v1596
      %v1601 = vadd.f32 %v1523, %v1597
      %v1602 = vadd.f32 %v1524, %v1598
      %s1603 = scalar_lea.vmem [#allocation2], 32
      %v1604 = vld [vmem:[%s1603] sm:$0xff]
      %v1605 = vld [vmem:[%s1603 + $0x8] sm:$0xff]
      %v1606 = vld [vmem:[%s1603 + $0x10] sm:$0xff]
      %v1607 = vld [vmem:[%s1603 + $0x18] sm:$0xff]
      %v1608 = vadd.f32 %v1604, %v1587
      %v1609 = vadd.f32 %v1605, %v1588
      %v1610 = vadd.f32 %v1606, %v1589
      %v1611 = vadd.f32 %v1607, %v1590
      %1612 = vst [vmem:[%s1603] sm:$0xff] %v1608
      %1613 = vst [vmem:[%s1603 + $0x8] sm:$0xff] %v1609
      %1614 = vst [vmem:[%s1603 + $0x10] sm:$0xff] %v1610
      %1615 = vst [vmem:[%s1603 + $0x18] sm:$0xff] %v1611
      %s1616 = scalar_lea.vmem [#allocation3], 32
      %v1617 = vld [vmem:[%s1616] sm:$0xff]
      %v1618 = vld [vmem:[%s1616 + $0x8] sm:$0xff]
      %v1619 = vld [vmem:[%s1616 + $0x10] sm:$0xff]
      %v1620 = vld [vmem:[%s1616 + $0x18] sm:$0xff]
      %v1621 = vadd.f32 %v1617, %v1599
      %v1622 = vadd.f32 %v1618, %v1600
      %v1623 = vadd.f32 %v1619, %v1601
      %v1624 = vadd.f32 %v1620, %v1602
      %1625 = vst [vmem:[%s1616] sm:$0xff] %v1621
      %1626 = vst [vmem:[%s1616 + $0x8] sm:$0xff] %v1622
      %1627 = vst [vmem:[%s1616 + $0x10] sm:$0xff] %v1623
      %1628 = vst [vmem:[%s1616 + $0x18] sm:$0xff] %v1624
      %s1629 = scalar_lea.vmem %s198, 128
      %v1630 = vld [vmem:[%s1629] sm:$0xff]
      %1632 = vset.pattern.permute.xlu0 0
      %1633 = vperm.xlu0 %1632, %v1630
      %v1634 = vpop.permute.xlu0 %1633
      %v1636 = vsub.f32 %v293, %v1634
      %v1637 = vsub.f32 %v297, %v1634
      %v1638 = vsub.f32 %v301, %v1634
      %v1639 = vsub.f32 %v305, %v1634
      %1640 = vset.pattern.permute.xlu0 1
      %1641 = vperm.xlu0 %1640, %v1630
      %v1642 = vpop.permute.xlu0 %1641
      %v1644 = vsub.f32 %v323, %v1642
      %v1645 = vsub.f32 %v327, %v1642
      %v1646 = vsub.f32 %v331, %v1642
      %v1647 = vsub.f32 %v335, %v1642
      %v1648 = vmul.f32 %v1636, %v1636
      %v1649 = vmul.f32 %v1637, %v1637
      %v1650 = vmul.f32 %v1638, %v1638
      %v1651 = vmul.f32 %v1639, %v1639
      %v1652 = vmul.f32 %v1644, %v1644
      %v1653 = vmul.f32 %v1645, %v1645
      %v1654 = vmul.f32 %v1646, %v1646
      %v1655 = vmul.f32 %v1647, %v1647
      %v1656 = vadd.f32 %v1648, %v1652
      %v1657 = vadd.f32 %v1649, %v1653
      %v1658 = vadd.f32 %v1650, %v1654
      %v1659 = vadd.f32 %v1651, %v1655
      %v1660 = vsub.f32 0.0, %v1656
      %v1661 = vsub.f32 0.0, %v1657
      %v1662 = vsub.f32 0.0, %v1658
      %v1663 = vsub.f32 0.0, %v1659
      %v1664 = vmul.f32 %v1660, 1.442695
      %v1665 = vpow.pop %v1664
      %v1666 = vmul.f32 %v1661, 1.442695
      %v1667 = vpow.pop %v1666
      %v1668 = vmul.f32 %v1662, 1.442695
      %v1669 = vpow.pop %v1668
      %v1670 = vmul.f32 %v1663, 1.442695
      %v1671 = vpow.pop %v1670
      %1672 = vset.pattern.permute.xlu0 2
      %1673 = vperm.xlu0 %1672, %v1630
      %v1674 = vpop.permute.xlu0 %1673
      %vm1676 = vcmp.le.f32.partialorder %v1656, %v1674
      %vm1677 = vcmp.le.f32.partialorder %v1657, %v1674
      %vm1678 = vcmp.le.f32.partialorder %v1658, %v1674
      %vm1679 = vcmp.le.f32.partialorder %v1659, %v1674
      %v1680 = vsel %vm1676, %v1665, 0.0
      %v1681 = vsel %vm1677, %v1667, 0.0
      %v1682 = vsel %vm1678, %v1669, 0.0
      %v1683 = vsel %vm1679, %v1671, 0.0
      %1684 = vset.pattern.permute.xlu0 4
      %1685 = vperm.xlu0 %1684, %v1630
      %v1686 = vpop.permute.xlu0 %1685
      %v1688 = vmul.f32 %v1680, %v1686
      %v1689 = vmul.f32 %v1681, %v1686
      %v1690 = vmul.f32 %v1682, %v1686
      %v1691 = vmul.f32 %v1683, %v1686
      %v1692 = vadd.f32 %v1688, 0.0
      %v1693 = vadd.f32 %v1689, 0.0
      %v1694 = vadd.f32 %v1690, 0.0
      %v1695 = vadd.f32 %v1691, 0.0
      %1696 = vset.pattern.permute.xlu0 3
      %1697 = vperm.xlu0 %1696, %v1630
      %v1698 = vpop.permute.xlu0 %1697
      %v1700 = vmul.f32 %v1680, %v1698
      %v1701 = vmul.f32 %v1681, %v1698
      %v1702 = vmul.f32 %v1682, %v1698
      %v1703 = vmul.f32 %v1683, %v1698
      %v1704 = vadd.f32 %v1700, 0.0
      %v1705 = vadd.f32 %v1701, 0.0
      %v1706 = vadd.f32 %v1702, 0.0
      %v1707 = vadd.f32 %v1703, 0.0
      %v1708 = vld [vmem:[%s1629 + $0x8] sm:$0xff]
      %1710 = vset.pattern.permute.xlu0 0
      %1711 = vperm.xlu0 %1710, %v1708
      %v1712 = vpop.permute.xlu0 %1711
      %v1714 = vsub.f32 %v293, %v1712
      %v1715 = vsub.f32 %v297, %v1712
      %v1716 = vsub.f32 %v301, %v1712
      %v1717 = vsub.f32 %v305, %v1712
      %1718 = vset.pattern.permute.xlu0 1
      %1719 = vperm.xlu0 %1718, %v1708
      %v1720 = vpop.permute.xlu0 %1719
      %v1722 = vsub.f32 %v323, %v1720
      %v1723 = vsub.f32 %v327, %v1720
      %v1724 = vsub.f32 %v331, %v1720
      %v1725 = vsub.f32 %v335, %v1720
      %v1726 = vmul.f32 %v1714, %v1714
      %v1727 = vmul.f32 %v1715, %v1715
      %v1728 = vmul.f32 %v1716, %v1716
      %v1729 = vmul.f32 %v1717, %v1717
      %v1730 = vmul.f32 %v1722, %v1722
      %v1731 = vmul.f32 %v1723, %v1723
      %v1732 = vmul.f32 %v1724, %v1724
      %v1733 = vmul.f32 %v1725, %v1725
      %v1734 = vadd.f32 %v1726, %v1730
      %v1735 = vadd.f32 %v1727, %v1731
      %v1736 = vadd.f32 %v1728, %v1732
      %v1737 = vadd.f32 %v1729, %v1733
      %v1738 = vsub.f32 0.0, %v1734
      %v1739 = vsub.f32 0.0, %v1735
      %v1740 = vsub.f32 0.0, %v1736
      %v1741 = vsub.f32 0.0, %v1737
      %v1742 = vmul.f32 %v1738, 1.442695
      %v1743 = vpow.pop %v1742
      %v1744 = vmul.f32 %v1739, 1.442695
      %v1745 = vpow.pop %v1744
      %v1746 = vmul.f32 %v1740, 1.442695
      %v1747 = vpow.pop %v1746
      %v1748 = vmul.f32 %v1741, 1.442695
      %v1749 = vpow.pop %v1748
      %1750 = vset.pattern.permute.xlu0 2
      %1751 = vperm.xlu0 %1750, %v1708
      %v1752 = vpop.permute.xlu0 %1751
      %vm1754 = vcmp.le.f32.partialorder %v1734, %v1752
      %vm1755 = vcmp.le.f32.partialorder %v1735, %v1752
      %vm1756 = vcmp.le.f32.partialorder %v1736, %v1752
      %vm1757 = vcmp.le.f32.partialorder %v1737, %v1752
      %v1758 = vsel %vm1754, %v1743, 0.0
      %v1759 = vsel %vm1755, %v1745, 0.0
      %v1760 = vsel %vm1756, %v1747, 0.0
      %v1761 = vsel %vm1757, %v1749, 0.0
      %1762 = vset.pattern.permute.xlu0 4
      %1763 = vperm.xlu0 %1762, %v1708
      %v1764 = vpop.permute.xlu0 %1763
      %v1766 = vmul.f32 %v1758, %v1764
      %v1767 = vmul.f32 %v1759, %v1764
      %v1768 = vmul.f32 %v1760, %v1764
      %v1769 = vmul.f32 %v1761, %v1764
      %v1770 = vadd.f32 %v1692, %v1766
      %v1771 = vadd.f32 %v1693, %v1767
      %v1772 = vadd.f32 %v1694, %v1768
      %v1773 = vadd.f32 %v1695, %v1769
      %1774 = vset.pattern.permute.xlu0 3
      %1775 = vperm.xlu0 %1774, %v1708
      %v1776 = vpop.permute.xlu0 %1775
      %v1778 = vmul.f32 %v1758, %v1776
      %v1779 = vmul.f32 %v1759, %v1776
      %v1780 = vmul.f32 %v1760, %v1776
      %v1781 = vmul.f32 %v1761, %v1776
      %v1782 = vadd.f32 %v1704, %v1778
      %v1783 = vadd.f32 %v1705, %v1779
      %v1784 = vadd.f32 %v1706, %v1780
      %v1785 = vadd.f32 %v1707, %v1781
      %v1786 = vld [vmem:[%s1629 + $0x10] sm:$0xff]
      %1788 = vset.pattern.permute.xlu0 0
      %1789 = vperm.xlu0 %1788, %v1786
      %v1790 = vpop.permute.xlu0 %1789
      %v1792 = vsub.f32 %v293, %v1790
      %v1793 = vsub.f32 %v297, %v1790
      %v1794 = vsub.f32 %v301, %v1790
      %v1795 = vsub.f32 %v305, %v1790
      %1796 = vset.pattern.permute.xlu0 1
      %1797 = vperm.xlu0 %1796, %v1786
      %v1798 = vpop.permute.xlu0 %1797
      %v1800 = vsub.f32 %v323, %v1798
      %v1801 = vsub.f32 %v327, %v1798
      %v1802 = vsub.f32 %v331, %v1798
      %v1803 = vsub.f32 %v335, %v1798
      %v1804 = vmul.f32 %v1792, %v1792
      %v1805 = vmul.f32 %v1793, %v1793
      %v1806 = vmul.f32 %v1794, %v1794
      %v1807 = vmul.f32 %v1795, %v1795
      %v1808 = vmul.f32 %v1800, %v1800
      %v1809 = vmul.f32 %v1801, %v1801
      %v1810 = vmul.f32 %v1802, %v1802
      %v1811 = vmul.f32 %v1803, %v1803
      %v1812 = vadd.f32 %v1804, %v1808
      %v1813 = vadd.f32 %v1805, %v1809
      %v1814 = vadd.f32 %v1806, %v1810
      %v1815 = vadd.f32 %v1807, %v1811
      %v1816 = vsub.f32 0.0, %v1812
      %v1817 = vsub.f32 0.0, %v1813
      %v1818 = vsub.f32 0.0, %v1814
      %v1819 = vsub.f32 0.0, %v1815
      %v1820 = vmul.f32 %v1816, 1.442695
      %v1821 = vpow.pop %v1820
      %v1822 = vmul.f32 %v1817, 1.442695
      %v1823 = vpow.pop %v1822
      %v1824 = vmul.f32 %v1818, 1.442695
      %v1825 = vpow.pop %v1824
      %v1826 = vmul.f32 %v1819, 1.442695
      %v1827 = vpow.pop %v1826
      %1828 = vset.pattern.permute.xlu0 2
      %1829 = vperm.xlu0 %1828, %v1786
      %v1830 = vpop.permute.xlu0 %1829
      %vm1832 = vcmp.le.f32.partialorder %v1812, %v1830
      %vm1833 = vcmp.le.f32.partialorder %v1813, %v1830
      %vm1834 = vcmp.le.f32.partialorder %v1814, %v1830
      %vm1835 = vcmp.le.f32.partialorder %v1815, %v1830
      %v1836 = vsel %vm1832, %v1821, 0.0
      %v1837 = vsel %vm1833, %v1823, 0.0
      %v1838 = vsel %vm1834, %v1825, 0.0
      %v1839 = vsel %vm1835, %v1827, 0.0
      %1840 = vset.pattern.permute.xlu0 4
      %1841 = vperm.xlu0 %1840, %v1786
      %v1842 = vpop.permute.xlu0 %1841
      %v1844 = vmul.f32 %v1836, %v1842
      %v1845 = vmul.f32 %v1837, %v1842
      %v1846 = vmul.f32 %v1838, %v1842
      %v1847 = vmul.f32 %v1839, %v1842
      %v1848 = vadd.f32 %v1770, %v1844
      %v1849 = vadd.f32 %v1771, %v1845
      %v1850 = vadd.f32 %v1772, %v1846
      %v1851 = vadd.f32 %v1773, %v1847
      %1852 = vset.pattern.permute.xlu0 3
      %1853 = vperm.xlu0 %1852, %v1786
      %v1854 = vpop.permute.xlu0 %1853
      %v1856 = vmul.f32 %v1836, %v1854
      %v1857 = vmul.f32 %v1837, %v1854
      %v1858 = vmul.f32 %v1838, %v1854
      %v1859 = vmul.f32 %v1839, %v1854
      %v1860 = vadd.f32 %v1782, %v1856
      %v1861 = vadd.f32 %v1783, %v1857
      %v1862 = vadd.f32 %v1784, %v1858
      %v1863 = vadd.f32 %v1785, %v1859
      %v1864 = vld [vmem:[%s1629 + $0x18] sm:$0xff]
      %1866 = vset.pattern.permute.xlu0 0
      %1867 = vperm.xlu0 %1866, %v1864
      %v1868 = vpop.permute.xlu0 %1867
      %v1870 = vsub.f32 %v293, %v1868
      %v1871 = vsub.f32 %v297, %v1868
      %v1872 = vsub.f32 %v301, %v1868
      %v1873 = vsub.f32 %v305, %v1868
      %1874 = vset.pattern.permute.xlu0 1
      %1875 = vperm.xlu0 %1874, %v1864
      %v1876 = vpop.permute.xlu0 %1875
      %v1878 = vsub.f32 %v323, %v1876
      %v1879 = vsub.f32 %v327, %v1876
      %v1880 = vsub.f32 %v331, %v1876
      %v1881 = vsub.f32 %v335, %v1876
      %v1882 = vmul.f32 %v1870, %v1870
      %v1883 = vmul.f32 %v1871, %v1871
      %v1884 = vmul.f32 %v1872, %v1872
      %v1885 = vmul.f32 %v1873, %v1873
      %v1886 = vmul.f32 %v1878, %v1878
      %v1887 = vmul.f32 %v1879, %v1879
      %v1888 = vmul.f32 %v1880, %v1880
      %v1889 = vmul.f32 %v1881, %v1881
      %v1890 = vadd.f32 %v1882, %v1886
      %v1891 = vadd.f32 %v1883, %v1887
      %v1892 = vadd.f32 %v1884, %v1888
      %v1893 = vadd.f32 %v1885, %v1889
      %v1894 = vsub.f32 0.0, %v1890
      %v1895 = vsub.f32 0.0, %v1891
      %v1896 = vsub.f32 0.0, %v1892
      %v1897 = vsub.f32 0.0, %v1893
      %v1898 = vmul.f32 %v1894, 1.442695
      %v1899 = vpow.pop %v1898
      %v1900 = vmul.f32 %v1895, 1.442695
      %v1901 = vpow.pop %v1900
      %v1902 = vmul.f32 %v1896, 1.442695
      %v1903 = vpow.pop %v1902
      %v1904 = vmul.f32 %v1897, 1.442695
      %v1905 = vpow.pop %v1904
      %1906 = vset.pattern.permute.xlu0 2
      %1907 = vperm.xlu0 %1906, %v1864
      %v1908 = vpop.permute.xlu0 %1907
      %vm1910 = vcmp.le.f32.partialorder %v1890, %v1908
      %vm1911 = vcmp.le.f32.partialorder %v1891, %v1908
      %vm1912 = vcmp.le.f32.partialorder %v1892, %v1908
      %vm1913 = vcmp.le.f32.partialorder %v1893, %v1908
      %v1914 = vsel %vm1910, %v1899, 0.0
      %v1915 = vsel %vm1911, %v1901, 0.0
      %v1916 = vsel %vm1912, %v1903, 0.0
      %v1917 = vsel %vm1913, %v1905, 0.0
      %1918 = vset.pattern.permute.xlu0 4
      %1919 = vperm.xlu0 %1918, %v1864
      %v1920 = vpop.permute.xlu0 %1919
      %v1922 = vmul.f32 %v1914, %v1920
      %v1923 = vmul.f32 %v1915, %v1920
      %v1924 = vmul.f32 %v1916, %v1920
      %v1925 = vmul.f32 %v1917, %v1920
      %v1926 = vadd.f32 %v1848, %v1922
      %v1927 = vadd.f32 %v1849, %v1923
      %v1928 = vadd.f32 %v1850, %v1924
      %v1929 = vadd.f32 %v1851, %v1925
      %1930 = vset.pattern.permute.xlu0 3
      %1931 = vperm.xlu0 %1930, %v1864
      %v1932 = vpop.permute.xlu0 %1931
      %v1934 = vmul.f32 %v1914, %v1932
      %v1935 = vmul.f32 %v1915, %v1932
      %v1936 = vmul.f32 %v1916, %v1932
      %v1937 = vmul.f32 %v1917, %v1932
      %v1938 = vadd.f32 %v1860, %v1934
      %v1939 = vadd.f32 %v1861, %v1935
      %v1940 = vadd.f32 %v1862, %v1936
      %v1941 = vadd.f32 %v1863, %v1937
      %v1942 = vld [vmem:[%s1629 + $0x20] sm:$0xff]
      %1944 = vset.pattern.permute.xlu0 0
      %1945 = vperm.xlu0 %1944, %v1942
      %v1946 = vpop.permute.xlu0 %1945
      %v1948 = vsub.f32 %v293, %v1946
      %v1949 = vsub.f32 %v297, %v1946
      %v1950 = vsub.f32 %v301, %v1946
      %v1951 = vsub.f32 %v305, %v1946
      %1952 = vset.pattern.permute.xlu0 1
      %1953 = vperm.xlu0 %1952, %v1942
      %v1954 = vpop.permute.xlu0 %1953
      %v1956 = vsub.f32 %v323, %v1954
      %v1957 = vsub.f32 %v327, %v1954
      %v1958 = vsub.f32 %v331, %v1954
      %v1959 = vsub.f32 %v335, %v1954
      %v1960 = vmul.f32 %v1948, %v1948
      %v1961 = vmul.f32 %v1949, %v1949
      %v1962 = vmul.f32 %v1950, %v1950
      %v1963 = vmul.f32 %v1951, %v1951
      %v1964 = vmul.f32 %v1956, %v1956
      %v1965 = vmul.f32 %v1957, %v1957
      %v1966 = vmul.f32 %v1958, %v1958
      %v1967 = vmul.f32 %v1959, %v1959
      %v1968 = vadd.f32 %v1960, %v1964
      %v1969 = vadd.f32 %v1961, %v1965
      %v1970 = vadd.f32 %v1962, %v1966
      %v1971 = vadd.f32 %v1963, %v1967
      %v1972 = vsub.f32 0.0, %v1968
      %v1973 = vsub.f32 0.0, %v1969
      %v1974 = vsub.f32 0.0, %v1970
      %v1975 = vsub.f32 0.0, %v1971
      %v1976 = vmul.f32 %v1972, 1.442695
      %v1977 = vpow.pop %v1976
      %v1978 = vmul.f32 %v1973, 1.442695
      %v1979 = vpow.pop %v1978
      %v1980 = vmul.f32 %v1974, 1.442695
      %v1981 = vpow.pop %v1980
      %v1982 = vmul.f32 %v1975, 1.442695
      %v1983 = vpow.pop %v1982
      %1984 = vset.pattern.permute.xlu0 2
      %1985 = vperm.xlu0 %1984, %v1942
      %v1986 = vpop.permute.xlu0 %1985
      %vm1988 = vcmp.le.f32.partialorder %v1968, %v1986
      %vm1989 = vcmp.le.f32.partialorder %v1969, %v1986
      %vm1990 = vcmp.le.f32.partialorder %v1970, %v1986
      %vm1991 = vcmp.le.f32.partialorder %v1971, %v1986
      %v1992 = vsel %vm1988, %v1977, 0.0
      %v1993 = vsel %vm1989, %v1979, 0.0
      %v1994 = vsel %vm1990, %v1981, 0.0
      %v1995 = vsel %vm1991, %v1983, 0.0
      %1996 = vset.pattern.permute.xlu0 4
      %1997 = vperm.xlu0 %1996, %v1942
      %v1998 = vpop.permute.xlu0 %1997
      %v2000 = vmul.f32 %v1992, %v1998
      %v2001 = vmul.f32 %v1993, %v1998
      %v2002 = vmul.f32 %v1994, %v1998
      %v2003 = vmul.f32 %v1995, %v1998
      %v2004 = vadd.f32 %v1926, %v2000
      %v2005 = vadd.f32 %v1927, %v2001
      %v2006 = vadd.f32 %v1928, %v2002
      %v2007 = vadd.f32 %v1929, %v2003
      %2008 = vset.pattern.permute.xlu0 3
      %2009 = vperm.xlu0 %2008, %v1942
      %v2010 = vpop.permute.xlu0 %2009
      %v2012 = vmul.f32 %v1992, %v2010
      %v2013 = vmul.f32 %v1993, %v2010
      %v2014 = vmul.f32 %v1994, %v2010
      %v2015 = vmul.f32 %v1995, %v2010
      %v2016 = vadd.f32 %v1938, %v2012
      %v2017 = vadd.f32 %v1939, %v2013
      %v2018 = vadd.f32 %v1940, %v2014
      %v2019 = vadd.f32 %v1941, %v2015
      %v2020 = vld [vmem:[%s1629 + $0x28] sm:$0xff]
      %2022 = vset.pattern.permute.xlu0 0
      %2023 = vperm.xlu0 %2022, %v2020
      %v2024 = vpop.permute.xlu0 %2023
      %v2026 = vsub.f32 %v293, %v2024
      %v2027 = vsub.f32 %v297, %v2024
      %v2028 = vsub.f32 %v301, %v2024
      %v2029 = vsub.f32 %v305, %v2024
      %2030 = vset.pattern.permute.xlu0 1
      %2031 = vperm.xlu0 %2030, %v2020
      %v2032 = vpop.permute.xlu0 %2031
      %v2034 = vsub.f32 %v323, %v2032
      %v2035 = vsub.f32 %v327, %v2032
      %v2036 = vsub.f32 %v331, %v2032
      %v2037 = vsub.f32 %v335, %v2032
      %v2038 = vmul.f32 %v2026, %v2026
      %v2039 = vmul.f32 %v2027, %v2027
      %v2040 = vmul.f32 %v2028, %v2028
      %v2041 = vmul.f32 %v2029, %v2029
      %v2042 = vmul.f32 %v2034, %v2034
      %v2043 = vmul.f32 %v2035, %v2035
      %v2044 = vmul.f32 %v2036, %v2036
      %v2045 = vmul.f32 %v2037, %v2037
      %v2046 = vadd.f32 %v2038, %v2042
      %v2047 = vadd.f32 %v2039, %v2043
      %v2048 = vadd.f32 %v2040, %v2044
      %v2049 = vadd.f32 %v2041, %v2045
      %v2050 = vsub.f32 0.0, %v2046
      %v2051 = vsub.f32 0.0, %v2047
      %v2052 = vsub.f32 0.0, %v2048
      %v2053 = vsub.f32 0.0, %v2049
      %v2054 = vmul.f32 %v2050, 1.442695
      %v2055 = vpow.pop %v2054
      %v2056 = vmul.f32 %v2051, 1.442695
      %v2057 = vpow.pop %v2056
      %v2058 = vmul.f32 %v2052, 1.442695
      %v2059 = vpow.pop %v2058
      %v2060 = vmul.f32 %v2053, 1.442695
      %v2061 = vpow.pop %v2060
      %2062 = vset.pattern.permute.xlu0 2
      %2063 = vperm.xlu0 %2062, %v2020
      %v2064 = vpop.permute.xlu0 %2063
      %vm2066 = vcmp.le.f32.partialorder %v2046, %v2064
      %vm2067 = vcmp.le.f32.partialorder %v2047, %v2064
      %vm2068 = vcmp.le.f32.partialorder %v2048, %v2064
      %vm2069 = vcmp.le.f32.partialorder %v2049, %v2064
      %v2070 = vsel %vm2066, %v2055, 0.0
      %v2071 = vsel %vm2067, %v2057, 0.0
      %v2072 = vsel %vm2068, %v2059, 0.0
      %v2073 = vsel %vm2069, %v2061, 0.0
      %2074 = vset.pattern.permute.xlu0 4
      %2075 = vperm.xlu0 %2074, %v2020
      %v2076 = vpop.permute.xlu0 %2075
      %v2078 = vmul.f32 %v2070, %v2076
      %v2079 = vmul.f32 %v2071, %v2076
      %v2080 = vmul.f32 %v2072, %v2076
      %v2081 = vmul.f32 %v2073, %v2076
      %v2082 = vadd.f32 %v2004, %v2078
      %v2083 = vadd.f32 %v2005, %v2079
      %v2084 = vadd.f32 %v2006, %v2080
      %v2085 = vadd.f32 %v2007, %v2081
      %2086 = vset.pattern.permute.xlu0 3
      %2087 = vperm.xlu0 %2086, %v2020
      %v2088 = vpop.permute.xlu0 %2087
      %v2090 = vmul.f32 %v2070, %v2088
      %v2091 = vmul.f32 %v2071, %v2088
      %v2092 = vmul.f32 %v2072, %v2088
      %v2093 = vmul.f32 %v2073, %v2088
      %v2094 = vadd.f32 %v2016, %v2090
      %v2095 = vadd.f32 %v2017, %v2091
      %v2096 = vadd.f32 %v2018, %v2092
      %v2097 = vadd.f32 %v2019, %v2093
      %v2098 = vld [vmem:[%s1629 + $0x30] sm:$0xff]
      %2100 = vset.pattern.permute.xlu0 0
      %2101 = vperm.xlu0 %2100, %v2098
      %v2102 = vpop.permute.xlu0 %2101
      %v2104 = vsub.f32 %v293, %v2102
      %v2105 = vsub.f32 %v297, %v2102
      %v2106 = vsub.f32 %v301, %v2102
      %v2107 = vsub.f32 %v305, %v2102
      %2108 = vset.pattern.permute.xlu0 1
      %2109 = vperm.xlu0 %2108, %v2098
      %v2110 = vpop.permute.xlu0 %2109
      %v2112 = vsub.f32 %v323, %v2110
      %v2113 = vsub.f32 %v327, %v2110
      %v2114 = vsub.f32 %v331, %v2110
      %v2115 = vsub.f32 %v335, %v2110
      %v2116 = vmul.f32 %v2104, %v2104
      %v2117 = vmul.f32 %v2105, %v2105
      %v2118 = vmul.f32 %v2106, %v2106
      %v2119 = vmul.f32 %v2107, %v2107
      %v2120 = vmul.f32 %v2112, %v2112
      %v2121 = vmul.f32 %v2113, %v2113
      %v2122 = vmul.f32 %v2114, %v2114
      %v2123 = vmul.f32 %v2115, %v2115
      %v2124 = vadd.f32 %v2116, %v2120
      %v2125 = vadd.f32 %v2117, %v2121
      %v2126 = vadd.f32 %v2118, %v2122
      %v2127 = vadd.f32 %v2119, %v2123
      %v2128 = vsub.f32 0.0, %v2124
      %v2129 = vsub.f32 0.0, %v2125
      %v2130 = vsub.f32 0.0, %v2126
      %v2131 = vsub.f32 0.0, %v2127
      %v2132 = vmul.f32 %v2128, 1.442695
      %v2133 = vpow.pop %v2132
      %v2134 = vmul.f32 %v2129, 1.442695
      %v2135 = vpow.pop %v2134
      %v2136 = vmul.f32 %v2130, 1.442695
      %v2137 = vpow.pop %v2136
      %v2138 = vmul.f32 %v2131, 1.442695
      %v2139 = vpow.pop %v2138
      %2140 = vset.pattern.permute.xlu0 2
      %2141 = vperm.xlu0 %2140, %v2098
      %v2142 = vpop.permute.xlu0 %2141
      %vm2144 = vcmp.le.f32.partialorder %v2124, %v2142
      %vm2145 = vcmp.le.f32.partialorder %v2125, %v2142
      %vm2146 = vcmp.le.f32.partialorder %v2126, %v2142
      %vm2147 = vcmp.le.f32.partialorder %v2127, %v2142
      %v2148 = vsel %vm2144, %v2133, 0.0
      %v2149 = vsel %vm2145, %v2135, 0.0
      %v2150 = vsel %vm2146, %v2137, 0.0
      %v2151 = vsel %vm2147, %v2139, 0.0
      %2152 = vset.pattern.permute.xlu0 4
      %2153 = vperm.xlu0 %2152, %v2098
      %v2154 = vpop.permute.xlu0 %2153
      %v2156 = vmul.f32 %v2148, %v2154
      %v2157 = vmul.f32 %v2149, %v2154
      %v2158 = vmul.f32 %v2150, %v2154
      %v2159 = vmul.f32 %v2151, %v2154
      %v2160 = vadd.f32 %v2082, %v2156
      %v2161 = vadd.f32 %v2083, %v2157
      %v2162 = vadd.f32 %v2084, %v2158
      %v2163 = vadd.f32 %v2085, %v2159
      %2164 = vset.pattern.permute.xlu0 3
      %2165 = vperm.xlu0 %2164, %v2098
      %v2166 = vpop.permute.xlu0 %2165
      %v2168 = vmul.f32 %v2148, %v2166
      %v2169 = vmul.f32 %v2149, %v2166
      %v2170 = vmul.f32 %v2150, %v2166
      %v2171 = vmul.f32 %v2151, %v2166
      %v2172 = vadd.f32 %v2094, %v2168
      %v2173 = vadd.f32 %v2095, %v2169
      %v2174 = vadd.f32 %v2096, %v2170
      %v2175 = vadd.f32 %v2097, %v2171
      %v2176 = vld [vmem:[%s1629 + $0x38] sm:$0xff]
      %2178 = vset.pattern.permute.xlu0 0
      %2179 = vperm.xlu0 %2178, %v2176
      %v2180 = vpop.permute.xlu0 %2179
      %v2182 = vsub.f32 %v293, %v2180
      %v2183 = vsub.f32 %v297, %v2180
      %v2184 = vsub.f32 %v301, %v2180
      %v2185 = vsub.f32 %v305, %v2180
      %2186 = vset.pattern.permute.xlu0 1
      %2187 = vperm.xlu0 %2186, %v2176
      %v2188 = vpop.permute.xlu0 %2187
      %v2190 = vsub.f32 %v323, %v2188
      %v2191 = vsub.f32 %v327, %v2188
      %v2192 = vsub.f32 %v331, %v2188
      %v2193 = vsub.f32 %v335, %v2188
      %v2194 = vmul.f32 %v2182, %v2182
      %v2195 = vmul.f32 %v2183, %v2183
      %v2196 = vmul.f32 %v2184, %v2184
      %v2197 = vmul.f32 %v2185, %v2185
      %v2198 = vmul.f32 %v2190, %v2190
      %v2199 = vmul.f32 %v2191, %v2191
      %v2200 = vmul.f32 %v2192, %v2192
      %v2201 = vmul.f32 %v2193, %v2193
      %v2202 = vadd.f32 %v2194, %v2198
      %v2203 = vadd.f32 %v2195, %v2199
      %v2204 = vadd.f32 %v2196, %v2200
      %v2205 = vadd.f32 %v2197, %v2201
      %v2206 = vsub.f32 0.0, %v2202
      %v2207 = vsub.f32 0.0, %v2203
      %v2208 = vsub.f32 0.0, %v2204
      %v2209 = vsub.f32 0.0, %v2205
      %v2210 = vmul.f32 %v2206, 1.442695
      %v2211 = vpow.pop %v2210
      %v2212 = vmul.f32 %v2207, 1.442695
      %v2213 = vpow.pop %v2212
      %v2214 = vmul.f32 %v2208, 1.442695
      %v2215 = vpow.pop %v2214
      %v2216 = vmul.f32 %v2209, 1.442695
      %v2217 = vpow.pop %v2216
      %2218 = vset.pattern.permute.xlu0 2
      %2219 = vperm.xlu0 %2218, %v2176
      %v2220 = vpop.permute.xlu0 %2219
      %vm2222 = vcmp.le.f32.partialorder %v2202, %v2220
      %vm2223 = vcmp.le.f32.partialorder %v2203, %v2220
      %vm2224 = vcmp.le.f32.partialorder %v2204, %v2220
      %vm2225 = vcmp.le.f32.partialorder %v2205, %v2220
      %v2226 = vsel %vm2222, %v2211, 0.0
      %v2227 = vsel %vm2223, %v2213, 0.0
      %v2228 = vsel %vm2224, %v2215, 0.0
      %v2229 = vsel %vm2225, %v2217, 0.0
      %2230 = vset.pattern.permute.xlu0 4
      %2231 = vperm.xlu0 %2230, %v2176
      %v2232 = vpop.permute.xlu0 %2231
      %v2234 = vmul.f32 %v2226, %v2232
      %v2235 = vmul.f32 %v2227, %v2232
      %v2236 = vmul.f32 %v2228, %v2232
      %v2237 = vmul.f32 %v2229, %v2232
      %v2238 = vadd.f32 %v2160, %v2234
      %v2239 = vadd.f32 %v2161, %v2235
      %v2240 = vadd.f32 %v2162, %v2236
      %v2241 = vadd.f32 %v2163, %v2237
      %2242 = vset.pattern.permute.xlu0 3
      %2243 = vperm.xlu0 %2242, %v2176
      %v2244 = vpop.permute.xlu0 %2243
      %v2246 = vmul.f32 %v2226, %v2244
      %v2247 = vmul.f32 %v2227, %v2244
      %v2248 = vmul.f32 %v2228, %v2244
      %v2249 = vmul.f32 %v2229, %v2244
      %v2250 = vadd.f32 %v2172, %v2246
      %v2251 = vadd.f32 %v2173, %v2247
      %v2252 = vadd.f32 %v2174, %v2248
      %v2253 = vadd.f32 %v2175, %v2249
      %s2254 = scalar_lea.vmem [#allocation2], 64
      %v2255 = vld [vmem:[%s2254] sm:$0xff]
      %v2256 = vld [vmem:[%s2254 + $0x8] sm:$0xff]
      %v2257 = vld [vmem:[%s2254 + $0x10] sm:$0xff]
      %v2258 = vld [vmem:[%s2254 + $0x18] sm:$0xff]
      %v2259 = vadd.f32 %v2255, %v2238
      %v2260 = vadd.f32 %v2256, %v2239
      %v2261 = vadd.f32 %v2257, %v2240
      %v2262 = vadd.f32 %v2258, %v2241
      %2263 = vst [vmem:[%s2254] sm:$0xff] %v2259
      %2264 = vst [vmem:[%s2254 + $0x8] sm:$0xff] %v2260
      %2265 = vst [vmem:[%s2254 + $0x10] sm:$0xff] %v2261
      %2266 = vst [vmem:[%s2254 + $0x18] sm:$0xff] %v2262
      %s2267 = scalar_lea.vmem [#allocation3], 64
      %v2268 = vld [vmem:[%s2267] sm:$0xff]
      %v2269 = vld [vmem:[%s2267 + $0x8] sm:$0xff]
      %v2270 = vld [vmem:[%s2267 + $0x10] sm:$0xff]
      %v2271 = vld [vmem:[%s2267 + $0x18] sm:$0xff]
      %v2272 = vadd.f32 %v2268, %v2250
      %v2273 = vadd.f32 %v2269, %v2251
      %v2274 = vadd.f32 %v2270, %v2252
      %v2275 = vadd.f32 %v2271, %v2253
      %2276 = vst [vmem:[%s2267] sm:$0xff] %v2272
      %2277 = vst [vmem:[%s2267 + $0x8] sm:$0xff] %v2273
      %2278 = vst [vmem:[%s2267 + $0x10] sm:$0xff] %v2274
      %2279 = vst [vmem:[%s2267 + $0x18] sm:$0xff] %v2275
      %s2280 = scalar_lea.vmem %s198, 192
      %v2281 = vld [vmem:[%s2280] sm:$0xff]
      %2283 = vset.pattern.permute.xlu0 0
      %2284 = vperm.xlu0 %2283, %v2281
      %v2285 = vpop.permute.xlu0 %2284
      %v2287 = vsub.f32 %v293, %v2285
      %v2288 = vsub.f32 %v297, %v2285
      %v2289 = vsub.f32 %v301, %v2285
      %v2290 = vsub.f32 %v305, %v2285
      %2291 = vset.pattern.permute.xlu0 1
      %2292 = vperm.xlu0 %2291, %v2281
      %v2293 = vpop.permute.xlu0 %2292
      %v2295 = vsub.f32 %v323, %v2293
      %v2296 = vsub.f32 %v327, %v2293
      %v2297 = vsub.f32 %v331, %v2293
      %v2298 = vsub.f32 %v335, %v2293
      %v2299 = vmul.f32 %v2287, %v2287
      %v2300 = vmul.f32 %v2288, %v2288
      %v2301 = vmul.f32 %v2289, %v2289
      %v2302 = vmul.f32 %v2290, %v2290
      %v2303 = vmul.f32 %v2295, %v2295
      %v2304 = vmul.f32 %v2296, %v2296
      %v2305 = vmul.f32 %v2297, %v2297
      %v2306 = vmul.f32 %v2298, %v2298
      %v2307 = vadd.f32 %v2299, %v2303
      %v2308 = vadd.f32 %v2300, %v2304
      %v2309 = vadd.f32 %v2301, %v2305
      %v2310 = vadd.f32 %v2302, %v2306
      %v2311 = vsub.f32 0.0, %v2307
      %v2312 = vsub.f32 0.0, %v2308
      %v2313 = vsub.f32 0.0, %v2309
      %v2314 = vsub.f32 0.0, %v2310
      %v2315 = vmul.f32 %v2311, 1.442695
      %v2316 = vpow.pop %v2315
      %v2317 = vmul.f32 %v2312, 1.442695
      %v2318 = vpow.pop %v2317
      %v2319 = vmul.f32 %v2313, 1.442695
      %v2320 = vpow.pop %v2319
      %v2321 = vmul.f32 %v2314, 1.442695
      %v2322 = vpow.pop %v2321
      %2323 = vset.pattern.permute.xlu0 2
      %2324 = vperm.xlu0 %2323, %v2281
      %v2325 = vpop.permute.xlu0 %2324
      %vm2327 = vcmp.le.f32.partialorder %v2307, %v2325
      %vm2328 = vcmp.le.f32.partialorder %v2308, %v2325
      %vm2329 = vcmp.le.f32.partialorder %v2309, %v2325
      %vm2330 = vcmp.le.f32.partialorder %v2310, %v2325
      %v2331 = vsel %vm2327, %v2316, 0.0
      %v2332 = vsel %vm2328, %v2318, 0.0
      %v2333 = vsel %vm2329, %v2320, 0.0
      %v2334 = vsel %vm2330, %v2322, 0.0
      %2335 = vset.pattern.permute.xlu0 4
      %2336 = vperm.xlu0 %2335, %v2281
      %v2337 = vpop.permute.xlu0 %2336
      %v2339 = vmul.f32 %v2331, %v2337
      %v2340 = vmul.f32 %v2332, %v2337
      %v2341 = vmul.f32 %v2333, %v2337
      %v2342 = vmul.f32 %v2334, %v2337
      %v2343 = vadd.f32 %v2339, 0.0
      %v2344 = vadd.f32 %v2340, 0.0
      %v2345 = vadd.f32 %v2341, 0.0
      %v2346 = vadd.f32 %v2342, 0.0
      %2347 = vset.pattern.permute.xlu0 3
      %2348 = vperm.xlu0 %2347, %v2281
      %v2349 = vpop.permute.xlu0 %2348
      %v2351 = vmul.f32 %v2331, %v2349
      %v2352 = vmul.f32 %v2332, %v2349
      %v2353 = vmul.f32 %v2333, %v2349
      %v2354 = vmul.f32 %v2334, %v2349
      %v2355 = vadd.f32 %v2351, 0.0
      %v2356 = vadd.f32 %v2352, 0.0
      %v2357 = vadd.f32 %v2353, 0.0
      %v2358 = vadd.f32 %v2354, 0.0
      %v2359 = vld [vmem:[%s2280 + $0x8] sm:$0xff]
      %2361 = vset.pattern.permute.xlu0 0
      %2362 = vperm.xlu0 %2361, %v2359
      %v2363 = vpop.permute.xlu0 %2362
      %v2365 = vsub.f32 %v293, %v2363
      %v2366 = vsub.f32 %v297, %v2363
      %v2367 = vsub.f32 %v301, %v2363
      %v2368 = vsub.f32 %v305, %v2363
      %2369 = vset.pattern.permute.xlu0 1
      %2370 = vperm.xlu0 %2369, %v2359
      %v2371 = vpop.permute.xlu0 %2370
      %v2373 = vsub.f32 %v323, %v2371
      %v2374 = vsub.f32 %v327, %v2371
      %v2375 = vsub.f32 %v331, %v2371
      %v2376 = vsub.f32 %v335, %v2371
      %v2377 = vmul.f32 %v2365, %v2365
      %v2378 = vmul.f32 %v2366, %v2366
      %v2379 = vmul.f32 %v2367, %v2367
      %v2380 = vmul.f32 %v2368, %v2368
      %v2381 = vmul.f32 %v2373, %v2373
      %v2382 = vmul.f32 %v2374, %v2374
      %v2383 = vmul.f32 %v2375, %v2375
      %v2384 = vmul.f32 %v2376, %v2376
      %v2385 = vadd.f32 %v2377, %v2381
      %v2386 = vadd.f32 %v2378, %v2382
      %v2387 = vadd.f32 %v2379, %v2383
      %v2388 = vadd.f32 %v2380, %v2384
      %v2389 = vsub.f32 0.0, %v2385
      %v2390 = vsub.f32 0.0, %v2386
      %v2391 = vsub.f32 0.0, %v2387
      %v2392 = vsub.f32 0.0, %v2388
      %v2393 = vmul.f32 %v2389, 1.442695
      %v2394 = vpow.pop %v2393
      %v2395 = vmul.f32 %v2390, 1.442695
      %v2396 = vpow.pop %v2395
      %v2397 = vmul.f32 %v2391, 1.442695
      %v2398 = vpow.pop %v2397
      %v2399 = vmul.f32 %v2392, 1.442695
      %v2400 = vpow.pop %v2399
      %2401 = vset.pattern.permute.xlu0 2
      %2402 = vperm.xlu0 %2401, %v2359
      %v2403 = vpop.permute.xlu0 %2402
      %vm2405 = vcmp.le.f32.partialorder %v2385, %v2403
      %vm2406 = vcmp.le.f32.partialorder %v2386, %v2403
      %vm2407 = vcmp.le.f32.partialorder %v2387, %v2403
      %vm2408 = vcmp.le.f32.partialorder %v2388, %v2403
      %v2409 = vsel %vm2405, %v2394, 0.0
      %v2410 = vsel %vm2406, %v2396, 0.0
      %v2411 = vsel %vm2407, %v2398, 0.0
      %v2412 = vsel %vm2408, %v2400, 0.0
      %2413 = vset.pattern.permute.xlu0 4
      %2414 = vperm.xlu0 %2413, %v2359
      %v2415 = vpop.permute.xlu0 %2414
      %v2417 = vmul.f32 %v2409, %v2415
      %v2418 = vmul.f32 %v2410, %v2415
      %v2419 = vmul.f32 %v2411, %v2415
      %v2420 = vmul.f32 %v2412, %v2415
      %v2421 = vadd.f32 %v2343, %v2417
      %v2422 = vadd.f32 %v2344, %v2418
      %v2423 = vadd.f32 %v2345, %v2419
      %v2424 = vadd.f32 %v2346, %v2420
      %2425 = vset.pattern.permute.xlu0 3
      %2426 = vperm.xlu0 %2425, %v2359
      %v2427 = vpop.permute.xlu0 %2426
      %v2429 = vmul.f32 %v2409, %v2427
      %v2430 = vmul.f32 %v2410, %v2427
      %v2431 = vmul.f32 %v2411, %v2427
      %v2432 = vmul.f32 %v2412, %v2427
      %v2433 = vadd.f32 %v2355, %v2429
      %v2434 = vadd.f32 %v2356, %v2430
      %v2435 = vadd.f32 %v2357, %v2431
      %v2436 = vadd.f32 %v2358, %v2432
      %v2437 = vld [vmem:[%s2280 + $0x10] sm:$0xff]
      %2439 = vset.pattern.permute.xlu0 0
      %2440 = vperm.xlu0 %2439, %v2437
      %v2441 = vpop.permute.xlu0 %2440
      %v2443 = vsub.f32 %v293, %v2441
      %v2444 = vsub.f32 %v297, %v2441
      %v2445 = vsub.f32 %v301, %v2441
      %v2446 = vsub.f32 %v305, %v2441
      %2447 = vset.pattern.permute.xlu0 1
      %2448 = vperm.xlu0 %2447, %v2437
      %v2449 = vpop.permute.xlu0 %2448
      %v2451 = vsub.f32 %v323, %v2449
      %v2452 = vsub.f32 %v327, %v2449
      %v2453 = vsub.f32 %v331, %v2449
      %v2454 = vsub.f32 %v335, %v2449
      %v2455 = vmul.f32 %v2443, %v2443
      %v2456 = vmul.f32 %v2444, %v2444
      %v2457 = vmul.f32 %v2445, %v2445
      %v2458 = vmul.f32 %v2446, %v2446
      %v2459 = vmul.f32 %v2451, %v2451
      %v2460 = vmul.f32 %v2452, %v2452
      %v2461 = vmul.f32 %v2453, %v2453
      %v2462 = vmul.f32 %v2454, %v2454
      %v2463 = vadd.f32 %v2455, %v2459
      %v2464 = vadd.f32 %v2456, %v2460
      %v2465 = vadd.f32 %v2457, %v2461
      %v2466 = vadd.f32 %v2458, %v2462
      %v2467 = vsub.f32 0.0, %v2463
      %v2468 = vsub.f32 0.0, %v2464
      %v2469 = vsub.f32 0.0, %v2465
      %v2470 = vsub.f32 0.0, %v2466
      %v2471 = vmul.f32 %v2467, 1.442695
      %v2472 = vpow.pop %v2471
      %v2473 = vmul.f32 %v2468, 1.442695
      %v2474 = vpow.pop %v2473
      %v2475 = vmul.f32 %v2469, 1.442695
      %v2476 = vpow.pop %v2475
      %v2477 = vmul.f32 %v2470, 1.442695
      %v2478 = vpow.pop %v2477
      %2479 = vset.pattern.permute.xlu0 2
      %2480 = vperm.xlu0 %2479, %v2437
      %v2481 = vpop.permute.xlu0 %2480
      %vm2483 = vcmp.le.f32.partialorder %v2463, %v2481
      %vm2484 = vcmp.le.f32.partialorder %v2464, %v2481
      %vm2485 = vcmp.le.f32.partialorder %v2465, %v2481
      %vm2486 = vcmp.le.f32.partialorder %v2466, %v2481
      %v2487 = vsel %vm2483, %v2472, 0.0
      %v2488 = vsel %vm2484, %v2474, 0.0
      %v2489 = vsel %vm2485, %v2476, 0.0
      %v2490 = vsel %vm2486, %v2478, 0.0
      %2491 = vset.pattern.permute.xlu0 4
      %2492 = vperm.xlu0 %2491, %v2437
      %v2493 = vpop.permute.xlu0 %2492
      %v2495 = vmul.f32 %v2487, %v2493
      %v2496 = vmul.f32 %v2488, %v2493
      %v2497 = vmul.f32 %v2489, %v2493
      %v2498 = vmul.f32 %v2490, %v2493
      %v2499 = vadd.f32 %v2421, %v2495
      %v2500 = vadd.f32 %v2422, %v2496
      %v2501 = vadd.f32 %v2423, %v2497
      %v2502 = vadd.f32 %v2424, %v2498
      %2503 = vset.pattern.permute.xlu0 3
      %2504 = vperm.xlu0 %2503, %v2437
      %v2505 = vpop.permute.xlu0 %2504
      %v2507 = vmul.f32 %v2487, %v2505
      %v2508 = vmul.f32 %v2488, %v2505
      %v2509 = vmul.f32 %v2489, %v2505
      %v2510 = vmul.f32 %v2490, %v2505
      %v2511 = vadd.f32 %v2433, %v2507
      %v2512 = vadd.f32 %v2434, %v2508
      %v2513 = vadd.f32 %v2435, %v2509
      %v2514 = vadd.f32 %v2436, %v2510
      %v2515 = vld [vmem:[%s2280 + $0x18] sm:$0xff]
      %2517 = vset.pattern.permute.xlu0 0
      %2518 = vperm.xlu0 %2517, %v2515
      %v2519 = vpop.permute.xlu0 %2518
      %v2521 = vsub.f32 %v293, %v2519
      %v2522 = vsub.f32 %v297, %v2519
      %v2523 = vsub.f32 %v301, %v2519
      %v2524 = vsub.f32 %v305, %v2519
      %2525 = vset.pattern.permute.xlu0 1
      %2526 = vperm.xlu0 %2525, %v2515
      %v2527 = vpop.permute.xlu0 %2526
      %v2529 = vsub.f32 %v323, %v2527
      %v2530 = vsub.f32 %v327, %v2527
      %v2531 = vsub.f32 %v331, %v2527
      %v2532 = vsub.f32 %v335, %v2527
      %v2533 = vmul.f32 %v2521, %v2521
      %v2534 = vmul.f32 %v2522, %v2522
      %v2535 = vmul.f32 %v2523, %v2523
      %v2536 = vmul.f32 %v2524, %v2524
      %v2537 = vmul.f32 %v2529, %v2529
      %v2538 = vmul.f32 %v2530, %v2530
      %v2539 = vmul.f32 %v2531, %v2531
      %v2540 = vmul.f32 %v2532, %v2532
      %v2541 = vadd.f32 %v2533, %v2537
      %v2542 = vadd.f32 %v2534, %v2538
      %v2543 = vadd.f32 %v2535, %v2539
      %v2544 = vadd.f32 %v2536, %v2540
      %v2545 = vsub.f32 0.0, %v2541
      %v2546 = vsub.f32 0.0, %v2542
      %v2547 = vsub.f32 0.0, %v2543
      %v2548 = vsub.f32 0.0, %v2544
      %v2549 = vmul.f32 %v2545, 1.442695
      %v2550 = vpow.pop %v2549
      %v2551 = vmul.f32 %v2546, 1.442695
      %v2552 = vpow.pop %v2551
      %v2553 = vmul.f32 %v2547, 1.442695
      %v2554 = vpow.pop %v2553
      %v2555 = vmul.f32 %v2548, 1.442695
      %v2556 = vpow.pop %v2555
      %2557 = vset.pattern.permute.xlu0 2
      %2558 = vperm.xlu0 %2557, %v2515
      %v2559 = vpop.permute.xlu0 %2558
      %vm2561 = vcmp.le.f32.partialorder %v2541, %v2559
      %vm2562 = vcmp.le.f32.partialorder %v2542, %v2559
      %vm2563 = vcmp.le.f32.partialorder %v2543, %v2559
      %vm2564 = vcmp.le.f32.partialorder %v2544, %v2559
      %v2565 = vsel %vm2561, %v2550, 0.0
      %v2566 = vsel %vm2562, %v2552, 0.0
      %v2567 = vsel %vm2563, %v2554, 0.0
      %v2568 = vsel %vm2564, %v2556, 0.0
      %2569 = vset.pattern.permute.xlu0 4
      %2570 = vperm.xlu0 %2569, %v2515
      %v2571 = vpop.permute.xlu0 %2570
      %v2573 = vmul.f32 %v2565, %v2571
      %v2574 = vmul.f32 %v2566, %v2571
      %v2575 = vmul.f32 %v2567, %v2571
      %v2576 = vmul.f32 %v2568, %v2571
      %v2577 = vadd.f32 %v2499, %v2573
      %v2578 = vadd.f32 %v2500, %v2574
      %v2579 = vadd.f32 %v2501, %v2575
      %v2580 = vadd.f32 %v2502, %v2576
      %2581 = vset.pattern.permute.xlu0 3
      %2582 = vperm.xlu0 %2581, %v2515
      %v2583 = vpop.permute.xlu0 %2582
      %v2585 = vmul.f32 %v2565, %v2583
      %v2586 = vmul.f32 %v2566, %v2583
      %v2587 = vmul.f32 %v2567, %v2583
      %v2588 = vmul.f32 %v2568, %v2583
      %v2589 = vadd.f32 %v2511, %v2585
      %v2590 = vadd.f32 %v2512, %v2586
      %v2591 = vadd.f32 %v2513, %v2587
      %v2592 = vadd.f32 %v2514, %v2588
      %v2593 = vld [vmem:[%s2280 + $0x20] sm:$0xff]
      %2595 = vset.pattern.permute.xlu0 0
      %2596 = vperm.xlu0 %2595, %v2593
      %v2597 = vpop.permute.xlu0 %2596
      %v2599 = vsub.f32 %v293, %v2597
      %v2600 = vsub.f32 %v297, %v2597
      %v2601 = vsub.f32 %v301, %v2597
      %v2602 = vsub.f32 %v305, %v2597
      %2603 = vset.pattern.permute.xlu0 1
      %2604 = vperm.xlu0 %2603, %v2593
      %v2605 = vpop.permute.xlu0 %2604
      %v2607 = vsub.f32 %v323, %v2605
      %v2608 = vsub.f32 %v327, %v2605
      %v2609 = vsub.f32 %v331, %v2605
      %v2610 = vsub.f32 %v335, %v2605
      %v2611 = vmul.f32 %v2599, %v2599
      %v2612 = vmul.f32 %v2600, %v2600
      %v2613 = vmul.f32 %v2601, %v2601
      %v2614 = vmul.f32 %v2602, %v2602
      %v2615 = vmul.f32 %v2607, %v2607
      %v2616 = vmul.f32 %v2608, %v2608
      %v2617 = vmul.f32 %v2609, %v2609
      %v2618 = vmul.f32 %v2610, %v2610
      %v2619 = vadd.f32 %v2611, %v2615
      %v2620 = vadd.f32 %v2612, %v2616
      %v2621 = vadd.f32 %v2613, %v2617
      %v2622 = vadd.f32 %v2614, %v2618
      %v2623 = vsub.f32 0.0, %v2619
      %v2624 = vsub.f32 0.0, %v2620
      %v2625 = vsub.f32 0.0, %v2621
      %v2626 = vsub.f32 0.0, %v2622
      %v2627 = vmul.f32 %v2623, 1.442695
      %v2628 = vpow.pop %v2627
      %v2629 = vmul.f32 %v2624, 1.442695
      %v2630 = vpow.pop %v2629
      %v2631 = vmul.f32 %v2625, 1.442695
      %v2632 = vpow.pop %v2631
      %v2633 = vmul.f32 %v2626, 1.442695
      %v2634 = vpow.pop %v2633
      %2635 = vset.pattern.permute.xlu0 2
      %2636 = vperm.xlu0 %2635, %v2593
      %v2637 = vpop.permute.xlu0 %2636
      %vm2639 = vcmp.le.f32.partialorder %v2619, %v2637
      %vm2640 = vcmp.le.f32.partialorder %v2620, %v2637
      %vm2641 = vcmp.le.f32.partialorder %v2621, %v2637
      %vm2642 = vcmp.le.f32.partialorder %v2622, %v2637
      %v2643 = vsel %vm2639, %v2628, 0.0
      %v2644 = vsel %vm2640, %v2630, 0.0
      %v2645 = vsel %vm2641, %v2632, 0.0
      %v2646 = vsel %vm2642, %v2634, 0.0
      %2647 = vset.pattern.permute.xlu0 4
      %2648 = vperm.xlu0 %2647, %v2593
      %v2649 = vpop.permute.xlu0 %2648
      %v2651 = vmul.f32 %v2643, %v2649
      %v2652 = vmul.f32 %v2644, %v2649
      %v2653 = vmul.f32 %v2645, %v2649
      %v2654 = vmul.f32 %v2646, %v2649
      %v2655 = vadd.f32 %v2577, %v2651
      %v2656 = vadd.f32 %v2578, %v2652
      %v2657 = vadd.f32 %v2579, %v2653
      %v2658 = vadd.f32 %v2580, %v2654
      %2659 = vset.pattern.permute.xlu0 3
      %2660 = vperm.xlu0 %2659, %v2593
      %v2661 = vpop.permute.xlu0 %2660
      %v2663 = vmul.f32 %v2643, %v2661
      %v2664 = vmul.f32 %v2644, %v2661
      %v2665 = vmul.f32 %v2645, %v2661
      %v2666 = vmul.f32 %v2646, %v2661
      %v2667 = vadd.f32 %v2589, %v2663
      %v2668 = vadd.f32 %v2590, %v2664
      %v2669 = vadd.f32 %v2591, %v2665
      %v2670 = vadd.f32 %v2592, %v2666
      %v2671 = vld [vmem:[%s2280 + $0x28] sm:$0xff]
      %2673 = vset.pattern.permute.xlu0 0
      %2674 = vperm.xlu0 %2673, %v2671
      %v2675 = vpop.permute.xlu0 %2674
      %v2677 = vsub.f32 %v293, %v2675
      %v2678 = vsub.f32 %v297, %v2675
      %v2679 = vsub.f32 %v301, %v2675
      %v2680 = vsub.f32 %v305, %v2675
      %2681 = vset.pattern.permute.xlu0 1
      %2682 = vperm.xlu0 %2681, %v2671
      %v2683 = vpop.permute.xlu0 %2682
      %v2685 = vsub.f32 %v323, %v2683
      %v2686 = vsub.f32 %v327, %v2683
      %v2687 = vsub.f32 %v331, %v2683
      %v2688 = vsub.f32 %v335, %v2683
      %v2689 = vmul.f32 %v2677, %v2677
      %v2690 = vmul.f32 %v2678, %v2678
      %v2691 = vmul.f32 %v2679, %v2679
      %v2692 = vmul.f32 %v2680, %v2680
      %v2693 = vmul.f32 %v2685, %v2685
      %v2694 = vmul.f32 %v2686, %v2686
      %v2695 = vmul.f32 %v2687, %v2687
      %v2696 = vmul.f32 %v2688, %v2688
      %v2697 = vadd.f32 %v2689, %v2693
      %v2698 = vadd.f32 %v2690, %v2694
      %v2699 = vadd.f32 %v2691, %v2695
      %v2700 = vadd.f32 %v2692, %v2696
      %v2701 = vsub.f32 0.0, %v2697
      %v2702 = vsub.f32 0.0, %v2698
      %v2703 = vsub.f32 0.0, %v2699
      %v2704 = vsub.f32 0.0, %v2700
      %v2705 = vmul.f32 %v2701, 1.442695
      %v2706 = vpow.pop %v2705
      %v2707 = vmul.f32 %v2702, 1.442695
      %v2708 = vpow.pop %v2707
      %v2709 = vmul.f32 %v2703, 1.442695
      %v2710 = vpow.pop %v2709
      %v2711 = vmul.f32 %v2704, 1.442695
      %v2712 = vpow.pop %v2711
      %2713 = vset.pattern.permute.xlu0 2
      %2714 = vperm.xlu0 %2713, %v2671
      %v2715 = vpop.permute.xlu0 %2714
      %vm2717 = vcmp.le.f32.partialorder %v2697, %v2715
      %vm2718 = vcmp.le.f32.partialorder %v2698, %v2715
      %vm2719 = vcmp.le.f32.partialorder %v2699, %v2715
      %vm2720 = vcmp.le.f32.partialorder %v2700, %v2715
      %v2721 = vsel %vm2717, %v2706, 0.0
      %v2722 = vsel %vm2718, %v2708, 0.0
      %v2723 = vsel %vm2719, %v2710, 0.0
      %v2724 = vsel %vm2720, %v2712, 0.0
      %2725 = vset.pattern.permute.xlu0 4
      %2726 = vperm.xlu0 %2725, %v2671
      %v2727 = vpop.permute.xlu0 %2726
      %v2729 = vmul.f32 %v2721, %v2727
      %v2730 = vmul.f32 %v2722, %v2727
      %v2731 = vmul.f32 %v2723, %v2727
      %v2732 = vmul.f32 %v2724, %v2727
      %v2733 = vadd.f32 %v2655, %v2729
      %v2734 = vadd.f32 %v2656, %v2730
      %v2735 = vadd.f32 %v2657, %v2731
      %v2736 = vadd.f32 %v2658, %v2732
      %2737 = vset.pattern.permute.xlu0 3
      %2738 = vperm.xlu0 %2737, %v2671
      %v2739 = vpop.permute.xlu0 %2738
      %v2741 = vmul.f32 %v2721, %v2739
      %v2742 = vmul.f32 %v2722, %v2739
      %v2743 = vmul.f32 %v2723, %v2739
      %v2744 = vmul.f32 %v2724, %v2739
      %v2745 = vadd.f32 %v2667, %v2741
      %v2746 = vadd.f32 %v2668, %v2742
      %v2747 = vadd.f32 %v2669, %v2743
      %v2748 = vadd.f32 %v2670, %v2744
      %v2749 = vld [vmem:[%s2280 + $0x30] sm:$0xff]
      %2751 = vset.pattern.permute.xlu0 0
      %2752 = vperm.xlu0 %2751, %v2749
      %v2753 = vpop.permute.xlu0 %2752
      %v2755 = vsub.f32 %v293, %v2753
      %v2756 = vsub.f32 %v297, %v2753
      %v2757 = vsub.f32 %v301, %v2753
      %v2758 = vsub.f32 %v305, %v2753
      %2759 = vset.pattern.permute.xlu0 1
      %2760 = vperm.xlu0 %2759, %v2749
      %v2761 = vpop.permute.xlu0 %2760
      %v2763 = vsub.f32 %v323, %v2761
      %v2764 = vsub.f32 %v327, %v2761
      %v2765 = vsub.f32 %v331, %v2761
      %v2766 = vsub.f32 %v335, %v2761
      %v2767 = vmul.f32 %v2755, %v2755
      %v2768 = vmul.f32 %v2756, %v2756
      %v2769 = vmul.f32 %v2757, %v2757
      %v2770 = vmul.f32 %v2758, %v2758
      %v2771 = vmul.f32 %v2763, %v2763
      %v2772 = vmul.f32 %v2764, %v2764
      %v2773 = vmul.f32 %v2765, %v2765
      %v2774 = vmul.f32 %v2766, %v2766
      %v2775 = vadd.f32 %v2767, %v2771
      %v2776 = vadd.f32 %v2768, %v2772
      %v2777 = vadd.f32 %v2769, %v2773
      %v2778 = vadd.f32 %v2770, %v2774
      %v2779 = vsub.f32 0.0, %v2775
      %v2780 = vsub.f32 0.0, %v2776
      %v2781 = vsub.f32 0.0, %v2777
      %v2782 = vsub.f32 0.0, %v2778
      %v2783 = vmul.f32 %v2779, 1.442695
      %v2784 = vpow.pop %v2783
      %v2785 = vmul.f32 %v2780, 1.442695
      %v2786 = vpow.pop %v2785
      %v2787 = vmul.f32 %v2781, 1.442695
      %v2788 = vpow.pop %v2787
      %v2789 = vmul.f32 %v2782, 1.442695
      %v2790 = vpow.pop %v2789
      %2791 = vset.pattern.permute.xlu0 2
      %2792 = vperm.xlu0 %2791, %v2749
      %v2793 = vpop.permute.xlu0 %2792
      %vm2795 = vcmp.le.f32.partialorder %v2775, %v2793
      %vm2796 = vcmp.le.f32.partialorder %v2776, %v2793
      %vm2797 = vcmp.le.f32.partialorder %v2777, %v2793
      %vm2798 = vcmp.le.f32.partialorder %v2778, %v2793
      %v2799 = vsel %vm2795, %v2784, 0.0
      %v2800 = vsel %vm2796, %v2786, 0.0
      %v2801 = vsel %vm2797, %v2788, 0.0
      %v2802 = vsel %vm2798, %v2790, 0.0
      %2803 = vset.pattern.permute.xlu0 4
      %2804 = vperm.xlu0 %2803, %v2749
      %v2805 = vpop.permute.xlu0 %2804
      %v2807 = vmul.f32 %v2799, %v2805
      %v2808 = vmul.f32 %v2800, %v2805
      %v2809 = vmul.f32 %v2801, %v2805
      %v2810 = vmul.f32 %v2802, %v2805
      %v2811 = vadd.f32 %v2733, %v2807
      %v2812 = vadd.f32 %v2734, %v2808
      %v2813 = vadd.f32 %v2735, %v2809
      %v2814 = vadd.f32 %v2736, %v2810
      %2815 = vset.pattern.permute.xlu0 3
      %2816 = vperm.xlu0 %2815, %v2749
      %v2817 = vpop.permute.xlu0 %2816
      %v2819 = vmul.f32 %v2799, %v2817
      %v2820 = vmul.f32 %v2800, %v2817
      %v2821 = vmul.f32 %v2801, %v2817
      %v2822 = vmul.f32 %v2802, %v2817
      %v2823 = vadd.f32 %v2745, %v2819
      %v2824 = vadd.f32 %v2746, %v2820
      %v2825 = vadd.f32 %v2747, %v2821
      %v2826 = vadd.f32 %v2748, %v2822
      %v2827 = vld [vmem:[%s2280 + $0x38] sm:$0xff]
      %2829 = vset.pattern.permute.xlu0 0
      %2830 = vperm.xlu0 %2829, %v2827
      %v2831 = vpop.permute.xlu0 %2830
      %v2833 = vsub.f32 %v293, %v2831
      %v2834 = vsub.f32 %v297, %v2831
      %v2835 = vsub.f32 %v301, %v2831
      %v2836 = vsub.f32 %v305, %v2831
      %2837 = vset.pattern.permute.xlu0 1
      %2838 = vperm.xlu0 %2837, %v2827
      %v2839 = vpop.permute.xlu0 %2838
      %v2841 = vsub.f32 %v323, %v2839
      %v2842 = vsub.f32 %v327, %v2839
      %v2843 = vsub.f32 %v331, %v2839
      %v2844 = vsub.f32 %v335, %v2839
      %v2845 = vmul.f32 %v2833, %v2833
      %v2846 = vmul.f32 %v2834, %v2834
      %v2847 = vmul.f32 %v2835, %v2835
      %v2848 = vmul.f32 %v2836, %v2836
      %v2849 = vmul.f32 %v2841, %v2841
      %v2850 = vmul.f32 %v2842, %v2842
      %v2851 = vmul.f32 %v2843, %v2843
      %v2852 = vmul.f32 %v2844, %v2844
      %v2853 = vadd.f32 %v2845, %v2849
      %v2854 = vadd.f32 %v2846, %v2850
      %v2855 = vadd.f32 %v2847, %v2851
      %v2856 = vadd.f32 %v2848, %v2852
      %v2857 = vsub.f32 0.0, %v2853
      %v2858 = vsub.f32 0.0, %v2854
      %v2859 = vsub.f32 0.0, %v2855
      %v2860 = vsub.f32 0.0, %v2856
      %v2861 = vmul.f32 %v2857, 1.442695
      %v2862 = vpow.pop %v2861
      %v2863 = vmul.f32 %v2858, 1.442695
      %v2864 = vpow.pop %v2863
      %v2865 = vmul.f32 %v2859, 1.442695
      %v2866 = vpow.pop %v2865
      %v2867 = vmul.f32 %v2860, 1.442695
      %v2868 = vpow.pop %v2867
      %2869 = vset.pattern.permute.xlu0 2
      %2870 = vperm.xlu0 %2869, %v2827
      %v2871 = vpop.permute.xlu0 %2870
      %vm2873 = vcmp.le.f32.partialorder %v2853, %v2871
      %vm2874 = vcmp.le.f32.partialorder %v2854, %v2871
      %vm2875 = vcmp.le.f32.partialorder %v2855, %v2871
      %vm2876 = vcmp.le.f32.partialorder %v2856, %v2871
      %v2877 = vsel %vm2873, %v2862, 0.0
      %v2878 = vsel %vm2874, %v2864, 0.0
      %v2879 = vsel %vm2875, %v2866, 0.0
      %v2880 = vsel %vm2876, %v2868, 0.0
      %2881 = vset.pattern.permute.xlu0 4
      %2882 = vperm.xlu0 %2881, %v2827
      %v2883 = vpop.permute.xlu0 %2882
      %v2885 = vmul.f32 %v2877, %v2883
      %v2886 = vmul.f32 %v2878, %v2883
      %v2887 = vmul.f32 %v2879, %v2883
      %v2888 = vmul.f32 %v2880, %v2883
      %v2889 = vadd.f32 %v2811, %v2885
      %v2890 = vadd.f32 %v2812, %v2886
      %v2891 = vadd.f32 %v2813, %v2887
      %v2892 = vadd.f32 %v2814, %v2888
      %2893 = vset.pattern.permute.xlu0 3
      %2894 = vperm.xlu0 %2893, %v2827
      %v2895 = vpop.permute.xlu0 %2894
      %v2897 = vmul.f32 %v2877, %v2895
      %v2898 = vmul.f32 %v2878, %v2895
      %v2899 = vmul.f32 %v2879, %v2895
      %v2900 = vmul.f32 %v2880, %v2895
      %v2901 = vadd.f32 %v2823, %v2897
      %v2902 = vadd.f32 %v2824, %v2898
      %v2903 = vadd.f32 %v2825, %v2899
      %v2904 = vadd.f32 %v2826, %v2900
      %s2905 = scalar_lea.vmem [#allocation2], 96
      %v2906 = vld [vmem:[%s2905] sm:$0xff]
      %v2907 = vld [vmem:[%s2905 + $0x8] sm:$0xff]
      %v2908 = vld [vmem:[%s2905 + $0x10] sm:$0xff]
      %v2909 = vld [vmem:[%s2905 + $0x18] sm:$0xff]
      %v2910 = vadd.f32 %v2906, %v2889
      %v2911 = vadd.f32 %v2907, %v2890
      %v2912 = vadd.f32 %v2908, %v2891
      %v2913 = vadd.f32 %v2909, %v2892
      %2914 = vst [vmem:[%s2905] sm:$0xff] %v2910
      %2915 = vst [vmem:[%s2905 + $0x8] sm:$0xff] %v2911
      %2916 = vst [vmem:[%s2905 + $0x10] sm:$0xff] %v2912
      %2917 = vst [vmem:[%s2905 + $0x18] sm:$0xff] %v2913
      %s2918 = scalar_lea.vmem [#allocation3], 96
      %v2919 = vld [vmem:[%s2918] sm:$0xff]
      %v2920 = vld [vmem:[%s2918 + $0x8] sm:$0xff]
      %v2921 = vld [vmem:[%s2918 + $0x10] sm:$0xff]
      %v2922 = vld [vmem:[%s2918 + $0x18] sm:$0xff]
      %v2923 = vadd.f32 %v2919, %v2901
      %v2924 = vadd.f32 %v2920, %v2902
      %v2925 = vadd.f32 %v2921, %v2903
      %v2926 = vadd.f32 %v2922, %v2904
      %2927 = vst [vmem:[%s2918] sm:$0xff] %v2923
      %2928 = vst [vmem:[%s2918 + $0x8] sm:$0xff] %v2924
      %2929 = vst [vmem:[%s2918 + $0x10] sm:$0xff] %v2925
      %2930 = vst [vmem:[%s2918 + $0x18] sm:$0xff] %v2926
      %s2931 = scalar_lea.vmem %s198, 256
      %v2932 = vld [vmem:[%s2931] sm:$0xff]
      %2934 = vset.pattern.permute.xlu0 0
      %2935 = vperm.xlu0 %2934, %v2932
      %v2936 = vpop.permute.xlu0 %2935
      %v2938 = vsub.f32 %v293, %v2936
      %v2939 = vsub.f32 %v297, %v2936
      %v2940 = vsub.f32 %v301, %v2936
      %v2941 = vsub.f32 %v305, %v2936
      %2942 = vset.pattern.permute.xlu0 1
      %2943 = vperm.xlu0 %2942, %v2932
      %v2944 = vpop.permute.xlu0 %2943
      %v2946 = vsub.f32 %v323, %v2944
      %v2947 = vsub.f32 %v327, %v2944
      %v2948 = vsub.f32 %v331, %v2944
      %v2949 = vsub.f32 %v335, %v2944
      %v2950 = vmul.f32 %v2938, %v2938
      %v2951 = vmul.f32 %v2939, %v2939
      %v2952 = vmul.f32 %v2940, %v2940
      %v2953 = vmul.f32 %v2941, %v2941
      %v2954 = vmul.f32 %v2946, %v2946
      %v2955 = vmul.f32 %v2947, %v2947
      %v2956 = vmul.f32 %v2948, %v2948
      %v2957 = vmul.f32 %v2949, %v2949
      %v2958 = vadd.f32 %v2950, %v2954
      %v2959 = vadd.f32 %v2951, %v2955
      %v2960 = vadd.f32 %v2952, %v2956
      %v2961 = vadd.f32 %v2953, %v2957
      %v2962 = vsub.f32 0.0, %v2958
      %v2963 = vsub.f32 0.0, %v2959
      %v2964 = vsub.f32 0.0, %v2960
      %v2965 = vsub.f32 0.0, %v2961
      %v2966 = vmul.f32 %v2962, 1.442695
      %v2967 = vpow.pop %v2966
      %v2968 = vmul.f32 %v2963, 1.442695
      %v2969 = vpow.pop %v2968
      %v2970 = vmul.f32 %v2964, 1.442695
      %v2971 = vpow.pop %v2970
      %v2972 = vmul.f32 %v2965, 1.442695
      %v2973 = vpow.pop %v2972
      %2974 = vset.pattern.permute.xlu0 2
      %2975 = vperm.xlu0 %2974, %v2932
      %v2976 = vpop.permute.xlu0 %2975
      %vm2978 = vcmp.le.f32.partialorder %v2958, %v2976
      %vm2979 = vcmp.le.f32.partialorder %v2959, %v2976
      %vm2980 = vcmp.le.f32.partialorder %v2960, %v2976
      %vm2981 = vcmp.le.f32.partialorder %v2961, %v2976
      %v2982 = vsel %vm2978, %v2967, 0.0
      %v2983 = vsel %vm2979, %v2969, 0.0
      %v2984 = vsel %vm2980, %v2971, 0.0
      %v2985 = vsel %vm2981, %v2973, 0.0
      %2986 = vset.pattern.permute.xlu0 4
      %2987 = vperm.xlu0 %2986, %v2932
      %v2988 = vpop.permute.xlu0 %2987
      %v2990 = vmul.f32 %v2982, %v2988
      %v2991 = vmul.f32 %v2983, %v2988
      %v2992 = vmul.f32 %v2984, %v2988
      %v2993 = vmul.f32 %v2985, %v2988
      %v2994 = vadd.f32 %v2990, 0.0
      %v2995 = vadd.f32 %v2991, 0.0
      %v2996 = vadd.f32 %v2992, 0.0
      %v2997 = vadd.f32 %v2993, 0.0
      %2998 = vset.pattern.permute.xlu0 3
      %2999 = vperm.xlu0 %2998, %v2932
      %v3000 = vpop.permute.xlu0 %2999
      %v3002 = vmul.f32 %v2982, %v3000
      %v3003 = vmul.f32 %v2983, %v3000
      %v3004 = vmul.f32 %v2984, %v3000
      %v3005 = vmul.f32 %v2985, %v3000
      %v3006 = vadd.f32 %v3002, 0.0
      %v3007 = vadd.f32 %v3003, 0.0
      %v3008 = vadd.f32 %v3004, 0.0
      %v3009 = vadd.f32 %v3005, 0.0
      %v3010 = vld [vmem:[%s2931 + $0x8] sm:$0xff]
      %3012 = vset.pattern.permute.xlu0 0
      %3013 = vperm.xlu0 %3012, %v3010
      %v3014 = vpop.permute.xlu0 %3013
      %v3016 = vsub.f32 %v293, %v3014
      %v3017 = vsub.f32 %v297, %v3014
      %v3018 = vsub.f32 %v301, %v3014
      %v3019 = vsub.f32 %v305, %v3014
      %3020 = vset.pattern.permute.xlu0 1
      %3021 = vperm.xlu0 %3020, %v3010
      %v3022 = vpop.permute.xlu0 %3021
      %v3024 = vsub.f32 %v323, %v3022
      %v3025 = vsub.f32 %v327, %v3022
      %v3026 = vsub.f32 %v331, %v3022
      %v3027 = vsub.f32 %v335, %v3022
      %v3028 = vmul.f32 %v3016, %v3016
      %v3029 = vmul.f32 %v3017, %v3017
      %v3030 = vmul.f32 %v3018, %v3018
      %v3031 = vmul.f32 %v3019, %v3019
      %v3032 = vmul.f32 %v3024, %v3024
      %v3033 = vmul.f32 %v3025, %v3025
      %v3034 = vmul.f32 %v3026, %v3026
      %v3035 = vmul.f32 %v3027, %v3027
      %v3036 = vadd.f32 %v3028, %v3032
      %v3037 = vadd.f32 %v3029, %v3033
      %v3038 = vadd.f32 %v3030, %v3034
      %v3039 = vadd.f32 %v3031, %v3035
      %v3040 = vsub.f32 0.0, %v3036
      %v3041 = vsub.f32 0.0, %v3037
      %v3042 = vsub.f32 0.0, %v3038
      %v3043 = vsub.f32 0.0, %v3039
      %v3044 = vmul.f32 %v3040, 1.442695
      %v3045 = vpow.pop %v3044
      %v3046 = vmul.f32 %v3041, 1.442695
      %v3047 = vpow.pop %v3046
      %v3048 = vmul.f32 %v3042, 1.442695
      %v3049 = vpow.pop %v3048
      %v3050 = vmul.f32 %v3043, 1.442695
      %v3051 = vpow.pop %v3050
      %3052 = vset.pattern.permute.xlu0 2
      %3053 = vperm.xlu0 %3052, %v3010
      %v3054 = vpop.permute.xlu0 %3053
      %vm3056 = vcmp.le.f32.partialorder %v3036, %v3054
      %vm3057 = vcmp.le.f32.partialorder %v3037, %v3054
      %vm3058 = vcmp.le.f32.partialorder %v3038, %v3054
      %vm3059 = vcmp.le.f32.partialorder %v3039, %v3054
      %v3060 = vsel %vm3056, %v3045, 0.0
      %v3061 = vsel %vm3057, %v3047, 0.0
      %v3062 = vsel %vm3058, %v3049, 0.0
      %v3063 = vsel %vm3059, %v3051, 0.0
      %3064 = vset.pattern.permute.xlu0 4
      %3065 = vperm.xlu0 %3064, %v3010
      %v3066 = vpop.permute.xlu0 %3065
      %v3068 = vmul.f32 %v3060, %v3066
      %v3069 = vmul.f32 %v3061, %v3066
      %v3070 = vmul.f32 %v3062, %v3066
      %v3071 = vmul.f32 %v3063, %v3066
      %v3072 = vadd.f32 %v2994, %v3068
      %v3073 = vadd.f32 %v2995, %v3069
      %v3074 = vadd.f32 %v2996, %v3070
      %v3075 = vadd.f32 %v2997, %v3071
      %3076 = vset.pattern.permute.xlu0 3
      %3077 = vperm.xlu0 %3076, %v3010
      %v3078 = vpop.permute.xlu0 %3077
      %v3080 = vmul.f32 %v3060, %v3078
      %v3081 = vmul.f32 %v3061, %v3078
      %v3082 = vmul.f32 %v3062, %v3078
      %v3083 = vmul.f32 %v3063, %v3078
      %v3084 = vadd.f32 %v3006, %v3080
      %v3085 = vadd.f32 %v3007, %v3081
      %v3086 = vadd.f32 %v3008, %v3082
      %v3087 = vadd.f32 %v3009, %v3083
      %v3088 = vld [vmem:[%s2931 + $0x10] sm:$0xff]
      %3090 = vset.pattern.permute.xlu0 0
      %3091 = vperm.xlu0 %3090, %v3088
      %v3092 = vpop.permute.xlu0 %3091
      %v3094 = vsub.f32 %v293, %v3092
      %v3095 = vsub.f32 %v297, %v3092
      %v3096 = vsub.f32 %v301, %v3092
      %v3097 = vsub.f32 %v305, %v3092
      %3098 = vset.pattern.permute.xlu0 1
      %3099 = vperm.xlu0 %3098, %v3088
      %v3100 = vpop.permute.xlu0 %3099
      %v3102 = vsub.f32 %v323, %v3100
      %v3103 = vsub.f32 %v327, %v3100
      %v3104 = vsub.f32 %v331, %v3100
      %v3105 = vsub.f32 %v335, %v3100
      %v3106 = vmul.f32 %v3094, %v3094
      %v3107 = vmul.f32 %v3095, %v3095
      %v3108 = vmul.f32 %v3096, %v3096
      %v3109 = vmul.f32 %v3097, %v3097
      %v3110 = vmul.f32 %v3102, %v3102
      %v3111 = vmul.f32 %v3103, %v3103
      %v3112 = vmul.f32 %v3104, %v3104
      %v3113 = vmul.f32 %v3105, %v3105
      %v3114 = vadd.f32 %v3106, %v3110
      %v3115 = vadd.f32 %v3107, %v3111
      %v3116 = vadd.f32 %v3108, %v3112
      %v3117 = vadd.f32 %v3109, %v3113
      %v3118 = vsub.f32 0.0, %v3114
      %v3119 = vsub.f32 0.0, %v3115
      %v3120 = vsub.f32 0.0, %v3116
      %v3121 = vsub.f32 0.0, %v3117
      %v3122 = vmul.f32 %v3118, 1.442695
      %v3123 = vpow.pop %v3122
      %v3124 = vmul.f32 %v3119, 1.442695
      %v3125 = vpow.pop %v3124
      %v3126 = vmul.f32 %v3120, 1.442695
      %v3127 = vpow.pop %v3126
      %v3128 = vmul.f32 %v3121, 1.442695
      %v3129 = vpow.pop %v3128
      %3130 = vset.pattern.permute.xlu0 2
      %3131 = vperm.xlu0 %3130, %v3088
      %v3132 = vpop.permute.xlu0 %3131
      %vm3134 = vcmp.le.f32.partialorder %v3114, %v3132
      %vm3135 = vcmp.le.f32.partialorder %v3115, %v3132
      %vm3136 = vcmp.le.f32.partialorder %v3116, %v3132
      %vm3137 = vcmp.le.f32.partialorder %v3117, %v3132
      %v3138 = vsel %vm3134, %v3123, 0.0
      %v3139 = vsel %vm3135, %v3125, 0.0
      %v3140 = vsel %vm3136, %v3127, 0.0
      %v3141 = vsel %vm3137, %v3129, 0.0
      %3142 = vset.pattern.permute.xlu0 4
      %3143 = vperm.xlu0 %3142, %v3088
      %v3144 = vpop.permute.xlu0 %3143
      %v3146 = vmul.f32 %v3138, %v3144
      %v3147 = vmul.f32 %v3139, %v3144
      %v3148 = vmul.f32 %v3140, %v3144
      %v3149 = vmul.f32 %v3141, %v3144
      %v3150 = vadd.f32 %v3072, %v3146
      %v3151 = vadd.f32 %v3073, %v3147
      %v3152 = vadd.f32 %v3074, %v3148
      %v3153 = vadd.f32 %v3075, %v3149
      %3154 = vset.pattern.permute.xlu0 3
      %3155 = vperm.xlu0 %3154, %v3088
      %v3156 = vpop.permute.xlu0 %3155
      %v3158 = vmul.f32 %v3138, %v3156
      %v3159 = vmul.f32 %v3139, %v3156
      %v3160 = vmul.f32 %v3140, %v3156
      %v3161 = vmul.f32 %v3141, %v3156
      %v3162 = vadd.f32 %v3084, %v3158
      %v3163 = vadd.f32 %v3085, %v3159
      %v3164 = vadd.f32 %v3086, %v3160
      %v3165 = vadd.f32 %v3087, %v3161
      %v3166 = vld [vmem:[%s2931 + $0x18] sm:$0xff]
      %3168 = vset.pattern.permute.xlu0 0
      %3169 = vperm.xlu0 %3168, %v3166
      %v3170 = vpop.permute.xlu0 %3169
      %v3172 = vsub.f32 %v293, %v3170
      %v3173 = vsub.f32 %v297, %v3170
      %v3174 = vsub.f32 %v301, %v3170
      %v3175 = vsub.f32 %v305, %v3170
      %3176 = vset.pattern.permute.xlu0 1
      %3177 = vperm.xlu0 %3176, %v3166
      %v3178 = vpop.permute.xlu0 %3177
      %v3180 = vsub.f32 %v323, %v3178
      %v3181 = vsub.f32 %v327, %v3178
      %v3182 = vsub.f32 %v331, %v3178
      %v3183 = vsub.f32 %v335, %v3178
      %v3184 = vmul.f32 %v3172, %v3172
      %v3185 = vmul.f32 %v3173, %v3173
      %v3186 = vmul.f32 %v3174, %v3174
      %v3187 = vmul.f32 %v3175, %v3175
      %v3188 = vmul.f32 %v3180, %v3180
      %v3189 = vmul.f32 %v3181, %v3181
      %v3190 = vmul.f32 %v3182, %v3182
      %v3191 = vmul.f32 %v3183, %v3183
      %v3192 = vadd.f32 %v3184, %v3188
      %v3193 = vadd.f32 %v3185, %v3189
      %v3194 = vadd.f32 %v3186, %v3190
      %v3195 = vadd.f32 %v3187, %v3191
      %v3196 = vsub.f32 0.0, %v3192
      %v3197 = vsub.f32 0.0, %v3193
      %v3198 = vsub.f32 0.0, %v3194
      %v3199 = vsub.f32 0.0, %v3195
      %v3200 = vmul.f32 %v3196, 1.442695
      %v3201 = vpow.pop %v3200
      %v3202 = vmul.f32 %v3197, 1.442695
      %v3203 = vpow.pop %v3202
      %v3204 = vmul.f32 %v3198, 1.442695
      %v3205 = vpow.pop %v3204
      %v3206 = vmul.f32 %v3199, 1.442695
      %v3207 = vpow.pop %v3206
      %3208 = vset.pattern.permute.xlu0 2
      %3209 = vperm.xlu0 %3208, %v3166
      %v3210 = vpop.permute.xlu0 %3209
      %vm3212 = vcmp.le.f32.partialorder %v3192, %v3210
      %vm3213 = vcmp.le.f32.partialorder %v3193, %v3210
      %vm3214 = vcmp.le.f32.partialorder %v3194, %v3210
      %vm3215 = vcmp.le.f32.partialorder %v3195, %v3210
      %v3216 = vsel %vm3212, %v3201, 0.0
      %v3217 = vsel %vm3213, %v3203, 0.0
      %v3218 = vsel %vm3214, %v3205, 0.0
      %v3219 = vsel %vm3215, %v3207, 0.0
      %3220 = vset.pattern.permute.xlu0 4
      %3221 = vperm.xlu0 %3220, %v3166
      %v3222 = vpop.permute.xlu0 %3221
      %v3224 = vmul.f32 %v3216, %v3222
      %v3225 = vmul.f32 %v3217, %v3222
      %v3226 = vmul.f32 %v3218, %v3222
      %v3227 = vmul.f32 %v3219, %v3222
      %v3228 = vadd.f32 %v3150, %v3224
      %v3229 = vadd.f32 %v3151, %v3225
      %v3230 = vadd.f32 %v3152, %v3226
      %v3231 = vadd.f32 %v3153, %v3227
      %3232 = vset.pattern.permute.xlu0 3
      %3233 = vperm.xlu0 %3232, %v3166
      %v3234 = vpop.permute.xlu0 %3233
      %v3236 = vmul.f32 %v3216, %v3234
      %v3237 = vmul.f32 %v3217, %v3234
      %v3238 = vmul.f32 %v3218, %v3234
      %v3239 = vmul.f32 %v3219, %v3234
      %v3240 = vadd.f32 %v3162, %v3236
      %v3241 = vadd.f32 %v3163, %v3237
      %v3242 = vadd.f32 %v3164, %v3238
      %v3243 = vadd.f32 %v3165, %v3239
      %v3244 = vld [vmem:[%s2931 + $0x20] sm:$0xff]
      %3246 = vset.pattern.permute.xlu0 0
      %3247 = vperm.xlu0 %3246, %v3244
      %v3248 = vpop.permute.xlu0 %3247
      %v3250 = vsub.f32 %v293, %v3248
      %v3251 = vsub.f32 %v297, %v3248
      %v3252 = vsub.f32 %v301, %v3248
      %v3253 = vsub.f32 %v305, %v3248
      %3254 = vset.pattern.permute.xlu0 1
      %3255 = vperm.xlu0 %3254, %v3244
      %v3256 = vpop.permute.xlu0 %3255
      %v3258 = vsub.f32 %v323, %v3256
      %v3259 = vsub.f32 %v327, %v3256
      %v3260 = vsub.f32 %v331, %v3256
      %v3261 = vsub.f32 %v335, %v3256
      %v3262 = vmul.f32 %v3250, %v3250
      %v3263 = vmul.f32 %v3251, %v3251
      %v3264 = vmul.f32 %v3252, %v3252
      %v3265 = vmul.f32 %v3253, %v3253
      %v3266 = vmul.f32 %v3258, %v3258
      %v3267 = vmul.f32 %v3259, %v3259
      %v3268 = vmul.f32 %v3260, %v3260
      %v3269 = vmul.f32 %v3261, %v3261
      %v3270 = vadd.f32 %v3262, %v3266
      %v3271 = vadd.f32 %v3263, %v3267
      %v3272 = vadd.f32 %v3264, %v3268
      %v3273 = vadd.f32 %v3265, %v3269
      %v3274 = vsub.f32 0.0, %v3270
      %v3275 = vsub.f32 0.0, %v3271
      %v3276 = vsub.f32 0.0, %v3272
      %v3277 = vsub.f32 0.0, %v3273
      %v3278 = vmul.f32 %v3274, 1.442695
      %v3279 = vpow.pop %v3278
      %v3280 = vmul.f32 %v3275, 1.442695
      %v3281 = vpow.pop %v3280
      %v3282 = vmul.f32 %v3276, 1.442695
      %v3283 = vpow.pop %v3282
      %v3284 = vmul.f32 %v3277, 1.442695
      %v3285 = vpow.pop %v3284
      %3286 = vset.pattern.permute.xlu0 2
      %3287 = vperm.xlu0 %3286, %v3244
      %v3288 = vpop.permute.xlu0 %3287
      %vm3290 = vcmp.le.f32.partialorder %v3270, %v3288
      %vm3291 = vcmp.le.f32.partialorder %v3271, %v3288
      %vm3292 = vcmp.le.f32.partialorder %v3272, %v3288
      %vm3293 = vcmp.le.f32.partialorder %v3273, %v3288
      %v3294 = vsel %vm3290, %v3279, 0.0
      %v3295 = vsel %vm3291, %v3281, 0.0
      %v3296 = vsel %vm3292, %v3283, 0.0
      %v3297 = vsel %vm3293, %v3285, 0.0
      %3298 = vset.pattern.permute.xlu0 4
      %3299 = vperm.xlu0 %3298, %v3244
      %v3300 = vpop.permute.xlu0 %3299
      %v3302 = vmul.f32 %v3294, %v3300
      %v3303 = vmul.f32 %v3295, %v3300
      %v3304 = vmul.f32 %v3296, %v3300
      %v3305 = vmul.f32 %v3297, %v3300
      %v3306 = vadd.f32 %v3228, %v3302
      %v3307 = vadd.f32 %v3229, %v3303
      %v3308 = vadd.f32 %v3230, %v3304
      %v3309 = vadd.f32 %v3231, %v3305
      %3310 = vset.pattern.permute.xlu0 3
      %3311 = vperm.xlu0 %3310, %v3244
      %v3312 = vpop.permute.xlu0 %3311
      %v3314 = vmul.f32 %v3294, %v3312
      %v3315 = vmul.f32 %v3295, %v3312
      %v3316 = vmul.f32 %v3296, %v3312
      %v3317 = vmul.f32 %v3297, %v3312
      %v3318 = vadd.f32 %v3240, %v3314
      %v3319 = vadd.f32 %v3241, %v3315
      %v3320 = vadd.f32 %v3242, %v3316
      %v3321 = vadd.f32 %v3243, %v3317
      %v3322 = vld [vmem:[%s2931 + $0x28] sm:$0xff]
      %3324 = vset.pattern.permute.xlu0 0
      %3325 = vperm.xlu0 %3324, %v3322
      %v3326 = vpop.permute.xlu0 %3325
      %v3328 = vsub.f32 %v293, %v3326
      %v3329 = vsub.f32 %v297, %v3326
      %v3330 = vsub.f32 %v301, %v3326
      %v3331 = vsub.f32 %v305, %v3326
      %3332 = vset.pattern.permute.xlu0 1
      %3333 = vperm.xlu0 %3332, %v3322
      %v3334 = vpop.permute.xlu0 %3333
      %v3336 = vsub.f32 %v323, %v3334
      %v3337 = vsub.f32 %v327, %v3334
      %v3338 = vsub.f32 %v331, %v3334
      %v3339 = vsub.f32 %v335, %v3334
      %v3340 = vmul.f32 %v3328, %v3328
      %v3341 = vmul.f32 %v3329, %v3329
      %v3342 = vmul.f32 %v3330, %v3330
      %v3343 = vmul.f32 %v3331, %v3331
      %v3344 = vmul.f32 %v3336, %v3336
      %v3345 = vmul.f32 %v3337, %v3337
      %v3346 = vmul.f32 %v3338, %v3338
      %v3347 = vmul.f32 %v3339, %v3339
      %v3348 = vadd.f32 %v3340, %v3344
      %v3349 = vadd.f32 %v3341, %v3345
      %v3350 = vadd.f32 %v3342, %v3346
      %v3351 = vadd.f32 %v3343, %v3347
      %v3352 = vsub.f32 0.0, %v3348
      %v3353 = vsub.f32 0.0, %v3349
      %v3354 = vsub.f32 0.0, %v3350
      %v3355 = vsub.f32 0.0, %v3351
      %v3356 = vmul.f32 %v3352, 1.442695
      %v3357 = vpow.pop %v3356
      %v3358 = vmul.f32 %v3353, 1.442695
      %v3359 = vpow.pop %v3358
      %v3360 = vmul.f32 %v3354, 1.442695
      %v3361 = vpow.pop %v3360
      %v3362 = vmul.f32 %v3355, 1.442695
      %v3363 = vpow.pop %v3362
      %3364 = vset.pattern.permute.xlu0 2
      %3365 = vperm.xlu0 %3364, %v3322
      %v3366 = vpop.permute.xlu0 %3365
      %vm3368 = vcmp.le.f32.partialorder %v3348, %v3366
      %vm3369 = vcmp.le.f32.partialorder %v3349, %v3366
      %vm3370 = vcmp.le.f32.partialorder %v3350, %v3366
      %vm3371 = vcmp.le.f32.partialorder %v3351, %v3366
      %v3372 = vsel %vm3368, %v3357, 0.0
      %v3373 = vsel %vm3369, %v3359, 0.0
      %v3374 = vsel %vm3370, %v3361, 0.0
      %v3375 = vsel %vm3371, %v3363, 0.0
      %3376 = vset.pattern.permute.xlu0 4
      %3377 = vperm.xlu0 %3376, %v3322
      %v3378 = vpop.permute.xlu0 %3377
      %v3380 = vmul.f32 %v3372, %v3378
      %v3381 = vmul.f32 %v3373, %v3378
      %v3382 = vmul.f32 %v3374, %v3378
      %v3383 = vmul.f32 %v3375, %v3378
      %v3384 = vadd.f32 %v3306, %v3380
      %v3385 = vadd.f32 %v3307, %v3381
      %v3386 = vadd.f32 %v3308, %v3382
      %v3387 = vadd.f32 %v3309, %v3383
      %3388 = vset.pattern.permute.xlu0 3
      %3389 = vperm.xlu0 %3388, %v3322
      %v3390 = vpop.permute.xlu0 %3389
      %v3392 = vmul.f32 %v3372, %v3390
      %v3393 = vmul.f32 %v3373, %v3390
      %v3394 = vmul.f32 %v3374, %v3390
      %v3395 = vmul.f32 %v3375, %v3390
      %v3396 = vadd.f32 %v3318, %v3392
      %v3397 = vadd.f32 %v3319, %v3393
      %v3398 = vadd.f32 %v3320, %v3394
      %v3399 = vadd.f32 %v3321, %v3395
      %v3400 = vld [vmem:[%s2931 + $0x30] sm:$0xff]
      %3402 = vset.pattern.permute.xlu0 0
      %3403 = vperm.xlu0 %3402, %v3400
      %v3404 = vpop.permute.xlu0 %3403
      %v3406 = vsub.f32 %v293, %v3404
      %v3407 = vsub.f32 %v297, %v3404
      %v3408 = vsub.f32 %v301, %v3404
      %v3409 = vsub.f32 %v305, %v3404
      %3410 = vset.pattern.permute.xlu0 1
      %3411 = vperm.xlu0 %3410, %v3400
      %v3412 = vpop.permute.xlu0 %3411
      %v3414 = vsub.f32 %v323, %v3412
      %v3415 = vsub.f32 %v327, %v3412
      %v3416 = vsub.f32 %v331, %v3412
      %v3417 = vsub.f32 %v335, %v3412
      %v3418 = vmul.f32 %v3406, %v3406
      %v3419 = vmul.f32 %v3407, %v3407
      %v3420 = vmul.f32 %v3408, %v3408
      %v3421 = vmul.f32 %v3409, %v3409
      %v3422 = vmul.f32 %v3414, %v3414
      %v3423 = vmul.f32 %v3415, %v3415
      %v3424 = vmul.f32 %v3416, %v3416
      %v3425 = vmul.f32 %v3417, %v3417
      %v3426 = vadd.f32 %v3418, %v3422
      %v3427 = vadd.f32 %v3419, %v3423
      %v3428 = vadd.f32 %v3420, %v3424
      %v3429 = vadd.f32 %v3421, %v3425
      %v3430 = vsub.f32 0.0, %v3426
      %v3431 = vsub.f32 0.0, %v3427
      %v3432 = vsub.f32 0.0, %v3428
      %v3433 = vsub.f32 0.0, %v3429
      %v3434 = vmul.f32 %v3430, 1.442695
      %v3435 = vpow.pop %v3434
      %v3436 = vmul.f32 %v3431, 1.442695
      %v3437 = vpow.pop %v3436
      %v3438 = vmul.f32 %v3432, 1.442695
      %v3439 = vpow.pop %v3438
      %v3440 = vmul.f32 %v3433, 1.442695
      %v3441 = vpow.pop %v3440
      %3442 = vset.pattern.permute.xlu0 2
      %3443 = vperm.xlu0 %3442, %v3400
      %v3444 = vpop.permute.xlu0 %3443
      %vm3446 = vcmp.le.f32.partialorder %v3426, %v3444
      %vm3447 = vcmp.le.f32.partialorder %v3427, %v3444
      %vm3448 = vcmp.le.f32.partialorder %v3428, %v3444
      %vm3449 = vcmp.le.f32.partialorder %v3429, %v3444
      %v3450 = vsel %vm3446, %v3435, 0.0
      %v3451 = vsel %vm3447, %v3437, 0.0
      %v3452 = vsel %vm3448, %v3439, 0.0
      %v3453 = vsel %vm3449, %v3441, 0.0
      %3454 = vset.pattern.permute.xlu0 4
      %3455 = vperm.xlu0 %3454, %v3400
      %v3456 = vpop.permute.xlu0 %3455
      %v3458 = vmul.f32 %v3450, %v3456
      %v3459 = vmul.f32 %v3451, %v3456
      %v3460 = vmul.f32 %v3452, %v3456
      %v3461 = vmul.f32 %v3453, %v3456
      %v3462 = vadd.f32 %v3384, %v3458
      %v3463 = vadd.f32 %v3385, %v3459
      %v3464 = vadd.f32 %v3386, %v3460
      %v3465 = vadd.f32 %v3387, %v3461
      %3466 = vset.pattern.permute.xlu0 3
      %3467 = vperm.xlu0 %3466, %v3400
      %v3468 = vpop.permute.xlu0 %3467
      %v3470 = vmul.f32 %v3450, %v3468
      %v3471 = vmul.f32 %v3451, %v3468
      %v3472 = vmul.f32 %v3452, %v3468
      %v3473 = vmul.f32 %v3453, %v3468
      %v3474 = vadd.f32 %v3396, %v3470
      %v3475 = vadd.f32 %v3397, %v3471
      %v3476 = vadd.f32 %v3398, %v3472
      %v3477 = vadd.f32 %v3399, %v3473
      %v3478 = vld [vmem:[%s2931 + $0x38] sm:$0xff]
      %3480 = vset.pattern.permute.xlu0 0
      %3481 = vperm.xlu0 %3480, %v3478
      %v3482 = vpop.permute.xlu0 %3481
      %v3484 = vsub.f32 %v293, %v3482
      %v3485 = vsub.f32 %v297, %v3482
      %v3486 = vsub.f32 %v301, %v3482
      %v3487 = vsub.f32 %v305, %v3482
      %3488 = vset.pattern.permute.xlu0 1
      %3489 = vperm.xlu0 %3488, %v3478
      %v3490 = vpop.permute.xlu0 %3489
      %v3492 = vsub.f32 %v323, %v3490
      %v3493 = vsub.f32 %v327, %v3490
      %v3494 = vsub.f32 %v331, %v3490
      %v3495 = vsub.f32 %v335, %v3490
      %v3496 = vmul.f32 %v3484, %v3484
      %v3497 = vmul.f32 %v3485, %v3485
      %v3498 = vmul.f32 %v3486, %v3486
      %v3499 = vmul.f32 %v3487, %v3487
      %v3500 = vmul.f32 %v3492, %v3492
      %v3501 = vmul.f32 %v3493, %v3493
      %v3502 = vmul.f32 %v3494, %v3494
      %v3503 = vmul.f32 %v3495, %v3495
      %v3504 = vadd.f32 %v3496, %v3500
      %v3505 = vadd.f32 %v3497, %v3501
      %v3506 = vadd.f32 %v3498, %v3502
      %v3507 = vadd.f32 %v3499, %v3503
      %v3508 = vsub.f32 0.0, %v3504
      %v3509 = vsub.f32 0.0, %v3505
      %v3510 = vsub.f32 0.0, %v3506
      %v3511 = vsub.f32 0.0, %v3507
      %v3512 = vmul.f32 %v3508, 1.442695
      %v3513 = vpow.pop %v3512
      %v3514 = vmul.f32 %v3509, 1.442695
      %v3515 = vpow.pop %v3514
      %v3516 = vmul.f32 %v3510, 1.442695
      %v3517 = vpow.pop %v3516
      %v3518 = vmul.f32 %v3511, 1.442695
      %v3519 = vpow.pop %v3518
      %3520 = vset.pattern.permute.xlu0 2
      %3521 = vperm.xlu0 %3520, %v3478
      %v3522 = vpop.permute.xlu0 %3521
      %vm3524 = vcmp.le.f32.partialorder %v3504, %v3522
      %vm3525 = vcmp.le.f32.partialorder %v3505, %v3522
      %vm3526 = vcmp.le.f32.partialorder %v3506, %v3522
      %vm3527 = vcmp.le.f32.partialorder %v3507, %v3522
      %v3528 = vsel %vm3524, %v3513, 0.0
      %v3529 = vsel %vm3525, %v3515, 0.0
      %v3530 = vsel %vm3526, %v3517, 0.0
      %v3531 = vsel %vm3527, %v3519, 0.0
      %3532 = vset.pattern.permute.xlu0 4
      %3533 = vperm.xlu0 %3532, %v3478
      %v3534 = vpop.permute.xlu0 %3533
      %v3536 = vmul.f32 %v3528, %v3534
      %v3537 = vmul.f32 %v3529, %v3534
      %v3538 = vmul.f32 %v3530, %v3534
      %v3539 = vmul.f32 %v3531, %v3534
      %v3540 = vadd.f32 %v3462, %v3536
      %v3541 = vadd.f32 %v3463, %v3537
      %v3542 = vadd.f32 %v3464, %v3538
      %v3543 = vadd.f32 %v3465, %v3539
      %3544 = vset.pattern.permute.xlu0 3
      %3545 = vperm.xlu0 %3544, %v3478
      %v3546 = vpop.permute.xlu0 %3545
      %v3548 = vmul.f32 %v3528, %v3546
      %v3549 = vmul.f32 %v3529, %v3546
      %v3550 = vmul.f32 %v3530, %v3546
      %v3551 = vmul.f32 %v3531, %v3546
      %v3552 = vadd.f32 %v3474, %v3548
      %v3553 = vadd.f32 %v3475, %v3549
      %v3554 = vadd.f32 %v3476, %v3550
      %v3555 = vadd.f32 %v3477, %v3551
      %s3556 = scalar_lea.vmem [#allocation2], 128
      %v3557 = vld [vmem:[%s3556] sm:$0xff]
      %v3558 = vld [vmem:[%s3556 + $0x8] sm:$0xff]
      %v3559 = vld [vmem:[%s3556 + $0x10] sm:$0xff]
      %v3560 = vld [vmem:[%s3556 + $0x18] sm:$0xff]
      %v3561 = vadd.f32 %v3557, %v3540
      %v3562 = vadd.f32 %v3558, %v3541
      %v3563 = vadd.f32 %v3559, %v3542
      %v3564 = vadd.f32 %v3560, %v3543
      %3565 = vst [vmem:[%s3556] sm:$0xff] %v3561
      %3566 = vst [vmem:[%s3556 + $0x8] sm:$0xff] %v3562
      %3567 = vst [vmem:[%s3556 + $0x10] sm:$0xff] %v3563
      %3568 = vst [vmem:[%s3556 + $0x18] sm:$0xff] %v3564
      %s3569 = scalar_lea.vmem [#allocation3], 128
      %v3570 = vld [vmem:[%s3569] sm:$0xff]
      %v3571 = vld [vmem:[%s3569 + $0x8] sm:$0xff]
      %v3572 = vld [vmem:[%s3569 + $0x10] sm:$0xff]
      %v3573 = vld [vmem:[%s3569 + $0x18] sm:$0xff]
      %v3574 = vadd.f32 %v3570, %v3552
      %v3575 = vadd.f32 %v3571, %v3553
      %v3576 = vadd.f32 %v3572, %v3554
      %v3577 = vadd.f32 %v3573, %v3555
      %3578 = vst [vmem:[%s3569] sm:$0xff] %v3574
      %3579 = vst [vmem:[%s3569 + $0x8] sm:$0xff] %v3575
      %3580 = vst [vmem:[%s3569 + $0x10] sm:$0xff] %v3576
      %3581 = vst [vmem:[%s3569 + $0x18] sm:$0xff] %v3577
      %s3582 = scalar_lea.vmem %s198, 320
      %v3583 = vld [vmem:[%s3582] sm:$0xff]
      %3585 = vset.pattern.permute.xlu0 0
      %3586 = vperm.xlu0 %3585, %v3583
      %v3587 = vpop.permute.xlu0 %3586
      %v3589 = vsub.f32 %v293, %v3587
      %v3590 = vsub.f32 %v297, %v3587
      %v3591 = vsub.f32 %v301, %v3587
      %v3592 = vsub.f32 %v305, %v3587
      %3593 = vset.pattern.permute.xlu0 1
      %3594 = vperm.xlu0 %3593, %v3583
      %v3595 = vpop.permute.xlu0 %3594
      %v3597 = vsub.f32 %v323, %v3595
      %v3598 = vsub.f32 %v327, %v3595
      %v3599 = vsub.f32 %v331, %v3595
      %v3600 = vsub.f32 %v335, %v3595
      %v3601 = vmul.f32 %v3589, %v3589
      %v3602 = vmul.f32 %v3590, %v3590
      %v3603 = vmul.f32 %v3591, %v3591
      %v3604 = vmul.f32 %v3592, %v3592
      %v3605 = vmul.f32 %v3597, %v3597
      %v3606 = vmul.f32 %v3598, %v3598
      %v3607 = vmul.f32 %v3599, %v3599
      %v3608 = vmul.f32 %v3600, %v3600
      %v3609 = vadd.f32 %v3601, %v3605
      %v3610 = vadd.f32 %v3602, %v3606
      %v3611 = vadd.f32 %v3603, %v3607
      %v3612 = vadd.f32 %v3604, %v3608
      %v3613 = vsub.f32 0.0, %v3609
      %v3614 = vsub.f32 0.0, %v3610
      %v3615 = vsub.f32 0.0, %v3611
      %v3616 = vsub.f32 0.0, %v3612
      %v3617 = vmul.f32 %v3613, 1.442695
      %v3618 = vpow.pop %v3617
      %v3619 = vmul.f32 %v3614, 1.442695
      %v3620 = vpow.pop %v3619
      %v3621 = vmul.f32 %v3615, 1.442695
      %v3622 = vpow.pop %v3621
      %v3623 = vmul.f32 %v3616, 1.442695
      %v3624 = vpow.pop %v3623
      %3625 = vset.pattern.permute.xlu0 2
      %3626 = vperm.xlu0 %3625, %v3583
      %v3627 = vpop.permute.xlu0 %3626
      %vm3629 = vcmp.le.f32.partialorder %v3609, %v3627
      %vm3630 = vcmp.le.f32.partialorder %v3610, %v3627
      %vm3631 = vcmp.le.f32.partialorder %v3611, %v3627
      %vm3632 = vcmp.le.f32.partialorder %v3612, %v3627
      %v3633 = vsel %vm3629, %v3618, 0.0
      %v3634 = vsel %vm3630, %v3620, 0.0
      %v3635 = vsel %vm3631, %v3622, 0.0
      %v3636 = vsel %vm3632, %v3624, 0.0
      %3637 = vset.pattern.permute.xlu0 4
      %3638 = vperm.xlu0 %3637, %v3583
      %v3639 = vpop.permute.xlu0 %3638
      %v3641 = vmul.f32 %v3633, %v3639
      %v3642 = vmul.f32 %v3634, %v3639
      %v3643 = vmul.f32 %v3635, %v3639
      %v3644 = vmul.f32 %v3636, %v3639
      %v3645 = vadd.f32 %v3641, 0.0
      %v3646 = vadd.f32 %v3642, 0.0
      %v3647 = vadd.f32 %v3643, 0.0
      %v3648 = vadd.f32 %v3644, 0.0
      %3649 = vset.pattern.permute.xlu0 3
      %3650 = vperm.xlu0 %3649, %v3583
      %v3651 = vpop.permute.xlu0 %3650
      %v3653 = vmul.f32 %v3633, %v3651
      %v3654 = vmul.f32 %v3634, %v3651
      %v3655 = vmul.f32 %v3635, %v3651
      %v3656 = vmul.f32 %v3636, %v3651
      %v3657 = vadd.f32 %v3653, 0.0
      %v3658 = vadd.f32 %v3654, 0.0
      %v3659 = vadd.f32 %v3655, 0.0
      %v3660 = vadd.f32 %v3656, 0.0
      %v3661 = vld [vmem:[%s3582 + $0x8] sm:$0xff]
      %3663 = vset.pattern.permute.xlu0 0
      %3664 = vperm.xlu0 %3663, %v3661
      %v3665 = vpop.permute.xlu0 %3664
      %v3667 = vsub.f32 %v293, %v3665
      %v3668 = vsub.f32 %v297, %v3665
      %v3669 = vsub.f32 %v301, %v3665
      %v3670 = vsub.f32 %v305, %v3665
      %3671 = vset.pattern.permute.xlu0 1
      %3672 = vperm.xlu0 %3671, %v3661
      %v3673 = vpop.permute.xlu0 %3672
      %v3675 = vsub.f32 %v323, %v3673
      %v3676 = vsub.f32 %v327, %v3673
      %v3677 = vsub.f32 %v331, %v3673
      %v3678 = vsub.f32 %v335, %v3673
      %v3679 = vmul.f32 %v3667, %v3667
      %v3680 = vmul.f32 %v3668, %v3668
      %v3681 = vmul.f32 %v3669, %v3669
      %v3682 = vmul.f32 %v3670, %v3670
      %v3683 = vmul.f32 %v3675, %v3675
      %v3684 = vmul.f32 %v3676, %v3676
      %v3685 = vmul.f32 %v3677, %v3677
      %v3686 = vmul.f32 %v3678, %v3678
      %v3687 = vadd.f32 %v3679, %v3683
      %v3688 = vadd.f32 %v3680, %v3684
      %v3689 = vadd.f32 %v3681, %v3685
      %v3690 = vadd.f32 %v3682, %v3686
      %v3691 = vsub.f32 0.0, %v3687
      %v3692 = vsub.f32 0.0, %v3688
      %v3693 = vsub.f32 0.0, %v3689
      %v3694 = vsub.f32 0.0, %v3690
      %v3695 = vmul.f32 %v3691, 1.442695
      %v3696 = vpow.pop %v3695
      %v3697 = vmul.f32 %v3692, 1.442695
      %v3698 = vpow.pop %v3697
      %v3699 = vmul.f32 %v3693, 1.442695
      %v3700 = vpow.pop %v3699
      %v3701 = vmul.f32 %v3694, 1.442695
      %v3702 = vpow.pop %v3701
      %3703 = vset.pattern.permute.xlu0 2
      %3704 = vperm.xlu0 %3703, %v3661
      %v3705 = vpop.permute.xlu0 %3704
      %vm3707 = vcmp.le.f32.partialorder %v3687, %v3705
      %vm3708 = vcmp.le.f32.partialorder %v3688, %v3705
      %vm3709 = vcmp.le.f32.partialorder %v3689, %v3705
      %vm3710 = vcmp.le.f32.partialorder %v3690, %v3705
      %v3711 = vsel %vm3707, %v3696, 0.0
      %v3712 = vsel %vm3708, %v3698, 0.0
      %v3713 = vsel %vm3709, %v3700, 0.0
      %v3714 = vsel %vm3710, %v3702, 0.0
      %3715 = vset.pattern.permute.xlu0 4
      %3716 = vperm.xlu0 %3715, %v3661
      %v3717 = vpop.permute.xlu0 %3716
      %v3719 = vmul.f32 %v3711, %v3717
      %v3720 = vmul.f32 %v3712, %v3717
      %v3721 = vmul.f32 %v3713, %v3717
      %v3722 = vmul.f32 %v3714, %v3717
      %v3723 = vadd.f32 %v3645, %v3719
      %v3724 = vadd.f32 %v3646, %v3720
      %v3725 = vadd.f32 %v3647, %v3721
      %v3726 = vadd.f32 %v3648, %v3722
      %3727 = vset.pattern.permute.xlu0 3
      %3728 = vperm.xlu0 %3727, %v3661
      %v3729 = vpop.permute.xlu0 %3728
      %v3731 = vmul.f32 %v3711, %v3729
      %v3732 = vmul.f32 %v3712, %v3729
      %v3733 = vmul.f32 %v3713, %v3729
      %v3734 = vmul.f32 %v3714, %v3729
      %v3735 = vadd.f32 %v3657, %v3731
      %v3736 = vadd.f32 %v3658, %v3732
      %v3737 = vadd.f32 %v3659, %v3733
      %v3738 = vadd.f32 %v3660, %v3734
      %v3739 = vld [vmem:[%s3582 + $0x10] sm:$0xff]
      %3741 = vset.pattern.permute.xlu0 0
      %3742 = vperm.xlu0 %3741, %v3739
      %v3743 = vpop.permute.xlu0 %3742
      %v3745 = vsub.f32 %v293, %v3743
      %v3746 = vsub.f32 %v297, %v3743
      %v3747 = vsub.f32 %v301, %v3743
      %v3748 = vsub.f32 %v305, %v3743
      %3749 = vset.pattern.permute.xlu0 1
      %3750 = vperm.xlu0 %3749, %v3739
      %v3751 = vpop.permute.xlu0 %3750
      %v3753 = vsub.f32 %v323, %v3751
      %v3754 = vsub.f32 %v327, %v3751
      %v3755 = vsub.f32 %v331, %v3751
      %v3756 = vsub.f32 %v335, %v3751
      %v3757 = vmul.f32 %v3745, %v3745
      %v3758 = vmul.f32 %v3746, %v3746
      %v3759 = vmul.f32 %v3747, %v3747
      %v3760 = vmul.f32 %v3748, %v3748
      %v3761 = vmul.f32 %v3753, %v3753
      %v3762 = vmul.f32 %v3754, %v3754
      %v3763 = vmul.f32 %v3755, %v3755
      %v3764 = vmul.f32 %v3756, %v3756
      %v3765 = vadd.f32 %v3757, %v3761
      %v3766 = vadd.f32 %v3758, %v3762
      %v3767 = vadd.f32 %v3759, %v3763
      %v3768 = vadd.f32 %v3760, %v3764
      %v3769 = vsub.f32 0.0, %v3765
      %v3770 = vsub.f32 0.0, %v3766
      %v3771 = vsub.f32 0.0, %v3767
      %v3772 = vsub.f32 0.0, %v3768
      %v3773 = vmul.f32 %v3769, 1.442695
      %v3774 = vpow.pop %v3773
      %v3775 = vmul.f32 %v3770, 1.442695
      %v3776 = vpow.pop %v3775
      %v3777 = vmul.f32 %v3771, 1.442695
      %v3778 = vpow.pop %v3777
      %v3779 = vmul.f32 %v3772, 1.442695
      %v3780 = vpow.pop %v3779
      %3781 = vset.pattern.permute.xlu0 2
      %3782 = vperm.xlu0 %3781, %v3739
      %v3783 = vpop.permute.xlu0 %3782
      %vm3785 = vcmp.le.f32.partialorder %v3765, %v3783
      %vm3786 = vcmp.le.f32.partialorder %v3766, %v3783
      %vm3787 = vcmp.le.f32.partialorder %v3767, %v3783
      %vm3788 = vcmp.le.f32.partialorder %v3768, %v3783
      %v3789 = vsel %vm3785, %v3774, 0.0
      %v3790 = vsel %vm3786, %v3776, 0.0
      %v3791 = vsel %vm3787, %v3778, 0.0
      %v3792 = vsel %vm3788, %v3780, 0.0
      %3793 = vset.pattern.permute.xlu0 4
      %3794 = vperm.xlu0 %3793, %v3739
      %v3795 = vpop.permute.xlu0 %3794
      %v3797 = vmul.f32 %v3789, %v3795
      %v3798 = vmul.f32 %v3790, %v3795
      %v3799 = vmul.f32 %v3791, %v3795
      %v3800 = vmul.f32 %v3792, %v3795
      %v3801 = vadd.f32 %v3723, %v3797
      %v3802 = vadd.f32 %v3724, %v3798
      %v3803 = vadd.f32 %v3725, %v3799
      %v3804 = vadd.f32 %v3726, %v3800
      %3805 = vset.pattern.permute.xlu0 3
      %3806 = vperm.xlu0 %3805, %v3739
      %v3807 = vpop.permute.xlu0 %3806
      %v3809 = vmul.f32 %v3789, %v3807
      %v3810 = vmul.f32 %v3790, %v3807
      %v3811 = vmul.f32 %v3791, %v3807
      %v3812 = vmul.f32 %v3792, %v3807
      %v3813 = vadd.f32 %v3735, %v3809
      %v3814 = vadd.f32 %v3736, %v3810
      %v3815 = vadd.f32 %v3737, %v3811
      %v3816 = vadd.f32 %v3738, %v3812
      %v3817 = vld [vmem:[%s3582 + $0x18] sm:$0xff]
      %3819 = vset.pattern.permute.xlu0 0
      %3820 = vperm.xlu0 %3819, %v3817
      %v3821 = vpop.permute.xlu0 %3820
      %v3823 = vsub.f32 %v293, %v3821
      %v3824 = vsub.f32 %v297, %v3821
      %v3825 = vsub.f32 %v301, %v3821
      %v3826 = vsub.f32 %v305, %v3821
      %3827 = vset.pattern.permute.xlu0 1
      %3828 = vperm.xlu0 %3827, %v3817
      %v3829 = vpop.permute.xlu0 %3828
      %v3831 = vsub.f32 %v323, %v3829
      %v3832 = vsub.f32 %v327, %v3829
      %v3833 = vsub.f32 %v331, %v3829
      %v3834 = vsub.f32 %v335, %v3829
      %v3835 = vmul.f32 %v3823, %v3823
      %v3836 = vmul.f32 %v3824, %v3824
      %v3837 = vmul.f32 %v3825, %v3825
      %v3838 = vmul.f32 %v3826, %v3826
      %v3839 = vmul.f32 %v3831, %v3831
      %v3840 = vmul.f32 %v3832, %v3832
      %v3841 = vmul.f32 %v3833, %v3833
      %v3842 = vmul.f32 %v3834, %v3834
      %v3843 = vadd.f32 %v3835, %v3839
      %v3844 = vadd.f32 %v3836, %v3840
      %v3845 = vadd.f32 %v3837, %v3841
      %v3846 = vadd.f32 %v3838, %v3842
      %v3847 = vsub.f32 0.0, %v3843
      %v3848 = vsub.f32 0.0, %v3844
      %v3849 = vsub.f32 0.0, %v3845
      %v3850 = vsub.f32 0.0, %v3846
      %v3851 = vmul.f32 %v3847, 1.442695
      %v3852 = vpow.pop %v3851
      %v3853 = vmul.f32 %v3848, 1.442695
      %v3854 = vpow.pop %v3853
      %v3855 = vmul.f32 %v3849, 1.442695
      %v3856 = vpow.pop %v3855
      %v3857 = vmul.f32 %v3850, 1.442695
      %v3858 = vpow.pop %v3857
      %3859 = vset.pattern.permute.xlu0 2
      %3860 = vperm.xlu0 %3859, %v3817
      %v3861 = vpop.permute.xlu0 %3860
      %vm3863 = vcmp.le.f32.partialorder %v3843, %v3861
      %vm3864 = vcmp.le.f32.partialorder %v3844, %v3861
      %vm3865 = vcmp.le.f32.partialorder %v3845, %v3861
      %vm3866 = vcmp.le.f32.partialorder %v3846, %v3861
      %v3867 = vsel %vm3863, %v3852, 0.0
      %v3868 = vsel %vm3864, %v3854, 0.0
      %v3869 = vsel %vm3865, %v3856, 0.0
      %v3870 = vsel %vm3866, %v3858, 0.0
      %3871 = vset.pattern.permute.xlu0 4
      %3872 = vperm.xlu0 %3871, %v3817
      %v3873 = vpop.permute.xlu0 %3872
      %v3875 = vmul.f32 %v3867, %v3873
      %v3876 = vmul.f32 %v3868, %v3873
      %v3877 = vmul.f32 %v3869, %v3873
      %v3878 = vmul.f32 %v3870, %v3873
      %v3879 = vadd.f32 %v3801, %v3875
      %v3880 = vadd.f32 %v3802, %v3876
      %v3881 = vadd.f32 %v3803, %v3877
      %v3882 = vadd.f32 %v3804, %v3878
      %3883 = vset.pattern.permute.xlu0 3
      %3884 = vperm.xlu0 %3883, %v3817
      %v3885 = vpop.permute.xlu0 %3884
      %v3887 = vmul.f32 %v3867, %v3885
      %v3888 = vmul.f32 %v3868, %v3885
      %v3889 = vmul.f32 %v3869, %v3885
      %v3890 = vmul.f32 %v3870, %v3885
      %v3891 = vadd.f32 %v3813, %v3887
      %v3892 = vadd.f32 %v3814, %v3888
      %v3893 = vadd.f32 %v3815, %v3889
      %v3894 = vadd.f32 %v3816, %v3890
      %v3895 = vld [vmem:[%s3582 + $0x20] sm:$0xff]
      %3897 = vset.pattern.permute.xlu0 0
      %3898 = vperm.xlu0 %3897, %v3895
      %v3899 = vpop.permute.xlu0 %3898
      %v3901 = vsub.f32 %v293, %v3899
      %v3902 = vsub.f32 %v297, %v3899
      %v3903 = vsub.f32 %v301, %v3899
      %v3904 = vsub.f32 %v305, %v3899
      %3905 = vset.pattern.permute.xlu0 1
      %3906 = vperm.xlu0 %3905, %v3895
      %v3907 = vpop.permute.xlu0 %3906
      %v3909 = vsub.f32 %v323, %v3907
      %v3910 = vsub.f32 %v327, %v3907
      %v3911 = vsub.f32 %v331, %v3907
      %v3912 = vsub.f32 %v335, %v3907
      %v3913 = vmul.f32 %v3901, %v3901
      %v3914 = vmul.f32 %v3902, %v3902
      %v3915 = vmul.f32 %v3903, %v3903
      %v3916 = vmul.f32 %v3904, %v3904
      %v3917 = vmul.f32 %v3909, %v3909
      %v3918 = vmul.f32 %v3910, %v3910
      %v3919 = vmul.f32 %v3911, %v3911
      %v3920 = vmul.f32 %v3912, %v3912
      %v3921 = vadd.f32 %v3913, %v3917
      %v3922 = vadd.f32 %v3914, %v3918
      %v3923 = vadd.f32 %v3915, %v3919
      %v3924 = vadd.f32 %v3916, %v3920
      %v3925 = vsub.f32 0.0, %v3921
      %v3926 = vsub.f32 0.0, %v3922
      %v3927 = vsub.f32 0.0, %v3923
      %v3928 = vsub.f32 0.0, %v3924
      %v3929 = vmul.f32 %v3925, 1.442695
      %v3930 = vpow.pop %v3929
      %v3931 = vmul.f32 %v3926, 1.442695
      %v3932 = vpow.pop %v3931
      %v3933 = vmul.f32 %v3927, 1.442695
      %v3934 = vpow.pop %v3933
      %v3935 = vmul.f32 %v3928, 1.442695
      %v3936 = vpow.pop %v3935
      %3937 = vset.pattern.permute.xlu0 2
      %3938 = vperm.xlu0 %3937, %v3895
      %v3939 = vpop.permute.xlu0 %3938
      %vm3941 = vcmp.le.f32.partialorder %v3921, %v3939
      %vm3942 = vcmp.le.f32.partialorder %v3922, %v3939
      %vm3943 = vcmp.le.f32.partialorder %v3923, %v3939
      %vm3944 = vcmp.le.f32.partialorder %v3924, %v3939
      %v3945 = vsel %vm3941, %v3930, 0.0
      %v3946 = vsel %vm3942, %v3932, 0.0
      %v3947 = vsel %vm3943, %v3934, 0.0
      %v3948 = vsel %vm3944, %v3936, 0.0
      %3949 = vset.pattern.permute.xlu0 4
      %3950 = vperm.xlu0 %3949, %v3895
      %v3951 = vpop.permute.xlu0 %3950
      %v3953 = vmul.f32 %v3945, %v3951
      %v3954 = vmul.f32 %v3946, %v3951
      %v3955 = vmul.f32 %v3947, %v3951
      %v3956 = vmul.f32 %v3948, %v3951
      %v3957 = vadd.f32 %v3879, %v3953
      %v3958 = vadd.f32 %v3880, %v3954
      %v3959 = vadd.f32 %v3881, %v3955
      %v3960 = vadd.f32 %v3882, %v3956
      %3961 = vset.pattern.permute.xlu0 3
      %3962 = vperm.xlu0 %3961, %v3895
      %v3963 = vpop.permute.xlu0 %3962
      %v3965 = vmul.f32 %v3945, %v3963
      %v3966 = vmul.f32 %v3946, %v3963
      %v3967 = vmul.f32 %v3947, %v3963
      %v3968 = vmul.f32 %v3948, %v3963
      %v3969 = vadd.f32 %v3891, %v3965
      %v3970 = vadd.f32 %v3892, %v3966
      %v3971 = vadd.f32 %v3893, %v3967
      %v3972 = vadd.f32 %v3894, %v3968
      %v3973 = vld [vmem:[%s3582 + $0x28] sm:$0xff]
      %3975 = vset.pattern.permute.xlu0 0
      %3976 = vperm.xlu0 %3975, %v3973
      %v3977 = vpop.permute.xlu0 %3976
      %v3979 = vsub.f32 %v293, %v3977
      %v3980 = vsub.f32 %v297, %v3977
      %v3981 = vsub.f32 %v301, %v3977
      %v3982 = vsub.f32 %v305, %v3977
      %3983 = vset.pattern.permute.xlu0 1
      %3984 = vperm.xlu0 %3983, %v3973
      %v3985 = vpop.permute.xlu0 %3984
      %v3987 = vsub.f32 %v323, %v3985
      %v3988 = vsub.f32 %v327, %v3985
      %v3989 = vsub.f32 %v331, %v3985
      %v3990 = vsub.f32 %v335, %v3985
      %v3991 = vmul.f32 %v3979, %v3979
      %v3992 = vmul.f32 %v3980, %v3980
      %v3993 = vmul.f32 %v3981, %v3981
      %v3994 = vmul.f32 %v3982, %v3982
      %v3995 = vmul.f32 %v3987, %v3987
      %v3996 = vmul.f32 %v3988, %v3988
      %v3997 = vmul.f32 %v3989, %v3989
      %v3998 = vmul.f32 %v3990, %v3990
      %v3999 = vadd.f32 %v3991, %v3995
      %v4000 = vadd.f32 %v3992, %v3996
      %v4001 = vadd.f32 %v3993, %v3997
      %v4002 = vadd.f32 %v3994, %v3998
      %v4003 = vsub.f32 0.0, %v3999
      %v4004 = vsub.f32 0.0, %v4000
      %v4005 = vsub.f32 0.0, %v4001
      %v4006 = vsub.f32 0.0, %v4002
      %v4007 = vmul.f32 %v4003, 1.442695
      %v4008 = vpow.pop %v4007
      %v4009 = vmul.f32 %v4004, 1.442695
      %v4010 = vpow.pop %v4009
      %v4011 = vmul.f32 %v4005, 1.442695
      %v4012 = vpow.pop %v4011
      %v4013 = vmul.f32 %v4006, 1.442695
      %v4014 = vpow.pop %v4013
      %4015 = vset.pattern.permute.xlu0 2
      %4016 = vperm.xlu0 %4015, %v3973
      %v4017 = vpop.permute.xlu0 %4016
      %vm4019 = vcmp.le.f32.partialorder %v3999, %v4017
      %vm4020 = vcmp.le.f32.partialorder %v4000, %v4017
      %vm4021 = vcmp.le.f32.partialorder %v4001, %v4017
      %vm4022 = vcmp.le.f32.partialorder %v4002, %v4017
      %v4023 = vsel %vm4019, %v4008, 0.0
      %v4024 = vsel %vm4020, %v4010, 0.0
      %v4025 = vsel %vm4021, %v4012, 0.0
      %v4026 = vsel %vm4022, %v4014, 0.0
      %4027 = vset.pattern.permute.xlu0 4
      %4028 = vperm.xlu0 %4027, %v3973
      %v4029 = vpop.permute.xlu0 %4028
      %v4031 = vmul.f32 %v4023, %v4029
      %v4032 = vmul.f32 %v4024, %v4029
      %v4033 = vmul.f32 %v4025, %v4029
      %v4034 = vmul.f32 %v4026, %v4029
      %v4035 = vadd.f32 %v3957, %v4031
      %v4036 = vadd.f32 %v3958, %v4032
      %v4037 = vadd.f32 %v3959, %v4033
      %v4038 = vadd.f32 %v3960, %v4034
      %4039 = vset.pattern.permute.xlu0 3
      %4040 = vperm.xlu0 %4039, %v3973
      %v4041 = vpop.permute.xlu0 %4040
      %v4043 = vmul.f32 %v4023, %v4041
      %v4044 = vmul.f32 %v4024, %v4041
      %v4045 = vmul.f32 %v4025, %v4041
      %v4046 = vmul.f32 %v4026, %v4041
      %v4047 = vadd.f32 %v3969, %v4043
      %v4048 = vadd.f32 %v3970, %v4044
      %v4049 = vadd.f32 %v3971, %v4045
      %v4050 = vadd.f32 %v3972, %v4046
      %v4051 = vld [vmem:[%s3582 + $0x30] sm:$0xff]
      %4053 = vset.pattern.permute.xlu0 0
      %4054 = vperm.xlu0 %4053, %v4051
      %v4055 = vpop.permute.xlu0 %4054
      %v4057 = vsub.f32 %v293, %v4055
      %v4058 = vsub.f32 %v297, %v4055
      %v4059 = vsub.f32 %v301, %v4055
      %v4060 = vsub.f32 %v305, %v4055
      %4061 = vset.pattern.permute.xlu0 1
      %4062 = vperm.xlu0 %4061, %v4051
      %v4063 = vpop.permute.xlu0 %4062
      %v4065 = vsub.f32 %v323, %v4063
      %v4066 = vsub.f32 %v327, %v4063
      %v4067 = vsub.f32 %v331, %v4063
      %v4068 = vsub.f32 %v335, %v4063
      %v4069 = vmul.f32 %v4057, %v4057
      %v4070 = vmul.f32 %v4058, %v4058
      %v4071 = vmul.f32 %v4059, %v4059
      %v4072 = vmul.f32 %v4060, %v4060
      %v4073 = vmul.f32 %v4065, %v4065
      %v4074 = vmul.f32 %v4066, %v4066
      %v4075 = vmul.f32 %v4067, %v4067
      %v4076 = vmul.f32 %v4068, %v4068
      %v4077 = vadd.f32 %v4069, %v4073
      %v4078 = vadd.f32 %v4070, %v4074
      %v4079 = vadd.f32 %v4071, %v4075
      %v4080 = vadd.f32 %v4072, %v4076
      %v4081 = vsub.f32 0.0, %v4077
      %v4082 = vsub.f32 0.0, %v4078
      %v4083 = vsub.f32 0.0, %v4079
      %v4084 = vsub.f32 0.0, %v4080
      %v4085 = vmul.f32 %v4081, 1.442695
      %v4086 = vpow.pop %v4085
      %v4087 = vmul.f32 %v4082, 1.442695
      %v4088 = vpow.pop %v4087
      %v4089 = vmul.f32 %v4083, 1.442695
      %v4090 = vpow.pop %v4089
      %v4091 = vmul.f32 %v4084, 1.442695
      %v4092 = vpow.pop %v4091
      %4093 = vset.pattern.permute.xlu0 2
      %4094 = vperm.xlu0 %4093, %v4051
      %v4095 = vpop.permute.xlu0 %4094
      %vm4097 = vcmp.le.f32.partialorder %v4077, %v4095
      %vm4098 = vcmp.le.f32.partialorder %v4078, %v4095
      %vm4099 = vcmp.le.f32.partialorder %v4079, %v4095
      %vm4100 = vcmp.le.f32.partialorder %v4080, %v4095
      %v4101 = vsel %vm4097, %v4086, 0.0
      %v4102 = vsel %vm4098, %v4088, 0.0
      %v4103 = vsel %vm4099, %v4090, 0.0
      %v4104 = vsel %vm4100, %v4092, 0.0
      %4105 = vset.pattern.permute.xlu0 4
      %4106 = vperm.xlu0 %4105, %v4051
      %v4107 = vpop.permute.xlu0 %4106
      %v4109 = vmul.f32 %v4101, %v4107
      %v4110 = vmul.f32 %v4102, %v4107
      %v4111 = vmul.f32 %v4103, %v4107
      %v4112 = vmul.f32 %v4104, %v4107
      %v4113 = vadd.f32 %v4035, %v4109
      %v4114 = vadd.f32 %v4036, %v4110
      %v4115 = vadd.f32 %v4037, %v4111
      %v4116 = vadd.f32 %v4038, %v4112
      %4117 = vset.pattern.permute.xlu0 3
      %4118 = vperm.xlu0 %4117, %v4051
      %v4119 = vpop.permute.xlu0 %4118
      %v4121 = vmul.f32 %v4101, %v4119
      %v4122 = vmul.f32 %v4102, %v4119
      %v4123 = vmul.f32 %v4103, %v4119
      %v4124 = vmul.f32 %v4104, %v4119
      %v4125 = vadd.f32 %v4047, %v4121
      %v4126 = vadd.f32 %v4048, %v4122
      %v4127 = vadd.f32 %v4049, %v4123
      %v4128 = vadd.f32 %v4050, %v4124
      %v4129 = vld [vmem:[%s3582 + $0x38] sm:$0xff]
      %4131 = vset.pattern.permute.xlu0 0
      %4132 = vperm.xlu0 %4131, %v4129
      %v4133 = vpop.permute.xlu0 %4132
      %v4135 = vsub.f32 %v293, %v4133
      %v4136 = vsub.f32 %v297, %v4133
      %v4137 = vsub.f32 %v301, %v4133
      %v4138 = vsub.f32 %v305, %v4133
      %4139 = vset.pattern.permute.xlu0 1
      %4140 = vperm.xlu0 %4139, %v4129
      %v4141 = vpop.permute.xlu0 %4140
      %v4143 = vsub.f32 %v323, %v4141
      %v4144 = vsub.f32 %v327, %v4141
      %v4145 = vsub.f32 %v331, %v4141
      %v4146 = vsub.f32 %v335, %v4141
      %v4147 = vmul.f32 %v4135, %v4135
      %v4148 = vmul.f32 %v4136, %v4136
      %v4149 = vmul.f32 %v4137, %v4137
      %v4150 = vmul.f32 %v4138, %v4138
      %v4151 = vmul.f32 %v4143, %v4143
      %v4152 = vmul.f32 %v4144, %v4144
      %v4153 = vmul.f32 %v4145, %v4145
      %v4154 = vmul.f32 %v4146, %v4146
      %v4155 = vadd.f32 %v4147, %v4151
      %v4156 = vadd.f32 %v4148, %v4152
      %v4157 = vadd.f32 %v4149, %v4153
      %v4158 = vadd.f32 %v4150, %v4154
      %v4159 = vsub.f32 0.0, %v4155
      %v4160 = vsub.f32 0.0, %v4156
      %v4161 = vsub.f32 0.0, %v4157
      %v4162 = vsub.f32 0.0, %v4158
      %v4163 = vmul.f32 %v4159, 1.442695
      %v4164 = vpow.pop %v4163
      %v4165 = vmul.f32 %v4160, 1.442695
      %v4166 = vpow.pop %v4165
      %v4167 = vmul.f32 %v4161, 1.442695
      %v4168 = vpow.pop %v4167
      %v4169 = vmul.f32 %v4162, 1.442695
      %v4170 = vpow.pop %v4169
      %4171 = vset.pattern.permute.xlu0 2
      %4172 = vperm.xlu0 %4171, %v4129
      %v4173 = vpop.permute.xlu0 %4172
      %vm4175 = vcmp.le.f32.partialorder %v4155, %v4173
      %vm4176 = vcmp.le.f32.partialorder %v4156, %v4173
      %vm4177 = vcmp.le.f32.partialorder %v4157, %v4173
      %vm4178 = vcmp.le.f32.partialorder %v4158, %v4173
      %v4179 = vsel %vm4175, %v4164, 0.0
      %v4180 = vsel %vm4176, %v4166, 0.0
      %v4181 = vsel %vm4177, %v4168, 0.0
      %v4182 = vsel %vm4178, %v4170, 0.0
      %4183 = vset.pattern.permute.xlu0 4
      %4184 = vperm.xlu0 %4183, %v4129
      %v4185 = vpop.permute.xlu0 %4184
      %v4187 = vmul.f32 %v4179, %v4185
      %v4188 = vmul.f32 %v4180, %v4185
      %v4189 = vmul.f32 %v4181, %v4185
      %v4190 = vmul.f32 %v4182, %v4185
      %v4191 = vadd.f32 %v4113, %v4187
      %v4192 = vadd.f32 %v4114, %v4188
      %v4193 = vadd.f32 %v4115, %v4189
      %v4194 = vadd.f32 %v4116, %v4190
      %4195 = vset.pattern.permute.xlu0 3
      %4196 = vperm.xlu0 %4195, %v4129
      %v4197 = vpop.permute.xlu0 %4196
      %v4199 = vmul.f32 %v4179, %v4197
      %v4200 = vmul.f32 %v4180, %v4197
      %v4201 = vmul.f32 %v4181, %v4197
      %v4202 = vmul.f32 %v4182, %v4197
      %v4203 = vadd.f32 %v4125, %v4199
      %v4204 = vadd.f32 %v4126, %v4200
      %v4205 = vadd.f32 %v4127, %v4201
      %v4206 = vadd.f32 %v4128, %v4202
      %s4207 = scalar_lea.vmem [#allocation2], 160
      %v4208 = vld [vmem:[%s4207] sm:$0xff]
      %v4209 = vld [vmem:[%s4207 + $0x8] sm:$0xff]
      %v4210 = vld [vmem:[%s4207 + $0x10] sm:$0xff]
      %v4211 = vld [vmem:[%s4207 + $0x18] sm:$0xff]
      %v4212 = vadd.f32 %v4208, %v4191
      %v4213 = vadd.f32 %v4209, %v4192
      %v4214 = vadd.f32 %v4210, %v4193
      %v4215 = vadd.f32 %v4211, %v4194
      %4216 = vst [vmem:[%s4207] sm:$0xff] %v4212
      %4217 = vst [vmem:[%s4207 + $0x8] sm:$0xff] %v4213
      %4218 = vst [vmem:[%s4207 + $0x10] sm:$0xff] %v4214
      %4219 = vst [vmem:[%s4207 + $0x18] sm:$0xff] %v4215
      %s4220 = scalar_lea.vmem [#allocation3], 160
      %v4221 = vld [vmem:[%s4220] sm:$0xff]
      %v4222 = vld [vmem:[%s4220 + $0x8] sm:$0xff]
      %v4223 = vld [vmem:[%s4220 + $0x10] sm:$0xff]
      %v4224 = vld [vmem:[%s4220 + $0x18] sm:$0xff]
      %v4225 = vadd.f32 %v4221, %v4203
      %v4226 = vadd.f32 %v4222, %v4204
      %v4227 = vadd.f32 %v4223, %v4205
      %v4228 = vadd.f32 %v4224, %v4206
      %4229 = vst [vmem:[%s4220] sm:$0xff] %v4225
      %4230 = vst [vmem:[%s4220 + $0x8] sm:$0xff] %v4226
      %4231 = vst [vmem:[%s4220 + $0x10] sm:$0xff] %v4227
      %4232 = vst [vmem:[%s4220 + $0x18] sm:$0xff] %v4228
      %s4233 = scalar_lea.vmem %s198, 384
      %v4234 = vld [vmem:[%s4233] sm:$0xff]
      %4236 = vset.pattern.permute.xlu0 0
      %4237 = vperm.xlu0 %4236, %v4234
      %v4238 = vpop.permute.xlu0 %4237
      %v4240 = vsub.f32 %v293, %v4238
      %v4241 = vsub.f32 %v297, %v4238
      %v4242 = vsub.f32 %v301, %v4238
      %v4243 = vsub.f32 %v305, %v4238
      %4244 = vset.pattern.permute.xlu0 1
      %4245 = vperm.xlu0 %4244, %v4234
      %v4246 = vpop.permute.xlu0 %4245
      %v4248 = vsub.f32 %v323, %v4246
      %v4249 = vsub.f32 %v327, %v4246
      %v4250 = vsub.f32 %v331, %v4246
      %v4251 = vsub.f32 %v335, %v4246
      %v4252 = vmul.f32 %v4240, %v4240
      %v4253 = vmul.f32 %v4241, %v4241
      %v4254 = vmul.f32 %v4242, %v4242
      %v4255 = vmul.f32 %v4243, %v4243
      %v4256 = vmul.f32 %v4248, %v4248
      %v4257 = vmul.f32 %v4249, %v4249
      %v4258 = vmul.f32 %v4250, %v4250
      %v4259 = vmul.f32 %v4251, %v4251
      %v4260 = vadd.f32 %v4252, %v4256
      %v4261 = vadd.f32 %v4253, %v4257
      %v4262 = vadd.f32 %v4254, %v4258
      %v4263 = vadd.f32 %v4255, %v4259
      %v4264 = vsub.f32 0.0, %v4260
      %v4265 = vsub.f32 0.0, %v4261
      %v4266 = vsub.f32 0.0, %v4262
      %v4267 = vsub.f32 0.0, %v4263
      %v4268 = vmul.f32 %v4264, 1.442695
      %v4269 = vpow.pop %v4268
      %v4270 = vmul.f32 %v4265, 1.442695
      %v4271 = vpow.pop %v4270
      %v4272 = vmul.f32 %v4266, 1.442695
      %v4273 = vpow.pop %v4272
      %v4274 = vmul.f32 %v4267, 1.442695
      %v4275 = vpow.pop %v4274
      %4276 = vset.pattern.permute.xlu0 2
      %4277 = vperm.xlu0 %4276, %v4234
      %v4278 = vpop.permute.xlu0 %4277
      %vm4280 = vcmp.le.f32.partialorder %v4260, %v4278
      %vm4281 = vcmp.le.f32.partialorder %v4261, %v4278
      %vm4282 = vcmp.le.f32.partialorder %v4262, %v4278
      %vm4283 = vcmp.le.f32.partialorder %v4263, %v4278
      %v4284 = vsel %vm4280, %v4269, 0.0
      %v4285 = vsel %vm4281, %v4271, 0.0
      %v4286 = vsel %vm4282, %v4273, 0.0
      %v4287 = vsel %vm4283, %v4275, 0.0
      %4288 = vset.pattern.permute.xlu0 4
      %4289 = vperm.xlu0 %4288, %v4234
      %v4290 = vpop.permute.xlu0 %4289
      %v4292 = vmul.f32 %v4284, %v4290
      %v4293 = vmul.f32 %v4285, %v4290
      %v4294 = vmul.f32 %v4286, %v4290
      %v4295 = vmul.f32 %v4287, %v4290
      %v4296 = vadd.f32 %v4292, 0.0
      %v4297 = vadd.f32 %v4293, 0.0
      %v4298 = vadd.f32 %v4294, 0.0
      %v4299 = vadd.f32 %v4295, 0.0
      %4300 = vset.pattern.permute.xlu0 3
      %4301 = vperm.xlu0 %4300, %v4234
      %v4302 = vpop.permute.xlu0 %4301
      %v4304 = vmul.f32 %v4284, %v4302
      %v4305 = vmul.f32 %v4285, %v4302
      %v4306 = vmul.f32 %v4286, %v4302
      %v4307 = vmul.f32 %v4287, %v4302
      %v4308 = vadd.f32 %v4304, 0.0
      %v4309 = vadd.f32 %v4305, 0.0
      %v4310 = vadd.f32 %v4306, 0.0
      %v4311 = vadd.f32 %v4307, 0.0
      %v4312 = vld [vmem:[%s4233 + $0x8] sm:$0xff]
      %4314 = vset.pattern.permute.xlu0 0
      %4315 = vperm.xlu0 %4314, %v4312
      %v4316 = vpop.permute.xlu0 %4315
      %v4318 = vsub.f32 %v293, %v4316
      %v4319 = vsub.f32 %v297, %v4316
      %v4320 = vsub.f32 %v301, %v4316
      %v4321 = vsub.f32 %v305, %v4316
      %4322 = vset.pattern.permute.xlu0 1
      %4323 = vperm.xlu0 %4322, %v4312
      %v4324 = vpop.permute.xlu0 %4323
      %v4326 = vsub.f32 %v323, %v4324
      %v4327 = vsub.f32 %v327, %v4324
      %v4328 = vsub.f32 %v331, %v4324
      %v4329 = vsub.f32 %v335, %v4324
      %v4330 = vmul.f32 %v4318, %v4318
      %v4331 = vmul.f32 %v4319, %v4319
      %v4332 = vmul.f32 %v4320, %v4320
      %v4333 = vmul.f32 %v4321, %v4321
      %v4334 = vmul.f32 %v4326, %v4326
      %v4335 = vmul.f32 %v4327, %v4327
      %v4336 = vmul.f32 %v4328, %v4328
      %v4337 = vmul.f32 %v4329, %v4329
      %v4338 = vadd.f32 %v4330, %v4334
      %v4339 = vadd.f32 %v4331, %v4335
      %v4340 = vadd.f32 %v4332, %v4336
      %v4341 = vadd.f32 %v4333, %v4337
      %v4342 = vsub.f32 0.0, %v4338
      %v4343 = vsub.f32 0.0, %v4339
      %v4344 = vsub.f32 0.0, %v4340
      %v4345 = vsub.f32 0.0, %v4341
      %v4346 = vmul.f32 %v4342, 1.442695
      %v4347 = vpow.pop %v4346
      %v4348 = vmul.f32 %v4343, 1.442695
      %v4349 = vpow.pop %v4348
      %v4350 = vmul.f32 %v4344, 1.442695
      %v4351 = vpow.pop %v4350
      %v4352 = vmul.f32 %v4345, 1.442695
      %v4353 = vpow.pop %v4352
      %4354 = vset.pattern.permute.xlu0 2
      %4355 = vperm.xlu0 %4354, %v4312
      %v4356 = vpop.permute.xlu0 %4355
      %vm4358 = vcmp.le.f32.partialorder %v4338, %v4356
      %vm4359 = vcmp.le.f32.partialorder %v4339, %v4356
      %vm4360 = vcmp.le.f32.partialorder %v4340, %v4356
      %vm4361 = vcmp.le.f32.partialorder %v4341, %v4356
      %v4362 = vsel %vm4358, %v4347, 0.0
      %v4363 = vsel %vm4359, %v4349, 0.0
      %v4364 = vsel %vm4360, %v4351, 0.0
      %v4365 = vsel %vm4361, %v4353, 0.0
      %4366 = vset.pattern.permute.xlu0 4
      %4367 = vperm.xlu0 %4366, %v4312
      %v4368 = vpop.permute.xlu0 %4367
      %v4370 = vmul.f32 %v4362, %v4368
      %v4371 = vmul.f32 %v4363, %v4368
      %v4372 = vmul.f32 %v4364, %v4368
      %v4373 = vmul.f32 %v4365, %v4368
      %v4374 = vadd.f32 %v4296, %v4370
      %v4375 = vadd.f32 %v4297, %v4371
      %v4376 = vadd.f32 %v4298, %v4372
      %v4377 = vadd.f32 %v4299, %v4373
      %4378 = vset.pattern.permute.xlu0 3
      %4379 = vperm.xlu0 %4378, %v4312
      %v4380 = vpop.permute.xlu0 %4379
      %v4382 = vmul.f32 %v4362, %v4380
      %v4383 = vmul.f32 %v4363, %v4380
      %v4384 = vmul.f32 %v4364, %v4380
      %v4385 = vmul.f32 %v4365, %v4380
      %v4386 = vadd.f32 %v4308, %v4382
      %v4387 = vadd.f32 %v4309, %v4383
      %v4388 = vadd.f32 %v4310, %v4384
      %v4389 = vadd.f32 %v4311, %v4385
      %v4390 = vld [vmem:[%s4233 + $0x10] sm:$0xff]
      %4392 = vset.pattern.permute.xlu0 0
      %4393 = vperm.xlu0 %4392, %v4390
      %v4394 = vpop.permute.xlu0 %4393
      %v4396 = vsub.f32 %v293, %v4394
      %v4397 = vsub.f32 %v297, %v4394
      %v4398 = vsub.f32 %v301, %v4394
      %v4399 = vsub.f32 %v305, %v4394
      %4400 = vset.pattern.permute.xlu0 1
      %4401 = vperm.xlu0 %4400, %v4390
      %v4402 = vpop.permute.xlu0 %4401
      %v4404 = vsub.f32 %v323, %v4402
      %v4405 = vsub.f32 %v327, %v4402
      %v4406 = vsub.f32 %v331, %v4402
      %v4407 = vsub.f32 %v335, %v4402
      %v4408 = vmul.f32 %v4396, %v4396
      %v4409 = vmul.f32 %v4397, %v4397
      %v4410 = vmul.f32 %v4398, %v4398
      %v4411 = vmul.f32 %v4399, %v4399
      %v4412 = vmul.f32 %v4404, %v4404
      %v4413 = vmul.f32 %v4405, %v4405
      %v4414 = vmul.f32 %v4406, %v4406
      %v4415 = vmul.f32 %v4407, %v4407
      %v4416 = vadd.f32 %v4408, %v4412
      %v4417 = vadd.f32 %v4409, %v4413
      %v4418 = vadd.f32 %v4410, %v4414
      %v4419 = vadd.f32 %v4411, %v4415
      %v4420 = vsub.f32 0.0, %v4416
      %v4421 = vsub.f32 0.0, %v4417
      %v4422 = vsub.f32 0.0, %v4418
      %v4423 = vsub.f32 0.0, %v4419
      %v4424 = vmul.f32 %v4420, 1.442695
      %v4425 = vpow.pop %v4424
      %v4426 = vmul.f32 %v4421, 1.442695
      %v4427 = vpow.pop %v4426
      %v4428 = vmul.f32 %v4422, 1.442695
      %v4429 = vpow.pop %v4428
      %v4430 = vmul.f32 %v4423, 1.442695
      %v4431 = vpow.pop %v4430
      %4432 = vset.pattern.permute.xlu0 2
      %4433 = vperm.xlu0 %4432, %v4390
      %v4434 = vpop.permute.xlu0 %4433
      %vm4436 = vcmp.le.f32.partialorder %v4416, %v4434
      %vm4437 = vcmp.le.f32.partialorder %v4417, %v4434
      %vm4438 = vcmp.le.f32.partialorder %v4418, %v4434
      %vm4439 = vcmp.le.f32.partialorder %v4419, %v4434
      %v4440 = vsel %vm4436, %v4425, 0.0
      %v4441 = vsel %vm4437, %v4427, 0.0
      %v4442 = vsel %vm4438, %v4429, 0.0
      %v4443 = vsel %vm4439, %v4431, 0.0
      %4444 = vset.pattern.permute.xlu0 4
      %4445 = vperm.xlu0 %4444, %v4390
      %v4446 = vpop.permute.xlu0 %4445
      %v4448 = vmul.f32 %v4440, %v4446
      %v4449 = vmul.f32 %v4441, %v4446
      %v4450 = vmul.f32 %v4442, %v4446
      %v4451 = vmul.f32 %v4443, %v4446
      %v4452 = vadd.f32 %v4374, %v4448
      %v4453 = vadd.f32 %v4375, %v4449
      %v4454 = vadd.f32 %v4376, %v4450
      %v4455 = vadd.f32 %v4377, %v4451
      %4456 = vset.pattern.permute.xlu0 3
      %4457 = vperm.xlu0 %4456, %v4390
      %v4458 = vpop.permute.xlu0 %4457
      %v4460 = vmul.f32 %v4440, %v4458
      %v4461 = vmul.f32 %v4441, %v4458
      %v4462 = vmul.f32 %v4442, %v4458
      %v4463 = vmul.f32 %v4443, %v4458
      %v4464 = vadd.f32 %v4386, %v4460
      %v4465 = vadd.f32 %v4387, %v4461
      %v4466 = vadd.f32 %v4388, %v4462
      %v4467 = vadd.f32 %v4389, %v4463
      %v4468 = vld [vmem:[%s4233 + $0x18] sm:$0xff]
      %4470 = vset.pattern.permute.xlu0 0
      %4471 = vperm.xlu0 %4470, %v4468
      %v4472 = vpop.permute.xlu0 %4471
      %v4474 = vsub.f32 %v293, %v4472
      %v4475 = vsub.f32 %v297, %v4472
      %v4476 = vsub.f32 %v301, %v4472
      %v4477 = vsub.f32 %v305, %v4472
      %4478 = vset.pattern.permute.xlu0 1
      %4479 = vperm.xlu0 %4478, %v4468
      %v4480 = vpop.permute.xlu0 %4479
      %v4482 = vsub.f32 %v323, %v4480
      %v4483 = vsub.f32 %v327, %v4480
      %v4484 = vsub.f32 %v331, %v4480
      %v4485 = vsub.f32 %v335, %v4480
      %v4486 = vmul.f32 %v4474, %v4474
      %v4487 = vmul.f32 %v4475, %v4475
      %v4488 = vmul.f32 %v4476, %v4476
      %v4489 = vmul.f32 %v4477, %v4477
      %v4490 = vmul.f32 %v4482, %v4482
      %v4491 = vmul.f32 %v4483, %v4483
      %v4492 = vmul.f32 %v4484, %v4484
      %v4493 = vmul.f32 %v4485, %v4485
      %v4494 = vadd.f32 %v4486, %v4490
      %v4495 = vadd.f32 %v4487, %v4491
      %v4496 = vadd.f32 %v4488, %v4492
      %v4497 = vadd.f32 %v4489, %v4493
      %v4498 = vsub.f32 0.0, %v4494
      %v4499 = vsub.f32 0.0, %v4495
      %v4500 = vsub.f32 0.0, %v4496
      %v4501 = vsub.f32 0.0, %v4497
      %v4502 = vmul.f32 %v4498, 1.442695
      %v4503 = vpow.pop %v4502
      %v4504 = vmul.f32 %v4499, 1.442695
      %v4505 = vpow.pop %v4504
      %v4506 = vmul.f32 %v4500, 1.442695
      %v4507 = vpow.pop %v4506
      %v4508 = vmul.f32 %v4501, 1.442695
      %v4509 = vpow.pop %v4508
      %4510 = vset.pattern.permute.xlu0 2
      %4511 = vperm.xlu0 %4510, %v4468
      %v4512 = vpop.permute.xlu0 %4511
      %vm4514 = vcmp.le.f32.partialorder %v4494, %v4512
      %vm4515 = vcmp.le.f32.partialorder %v4495, %v4512
      %vm4516 = vcmp.le.f32.partialorder %v4496, %v4512
      %vm4517 = vcmp.le.f32.partialorder %v4497, %v4512
      %v4518 = vsel %vm4514, %v4503, 0.0
      %v4519 = vsel %vm4515, %v4505, 0.0
      %v4520 = vsel %vm4516, %v4507, 0.0
      %v4521 = vsel %vm4517, %v4509, 0.0
      %4522 = vset.pattern.permute.xlu0 4
      %4523 = vperm.xlu0 %4522, %v4468
      %v4524 = vpop.permute.xlu0 %4523
      %v4526 = vmul.f32 %v4518, %v4524
      %v4527 = vmul.f32 %v4519, %v4524
      %v4528 = vmul.f32 %v4520, %v4524
      %v4529 = vmul.f32 %v4521, %v4524
      %v4530 = vadd.f32 %v4452, %v4526
      %v4531 = vadd.f32 %v4453, %v4527
      %v4532 = vadd.f32 %v4454, %v4528
      %v4533 = vadd.f32 %v4455, %v4529
      %4534 = vset.pattern.permute.xlu0 3
      %4535 = vperm.xlu0 %4534, %v4468
      %v4536 = vpop.permute.xlu0 %4535
      %v4538 = vmul.f32 %v4518, %v4536
      %v4539 = vmul.f32 %v4519, %v4536
      %v4540 = vmul.f32 %v4520, %v4536
      %v4541 = vmul.f32 %v4521, %v4536
      %v4542 = vadd.f32 %v4464, %v4538
      %v4543 = vadd.f32 %v4465, %v4539
      %v4544 = vadd.f32 %v4466, %v4540
      %v4545 = vadd.f32 %v4467, %v4541
      %v4546 = vld [vmem:[%s4233 + $0x20] sm:$0xff]
      %4548 = vset.pattern.permute.xlu0 0
      %4549 = vperm.xlu0 %4548, %v4546
      %v4550 = vpop.permute.xlu0 %4549
      %v4552 = vsub.f32 %v293, %v4550
      %v4553 = vsub.f32 %v297, %v4550
      %v4554 = vsub.f32 %v301, %v4550
      %v4555 = vsub.f32 %v305, %v4550
      %4556 = vset.pattern.permute.xlu0 1
      %4557 = vperm.xlu0 %4556, %v4546
      %v4558 = vpop.permute.xlu0 %4557
      %v4560 = vsub.f32 %v323, %v4558
      %v4561 = vsub.f32 %v327, %v4558
      %v4562 = vsub.f32 %v331, %v4558
      %v4563 = vsub.f32 %v335, %v4558
      %v4564 = vmul.f32 %v4552, %v4552
      %v4565 = vmul.f32 %v4553, %v4553
      %v4566 = vmul.f32 %v4554, %v4554
      %v4567 = vmul.f32 %v4555, %v4555
      %v4568 = vmul.f32 %v4560, %v4560
      %v4569 = vmul.f32 %v4561, %v4561
      %v4570 = vmul.f32 %v4562, %v4562
      %v4571 = vmul.f32 %v4563, %v4563
      %v4572 = vadd.f32 %v4564, %v4568
      %v4573 = vadd.f32 %v4565, %v4569
      %v4574 = vadd.f32 %v4566, %v4570
      %v4575 = vadd.f32 %v4567, %v4571
      %v4576 = vsub.f32 0.0, %v4572
      %v4577 = vsub.f32 0.0, %v4573
      %v4578 = vsub.f32 0.0, %v4574
      %v4579 = vsub.f32 0.0, %v4575
      %v4580 = vmul.f32 %v4576, 1.442695
      %v4581 = vpow.pop %v4580
      %v4582 = vmul.f32 %v4577, 1.442695
      %v4583 = vpow.pop %v4582
      %v4584 = vmul.f32 %v4578, 1.442695
      %v4585 = vpow.pop %v4584
      %v4586 = vmul.f32 %v4579, 1.442695
      %v4587 = vpow.pop %v4586
      %4588 = vset.pattern.permute.xlu0 2
      %4589 = vperm.xlu0 %4588, %v4546
      %v4590 = vpop.permute.xlu0 %4589
      %vm4592 = vcmp.le.f32.partialorder %v4572, %v4590
      %vm4593 = vcmp.le.f32.partialorder %v4573, %v4590
      %vm4594 = vcmp.le.f32.partialorder %v4574, %v4590
      %vm4595 = vcmp.le.f32.partialorder %v4575, %v4590
      %v4596 = vsel %vm4592, %v4581, 0.0
      %v4597 = vsel %vm4593, %v4583, 0.0
      %v4598 = vsel %vm4594, %v4585, 0.0
      %v4599 = vsel %vm4595, %v4587, 0.0
      %4600 = vset.pattern.permute.xlu0 4
      %4601 = vperm.xlu0 %4600, %v4546
      %v4602 = vpop.permute.xlu0 %4601
      %v4604 = vmul.f32 %v4596, %v4602
      %v4605 = vmul.f32 %v4597, %v4602
      %v4606 = vmul.f32 %v4598, %v4602
      %v4607 = vmul.f32 %v4599, %v4602
      %v4608 = vadd.f32 %v4530, %v4604
      %v4609 = vadd.f32 %v4531, %v4605
      %v4610 = vadd.f32 %v4532, %v4606
      %v4611 = vadd.f32 %v4533, %v4607
      %4612 = vset.pattern.permute.xlu0 3
      %4613 = vperm.xlu0 %4612, %v4546
      %v4614 = vpop.permute.xlu0 %4613
      %v4616 = vmul.f32 %v4596, %v4614
      %v4617 = vmul.f32 %v4597, %v4614
      %v4618 = vmul.f32 %v4598, %v4614
      %v4619 = vmul.f32 %v4599, %v4614
      %v4620 = vadd.f32 %v4542, %v4616
      %v4621 = vadd.f32 %v4543, %v4617
      %v4622 = vadd.f32 %v4544, %v4618
      %v4623 = vadd.f32 %v4545, %v4619
      %v4624 = vld [vmem:[%s4233 + $0x28] sm:$0xff]
      %4626 = vset.pattern.permute.xlu0 0
      %4627 = vperm.xlu0 %4626, %v4624
      %v4628 = vpop.permute.xlu0 %4627
      %v4630 = vsub.f32 %v293, %v4628
      %v4631 = vsub.f32 %v297, %v4628
      %v4632 = vsub.f32 %v301, %v4628
      %v4633 = vsub.f32 %v305, %v4628
      %4634 = vset.pattern.permute.xlu0 1
      %4635 = vperm.xlu0 %4634, %v4624
      %v4636 = vpop.permute.xlu0 %4635
      %v4638 = vsub.f32 %v323, %v4636
      %v4639 = vsub.f32 %v327, %v4636
      %v4640 = vsub.f32 %v331, %v4636
      %v4641 = vsub.f32 %v335, %v4636
      %v4642 = vmul.f32 %v4630, %v4630
      %v4643 = vmul.f32 %v4631, %v4631
      %v4644 = vmul.f32 %v4632, %v4632
      %v4645 = vmul.f32 %v4633, %v4633
      %v4646 = vmul.f32 %v4638, %v4638
      %v4647 = vmul.f32 %v4639, %v4639
      %v4648 = vmul.f32 %v4640, %v4640
      %v4649 = vmul.f32 %v4641, %v4641
      %v4650 = vadd.f32 %v4642, %v4646
      %v4651 = vadd.f32 %v4643, %v4647
      %v4652 = vadd.f32 %v4644, %v4648
      %v4653 = vadd.f32 %v4645, %v4649
      %v4654 = vsub.f32 0.0, %v4650
      %v4655 = vsub.f32 0.0, %v4651
      %v4656 = vsub.f32 0.0, %v4652
      %v4657 = vsub.f32 0.0, %v4653
      %v4658 = vmul.f32 %v4654, 1.442695
      %v4659 = vpow.pop %v4658
      %v4660 = vmul.f32 %v4655, 1.442695
      %v4661 = vpow.pop %v4660
      %v4662 = vmul.f32 %v4656, 1.442695
      %v4663 = vpow.pop %v4662
      %v4664 = vmul.f32 %v4657, 1.442695
      %v4665 = vpow.pop %v4664
      %4666 = vset.pattern.permute.xlu0 2
      %4667 = vperm.xlu0 %4666, %v4624
      %v4668 = vpop.permute.xlu0 %4667
      %vm4670 = vcmp.le.f32.partialorder %v4650, %v4668
      %vm4671 = vcmp.le.f32.partialorder %v4651, %v4668
      %vm4672 = vcmp.le.f32.partialorder %v4652, %v4668
      %vm4673 = vcmp.le.f32.partialorder %v4653, %v4668
      %v4674 = vsel %vm4670, %v4659, 0.0
      %v4675 = vsel %vm4671, %v4661, 0.0
      %v4676 = vsel %vm4672, %v4663, 0.0
      %v4677 = vsel %vm4673, %v4665, 0.0
      %4678 = vset.pattern.permute.xlu0 4
      %4679 = vperm.xlu0 %4678, %v4624
      %v4680 = vpop.permute.xlu0 %4679
      %v4682 = vmul.f32 %v4674, %v4680
      %v4683 = vmul.f32 %v4675, %v4680
      %v4684 = vmul.f32 %v4676, %v4680
      %v4685 = vmul.f32 %v4677, %v4680
      %v4686 = vadd.f32 %v4608, %v4682
      %v4687 = vadd.f32 %v4609, %v4683
      %v4688 = vadd.f32 %v4610, %v4684
      %v4689 = vadd.f32 %v4611, %v4685
      %4690 = vset.pattern.permute.xlu0 3
      %4691 = vperm.xlu0 %4690, %v4624
      %v4692 = vpop.permute.xlu0 %4691
      %v4694 = vmul.f32 %v4674, %v4692
      %v4695 = vmul.f32 %v4675, %v4692
      %v4696 = vmul.f32 %v4676, %v4692
      %v4697 = vmul.f32 %v4677, %v4692
      %v4698 = vadd.f32 %v4620, %v4694
      %v4699 = vadd.f32 %v4621, %v4695
      %v4700 = vadd.f32 %v4622, %v4696
      %v4701 = vadd.f32 %v4623, %v4697
      %v4702 = vld [vmem:[%s4233 + $0x30] sm:$0xff]
      %4704 = vset.pattern.permute.xlu0 0
      %4705 = vperm.xlu0 %4704, %v4702
      %v4706 = vpop.permute.xlu0 %4705
      %v4708 = vsub.f32 %v293, %v4706
      %v4709 = vsub.f32 %v297, %v4706
      %v4710 = vsub.f32 %v301, %v4706
      %v4711 = vsub.f32 %v305, %v4706
      %4712 = vset.pattern.permute.xlu0 1
      %4713 = vperm.xlu0 %4712, %v4702
      %v4714 = vpop.permute.xlu0 %4713
      %v4716 = vsub.f32 %v323, %v4714
      %v4717 = vsub.f32 %v327, %v4714
      %v4718 = vsub.f32 %v331, %v4714
      %v4719 = vsub.f32 %v335, %v4714
      %v4720 = vmul.f32 %v4708, %v4708
      %v4721 = vmul.f32 %v4709, %v4709
      %v4722 = vmul.f32 %v4710, %v4710
      %v4723 = vmul.f32 %v4711, %v4711
      %v4724 = vmul.f32 %v4716, %v4716
      %v4725 = vmul.f32 %v4717, %v4717
      %v4726 = vmul.f32 %v4718, %v4718
      %v4727 = vmul.f32 %v4719, %v4719
      %v4728 = vadd.f32 %v4720, %v4724
      %v4729 = vadd.f32 %v4721, %v4725
      %v4730 = vadd.f32 %v4722, %v4726
      %v4731 = vadd.f32 %v4723, %v4727
      %v4732 = vsub.f32 0.0, %v4728
      %v4733 = vsub.f32 0.0, %v4729
      %v4734 = vsub.f32 0.0, %v4730
      %v4735 = vsub.f32 0.0, %v4731
      %v4736 = vmul.f32 %v4732, 1.442695
      %v4737 = vpow.pop %v4736
      %v4738 = vmul.f32 %v4733, 1.442695
      %v4739 = vpow.pop %v4738
      %v4740 = vmul.f32 %v4734, 1.442695
      %v4741 = vpow.pop %v4740
      %v4742 = vmul.f32 %v4735, 1.442695
      %v4743 = vpow.pop %v4742
      %4744 = vset.pattern.permute.xlu0 2
      %4745 = vperm.xlu0 %4744, %v4702
      %v4746 = vpop.permute.xlu0 %4745
      %vm4748 = vcmp.le.f32.partialorder %v4728, %v4746
      %vm4749 = vcmp.le.f32.partialorder %v4729, %v4746
      %vm4750 = vcmp.le.f32.partialorder %v4730, %v4746
      %vm4751 = vcmp.le.f32.partialorder %v4731, %v4746
      %v4752 = vsel %vm4748, %v4737, 0.0
      %v4753 = vsel %vm4749, %v4739, 0.0
      %v4754 = vsel %vm4750, %v4741, 0.0
      %v4755 = vsel %vm4751, %v4743, 0.0
      %4756 = vset.pattern.permute.xlu0 4
      %4757 = vperm.xlu0 %4756, %v4702
      %v4758 = vpop.permute.xlu0 %4757
      %v4760 = vmul.f32 %v4752, %v4758
      %v4761 = vmul.f32 %v4753, %v4758
      %v4762 = vmul.f32 %v4754, %v4758
      %v4763 = vmul.f32 %v4755, %v4758
      %v4764 = vadd.f32 %v4686, %v4760
      %v4765 = vadd.f32 %v4687, %v4761
      %v4766 = vadd.f32 %v4688, %v4762
      %v4767 = vadd.f32 %v4689, %v4763
      %4768 = vset.pattern.permute.xlu0 3
      %4769 = vperm.xlu0 %4768, %v4702
      %v4770 = vpop.permute.xlu0 %4769
      %v4772 = vmul.f32 %v4752, %v4770
      %v4773 = vmul.f32 %v4753, %v4770
      %v4774 = vmul.f32 %v4754, %v4770
      %v4775 = vmul.f32 %v4755, %v4770
      %v4776 = vadd.f32 %v4698, %v4772
      %v4777 = vadd.f32 %v4699, %v4773
      %v4778 = vadd.f32 %v4700, %v4774
      %v4779 = vadd.f32 %v4701, %v4775
      %v4780 = vld [vmem:[%s4233 + $0x38] sm:$0xff]
      %4782 = vset.pattern.permute.xlu0 0
      %4783 = vperm.xlu0 %4782, %v4780
      %v4784 = vpop.permute.xlu0 %4783
      %v4786 = vsub.f32 %v293, %v4784
      %v4787 = vsub.f32 %v297, %v4784
      %v4788 = vsub.f32 %v301, %v4784
      %v4789 = vsub.f32 %v305, %v4784
      %4790 = vset.pattern.permute.xlu0 1
      %4791 = vperm.xlu0 %4790, %v4780
      %v4792 = vpop.permute.xlu0 %4791
      %v4794 = vsub.f32 %v323, %v4792
      %v4795 = vsub.f32 %v327, %v4792
      %v4796 = vsub.f32 %v331, %v4792
      %v4797 = vsub.f32 %v335, %v4792
      %v4798 = vmul.f32 %v4786, %v4786
      %v4799 = vmul.f32 %v4787, %v4787
      %v4800 = vmul.f32 %v4788, %v4788
      %v4801 = vmul.f32 %v4789, %v4789
      %v4802 = vmul.f32 %v4794, %v4794
      %v4803 = vmul.f32 %v4795, %v4795
      %v4804 = vmul.f32 %v4796, %v4796
      %v4805 = vmul.f32 %v4797, %v4797
      %v4806 = vadd.f32 %v4798, %v4802
      %v4807 = vadd.f32 %v4799, %v4803
      %v4808 = vadd.f32 %v4800, %v4804
      %v4809 = vadd.f32 %v4801, %v4805
      %v4810 = vsub.f32 0.0, %v4806
      %v4811 = vsub.f32 0.0, %v4807
      %v4812 = vsub.f32 0.0, %v4808
      %v4813 = vsub.f32 0.0, %v4809
      %v4814 = vmul.f32 %v4810, 1.442695
      %v4815 = vpow.pop %v4814
      %v4816 = vmul.f32 %v4811, 1.442695
      %v4817 = vpow.pop %v4816
      %v4818 = vmul.f32 %v4812, 1.442695
      %v4819 = vpow.pop %v4818
      %v4820 = vmul.f32 %v4813, 1.442695
      %v4821 = vpow.pop %v4820
      %4822 = vset.pattern.permute.xlu0 2
      %4823 = vperm.xlu0 %4822, %v4780
      %v4824 = vpop.permute.xlu0 %4823
      %vm4826 = vcmp.le.f32.partialorder %v4806, %v4824
      %vm4827 = vcmp.le.f32.partialorder %v4807, %v4824
      %vm4828 = vcmp.le.f32.partialorder %v4808, %v4824
      %vm4829 = vcmp.le.f32.partialorder %v4809, %v4824
      %v4830 = vsel %vm4826, %v4815, 0.0
      %v4831 = vsel %vm4827, %v4817, 0.0
      %v4832 = vsel %vm4828, %v4819, 0.0
      %v4833 = vsel %vm4829, %v4821, 0.0
      %4834 = vset.pattern.permute.xlu0 4
      %4835 = vperm.xlu0 %4834, %v4780
      %v4836 = vpop.permute.xlu0 %4835
      %v4838 = vmul.f32 %v4830, %v4836
      %v4839 = vmul.f32 %v4831, %v4836
      %v4840 = vmul.f32 %v4832, %v4836
      %v4841 = vmul.f32 %v4833, %v4836
      %v4842 = vadd.f32 %v4764, %v4838
      %v4843 = vadd.f32 %v4765, %v4839
      %v4844 = vadd.f32 %v4766, %v4840
      %v4845 = vadd.f32 %v4767, %v4841
      %4846 = vset.pattern.permute.xlu0 3
      %4847 = vperm.xlu0 %4846, %v4780
      %v4848 = vpop.permute.xlu0 %4847
      %v4850 = vmul.f32 %v4830, %v4848
      %v4851 = vmul.f32 %v4831, %v4848
      %v4852 = vmul.f32 %v4832, %v4848
      %v4853 = vmul.f32 %v4833, %v4848
      %v4854 = vadd.f32 %v4776, %v4850
      %v4855 = vadd.f32 %v4777, %v4851
      %v4856 = vadd.f32 %v4778, %v4852
      %v4857 = vadd.f32 %v4779, %v4853
      %s4858 = scalar_lea.vmem [#allocation2], 192
      %v4859 = vld [vmem:[%s4858] sm:$0xff]
      %v4860 = vld [vmem:[%s4858 + $0x8] sm:$0xff]
      %v4861 = vld [vmem:[%s4858 + $0x10] sm:$0xff]
      %v4862 = vld [vmem:[%s4858 + $0x18] sm:$0xff]
      %v4863 = vadd.f32 %v4859, %v4842
      %v4864 = vadd.f32 %v4860, %v4843
      %v4865 = vadd.f32 %v4861, %v4844
      %v4866 = vadd.f32 %v4862, %v4845
      %4867 = vst [vmem:[%s4858] sm:$0xff] %v4863
      %4868 = vst [vmem:[%s4858 + $0x8] sm:$0xff] %v4864
      %4869 = vst [vmem:[%s4858 + $0x10] sm:$0xff] %v4865
      %4870 = vst [vmem:[%s4858 + $0x18] sm:$0xff] %v4866
      %s4871 = scalar_lea.vmem [#allocation3], 192
      %v4872 = vld [vmem:[%s4871] sm:$0xff]
      %v4873 = vld [vmem:[%s4871 + $0x8] sm:$0xff]
      %v4874 = vld [vmem:[%s4871 + $0x10] sm:$0xff]
      %v4875 = vld [vmem:[%s4871 + $0x18] sm:$0xff]
      %v4876 = vadd.f32 %v4872, %v4854
      %v4877 = vadd.f32 %v4873, %v4855
      %v4878 = vadd.f32 %v4874, %v4856
      %v4879 = vadd.f32 %v4875, %v4857
      %4880 = vst [vmem:[%s4871] sm:$0xff] %v4876
      %4881 = vst [vmem:[%s4871 + $0x8] sm:$0xff] %v4877
      %4882 = vst [vmem:[%s4871 + $0x10] sm:$0xff] %v4878
      %4883 = vst [vmem:[%s4871 + $0x18] sm:$0xff] %v4879
      %s4884 = scalar_lea.vmem %s198, 448
      %v4885 = vld [vmem:[%s4884] sm:$0xff]
      %4887 = vset.pattern.permute.xlu0 0
      %4888 = vperm.xlu0 %4887, %v4885
      %v4889 = vpop.permute.xlu0 %4888
      %v4891 = vsub.f32 %v293, %v4889
      %v4892 = vsub.f32 %v297, %v4889
      %v4893 = vsub.f32 %v301, %v4889
      %v4894 = vsub.f32 %v305, %v4889
      %4895 = vset.pattern.permute.xlu0 1
      %4896 = vperm.xlu0 %4895, %v4885
      %v4897 = vpop.permute.xlu0 %4896
      %v4899 = vsub.f32 %v323, %v4897
      %v4900 = vsub.f32 %v327, %v4897
      %v4901 = vsub.f32 %v331, %v4897
      %v4902 = vsub.f32 %v335, %v4897
      %v4903 = vmul.f32 %v4891, %v4891
      %v4904 = vmul.f32 %v4892, %v4892
      %v4905 = vmul.f32 %v4893, %v4893
      %v4906 = vmul.f32 %v4894, %v4894
      %v4907 = vmul.f32 %v4899, %v4899
      %v4908 = vmul.f32 %v4900, %v4900
      %v4909 = vmul.f32 %v4901, %v4901
      %v4910 = vmul.f32 %v4902, %v4902
      %v4911 = vadd.f32 %v4903, %v4907
      %v4912 = vadd.f32 %v4904, %v4908
      %v4913 = vadd.f32 %v4905, %v4909
      %v4914 = vadd.f32 %v4906, %v4910
      %v4915 = vsub.f32 0.0, %v4911
      %v4916 = vsub.f32 0.0, %v4912
      %v4917 = vsub.f32 0.0, %v4913
      %v4918 = vsub.f32 0.0, %v4914
      %v4919 = vmul.f32 %v4915, 1.442695
      %v4920 = vpow.pop %v4919
      %v4921 = vmul.f32 %v4916, 1.442695
      %v4922 = vpow.pop %v4921
      %v4923 = vmul.f32 %v4917, 1.442695
      %v4924 = vpow.pop %v4923
      %v4925 = vmul.f32 %v4918, 1.442695
      %v4926 = vpow.pop %v4925
      %4927 = vset.pattern.permute.xlu0 2
      %4928 = vperm.xlu0 %4927, %v4885
      %v4929 = vpop.permute.xlu0 %4928
      %vm4931 = vcmp.le.f32.partialorder %v4911, %v4929
      %vm4932 = vcmp.le.f32.partialorder %v4912, %v4929
      %vm4933 = vcmp.le.f32.partialorder %v4913, %v4929
      %vm4934 = vcmp.le.f32.partialorder %v4914, %v4929
      %v4935 = vsel %vm4931, %v4920, 0.0
      %v4936 = vsel %vm4932, %v4922, 0.0
      %v4937 = vsel %vm4933, %v4924, 0.0
      %v4938 = vsel %vm4934, %v4926, 0.0
      %4939 = vset.pattern.permute.xlu0 4
      %4940 = vperm.xlu0 %4939, %v4885
      %v4941 = vpop.permute.xlu0 %4940
      %v4943 = vmul.f32 %v4935, %v4941
      %v4944 = vmul.f32 %v4936, %v4941
      %v4945 = vmul.f32 %v4937, %v4941
      %v4946 = vmul.f32 %v4938, %v4941
      %v4947 = vadd.f32 %v4943, 0.0
      %v4948 = vadd.f32 %v4944, 0.0
      %v4949 = vadd.f32 %v4945, 0.0
      %v4950 = vadd.f32 %v4946, 0.0
      %4951 = vset.pattern.permute.xlu0 3
      %4952 = vperm.xlu0 %4951, %v4885
      %v4953 = vpop.permute.xlu0 %4952
      %v4955 = vmul.f32 %v4935, %v4953
      %v4956 = vmul.f32 %v4936, %v4953
      %v4957 = vmul.f32 %v4937, %v4953
      %v4958 = vmul.f32 %v4938, %v4953
      %v4959 = vadd.f32 %v4955, 0.0
      %v4960 = vadd.f32 %v4956, 0.0
      %v4961 = vadd.f32 %v4957, 0.0
      %v4962 = vadd.f32 %v4958, 0.0
      %v4963 = vld [vmem:[%s4884 + $0x8] sm:$0xff]
      %4965 = vset.pattern.permute.xlu0 0
      %4966 = vperm.xlu0 %4965, %v4963
      %v4967 = vpop.permute.xlu0 %4966
      %v4969 = vsub.f32 %v293, %v4967
      %v4970 = vsub.f32 %v297, %v4967
      %v4971 = vsub.f32 %v301, %v4967
      %v4972 = vsub.f32 %v305, %v4967
      %4973 = vset.pattern.permute.xlu0 1
      %4974 = vperm.xlu0 %4973, %v4963
      %v4975 = vpop.permute.xlu0 %4974
      %v4977 = vsub.f32 %v323, %v4975
      %v4978 = vsub.f32 %v327, %v4975
      %v4979 = vsub.f32 %v331, %v4975
      %v4980 = vsub.f32 %v335, %v4975
      %v4981 = vmul.f32 %v4969, %v4969
      %v4982 = vmul.f32 %v4970, %v4970
      %v4983 = vmul.f32 %v4971, %v4971
      %v4984 = vmul.f32 %v4972, %v4972
      %v4985 = vmul.f32 %v4977, %v4977
      %v4986 = vmul.f32 %v4978, %v4978
      %v4987 = vmul.f32 %v4979, %v4979
      %v4988 = vmul.f32 %v4980, %v4980
      %v4989 = vadd.f32 %v4981, %v4985
      %v4990 = vadd.f32 %v4982, %v4986
      %v4991 = vadd.f32 %v4983, %v4987
      %v4992 = vadd.f32 %v4984, %v4988
      %v4993 = vsub.f32 0.0, %v4989
      %v4994 = vsub.f32 0.0, %v4990
      %v4995 = vsub.f32 0.0, %v4991
      %v4996 = vsub.f32 0.0, %v4992
      %v4997 = vmul.f32 %v4993, 1.442695
      %v4998 = vpow.pop %v4997
      %v4999 = vmul.f32 %v4994, 1.442695
      %v5000 = vpow.pop %v4999
      %v5001 = vmul.f32 %v4995, 1.442695
      %v5002 = vpow.pop %v5001
      %v5003 = vmul.f32 %v4996, 1.442695
      %v5004 = vpow.pop %v5003
      %5005 = vset.pattern.permute.xlu0 2
      %5006 = vperm.xlu0 %5005, %v4963
      %v5007 = vpop.permute.xlu0 %5006
      %vm5009 = vcmp.le.f32.partialorder %v4989, %v5007
      %vm5010 = vcmp.le.f32.partialorder %v4990, %v5007
      %vm5011 = vcmp.le.f32.partialorder %v4991, %v5007
      %vm5012 = vcmp.le.f32.partialorder %v4992, %v5007
      %v5013 = vsel %vm5009, %v4998, 0.0
      %v5014 = vsel %vm5010, %v5000, 0.0
      %v5015 = vsel %vm5011, %v5002, 0.0
      %v5016 = vsel %vm5012, %v5004, 0.0
      %5017 = vset.pattern.permute.xlu0 4
      %5018 = vperm.xlu0 %5017, %v4963
      %v5019 = vpop.permute.xlu0 %5018
      %v5021 = vmul.f32 %v5013, %v5019
      %v5022 = vmul.f32 %v5014, %v5019
      %v5023 = vmul.f32 %v5015, %v5019
      %v5024 = vmul.f32 %v5016, %v5019
      %v5025 = vadd.f32 %v4947, %v5021
      %v5026 = vadd.f32 %v4948, %v5022
      %v5027 = vadd.f32 %v4949, %v5023
      %v5028 = vadd.f32 %v4950, %v5024
      %5029 = vset.pattern.permute.xlu0 3
      %5030 = vperm.xlu0 %5029, %v4963
      %v5031 = vpop.permute.xlu0 %5030
      %v5033 = vmul.f32 %v5013, %v5031
      %v5034 = vmul.f32 %v5014, %v5031
      %v5035 = vmul.f32 %v5015, %v5031
      %v5036 = vmul.f32 %v5016, %v5031
      %v5037 = vadd.f32 %v4959, %v5033
      %v5038 = vadd.f32 %v4960, %v5034
      %v5039 = vadd.f32 %v4961, %v5035
      %v5040 = vadd.f32 %v4962, %v5036
      %v5041 = vld [vmem:[%s4884 + $0x10] sm:$0xff]
      %5043 = vset.pattern.permute.xlu0 0
      %5044 = vperm.xlu0 %5043, %v5041
      %v5045 = vpop.permute.xlu0 %5044
      %v5047 = vsub.f32 %v293, %v5045
      %v5048 = vsub.f32 %v297, %v5045
      %v5049 = vsub.f32 %v301, %v5045
      %v5050 = vsub.f32 %v305, %v5045
      %5051 = vset.pattern.permute.xlu0 1
      %5052 = vperm.xlu0 %5051, %v5041
      %v5053 = vpop.permute.xlu0 %5052
      %v5055 = vsub.f32 %v323, %v5053
      %v5056 = vsub.f32 %v327, %v5053
      %v5057 = vsub.f32 %v331, %v5053
      %v5058 = vsub.f32 %v335, %v5053
      %v5059 = vmul.f32 %v5047, %v5047
      %v5060 = vmul.f32 %v5048, %v5048
      %v5061 = vmul.f32 %v5049, %v5049
      %v5062 = vmul.f32 %v5050, %v5050
      %v5063 = vmul.f32 %v5055, %v5055
      %v5064 = vmul.f32 %v5056, %v5056
      %v5065 = vmul.f32 %v5057, %v5057
      %v5066 = vmul.f32 %v5058, %v5058
      %v5067 = vadd.f32 %v5059, %v5063
      %v5068 = vadd.f32 %v5060, %v5064
      %v5069 = vadd.f32 %v5061, %v5065
      %v5070 = vadd.f32 %v5062, %v5066
      %v5071 = vsub.f32 0.0, %v5067
      %v5072 = vsub.f32 0.0, %v5068
      %v5073 = vsub.f32 0.0, %v5069
      %v5074 = vsub.f32 0.0, %v5070
      %v5075 = vmul.f32 %v5071, 1.442695
      %v5076 = vpow.pop %v5075
      %v5077 = vmul.f32 %v5072, 1.442695
      %v5078 = vpow.pop %v5077
      %v5079 = vmul.f32 %v5073, 1.442695
      %v5080 = vpow.pop %v5079
      %v5081 = vmul.f32 %v5074, 1.442695
      %v5082 = vpow.pop %v5081
      %5083 = vset.pattern.permute.xlu0 2
      %5084 = vperm.xlu0 %5083, %v5041
      %v5085 = vpop.permute.xlu0 %5084
      %vm5087 = vcmp.le.f32.partialorder %v5067, %v5085
      %vm5088 = vcmp.le.f32.partialorder %v5068, %v5085
      %vm5089 = vcmp.le.f32.partialorder %v5069, %v5085
      %vm5090 = vcmp.le.f32.partialorder %v5070, %v5085
      %v5091 = vsel %vm5087, %v5076, 0.0
      %v5092 = vsel %vm5088, %v5078, 0.0
      %v5093 = vsel %vm5089, %v5080, 0.0
      %v5094 = vsel %vm5090, %v5082, 0.0
      %5095 = vset.pattern.permute.xlu0 4
      %5096 = vperm.xlu0 %5095, %v5041
      %v5097 = vpop.permute.xlu0 %5096
      %v5099 = vmul.f32 %v5091, %v5097
      %v5100 = vmul.f32 %v5092, %v5097
      %v5101 = vmul.f32 %v5093, %v5097
      %v5102 = vmul.f32 %v5094, %v5097
      %v5103 = vadd.f32 %v5025, %v5099
      %v5104 = vadd.f32 %v5026, %v5100
      %v5105 = vadd.f32 %v5027, %v5101
      %v5106 = vadd.f32 %v5028, %v5102
      %5107 = vset.pattern.permute.xlu0 3
      %5108 = vperm.xlu0 %5107, %v5041
      %v5109 = vpop.permute.xlu0 %5108
      %v5111 = vmul.f32 %v5091, %v5109
      %v5112 = vmul.f32 %v5092, %v5109
      %v5113 = vmul.f32 %v5093, %v5109
      %v5114 = vmul.f32 %v5094, %v5109
      %v5115 = vadd.f32 %v5037, %v5111
      %v5116 = vadd.f32 %v5038, %v5112
      %v5117 = vadd.f32 %v5039, %v5113
      %v5118 = vadd.f32 %v5040, %v5114
      %v5119 = vld [vmem:[%s4884 + $0x18] sm:$0xff]
      %5121 = vset.pattern.permute.xlu0 0
      %5122 = vperm.xlu0 %5121, %v5119
      %v5123 = vpop.permute.xlu0 %5122
      %v5125 = vsub.f32 %v293, %v5123
      %v5126 = vsub.f32 %v297, %v5123
      %v5127 = vsub.f32 %v301, %v5123
      %v5128 = vsub.f32 %v305, %v5123
      %5129 = vset.pattern.permute.xlu0 1
      %5130 = vperm.xlu0 %5129, %v5119
      %v5131 = vpop.permute.xlu0 %5130
      %v5133 = vsub.f32 %v323, %v5131
      %v5134 = vsub.f32 %v327, %v5131
      %v5135 = vsub.f32 %v331, %v5131
      %v5136 = vsub.f32 %v335, %v5131
      %v5137 = vmul.f32 %v5125, %v5125
      %v5138 = vmul.f32 %v5126, %v5126
      %v5139 = vmul.f32 %v5127, %v5127
      %v5140 = vmul.f32 %v5128, %v5128
      %v5141 = vmul.f32 %v5133, %v5133
      %v5142 = vmul.f32 %v5134, %v5134
      %v5143 = vmul.f32 %v5135, %v5135
      %v5144 = vmul.f32 %v5136, %v5136
      %v5145 = vadd.f32 %v5137, %v5141
      %v5146 = vadd.f32 %v5138, %v5142
      %v5147 = vadd.f32 %v5139, %v5143
      %v5148 = vadd.f32 %v5140, %v5144
      %v5149 = vsub.f32 0.0, %v5145
      %v5150 = vsub.f32 0.0, %v5146
      %v5151 = vsub.f32 0.0, %v5147
      %v5152 = vsub.f32 0.0, %v5148
      %v5153 = vmul.f32 %v5149, 1.442695
      %v5154 = vpow.pop %v5153
      %v5155 = vmul.f32 %v5150, 1.442695
      %v5156 = vpow.pop %v5155
      %v5157 = vmul.f32 %v5151, 1.442695
      %v5158 = vpow.pop %v5157
      %v5159 = vmul.f32 %v5152, 1.442695
      %v5160 = vpow.pop %v5159
      %5161 = vset.pattern.permute.xlu0 2
      %5162 = vperm.xlu0 %5161, %v5119
      %v5163 = vpop.permute.xlu0 %5162
      %vm5165 = vcmp.le.f32.partialorder %v5145, %v5163
      %vm5166 = vcmp.le.f32.partialorder %v5146, %v5163
      %vm5167 = vcmp.le.f32.partialorder %v5147, %v5163
      %vm5168 = vcmp.le.f32.partialorder %v5148, %v5163
      %v5169 = vsel %vm5165, %v5154, 0.0
      %v5170 = vsel %vm5166, %v5156, 0.0
      %v5171 = vsel %vm5167, %v5158, 0.0
      %v5172 = vsel %vm5168, %v5160, 0.0
      %5173 = vset.pattern.permute.xlu0 4
      %5174 = vperm.xlu0 %5173, %v5119
      %v5175 = vpop.permute.xlu0 %5174
      %v5177 = vmul.f32 %v5169, %v5175
      %v5178 = vmul.f32 %v5170, %v5175
      %v5179 = vmul.f32 %v5171, %v5175
      %v5180 = vmul.f32 %v5172, %v5175
      %v5181 = vadd.f32 %v5103, %v5177
      %v5182 = vadd.f32 %v5104, %v5178
      %v5183 = vadd.f32 %v5105, %v5179
      %v5184 = vadd.f32 %v5106, %v5180
      %5185 = vset.pattern.permute.xlu0 3
      %5186 = vperm.xlu0 %5185, %v5119
      %v5187 = vpop.permute.xlu0 %5186
      %v5189 = vmul.f32 %v5169, %v5187
      %v5190 = vmul.f32 %v5170, %v5187
      %v5191 = vmul.f32 %v5171, %v5187
      %v5192 = vmul.f32 %v5172, %v5187
      %v5193 = vadd.f32 %v5115, %v5189
      %v5194 = vadd.f32 %v5116, %v5190
      %v5195 = vadd.f32 %v5117, %v5191
      %v5196 = vadd.f32 %v5118, %v5192
      %v5197 = vld [vmem:[%s4884 + $0x20] sm:$0xff]
      %5199 = vset.pattern.permute.xlu0 0
      %5200 = vperm.xlu0 %5199, %v5197
      %v5201 = vpop.permute.xlu0 %5200
      %v5203 = vsub.f32 %v293, %v5201
      %v5204 = vsub.f32 %v297, %v5201
      %v5205 = vsub.f32 %v301, %v5201
      %v5206 = vsub.f32 %v305, %v5201
      %5207 = vset.pattern.permute.xlu0 1
      %5208 = vperm.xlu0 %5207, %v5197
      %v5209 = vpop.permute.xlu0 %5208
      %v5211 = vsub.f32 %v323, %v5209
      %v5212 = vsub.f32 %v327, %v5209
      %v5213 = vsub.f32 %v331, %v5209
      %v5214 = vsub.f32 %v335, %v5209
      %v5215 = vmul.f32 %v5203, %v5203
      %v5216 = vmul.f32 %v5204, %v5204
      %v5217 = vmul.f32 %v5205, %v5205
      %v5218 = vmul.f32 %v5206, %v5206
      %v5219 = vmul.f32 %v5211, %v5211
      %v5220 = vmul.f32 %v5212, %v5212
      %v5221 = vmul.f32 %v5213, %v5213
      %v5222 = vmul.f32 %v5214, %v5214
      %v5223 = vadd.f32 %v5215, %v5219
      %v5224 = vadd.f32 %v5216, %v5220
      %v5225 = vadd.f32 %v5217, %v5221
      %v5226 = vadd.f32 %v5218, %v5222
      %v5227 = vsub.f32 0.0, %v5223
      %v5228 = vsub.f32 0.0, %v5224
      %v5229 = vsub.f32 0.0, %v5225
      %v5230 = vsub.f32 0.0, %v5226
      %v5231 = vmul.f32 %v5227, 1.442695
      %v5232 = vpow.pop %v5231
      %v5233 = vmul.f32 %v5228, 1.442695
      %v5234 = vpow.pop %v5233
      %v5235 = vmul.f32 %v5229, 1.442695
      %v5236 = vpow.pop %v5235
      %v5237 = vmul.f32 %v5230, 1.442695
      %v5238 = vpow.pop %v5237
      %5239 = vset.pattern.permute.xlu0 2
      %5240 = vperm.xlu0 %5239, %v5197
      %v5241 = vpop.permute.xlu0 %5240
      %vm5243 = vcmp.le.f32.partialorder %v5223, %v5241
      %vm5244 = vcmp.le.f32.partialorder %v5224, %v5241
      %vm5245 = vcmp.le.f32.partialorder %v5225, %v5241
      %vm5246 = vcmp.le.f32.partialorder %v5226, %v5241
      %v5247 = vsel %vm5243, %v5232, 0.0
      %v5248 = vsel %vm5244, %v5234, 0.0
      %v5249 = vsel %vm5245, %v5236, 0.0
      %v5250 = vsel %vm5246, %v5238, 0.0
      %5251 = vset.pattern.permute.xlu0 4
      %5252 = vperm.xlu0 %5251, %v5197
      %v5253 = vpop.permute.xlu0 %5252
      %v5255 = vmul.f32 %v5247, %v5253
      %v5256 = vmul.f32 %v5248, %v5253
      %v5257 = vmul.f32 %v5249, %v5253
      %v5258 = vmul.f32 %v5250, %v5253
      %v5259 = vadd.f32 %v5181, %v5255
      %v5260 = vadd.f32 %v5182, %v5256
      %v5261 = vadd.f32 %v5183, %v5257
      %v5262 = vadd.f32 %v5184, %v5258
      %5263 = vset.pattern.permute.xlu0 3
      %5264 = vperm.xlu0 %5263, %v5197
      %v5265 = vpop.permute.xlu0 %5264
      %v5267 = vmul.f32 %v5247, %v5265
      %v5268 = vmul.f32 %v5248, %v5265
      %v5269 = vmul.f32 %v5249, %v5265
      %v5270 = vmul.f32 %v5250, %v5265
      %v5271 = vadd.f32 %v5193, %v5267
      %v5272 = vadd.f32 %v5194, %v5268
      %v5273 = vadd.f32 %v5195, %v5269
      %v5274 = vadd.f32 %v5196, %v5270
      %v5275 = vld [vmem:[%s4884 + $0x28] sm:$0xff]
      %5277 = vset.pattern.permute.xlu0 0
      %5278 = vperm.xlu0 %5277, %v5275
      %v5279 = vpop.permute.xlu0 %5278
      %v5281 = vsub.f32 %v293, %v5279
      %v5282 = vsub.f32 %v297, %v5279
      %v5283 = vsub.f32 %v301, %v5279
      %v5284 = vsub.f32 %v305, %v5279
      %5285 = vset.pattern.permute.xlu0 1
      %5286 = vperm.xlu0 %5285, %v5275
      %v5287 = vpop.permute.xlu0 %5286
      %v5289 = vsub.f32 %v323, %v5287
      %v5290 = vsub.f32 %v327, %v5287
      %v5291 = vsub.f32 %v331, %v5287
      %v5292 = vsub.f32 %v335, %v5287
      %v5293 = vmul.f32 %v5281, %v5281
      %v5294 = vmul.f32 %v5282, %v5282
      %v5295 = vmul.f32 %v5283, %v5283
      %v5296 = vmul.f32 %v5284, %v5284
      %v5297 = vmul.f32 %v5289, %v5289
      %v5298 = vmul.f32 %v5290, %v5290
      %v5299 = vmul.f32 %v5291, %v5291
      %v5300 = vmul.f32 %v5292, %v5292
      %v5301 = vadd.f32 %v5293, %v5297
      %v5302 = vadd.f32 %v5294, %v5298
      %v5303 = vadd.f32 %v5295, %v5299
      %v5304 = vadd.f32 %v5296, %v5300
      %v5305 = vsub.f32 0.0, %v5301
      %v5306 = vsub.f32 0.0, %v5302
      %v5307 = vsub.f32 0.0, %v5303
      %v5308 = vsub.f32 0.0, %v5304
      %v5309 = vmul.f32 %v5305, 1.442695
      %v5310 = vpow.pop %v5309
      %v5311 = vmul.f32 %v5306, 1.442695
      %v5312 = vpow.pop %v5311
      %v5313 = vmul.f32 %v5307, 1.442695
      %v5314 = vpow.pop %v5313
      %v5315 = vmul.f32 %v5308, 1.442695
      %v5316 = vpow.pop %v5315
      %5317 = vset.pattern.permute.xlu0 2
      %5318 = vperm.xlu0 %5317, %v5275
      %v5319 = vpop.permute.xlu0 %5318
      %vm5321 = vcmp.le.f32.partialorder %v5301, %v5319
      %vm5322 = vcmp.le.f32.partialorder %v5302, %v5319
      %vm5323 = vcmp.le.f32.partialorder %v5303, %v5319
      %vm5324 = vcmp.le.f32.partialorder %v5304, %v5319
      %v5325 = vsel %vm5321, %v5310, 0.0
      %v5326 = vsel %vm5322, %v5312, 0.0
      %v5327 = vsel %vm5323, %v5314, 0.0
      %v5328 = vsel %vm5324, %v5316, 0.0
      %5329 = vset.pattern.permute.xlu0 4
      %5330 = vperm.xlu0 %5329, %v5275
      %v5331 = vpop.permute.xlu0 %5330
      %v5333 = vmul.f32 %v5325, %v5331
      %v5334 = vmul.f32 %v5326, %v5331
      %v5335 = vmul.f32 %v5327, %v5331
      %v5336 = vmul.f32 %v5328, %v5331
      %v5337 = vadd.f32 %v5259, %v5333
      %v5338 = vadd.f32 %v5260, %v5334
      %v5339 = vadd.f32 %v5261, %v5335
      %v5340 = vadd.f32 %v5262, %v5336
      %5341 = vset.pattern.permute.xlu0 3
      %5342 = vperm.xlu0 %5341, %v5275
      %v5343 = vpop.permute.xlu0 %5342
      %v5345 = vmul.f32 %v5325, %v5343
      %v5346 = vmul.f32 %v5326, %v5343
      %v5347 = vmul.f32 %v5327, %v5343
      %v5348 = vmul.f32 %v5328, %v5343
      %v5349 = vadd.f32 %v5271, %v5345
      %v5350 = vadd.f32 %v5272, %v5346
      %v5351 = vadd.f32 %v5273, %v5347
      %v5352 = vadd.f32 %v5274, %v5348
      %v5353 = vld [vmem:[%s4884 + $0x30] sm:$0xff]
      %5355 = vset.pattern.permute.xlu0 0
      %5356 = vperm.xlu0 %5355, %v5353
      %v5357 = vpop.permute.xlu0 %5356
      %v5359 = vsub.f32 %v293, %v5357
      %v5360 = vsub.f32 %v297, %v5357
      %v5361 = vsub.f32 %v301, %v5357
      %v5362 = vsub.f32 %v305, %v5357
      %5363 = vset.pattern.permute.xlu0 1
      %5364 = vperm.xlu0 %5363, %v5353
      %v5365 = vpop.permute.xlu0 %5364
      %v5367 = vsub.f32 %v323, %v5365
      %v5368 = vsub.f32 %v327, %v5365
      %v5369 = vsub.f32 %v331, %v5365
      %v5370 = vsub.f32 %v335, %v5365
      %v5371 = vmul.f32 %v5359, %v5359
      %v5372 = vmul.f32 %v5360, %v5360
      %v5373 = vmul.f32 %v5361, %v5361
      %v5374 = vmul.f32 %v5362, %v5362
      %v5375 = vmul.f32 %v5367, %v5367
      %v5376 = vmul.f32 %v5368, %v5368
      %v5377 = vmul.f32 %v5369, %v5369
      %v5378 = vmul.f32 %v5370, %v5370
      %v5379 = vadd.f32 %v5371, %v5375
      %v5380 = vadd.f32 %v5372, %v5376
      %v5381 = vadd.f32 %v5373, %v5377
      %v5382 = vadd.f32 %v5374, %v5378
      %v5383 = vsub.f32 0.0, %v5379
      %v5384 = vsub.f32 0.0, %v5380
      %v5385 = vsub.f32 0.0, %v5381
      %v5386 = vsub.f32 0.0, %v5382
      %v5387 = vmul.f32 %v5383, 1.442695
      %v5388 = vpow.pop %v5387
      %v5389 = vmul.f32 %v5384, 1.442695
      %v5390 = vpow.pop %v5389
      %v5391 = vmul.f32 %v5385, 1.442695
      %v5392 = vpow.pop %v5391
      %v5393 = vmul.f32 %v5386, 1.442695
      %v5394 = vpow.pop %v5393
      %5395 = vset.pattern.permute.xlu0 2
      %5396 = vperm.xlu0 %5395, %v5353
      %v5397 = vpop.permute.xlu0 %5396
      %vm5399 = vcmp.le.f32.partialorder %v5379, %v5397
      %vm5400 = vcmp.le.f32.partialorder %v5380, %v5397
      %vm5401 = vcmp.le.f32.partialorder %v5381, %v5397
      %vm5402 = vcmp.le.f32.partialorder %v5382, %v5397
      %v5403 = vsel %vm5399, %v5388, 0.0
      %v5404 = vsel %vm5400, %v5390, 0.0
      %v5405 = vsel %vm5401, %v5392, 0.0
      %v5406 = vsel %vm5402, %v5394, 0.0
      %5407 = vset.pattern.permute.xlu0 4
      %5408 = vperm.xlu0 %5407, %v5353
      %v5409 = vpop.permute.xlu0 %5408
      %v5411 = vmul.f32 %v5403, %v5409
      %v5412 = vmul.f32 %v5404, %v5409
      %v5413 = vmul.f32 %v5405, %v5409
      %v5414 = vmul.f32 %v5406, %v5409
      %v5415 = vadd.f32 %v5337, %v5411
      %v5416 = vadd.f32 %v5338, %v5412
      %v5417 = vadd.f32 %v5339, %v5413
      %v5418 = vadd.f32 %v5340, %v5414
      %5419 = vset.pattern.permute.xlu0 3
      %5420 = vperm.xlu0 %5419, %v5353
      %v5421 = vpop.permute.xlu0 %5420
      %v5423 = vmul.f32 %v5403, %v5421
      %v5424 = vmul.f32 %v5404, %v5421
      %v5425 = vmul.f32 %v5405, %v5421
      %v5426 = vmul.f32 %v5406, %v5421
      %v5427 = vadd.f32 %v5349, %v5423
      %v5428 = vadd.f32 %v5350, %v5424
      %v5429 = vadd.f32 %v5351, %v5425
      %v5430 = vadd.f32 %v5352, %v5426
      %v5431 = vld [vmem:[%s4884 + $0x38] sm:$0xff]
      %5433 = vset.pattern.permute.xlu0 0
      %5434 = vperm.xlu0 %5433, %v5431
      %v5435 = vpop.permute.xlu0 %5434
      %v5437 = vsub.f32 %v293, %v5435
      %v5438 = vsub.f32 %v297, %v5435
      %v5439 = vsub.f32 %v301, %v5435
      %v5440 = vsub.f32 %v305, %v5435
      %5441 = vset.pattern.permute.xlu0 1
      %5442 = vperm.xlu0 %5441, %v5431
      %v5443 = vpop.permute.xlu0 %5442
      %v5445 = vsub.f32 %v323, %v5443
      %v5446 = vsub.f32 %v327, %v5443
      %v5447 = vsub.f32 %v331, %v5443
      %v5448 = vsub.f32 %v335, %v5443
      %v5449 = vmul.f32 %v5437, %v5437
      %v5450 = vmul.f32 %v5438, %v5438
      %v5451 = vmul.f32 %v5439, %v5439
      %v5452 = vmul.f32 %v5440, %v5440
      %v5453 = vmul.f32 %v5445, %v5445
      %v5454 = vmul.f32 %v5446, %v5446
      %v5455 = vmul.f32 %v5447, %v5447
      %v5456 = vmul.f32 %v5448, %v5448
      %v5457 = vadd.f32 %v5449, %v5453
      %v5458 = vadd.f32 %v5450, %v5454
      %v5459 = vadd.f32 %v5451, %v5455
      %v5460 = vadd.f32 %v5452, %v5456
      %v5461 = vsub.f32 0.0, %v5457
      %v5462 = vsub.f32 0.0, %v5458
      %v5463 = vsub.f32 0.0, %v5459
      %v5464 = vsub.f32 0.0, %v5460
      %v5465 = vmul.f32 %v5461, 1.442695
      %v5466 = vpow.pop %v5465
      %v5467 = vmul.f32 %v5462, 1.442695
      %v5468 = vpow.pop %v5467
      %v5469 = vmul.f32 %v5463, 1.442695
      %v5470 = vpow.pop %v5469
      %v5471 = vmul.f32 %v5464, 1.442695
      %v5472 = vpow.pop %v5471
      %5473 = vset.pattern.permute.xlu0 2
      %5474 = vperm.xlu0 %5473, %v5431
      %v5475 = vpop.permute.xlu0 %5474
      %vm5477 = vcmp.le.f32.partialorder %v5457, %v5475
      %vm5478 = vcmp.le.f32.partialorder %v5458, %v5475
      %vm5479 = vcmp.le.f32.partialorder %v5459, %v5475
      %vm5480 = vcmp.le.f32.partialorder %v5460, %v5475
      %v5481 = vsel %vm5477, %v5466, 0.0
      %v5482 = vsel %vm5478, %v5468, 0.0
      %v5483 = vsel %vm5479, %v5470, 0.0
      %v5484 = vsel %vm5480, %v5472, 0.0
      %5485 = vset.pattern.permute.xlu0 4
      %5486 = vperm.xlu0 %5485, %v5431
      %v5487 = vpop.permute.xlu0 %5486
      %v5489 = vmul.f32 %v5481, %v5487
      %v5490 = vmul.f32 %v5482, %v5487
      %v5491 = vmul.f32 %v5483, %v5487
      %v5492 = vmul.f32 %v5484, %v5487
      %v5493 = vadd.f32 %v5415, %v5489
      %v5494 = vadd.f32 %v5416, %v5490
      %v5495 = vadd.f32 %v5417, %v5491
      %v5496 = vadd.f32 %v5418, %v5492
      %5497 = vset.pattern.permute.xlu0 3
      %5498 = vperm.xlu0 %5497, %v5431
      %v5499 = vpop.permute.xlu0 %5498
      %v5501 = vmul.f32 %v5481, %v5499
      %v5502 = vmul.f32 %v5482, %v5499
      %v5503 = vmul.f32 %v5483, %v5499
      %v5504 = vmul.f32 %v5484, %v5499
      %v5505 = vadd.f32 %v5427, %v5501
      %v5506 = vadd.f32 %v5428, %v5502
      %v5507 = vadd.f32 %v5429, %v5503
      %v5508 = vadd.f32 %v5430, %v5504
      %s5509 = scalar_lea.vmem [#allocation2], 224
      %v5510 = vld [vmem:[%s5509] sm:$0xff]
      %v5511 = vld [vmem:[%s5509 + $0x8] sm:$0xff]
      %v5512 = vld [vmem:[%s5509 + $0x10] sm:$0xff]
      %v5513 = vld [vmem:[%s5509 + $0x18] sm:$0xff]
      %v5514 = vadd.f32 %v5510, %v5493
      %v5515 = vadd.f32 %v5511, %v5494
      %v5516 = vadd.f32 %v5512, %v5495
      %v5517 = vadd.f32 %v5513, %v5496
      %5518 = vst [vmem:[%s5509] sm:$0xff] %v5514
      %5519 = vst [vmem:[%s5509 + $0x8] sm:$0xff] %v5515
      %5520 = vst [vmem:[%s5509 + $0x10] sm:$0xff] %v5516
      %5521 = vst [vmem:[%s5509 + $0x18] sm:$0xff] %v5517
      %s5522 = scalar_lea.vmem [#allocation3], 224
      %v5523 = vld [vmem:[%s5522] sm:$0xff]
      %v5524 = vld [vmem:[%s5522 + $0x8] sm:$0xff]
      %v5525 = vld [vmem:[%s5522 + $0x10] sm:$0xff]
      %v5526 = vld [vmem:[%s5522 + $0x18] sm:$0xff]
      %v5527 = vadd.f32 %v5523, %v5505
      %v5528 = vadd.f32 %v5524, %v5506
      %v5529 = vadd.f32 %v5525, %v5507
      %v5530 = vadd.f32 %v5526, %v5508
      %5531 = vst [vmem:[%s5522] sm:$0xff] %v5527
      %5532 = vst [vmem:[%s5522 + $0x8] sm:$0xff] %v5528
      %5533 = vst [vmem:[%s5522 + $0x10] sm:$0xff] %v5529
      %5534 = vst [vmem:[%s5522 + $0x18] sm:$0xff] %v5530
      // Predicated region
      $region33: #{soft_rasterize_depth.1} parent=27 // pred_check
        %p5535 = pneg %p217
      $region34: #{soft_rasterize_depth.1} parent=27 // pred_check_branch
        %5537 = sbr.rel (%p5535) target = $region36
      $region35: #{soft_rasterize_depth.1} parent=27 // pred_region
        %v5538 = vld [vmem:[#allocation2] sm:$0xff]
        %v5539 = vld [vmem:[#allocation2 + $0x8] sm:$0xff]
        %v5540 = vld [vmem:[#allocation2 + $0x10] sm:$0xff]
        %v5541 = vld [vmem:[#allocation2 + $0x18] sm:$0xff]
        %v5542 = vrot.slane %v5538, 4
        %v5543 = vadd.f32 %v5538, %v5542
        %v5544 = vrot.slane %v5543, 2
        %v5545 = vadd.f32 %v5543, %v5544
        %v5546 = vrot.slane %v5545, 1
        %v5547 = vadd.f32 %v5545, %v5546
        %v5548 = vrot.slane %v5539, 4
        %v5549 = vadd.f32 %v5539, %v5548
        %v5550 = vrot.slane %v5549, 2
        %v5551 = vadd.f32 %v5549, %v5550
        %v5552 = vrot.slane %v5551, 1
        %v5553 = vadd.f32 %v5551, %v5552
        %v5554 = vrot.slane %v5540, 4
        %v5555 = vadd.f32 %v5540, %v5554
        %v5556 = vrot.slane %v5555, 2
        %v5557 = vadd.f32 %v5555, %v5556
        %v5558 = vrot.slane %v5557, 1
        %v5559 = vadd.f32 %v5557, %v5558
        %v5560 = vrot.slane %v5541, 4
        %v5561 = vadd.f32 %v5541, %v5560
        %v5562 = vrot.slane %v5561, 2
        %v5563 = vadd.f32 %v5561, %v5562
        %v5564 = vrot.slane %v5563, 1
        %v5565 = vadd.f32 %v5563, %v5564
        %v5566 = vadd.f32 %v5547, 1e-08
        %v5567 = vadd.f32 %v5553, 1e-08
        %v5568 = vadd.f32 %v5559, 1e-08
        %v5569 = vadd.f32 %v5565, 1e-08
        %v5570 = vld [vmem:[#allocation3] sm:$0xff]
        %v5571 = vld [vmem:[#allocation3 + $0x8] sm:$0xff]
        %v5572 = vld [vmem:[#allocation3 + $0x10] sm:$0xff]
        %v5573 = vld [vmem:[#allocation3 + $0x18] sm:$0xff]
        %v5574 = vrot.slane %v5570, 4
        %v5575 = vadd.f32 %v5570, %v5574
        %v5576 = vrot.slane %v5575, 2
        %v5577 = vadd.f32 %v5575, %v5576
        %v5578 = vrot.slane %v5577, 1
        %v5579 = vadd.f32 %v5577, %v5578
        %v5580 = vrot.slane %v5571, 4
        %v5581 = vadd.f32 %v5571, %v5580
        %v5582 = vrot.slane %v5581, 2
        %v5583 = vadd.f32 %v5581, %v5582
        %v5584 = vrot.slane %v5583, 1
        %v5585 = vadd.f32 %v5583, %v5584
        %v5586 = vrot.slane %v5572, 4
        %v5587 = vadd.f32 %v5572, %v5586
        %v5588 = vrot.slane %v5587, 2
        %v5589 = vadd.f32 %v5587, %v5588
        %v5590 = vrot.slane %v5589, 1
        %v5591 = vadd.f32 %v5589, %v5590
        %v5592 = vrot.slane %v5573, 4
        %v5593 = vadd.f32 %v5573, %v5592
        %v5594 = vrot.slane %v5593, 2
        %v5595 = vadd.f32 %v5593, %v5594
        %v5596 = vrot.slane %v5595, 1
        %v5597 = vadd.f32 %v5595, %v5596
        %v5598 = vadd.f32 %v5579, 1e-08
        %v5599 = vadd.f32 %v5585, 1e-08
        %v5600 = vadd.f32 %v5591, 1e-08
        %v5601 = vadd.f32 %v5597, 1e-08
        %v5602 = vrcp.pop %v5598
        %v5603 = vrcp.pop %v5599
        %v5604 = vrcp.pop %v5600
        %v5605 = vrcp.pop %v5601
        %v5606 = vmul.f32 %v5566, %v5602
        %v5607 = vmul.f32 %v5567, %v5603
        %v5608 = vmul.f32 %v5568, %v5604
        %v5609 = vmul.f32 %v5569, %v5605
        %v5614 = vcombine.low %v5606, %v5607
        %v5615 = vcombine.low %v5608, %v5609
        %v5617 = vunpack.c.l.s4 1966171168
        %v5618 = vunpack.c.0.s8 %v5617
        %v5619 = vlaneseq
        %v5620 = vshrl.u32 %v5619, 7
        %v5621 = vsub.s32 %v5618, %v5620
        %v5622 = vrot.slane %v5614, %v5621
        %v5624 = vunpack.c.l.s4 1966171168
        %v5625 = vunpack.c.0.s8 %v5624
        %v5626 = vlaneseq
        %v5627 = vshrl.u32 %v5626, 7
        %v5628 = vsub.s32 %v5625, %v5627
        %v5629 = vrot.slane %v5615, %v5628
        %v5630 = vcombine.low %v5622, %v5629
        %v5632 = vunpack.c.l.s4 1966171168
        %v5633 = vunpack.c.0.s8 %v5632
        %v5634 = vlaneseq
        %v5635 = vshrl.u32 %v5634, 7
        %v5636 = vsub.s32 %v5633, %v5635
        %v5637 = vrot.slane %v5630, %v5636
        %v5639 = vlaneseq
        %vm5640 = vcmp.ge.s32.totalorder %v5639, 0
        %vm5641 = vcmp.lt.s32.totalorder %v5639, 512
        %vm5642 = vmand %vm5640, %vm5641
        %5643 = vst.msk [vmem:[%s215] ss:$8 sm:$0xf] %vm5642, %v5637
        %5644 = vst.msk [vmem:[%s215] ss:$8 sm:$0x0] %vm5642, %v5637
        %v5645 = vld [vmem:[%s1603] sm:$0xff]
        %v5646 = vld [vmem:[%s1603 + $0x8] sm:$0xff]
        %v5647 = vld [vmem:[%s1603 + $0x10] sm:$0xff]
        %v5648 = vld [vmem:[%s1603 + $0x18] sm:$0xff]
        %v5649 = vrot.slane %v5645, 4
        %v5650 = vadd.f32 %v5645, %v5649
        %v5651 = vrot.slane %v5650, 2
        %v5652 = vadd.f32 %v5650, %v5651
        %v5653 = vrot.slane %v5652, 1
        %v5654 = vadd.f32 %v5652, %v5653
        %v5655 = vrot.slane %v5646, 4
        %v5656 = vadd.f32 %v5646, %v5655
        %v5657 = vrot.slane %v5656, 2
        %v5658 = vadd.f32 %v5656, %v5657
        %v5659 = vrot.slane %v5658, 1
        %v5660 = vadd.f32 %v5658, %v5659
        %v5661 = vrot.slane %v5647, 4
        %v5662 = vadd.f32 %v5647, %v5661
        %v5663 = vrot.slane %v5662, 2
        %v5664 = vadd.f32 %v5662, %v5663
        %v5665 = vrot.slane %v5664, 1
        %v5666 = vadd.f32 %v5664, %v5665
        %v5667 = vrot.slane %v5648, 4
        %v5668 = vadd.f32 %v5648, %v5667
        %v5669 = vrot.slane %v5668, 2
        %v5670 = vadd.f32 %v5668, %v5669
        %v5671 = vrot.slane %v5670, 1
        %v5672 = vadd.f32 %v5670, %v5671
        %v5673 = vadd.f32 %v5654, 1e-08
        %v5674 = vadd.f32 %v5660, 1e-08
        %v5675 = vadd.f32 %v5666, 1e-08
        %v5676 = vadd.f32 %v5672, 1e-08
        %v5677 = vld [vmem:[%s1616] sm:$0xff]
        %v5678 = vld [vmem:[%s1616 + $0x8] sm:$0xff]
        %v5679 = vld [vmem:[%s1616 + $0x10] sm:$0xff]
        %v5680 = vld [vmem:[%s1616 + $0x18] sm:$0xff]
        %v5681 = vrot.slane %v5677, 4
        %v5682 = vadd.f32 %v5677, %v5681
        %v5683 = vrot.slane %v5682, 2
        %v5684 = vadd.f32 %v5682, %v5683
        %v5685 = vrot.slane %v5684, 1
        %v5686 = vadd.f32 %v5684, %v5685
        %v5687 = vrot.slane %v5678, 4
        %v5688 = vadd.f32 %v5678, %v5687
        %v5689 = vrot.slane %v5688, 2
        %v5690 = vadd.f32 %v5688, %v5689
        %v5691 = vrot.slane %v5690, 1
        %v5692 = vadd.f32 %v5690, %v5691
        %v5693 = vrot.slane %v5679, 4
        %v5694 = vadd.f32 %v5679, %v5693
        %v5695 = vrot.slane %v5694, 2
        %v5696 = vadd.f32 %v5694, %v5695
        %v5697 = vrot.slane %v5696, 1
        %v5698 = vadd.f32 %v5696, %v5697
        %v5699 = vrot.slane %v5680, 4
        %v5700 = vadd.f32 %v5680, %v5699
        %v5701 = vrot.slane %v5700, 2
        %v5702 = vadd.f32 %v5700, %v5701
        %v5703 = vrot.slane %v5702, 1
        %v5704 = vadd.f32 %v5702, %v5703
        %v5705 = vadd.f32 %v5686, 1e-08
        %v5706 = vadd.f32 %v5692, 1e-08
        %v5707 = vadd.f32 %v5698, 1e-08
        %v5708 = vadd.f32 %v5704, 1e-08
        %v5709 = vrcp.pop %v5705
        %v5710 = vrcp.pop %v5706
        %v5711 = vrcp.pop %v5707
        %v5712 = vrcp.pop %v5708
        %v5713 = vmul.f32 %v5673, %v5709
        %v5714 = vmul.f32 %v5674, %v5710
        %v5715 = vmul.f32 %v5675, %v5711
        %v5716 = vmul.f32 %v5676, %v5712
        %v5721 = vcombine.low %v5713, %v5714
        %v5722 = vcombine.low %v5715, %v5716
        %v5724 = vunpack.c.l.s4 1966171168
        %v5725 = vunpack.c.0.s8 %v5724
        %v5726 = vlaneseq
        %v5727 = vshrl.u32 %v5726, 7
        %v5728 = vsub.s32 %v5725, %v5727
        %v5729 = vrot.slane %v5721, %v5728
        %v5731 = vunpack.c.l.s4 1966171168
        %v5732 = vunpack.c.0.s8 %v5731
        %v5733 = vlaneseq
        %v5734 = vshrl.u32 %v5733, 7
        %v5735 = vsub.s32 %v5732, %v5734
        %v5736 = vrot.slane %v5722, %v5735
        %v5737 = vcombine.low %v5729, %v5736
        %v5739 = vunpack.c.l.s4 1966171168
        %v5740 = vunpack.c.0.s8 %v5739
        %v5741 = vlaneseq
        %v5742 = vshrl.u32 %v5741, 7
        %v5743 = vsub.s32 %v5740, %v5742
        %v5744 = vrot.slane %v5737, %v5743
        %s5746 = scalar_lea.vmem %s215, 1
        %5747 = vst.msk [vmem:[%s5746] ss:$8 sm:$0xf] %vm5642, %v5744
        %5748 = vst.msk [vmem:[%s5746] ss:$8 sm:$0x0] %vm5642, %v5744
        %v5749 = vld [vmem:[%s2254] sm:$0xff]
        %v5750 = vld [vmem:[%s2254 + $0x8] sm:$0xff]
        %v5751 = vld [vmem:[%s2254 + $0x10] sm:$0xff]
        %v5752 = vld [vmem:[%s2254 + $0x18] sm:$0xff]
        %v5753 = vrot.slane %v5749, 4
        %v5754 = vadd.f32 %v5749, %v5753
        %v5755 = vrot.slane %v5754, 2
        %v5756 = vadd.f32 %v5754, %v5755
        %v5757 = vrot.slane %v5756, 1
        %v5758 = vadd.f32 %v5756, %v5757
        %v5759 = vrot.slane %v5750, 4
        %v5760 = vadd.f32 %v5750, %v5759
        %v5761 = vrot.slane %v5760, 2
        %v5762 = vadd.f32 %v5760, %v5761
        %v5763 = vrot.slane %v5762, 1
        %v5764 = vadd.f32 %v5762, %v5763
        %v5765 = vrot.slane %v5751, 4
        %v5766 = vadd.f32 %v5751, %v5765
        %v5767 = vrot.slane %v5766, 2
        %v5768 = vadd.f32 %v5766, %v5767
        %v5769 = vrot.slane %v5768, 1
        %v5770 = vadd.f32 %v5768, %v5769
        %v5771 = vrot.slane %v5752, 4
        %v5772 = vadd.f32 %v5752, %v5771
        %v5773 = vrot.slane %v5772, 2
        %v5774 = vadd.f32 %v5772, %v5773
        %v5775 = vrot.slane %v5774, 1
        %v5776 = vadd.f32 %v5774, %v5775
        %v5777 = vadd.f32 %v5758, 1e-08
        %v5778 = vadd.f32 %v5764, 1e-08
        %v5779 = vadd.f32 %v5770, 1e-08
        %v5780 = vadd.f32 %v5776, 1e-08
        %v5781 = vld [vmem:[%s2267] sm:$0xff]
        %v5782 = vld [vmem:[%s2267 + $0x8] sm:$0xff]
        %v5783 = vld [vmem:[%s2267 + $0x10] sm:$0xff]
        %v5784 = vld [vmem:[%s2267 + $0x18] sm:$0xff]
        %v5785 = vrot.slane %v5781, 4
        %v5786 = vadd.f32 %v5781, %v5785
        %v5787 = vrot.slane %v5786, 2
        %v5788 = vadd.f32 %v5786, %v5787
        %v5789 = vrot.slane %v5788, 1
        %v5790 = vadd.f32 %v5788, %v5789
        %v5791 = vrot.slane %v5782, 4
        %v5792 = vadd.f32 %v5782, %v5791
        %v5793 = vrot.slane %v5792, 2
        %v5794 = vadd.f32 %v5792, %v5793
        %v5795 = vrot.slane %v5794, 1
        %v5796 = vadd.f32 %v5794, %v5795
        %v5797 = vrot.slane %v5783, 4
        %v5798 = vadd.f32 %v5783, %v5797
        %v5799 = vrot.slane %v5798, 2
        %v5800 = vadd.f32 %v5798, %v5799
        %v5801 = vrot.slane %v5800, 1
        %v5802 = vadd.f32 %v5800, %v5801
        %v5803 = vrot.slane %v5784, 4
        %v5804 = vadd.f32 %v5784, %v5803
        %v5805 = vrot.slane %v5804, 2
        %v5806 = vadd.f32 %v5804, %v5805
        %v5807 = vrot.slane %v5806, 1
        %v5808 = vadd.f32 %v5806, %v5807
        %v5809 = vadd.f32 %v5790, 1e-08
        %v5810 = vadd.f32 %v5796, 1e-08
        %v5811 = vadd.f32 %v5802, 1e-08
        %v5812 = vadd.f32 %v5808, 1e-08
        %v5813 = vrcp.pop %v5809
        %v5814 = vrcp.pop %v5810
        %v5815 = vrcp.pop %v5811
        %v5816 = vrcp.pop %v5812
        %v5817 = vmul.f32 %v5777, %v5813
        %v5818 = vmul.f32 %v5778, %v5814
        %v5819 = vmul.f32 %v5779, %v5815
        %v5820 = vmul.f32 %v5780, %v5816
        %v5825 = vcombine.low %v5817, %v5818
        %v5826 = vcombine.low %v5819, %v5820
        %v5828 = vunpack.c.l.s4 1966171168
        %v5829 = vunpack.c.0.s8 %v5828
        %v5830 = vlaneseq
        %v5831 = vshrl.u32 %v5830, 7
        %v5832 = vsub.s32 %v5829, %v5831
        %v5833 = vrot.slane %v5825, %v5832
        %v5835 = vunpack.c.l.s4 1966171168
        %v5836 = vunpack.c.0.s8 %v5835
        %v5837 = vlaneseq
        %v5838 = vshrl.u32 %v5837, 7
        %v5839 = vsub.s32 %v5836, %v5838
        %v5840 = vrot.slane %v5826, %v5839
        %v5841 = vcombine.low %v5833, %v5840
        %v5843 = vunpack.c.l.s4 1966171168
        %v5844 = vunpack.c.0.s8 %v5843
        %v5845 = vlaneseq
        %v5846 = vshrl.u32 %v5845, 7
        %v5847 = vsub.s32 %v5844, %v5846
        %v5848 = vrot.slane %v5841, %v5847
        %s5850 = scalar_lea.vmem %s215, 2
        %5851 = vst.msk [vmem:[%s5850] ss:$8 sm:$0xf] %vm5642, %v5848
        %5852 = vst.msk [vmem:[%s5850] ss:$8 sm:$0x0] %vm5642, %v5848
        %v5853 = vld [vmem:[%s2905] sm:$0xff]
        %v5854 = vld [vmem:[%s2905 + $0x8] sm:$0xff]
        %v5855 = vld [vmem:[%s2905 + $0x10] sm:$0xff]
        %v5856 = vld [vmem:[%s2905 + $0x18] sm:$0xff]
        %v5857 = vrot.slane %v5853, 4
        %v5858 = vadd.f32 %v5853, %v5857
        %v5859 = vrot.slane %v5858, 2
        %v5860 = vadd.f32 %v5858, %v5859
        %v5861 = vrot.slane %v5860, 1
        %v5862 = vadd.f32 %v5860, %v5861
        %v5863 = vrot.slane %v5854, 4
        %v5864 = vadd.f32 %v5854, %v5863
        %v5865 = vrot.slane %v5864, 2
        %v5866 = vadd.f32 %v5864, %v5865
        %v5867 = vrot.slane %v5866, 1
        %v5868 = vadd.f32 %v5866, %v5867
        %v5869 = vrot.slane %v5855, 4
        %v5870 = vadd.f32 %v5855, %v5869
        %v5871 = vrot.slane %v5870, 2
        %v5872 = vadd.f32 %v5870, %v5871
        %v5873 = vrot.slane %v5872, 1
        %v5874 = vadd.f32 %v5872, %v5873
        %v5875 = vrot.slane %v5856, 4
        %v5876 = vadd.f32 %v5856, %v5875
        %v5877 = vrot.slane %v5876, 2
        %v5878 = vadd.f32 %v5876, %v5877
        %v5879 = vrot.slane %v5878, 1
        %v5880 = vadd.f32 %v5878, %v5879
        %v5881 = vadd.f32 %v5862, 1e-08
        %v5882 = vadd.f32 %v5868, 1e-08
        %v5883 = vadd.f32 %v5874, 1e-08
        %v5884 = vadd.f32 %v5880, 1e-08
        %v5885 = vld [vmem:[%s2918] sm:$0xff]
        %v5886 = vld [vmem:[%s2918 + $0x8] sm:$0xff]
        %v5887 = vld [vmem:[%s2918 + $0x10] sm:$0xff]
        %v5888 = vld [vmem:[%s2918 + $0x18] sm:$0xff]
        %v5889 = vrot.slane %v5885, 4
        %v5890 = vadd.f32 %v5885, %v5889
        %v5891 = vrot.slane %v5890, 2
        %v5892 = vadd.f32 %v5890, %v5891
        %v5893 = vrot.slane %v5892, 1
        %v5894 = vadd.f32 %v5892, %v5893
        %v5895 = vrot.slane %v5886, 4
        %v5896 = vadd.f32 %v5886, %v5895
        %v5897 = vrot.slane %v5896, 2
        %v5898 = vadd.f32 %v5896, %v5897
        %v5899 = vrot.slane %v5898, 1
        %v5900 = vadd.f32 %v5898, %v5899
        %v5901 = vrot.slane %v5887, 4
        %v5902 = vadd.f32 %v5887, %v5901
        %v5903 = vrot.slane %v5902, 2
        %v5904 = vadd.f32 %v5902, %v5903
        %v5905 = vrot.slane %v5904, 1
        %v5906 = vadd.f32 %v5904, %v5905
        %v5907 = vrot.slane %v5888, 4
        %v5908 = vadd.f32 %v5888, %v5907
        %v5909 = vrot.slane %v5908, 2
        %v5910 = vadd.f32 %v5908, %v5909
        %v5911 = vrot.slane %v5910, 1
        %v5912 = vadd.f32 %v5910, %v5911
        %v5913 = vadd.f32 %v5894, 1e-08
        %v5914 = vadd.f32 %v5900, 1e-08
        %v5915 = vadd.f32 %v5906, 1e-08
        %v5916 = vadd.f32 %v5912, 1e-08
        %v5917 = vrcp.pop %v5913
        %v5918 = vrcp.pop %v5914
        %v5919 = vrcp.pop %v5915
        %v5920 = vrcp.pop %v5916
        %v5921 = vmul.f32 %v5881, %v5917
        %v5922 = vmul.f32 %v5882, %v5918
        %v5923 = vmul.f32 %v5883, %v5919
        %v5924 = vmul.f32 %v5884, %v5920
        %v5929 = vcombine.low %v5921, %v5922
        %v5930 = vcombine.low %v5923, %v5924
        %v5932 = vunpack.c.l.s4 1966171168
        %v5933 = vunpack.c.0.s8 %v5932
        %v5934 = vlaneseq
        %v5935 = vshrl.u32 %v5934, 7
        %v5936 = vsub.s32 %v5933, %v5935
        %v5937 = vrot.slane %v5929, %v5936
        %v5939 = vunpack.c.l.s4 1966171168
        %v5940 = vunpack.c.0.s8 %v5939
        %v5941 = vlaneseq
        %v5942 = vshrl.u32 %v5941, 7
        %v5943 = vsub.s32 %v5940, %v5942
        %v5944 = vrot.slane %v5930, %v5943
        %v5945 = vcombine.low %v5937, %v5944
        %v5947 = vunpack.c.l.s4 1966171168
        %v5948 = vunpack.c.0.s8 %v5947
        %v5949 = vlaneseq
        %v5950 = vshrl.u32 %v5949, 7
        %v5951 = vsub.s32 %v5948, %v5950
        %v5952 = vrot.slane %v5945, %v5951
        %s5954 = scalar_lea.vmem %s215, 3
        %5955 = vst.msk [vmem:[%s5954] ss:$8 sm:$0xf] %vm5642, %v5952
        %5956 = vst.msk [vmem:[%s5954] ss:$8 sm:$0x0] %vm5642, %v5952
        %v5957 = vld [vmem:[%s3556] sm:$0xff]
        %v5958 = vld [vmem:[%s3556 + $0x8] sm:$0xff]
        %v5959 = vld [vmem:[%s3556 + $0x10] sm:$0xff]
        %v5960 = vld [vmem:[%s3556 + $0x18] sm:$0xff]
        %v5961 = vrot.slane %v5957, 4
        %v5962 = vadd.f32 %v5957, %v5961
        %v5963 = vrot.slane %v5962, 2
        %v5964 = vadd.f32 %v5962, %v5963
        %v5965 = vrot.slane %v5964, 1
        %v5966 = vadd.f32 %v5964, %v5965
        %v5967 = vrot.slane %v5958, 4
        %v5968 = vadd.f32 %v5958, %v5967
        %v5969 = vrot.slane %v5968, 2
        %v5970 = vadd.f32 %v5968, %v5969
        %v5971 = vrot.slane %v5970, 1
        %v5972 = vadd.f32 %v5970, %v5971
        %v5973 = vrot.slane %v5959, 4
        %v5974 = vadd.f32 %v5959, %v5973
        %v5975 = vrot.slane %v5974, 2
        %v5976 = vadd.f32 %v5974, %v5975
        %v5977 = vrot.slane %v5976, 1
        %v5978 = vadd.f32 %v5976, %v5977
        %v5979 = vrot.slane %v5960, 4
        %v5980 = vadd.f32 %v5960, %v5979
        %v5981 = vrot.slane %v5980, 2
        %v5982 = vadd.f32 %v5980, %v5981
        %v5983 = vrot.slane %v5982, 1
        %v5984 = vadd.f32 %v5982, %v5983
        %v5985 = vadd.f32 %v5966, 1e-08
        %v5986 = vadd.f32 %v5972, 1e-08
        %v5987 = vadd.f32 %v5978, 1e-08
        %v5988 = vadd.f32 %v5984, 1e-08
        %v5989 = vld [vmem:[%s3569] sm:$0xff]
        %v5990 = vld [vmem:[%s3569 + $0x8] sm:$0xff]
        %v5991 = vld [vmem:[%s3569 + $0x10] sm:$0xff]
        %v5992 = vld [vmem:[%s3569 + $0x18] sm:$0xff]
        %v5993 = vrot.slane %v5989, 4
        %v5994 = vadd.f32 %v5989, %v5993
        %v5995 = vrot.slane %v5994, 2
        %v5996 = vadd.f32 %v5994, %v5995
        %v5997 = vrot.slane %v5996, 1
        %v5998 = vadd.f32 %v5996, %v5997
        %v5999 = vrot.slane %v5990, 4
        %v6000 = vadd.f32 %v5990, %v5999
        %v6001 = vrot.slane %v6000, 2
        %v6002 = vadd.f32 %v6000, %v6001
        %v6003 = vrot.slane %v6002, 1
        %v6004 = vadd.f32 %v6002, %v6003
        %v6005 = vrot.slane %v5991, 4
        %v6006 = vadd.f32 %v5991, %v6005
        %v6007 = vrot.slane %v6006, 2
        %v6008 = vadd.f32 %v6006, %v6007
        %v6009 = vrot.slane %v6008, 1
        %v6010 = vadd.f32 %v6008, %v6009
        %v6011 = vrot.slane %v5992, 4
        %v6012 = vadd.f32 %v5992, %v6011
        %v6013 = vrot.slane %v6012, 2
        %v6014 = vadd.f32 %v6012, %v6013
        %v6015 = vrot.slane %v6014, 1
        %v6016 = vadd.f32 %v6014, %v6015
        %v6017 = vadd.f32 %v5998, 1e-08
        %v6018 = vadd.f32 %v6004, 1e-08
        %v6019 = vadd.f32 %v6010, 1e-08
        %v6020 = vadd.f32 %v6016, 1e-08
        %v6021 = vrcp.pop %v6017
        %v6022 = vrcp.pop %v6018
        %v6023 = vrcp.pop %v6019
        %v6024 = vrcp.pop %v6020
        %v6025 = vmul.f32 %v5985, %v6021
        %v6026 = vmul.f32 %v5986, %v6022
        %v6027 = vmul.f32 %v5987, %v6023
        %v6028 = vmul.f32 %v5988, %v6024
        %v6033 = vcombine.low %v6025, %v6026
        %v6034 = vcombine.low %v6027, %v6028
        %v6036 = vunpack.c.l.s4 1966171168
        %v6037 = vunpack.c.0.s8 %v6036
        %v6038 = vlaneseq
        %v6039 = vshrl.u32 %v6038, 7
        %v6040 = vsub.s32 %v6037, %v6039
        %v6041 = vrot.slane %v6033, %v6040
        %v6043 = vunpack.c.l.s4 1966171168
        %v6044 = vunpack.c.0.s8 %v6043
        %v6045 = vlaneseq
        %v6046 = vshrl.u32 %v6045, 7
        %v6047 = vsub.s32 %v6044, %v6046
        %v6048 = vrot.slane %v6034, %v6047
        %v6049 = vcombine.low %v6041, %v6048
        %v6051 = vunpack.c.l.s4 1966171168
        %v6052 = vunpack.c.0.s8 %v6051
        %v6053 = vlaneseq
        %v6054 = vshrl.u32 %v6053, 7
        %v6055 = vsub.s32 %v6052, %v6054
        %v6056 = vrot.slane %v6049, %v6055
        %s6058 = scalar_lea.vmem %s215, 4
        %6059 = vst.msk [vmem:[%s6058] ss:$8 sm:$0xf] %vm5642, %v6056
        %6060 = vst.msk [vmem:[%s6058] ss:$8 sm:$0x0] %vm5642, %v6056
        %v6061 = vld [vmem:[%s4207] sm:$0xff]
        %v6062 = vld [vmem:[%s4207 + $0x8] sm:$0xff]
        %v6063 = vld [vmem:[%s4207 + $0x10] sm:$0xff]
        %v6064 = vld [vmem:[%s4207 + $0x18] sm:$0xff]
        %v6065 = vrot.slane %v6061, 4
        %v6066 = vadd.f32 %v6061, %v6065
        %v6067 = vrot.slane %v6066, 2
        %v6068 = vadd.f32 %v6066, %v6067
        %v6069 = vrot.slane %v6068, 1
        %v6070 = vadd.f32 %v6068, %v6069
        %v6071 = vrot.slane %v6062, 4
        %v6072 = vadd.f32 %v6062, %v6071
        %v6073 = vrot.slane %v6072, 2
        %v6074 = vadd.f32 %v6072, %v6073
        %v6075 = vrot.slane %v6074, 1
        %v6076 = vadd.f32 %v6074, %v6075
        %v6077 = vrot.slane %v6063, 4
        %v6078 = vadd.f32 %v6063, %v6077
        %v6079 = vrot.slane %v6078, 2
        %v6080 = vadd.f32 %v6078, %v6079
        %v6081 = vrot.slane %v6080, 1
        %v6082 = vadd.f32 %v6080, %v6081
        %v6083 = vrot.slane %v6064, 4
        %v6084 = vadd.f32 %v6064, %v6083
        %v6085 = vrot.slane %v6084, 2
        %v6086 = vadd.f32 %v6084, %v6085
        %v6087 = vrot.slane %v6086, 1
        %v6088 = vadd.f32 %v6086, %v6087
        %v6089 = vadd.f32 %v6070, 1e-08
        %v6090 = vadd.f32 %v6076, 1e-08
        %v6091 = vadd.f32 %v6082, 1e-08
        %v6092 = vadd.f32 %v6088, 1e-08
        %v6093 = vld [vmem:[%s4220] sm:$0xff]
        %v6094 = vld [vmem:[%s4220 + $0x8] sm:$0xff]
        %v6095 = vld [vmem:[%s4220 + $0x10] sm:$0xff]
        %v6096 = vld [vmem:[%s4220 + $0x18] sm:$0xff]
        %v6097 = vrot.slane %v6093, 4
        %v6098 = vadd.f32 %v6093, %v6097
        %v6099 = vrot.slane %v6098, 2
        %v6100 = vadd.f32 %v6098, %v6099
        %v6101 = vrot.slane %v6100, 1
        %v6102 = vadd.f32 %v6100, %v6101
        %v6103 = vrot.slane %v6094, 4
        %v6104 = vadd.f32 %v6094, %v6103
        %v6105 = vrot.slane %v6104, 2
        %v6106 = vadd.f32 %v6104, %v6105
        %v6107 = vrot.slane %v6106, 1
        %v6108 = vadd.f32 %v6106, %v6107
        %v6109 = vrot.slane %v6095, 4
        %v6110 = vadd.f32 %v6095, %v6109
        %v6111 = vrot.slane %v6110, 2
        %v6112 = vadd.f32 %v6110, %v6111
        %v6113 = vrot.slane %v6112, 1
        %v6114 = vadd.f32 %v6112, %v6113
        %v6115 = vrot.slane %v6096, 4
        %v6116 = vadd.f32 %v6096, %v6115
        %v6117 = vrot.slane %v6116, 2
        %v6118 = vadd.f32 %v6116, %v6117
        %v6119 = vrot.slane %v6118, 1
        %v6120 = vadd.f32 %v6118, %v6119
        %v6121 = vadd.f32 %v6102, 1e-08
        %v6122 = vadd.f32 %v6108, 1e-08
        %v6123 = vadd.f32 %v6114, 1e-08
        %v6124 = vadd.f32 %v6120, 1e-08
        %v6125 = vrcp.pop %v6121
        %v6126 = vrcp.pop %v6122
        %v6127 = vrcp.pop %v6123
        %v6128 = vrcp.pop %v6124
        %v6129 = vmul.f32 %v6089, %v6125
        %v6130 = vmul.f32 %v6090, %v6126
        %v6131 = vmul.f32 %v6091, %v6127
        %v6132 = vmul.f32 %v6092, %v6128
        %v6137 = vcombine.low %v6129, %v6130
        %v6138 = vcombine.low %v6131, %v6132
        %v6140 = vunpack.c.l.s4 1966171168
        %v6141 = vunpack.c.0.s8 %v6140
        %v6142 = vlaneseq
        %v6143 = vshrl.u32 %v6142, 7
        %v6144 = vsub.s32 %v6141, %v6143
        %v6145 = vrot.slane %v6137, %v6144
        %v6147 = vunpack.c.l.s4 1966171168
        %v6148 = vunpack.c.0.s8 %v6147
        %v6149 = vlaneseq
        %v6150 = vshrl.u32 %v6149, 7
        %v6151 = vsub.s32 %v6148, %v6150
        %v6152 = vrot.slane %v6138, %v6151
        %v6153 = vcombine.low %v6145, %v6152
        %v6155 = vunpack.c.l.s4 1966171168
        %v6156 = vunpack.c.0.s8 %v6155
        %v6157 = vlaneseq
        %v6158 = vshrl.u32 %v6157, 7
        %v6159 = vsub.s32 %v6156, %v6158
        %v6160 = vrot.slane %v6153, %v6159
        %s6162 = scalar_lea.vmem %s215, 5
        %6163 = vst.msk [vmem:[%s6162] ss:$8 sm:$0xf] %vm5642, %v6160
        %6164 = vst.msk [vmem:[%s6162] ss:$8 sm:$0x0] %vm5642, %v6160
        %v6165 = vld [vmem:[%s4858] sm:$0xff]
        %v6166 = vld [vmem:[%s4858 + $0x8] sm:$0xff]
        %v6167 = vld [vmem:[%s4858 + $0x10] sm:$0xff]
        %v6168 = vld [vmem:[%s4858 + $0x18] sm:$0xff]
        %v6169 = vrot.slane %v6165, 4
        %v6170 = vadd.f32 %v6165, %v6169
        %v6171 = vrot.slane %v6170, 2
        %v6172 = vadd.f32 %v6170, %v6171
        %v6173 = vrot.slane %v6172, 1
        %v6174 = vadd.f32 %v6172, %v6173
        %v6175 = vrot.slane %v6166, 4
        %v6176 = vadd.f32 %v6166, %v6175
        %v6177 = vrot.slane %v6176, 2
        %v6178 = vadd.f32 %v6176, %v6177
        %v6179 = vrot.slane %v6178, 1
        %v6180 = vadd.f32 %v6178, %v6179
        %v6181 = vrot.slane %v6167, 4
        %v6182 = vadd.f32 %v6167, %v6181
        %v6183 = vrot.slane %v6182, 2
        %v6184 = vadd.f32 %v6182, %v6183
        %v6185 = vrot.slane %v6184, 1
        %v6186 = vadd.f32 %v6184, %v6185
        %v6187 = vrot.slane %v6168, 4
        %v6188 = vadd.f32 %v6168, %v6187
        %v6189 = vrot.slane %v6188, 2
        %v6190 = vadd.f32 %v6188, %v6189
        %v6191 = vrot.slane %v6190, 1
        %v6192 = vadd.f32 %v6190, %v6191
        %v6193 = vadd.f32 %v6174, 1e-08
        %v6194 = vadd.f32 %v6180, 1e-08
        %v6195 = vadd.f32 %v6186, 1e-08
        %v6196 = vadd.f32 %v6192, 1e-08
        %v6197 = vld [vmem:[%s4871] sm:$0xff]
        %v6198 = vld [vmem:[%s4871 + $0x8] sm:$0xff]
        %v6199 = vld [vmem:[%s4871 + $0x10] sm:$0xff]
        %v6200 = vld [vmem:[%s4871 + $0x18] sm:$0xff]
        %v6201 = vrot.slane %v6197, 4
        %v6202 = vadd.f32 %v6197, %v6201
        %v6203 = vrot.slane %v6202, 2
        %v6204 = vadd.f32 %v6202, %v6203
        %v6205 = vrot.slane %v6204, 1
        %v6206 = vadd.f32 %v6204, %v6205
        %v6207 = vrot.slane %v6198, 4
        %v6208 = vadd.f32 %v6198, %v6207
        %v6209 = vrot.slane %v6208, 2
        %v6210 = vadd.f32 %v6208, %v6209
        %v6211 = vrot.slane %v6210, 1
        %v6212 = vadd.f32 %v6210, %v6211
        %v6213 = vrot.slane %v6199, 4
        %v6214 = vadd.f32 %v6199, %v6213
        %v6215 = vrot.slane %v6214, 2
        %v6216 = vadd.f32 %v6214, %v6215
        %v6217 = vrot.slane %v6216, 1
        %v6218 = vadd.f32 %v6216, %v6217
        %v6219 = vrot.slane %v6200, 4
        %v6220 = vadd.f32 %v6200, %v6219
        %v6221 = vrot.slane %v6220, 2
        %v6222 = vadd.f32 %v6220, %v6221
        %v6223 = vrot.slane %v6222, 1
        %v6224 = vadd.f32 %v6222, %v6223
        %v6225 = vadd.f32 %v6206, 1e-08
        %v6226 = vadd.f32 %v6212, 1e-08
        %v6227 = vadd.f32 %v6218, 1e-08
        %v6228 = vadd.f32 %v6224, 1e-08
        %v6229 = vrcp.pop %v6225
        %v6230 = vrcp.pop %v6226
        %v6231 = vrcp.pop %v6227
        %v6232 = vrcp.pop %v6228
        %v6233 = vmul.f32 %v6193, %v6229
        %v6234 = vmul.f32 %v6194, %v6230
        %v6235 = vmul.f32 %v6195, %v6231
        %v6236 = vmul.f32 %v6196, %v6232
        %v6241 = vcombine.low %v6233, %v6234
        %v6242 = vcombine.low %v6235, %v6236
        %v6244 = vunpack.c.l.s4 1966171168
        %v6245 = vunpack.c.0.s8 %v6244
        %v6246 = vlaneseq
        %v6247 = vshrl.u32 %v6246, 7
        %v6248 = vsub.s32 %v6245, %v6247
        %v6249 = vrot.slane %v6241, %v6248
        %v6251 = vunpack.c.l.s4 1966171168
        %v6252 = vunpack.c.0.s8 %v6251
        %v6253 = vlaneseq
        %v6254 = vshrl.u32 %v6253, 7
        %v6255 = vsub.s32 %v6252, %v6254
        %v6256 = vrot.slane %v6242, %v6255
        %v6257 = vcombine.low %v6249, %v6256
        %v6259 = vunpack.c.l.s4 1966171168
        %v6260 = vunpack.c.0.s8 %v6259
        %v6261 = vlaneseq
        %v6262 = vshrl.u32 %v6261, 7
        %v6263 = vsub.s32 %v6260, %v6262
        %v6264 = vrot.slane %v6257, %v6263
        %s6266 = scalar_lea.vmem %s215, 6
        %6267 = vst.msk [vmem:[%s6266] ss:$8 sm:$0xf] %vm5642, %v6264
        %6268 = vst.msk [vmem:[%s6266] ss:$8 sm:$0x0] %vm5642, %v6264
        %v6269 = vld [vmem:[%s5509] sm:$0xff]
        %v6270 = vld [vmem:[%s5509 + $0x8] sm:$0xff]
        %v6271 = vld [vmem:[%s5509 + $0x10] sm:$0xff]
        %v6272 = vld [vmem:[%s5509 + $0x18] sm:$0xff]
        %v6273 = vrot.slane %v6269, 4
        %v6274 = vadd.f32 %v6269, %v6273
        %v6275 = vrot.slane %v6274, 2
        %v6276 = vadd.f32 %v6274, %v6275
        %v6277 = vrot.slane %v6276, 1
        %v6278 = vadd.f32 %v6276, %v6277
        %v6279 = vrot.slane %v6270, 4
        %v6280 = vadd.f32 %v6270, %v6279
        %v6281 = vrot.slane %v6280, 2
        %v6282 = vadd.f32 %v6280, %v6281
        %v6283 = vrot.slane %v6282, 1
        %v6284 = vadd.f32 %v6282, %v6283
        %v6285 = vrot.slane %v6271, 4
        %v6286 = vadd.f32 %v6271, %v6285
        %v6287 = vrot.slane %v6286, 2
        %v6288 = vadd.f32 %v6286, %v6287
        %v6289 = vrot.slane %v6288, 1
        %v6290 = vadd.f32 %v6288, %v6289
        %v6291 = vrot.slane %v6272, 4
        %v6292 = vadd.f32 %v6272, %v6291
        %v6293 = vrot.slane %v6292, 2
        %v6294 = vadd.f32 %v6292, %v6293
        %v6295 = vrot.slane %v6294, 1
        %v6296 = vadd.f32 %v6294, %v6295
        %v6297 = vadd.f32 %v6278, 1e-08
        %v6298 = vadd.f32 %v6284, 1e-08
        %v6299 = vadd.f32 %v6290, 1e-08
        %v6300 = vadd.f32 %v6296, 1e-08
        %v6301 = vld [vmem:[%s5522] sm:$0xff]
        %v6302 = vld [vmem:[%s5522 + $0x8] sm:$0xff]
        %v6303 = vld [vmem:[%s5522 + $0x10] sm:$0xff]
        %v6304 = vld [vmem:[%s5522 + $0x18] sm:$0xff]
        %v6305 = vrot.slane %v6301, 4
        %v6306 = vadd.f32 %v6301, %v6305
        %v6307 = vrot.slane %v6306, 2
        %v6308 = vadd.f32 %v6306, %v6307
        %v6309 = vrot.slane %v6308, 1
        %v6310 = vadd.f32 %v6308, %v6309
        %v6311 = vrot.slane %v6302, 4
        %v6312 = vadd.f32 %v6302, %v6311
        %v6313 = vrot.slane %v6312, 2
        %v6314 = vadd.f32 %v6312, %v6313
        %v6315 = vrot.slane %v6314, 1
        %v6316 = vadd.f32 %v6314, %v6315
        %v6317 = vrot.slane %v6303, 4
        %v6318 = vadd.f32 %v6303, %v6317
        %v6319 = vrot.slane %v6318, 2
        %v6320 = vadd.f32 %v6318, %v6319
        %v6321 = vrot.slane %v6320, 1
        %v6322 = vadd.f32 %v6320, %v6321
        %v6323 = vrot.slane %v6304, 4
        %v6324 = vadd.f32 %v6304, %v6323
        %v6325 = vrot.slane %v6324, 2
        %v6326 = vadd.f32 %v6324, %v6325
        %v6327 = vrot.slane %v6326, 1
        %v6328 = vadd.f32 %v6326, %v6327
        %v6329 = vadd.f32 %v6310, 1e-08
        %v6330 = vadd.f32 %v6316, 1e-08
        %v6331 = vadd.f32 %v6322, 1e-08
        %v6332 = vadd.f32 %v6328, 1e-08
        %v6333 = vrcp.pop %v6329
        %v6334 = vrcp.pop %v6330
        %v6335 = vrcp.pop %v6331
        %v6336 = vrcp.pop %v6332
        %v6337 = vmul.f32 %v6297, %v6333
        %v6338 = vmul.f32 %v6298, %v6334
        %v6339 = vmul.f32 %v6299, %v6335
        %v6340 = vmul.f32 %v6300, %v6336
        %v6345 = vcombine.low %v6337, %v6338
        %v6346 = vcombine.low %v6339, %v6340
        %v6348 = vunpack.c.l.s4 1966171168
        %v6349 = vunpack.c.0.s8 %v6348
        %v6350 = vlaneseq
        %v6351 = vshrl.u32 %v6350, 7
        %v6352 = vsub.s32 %v6349, %v6351
        %v6353 = vrot.slane %v6345, %v6352
        %v6355 = vunpack.c.l.s4 1966171168
        %v6356 = vunpack.c.0.s8 %v6355
        %v6357 = vlaneseq
        %v6358 = vshrl.u32 %v6357, 7
        %v6359 = vsub.s32 %v6356, %v6358
        %v6360 = vrot.slane %v6346, %v6359
        %v6361 = vcombine.low %v6353, %v6360
        %v6363 = vunpack.c.l.s4 1966171168
        %v6364 = vunpack.c.0.s8 %v6363
        %v6365 = vlaneseq
        %v6366 = vshrl.u32 %v6365, 7
        %v6367 = vsub.s32 %v6364, %v6366
        %v6368 = vrot.slane %v6361, %v6367
        %s6370 = scalar_lea.vmem %s215, 7
        %6371 = vst.msk [vmem:[%s6370] ss:$8 sm:$0xf] %vm5642, %v6368
        %6372 = vst.msk [vmem:[%s6370] ss:$8 sm:$0x0] %vm5642, %v6368
      $region36: #{soft_rasterize_depth.1} parent=27 // pred_fallthru
        _
      %s6373 = smul.u32 4, %s19
      %p6374 = scmp.lt.s32.totalorder %s18, 0
      %s6375 = scalar_select %p6374, %s18, 0
      %p6376 = scmp.lt.s32.totalorder %s6373, 7
      %s6377 = scalar_select %p6376, %s6373, 7
      %s6378 = smul.addr %s6375, 8
      %s6379 = sadd.s32 %s6377, %s6378
      %s6380 = smul.addr %s6379, 8
      %s6381 = scalar_lea.vmem %s2, %s6380
      // Predicated region
      $region37: #{soft_rasterize_depth.1} parent=27 // pred_check
        %p6382 = pneg %p106
      $region38: #{soft_rasterize_depth.1} parent=27 // pred_check_branch
        %6384 = sbr.rel (%p6382) target = $region40
      $region39: #{soft_rasterize_depth.1} parent=27 // pred_region
        %s6385 = smul.u32 4, %s19
      $region40: #{soft_rasterize_depth.1} parent=27 // pred_fallthru
        _
    $region28: #{soft_rasterize_depth.1} parent=5 // pred_fallthru
      _
    %p6386 = scmp.le.s32.totalorder 2, %s8
    // Predicated region
    $region41: #{soft_rasterize_depth.1} parent=5 // pred_check
      %p6387 = pneg %p6386
    $region42: #{soft_rasterize_depth.1} parent=5 // pred_check_branch
      %6389 = sbr.rel (%p6387) target = $region44
    $region43: #{soft_rasterize_depth.1} parent=5 // pred_region
      %s6390 = ssub.s32 %s8, 2
      // Predicated region
      $region45: #{soft_rasterize_depth.1} parent=43 // pred_check
        %p6391 = pneg %p112
      $region46: #{soft_rasterize_depth.1} parent=43 // pred_check_branch
        %6393 = sbr.rel (%p6391) target = $region48
      $region47: #{soft_rasterize_depth.1} parent=43 // pred_region
        %s6394 = smul.u32 4, %s22
        %p6395 = scmp.lt.s32.totalorder %s21, 0
        %s6396 = scalar_select %p6395, %s21, 0
        %p6397 = scmp.lt.s32.totalorder %s6394, 7
        %s6398 = scalar_select %p6397, %s6394, 7
        %s6399 = smul.addr %s6396, 8
        %s6400 = sadd.s32 %s6398, %s6399
        %s6401 = smul.addr %s6400, 8
        %s6402 = scalar_lea.vmem %s2, %s6401
      $region48: #{soft_rasterize_depth.1} parent=43 // pred_fallthru
        _
    $region44: #{soft_rasterize_depth.1} parent=5 // pred_fallthru
      _
  $region6: #{soft_rasterize_depth.1} parent=0 // loop_footer
    %s12 = sadd.s32 1, %s8
  $region7: #{soft_rasterize_depth.1} parent=0 // loop_footer_branch
    %7 = sbr.rel target = $region3
  $region8: #{soft_rasterize_depth.1} parent=0 // loop_exit
    _

</llo_original>
